<compile_context>
chip_gen: v7x
topology: tpu7x:2x2x1
jax: 0.10.0
libtpu: 0.0.40
codegen_flags: <defaults>
</compile_context>

<pallas_src>
import numpy as np
import jax
import jax.numpy as jnp
from jax import lax
from jax.experimental import pallas as pl
from jax.experimental.pallas import tpu as pltpu

PN_EPS = 1e-8
LRELU_SLOPE = 0.2

LATENT_DIM = 32
FEATURE_MAPS = 16
IMAGE_CHANNELS = 3
BATCH = 2
FIRST_SIZE = 4                   # FirstLayer spatial size (version == 1)
BLOCK_SCALES = (2, 2, 2, 1, 2)   # per gen block (version == 1)


# ---------------------------------------------------------------------------
# Raw (PyTorch-equivalent) parameters, synthetic & deterministic
# ---------------------------------------------------------------------------
def init_raw_params(key, latent_dim, feature_maps, image_channels):
    fm = feature_maps
    chans = [(fm, fm), (fm, fm // 2), (fm // 2, fm // 4),
             (fm // 4, fm // 8), (fm // 8, image_channels)]
    keys = jax.random.split(key, 2 + 2 * len(chans))
    d = FIRST_SIZE * FIRST_SIZE * fm
    raw = {
        "linear_w": jax.random.normal(keys[0], (latent_dim, d), jnp.float32) * 0.1,
        "linear_b": jax.random.normal(keys[1], (d,), jnp.float32) * 0.01,
        "convs": [],
    }
    for i, (ci, co) in enumerate(chans):
        w = jax.random.normal(keys[2 + 2 * i], (3, 3, ci, co), jnp.float32)
        w = w * (1.0 / (3 * 3 * ci) ** 0.5)
        b = jax.random.normal(keys[3 + 2 * i], (co,), jnp.float32) * 0.01
        raw["convs"].append((w, b))
    return raw, chans


# ---------------------------------------------------------------------------
# Host-side packing: fold upsample / zero-pad / 3x3 taps / pixelnorm into
# small constant matrices acting on the padded lane-interleaved layout
#   activation buffer:  (H+2, (W+2)*C)   rows=sublanes, width*channels=lanes
#   valid interior:     rows 1..H, lane groups 1..W  (group g holds channels)
# ---------------------------------------------------------------------------
def _upsample_pad_mats(h_prev, w_prev, c, scale):
    """col: lane-side nearest upsample + re-pad; row3[ky]: row-side upsample +
    re-pad, pre-shifted by the vertical tap offset ky-1."""
    h_new, w_new = h_prev * scale, w_prev * scale
    hp_prev, wp_prev = h_prev + 2, w_prev + 2
    hp_new, wp_new = h_new + 2, w_new + 2

    col = np.zeros((wp_prev * c, wp_new * c), np.float32)
    for wn in range(w_new):
        wp_dst = wn + 1
        wp_src = wn // scale + 1
        for ch in range(c):
            col[wp_src * c + ch, wp_dst * c + ch] = 1.0

    row_base = np.zeros((hp_new, hp_prev), np.float32)
    for hn in range(h_new):
        row_base[hn + 1, hn // scale + 1] = 1.0

    row3 = np.zeros((3, hp_new, hp_prev), np.float32)
    for ky in range(3):
        for r in range(hp_new):
            src = r + ky - 1
            if 0 <= src < hp_new:
                row3[ky, r, :] = row_base[src, :]
    return col, row3, h_new, w_new


def _conv_mix_mats(w_size, cin, cout, wgt, bias):
    """m3[ky]: block-Toeplitz matrix folding the 3 horizontal taps + channel
    mixing of the 3x3 conv; bt: lane-tiled bias row. wgt: (3,3,cin,cout)."""
    wp = w_size + 2
    m3 = np.zeros((3, wp * cin, wp * cout), np.float32)
    for ky in range(3):
        for w in range(w_size):
            wp_out = w + 1
            for kx in range(3):
                wp_in = w + kx                      # == wp_out + kx - 1, in [0, wp-1]
                m3[ky,
                   wp_in * cin:(wp_in + 1) * cin,
                   wp_out * cout:(wp_out + 1) * cout] = wgt[ky, kx]
    bt = np.zeros((1, wp * cout), np.float32)
    for wp_out in range(1, w_size + 1):
        bt[0, wp_out * cout:(wp_out + 1) * cout] = bias
    return m3, bt


def _pixelnorm_mat(w_size, c):
    """(y*y) @ S == per-pixel mean over channels, broadcast back to each
    channel lane of that pixel (block-diagonal ones / C)."""
    wp = w_size + 2
    s = np.zeros((wp * c, wp * c), np.float32)
    blk = np.full((c, c), 1.0 / c, np.float32)
    for g in range(wp):
        s[g * c:(g + 1) * c, g * c:(g + 1) * c] = blk
    return s


def _first_layer_mats(w_lin, b_lin, c, size):
    """Linear weights rearranged so that sum_l noise[l]*wr[l] + br directly
    gives the FirstLayer activation in the padded lane-interleaved layout
    (matching torch's .view(N, C, size, size) ordering)."""
    lat = w_lin.shape[0]
    hp, wpc = size + 2, (size + 2) * c
    wr = np.zeros((lat, hp, wpc), np.float32)
    br = np.zeros((hp, wpc), np.float32)
    for ch in range(c):
        for h in range(size):
            for w in range(size):
                src = ch * size * size + h * size + w
                wr[:, h + 1, (w + 1) * c + ch] = w_lin[:, src]
                br[h + 1, (w + 1) * c + ch] = b_lin[src]
    return wr, br


def pack_params(raw, chans, feature_maps, image_channels):
    w_lin = np.asarray(raw["linear_w"])
    b_lin = np.asarray(raw["linear_b"])

    inputs = []
    wr, br = _first_layer_mats(w_lin, b_lin, feature_maps, FIRST_SIZE)
    s0 = _pixelnorm_mat(FIRST_SIZE, feature_maps)
    inputs += [wr, br, s0]

    h = w = FIRST_SIZE
    for i, ((cin, cout), scale) in enumerate(zip(chans, BLOCK_SCALES)):
        wgt = np.asarray(raw["convs"][i][0])
        bia = np.asarray(raw["convs"][i][1])
        col, row3, h, w = _upsample_pad_mats(h, w, cin, scale)
        m3, bt = _conv_mix_mats(w, cin, cout, wgt, bia)
        inputs += [col, row3, m3, bt]
        if i < len(chans) - 1:                       # last block has Identity act
            inputs.append(_pixelnorm_mat(w, cout))

    return {
        "inputs": tuple(jnp.asarray(a) for a in inputs),
        "out_shape": (h + 2, (w + 2) * image_channels),   # (66, 198)
        "img_size": h,
        "img_channels": image_channels,
    }


# ---------------------------------------------------------------------------
# Fused kernel: one grid step == one image; everything stays in VMEM
# ---------------------------------------------------------------------------
def _pn_lrelu(y, s):
    ms = jnp.dot(y * y, s, preferred_element_type=jnp.float32)   # per-pixel chan mean
    y = y * lax.rsqrt(ms + PN_EPS)
    return jnp.where(y >= 0, y, LRELU_SLOPE * y)


def _generator_kernel(*refs):
    noise_ref = refs[0]                      # (N, latent), SMEM (scalar prefetch)
    wr_ref, br_ref, s0_ref = refs[1:4]
    out_ref = refs[-1]                       # (66, 198) block of the output
    blk_refs = refs[4:-1]

    n = pl.program_id(0)

    # FirstLayer: linear as latent broadcast-MACs, then PixelNorm + LeakyReLU.
    y = br_ref[...]
    for l in range(wr_ref.shape[0]):
        y = y + noise_ref[n, l] * wr_ref[l]
    y = _pn_lrelu(y, s0_ref[...])

    # 5 gen blocks: (upsample + zero-pad + 3x3 conv) == 7 lane-dense matmuls.
    k = 0
    num_blocks = 5
    for blk in range(num_blocks):
        col_ref, row3_ref, m3_ref, bt_ref = blk_refs[k:k + 4]
        k += 4
        t = jnp.dot(y, col_ref[...], preferred_element_type=jnp.float32)
        acc = None
        for ky in range(3):
            xk = jnp.dot(row3_ref[ky], t, preferred_element_type=jnp.float32)
            contrib = jnp.dot(xk, m3_ref[ky], preferred_element_type=jnp.float32)
            acc = contrib if acc is None else acc + contrib
        y = acc + bt_ref[...]
        if blk < num_blocks - 1:
            s_ref = blk_refs[k]
            k += 1
            y = _pn_lrelu(y, s_ref[...])

    out_ref[...] = jnp.clip(y, -1.0, 1.0)


def make_generator(packed, batch):
    inputs = packed["inputs"]
    out_hp, out_wc = packed["out_shape"]
    size = packed["img_size"]
    cimg = packed["img_channels"]

    def _const_spec(a):
        zeros = (0,) * a.ndim
        return pl.BlockSpec(a.shape, lambda n, *_, _z=zeros: _z)

    grid_spec = pltpu.PrefetchScalarGridSpec(
        num_scalar_prefetch=1,                       # noise -> SMEM scalars
        grid=(batch,),
        in_specs=[_const_spec(a) for a in inputs],
        out_specs=pl.BlockSpec((None, out_hp, out_wc), lambda n, *_: (n, 0, 0)),
    )
    fwd = pl.pallas_call(
        _generator_kernel,
        out_shape=jax.ShapeDtypeStruct((batch, out_hp, out_wc), jnp.float32),
        grid_spec=grid_spec,
        compiler_params=pltpu.CompilerParams(
            dimension_semantics=("parallel",),       # batch across cores (megacore)
            vmem_limit_bytes=32 * 1024 * 1024,
        ),
    )

    @jax.jit
    def generate(noise):
        padded = fwd(noise, *inputs)                               # (N, 66, 198)
        x = padded[:, 1:1 + size, cimg:cimg + size * cimg]         # drop pad border
        x = x.reshape(batch, size, size, cimg)                     # de-interleave (w, c)
        return x.transpose(0, 3, 1, 2)                             # NHWC -> NCHW
    return generate


# ---------------------------------------------------------------------------
# Straightforward XLA reference (same assumed PixelNorm), for cross-checking
# ---------------------------------------------------------------------------
def _pn_lrelu_ref(x):
    ms = jnp.mean(x * x, axis=-1, keepdims=True)
    x = x * lax.rsqrt(ms + PN_EPS)
    return jnp.where(x >= 0, x, LRELU_SLOPE * x)


def reference_forward(noise, raw, feature_maps):
    n = noise.shape[0]
    x = noise @ raw["linear_w"] + raw["linear_b"]                  # (N, 4*4*fm)
    x = x.reshape(n, feature_maps, FIRST_SIZE, FIRST_SIZE)         # torch .view (NCHW)
    x = jnp.transpose(x, (0, 2, 3, 1))                             # NHWC
    x = _pn_lrelu_ref(x)
    for i, ((w, b), scale) in enumerate(zip(raw["convs"], BLOCK_SCALES)):
        if scale == 2:
            x = jnp.repeat(jnp.repeat(x, 2, axis=1), 2, axis=2)
        x = lax.conv_general_dilated(
            x, w, window_strides=(1, 1), padding="SAME",
            dimension_numbers=("NHWC", "HWIO", "NHWC")) + b
        if i < len(raw["convs"]) - 1:
            x = _pn_lrelu_ref(x)
    x = jnp.clip(x, -1.0, 1.0)
    return jnp.transpose(x, (0, 3, 1, 2))                          # NCHW


if __name__ == "__main__":
    root = jax.random.PRNGKey(0)
    k_noise, k_params = jax.random.split(root)
    noise = jax.random.normal(k_noise, (BATCH, LATENT_DIM), jnp.float32)

    raw, chans = init_raw_params(k_params, LATENT_DIM, FEATURE_MAPS, IMAGE_CHANNELS)
    packed = pack_params(raw, chans, FEATURE_MAPS, IMAGE_CHANNELS)
    generate = make_generator(packed, BATCH)

    out = jax.block_until_ready(generate(noise))

    assert out.shape == (BATCH, IMAGE_CHANNELS, 64, 64), out.shape
    assert bool(jnp.all(out <= 1.0)) and bool(jnp.all(out >= -1.0))

    # Cross-check the fused kernel against the plain XLA reference.
    ref = jax.block_until_ready(reference_forward(noise, raw, FEATURE_MAPS))
    max_err = float(jnp.max(jnp.abs(out - ref)))
    assert max_err < 5e-2, f"kernel/reference mismatch: max |err| = {max_err}"

    print("KERNEL_OK")
</pallas_src>

<mosaic_0001>
module attributes {stable_mosaic.version = 11 : i64} {
  func.func @_generator_kernel(%arg0: i32, %arg1: memref<2x32xf32, #tpu.memory_space<smem>>, %arg2: memref<32x6x96xf32, #tpu.memory_space<vmem>>, %arg3: memref<6x96xf32, #tpu.memory_space<vmem>>, %arg4: memref<96x96xf32, #tpu.memory_space<vmem>>, %arg5: memref<96x160xf32, #tpu.memory_space<vmem>>, %arg6: memref<3x10x6xf32, #tpu.memory_space<vmem>>, %arg7: memref<3x160x160xf32, #tpu.memory_space<vmem>>, %arg8: memref<1x160xf32, #tpu.memory_space<vmem>>, %arg9: memref<160x160xf32, #tpu.memory_space<vmem>>, %arg10: memref<160x288xf32, #tpu.memory_space<vmem>>, %arg11: memref<3x18x10xf32, #tpu.memory_space<vmem>>, %arg12: memref<3x288x144xf32, #tpu.memory_space<vmem>>, %arg13: memref<1x144xf32, #tpu.memory_space<vmem>>, %arg14: memref<144x144xf32, #tpu.memory_space<vmem>>, %arg15: memref<144x272xf32, #tpu.memory_space<vmem>>, %arg16: memref<3x34x18xf32, #tpu.memory_space<vmem>>, %arg17: memref<3x272x136xf32, #tpu.memory_space<vmem>>, %arg18: memref<1x136xf32, #tpu.memory_space<vmem>>, %arg19: memref<136x136xf32, #tpu.memory_space<vmem>>, %arg20: memref<136x136xf32, #tpu.memory_space<vmem>>, %arg21: memref<3x34x34xf32, #tpu.memory_space<vmem>>, %arg22: memref<3x136x68xf32, #tpu.memory_space<vmem>>, %arg23: memref<1x68xf32, #tpu.memory_space<vmem>>, %arg24: memref<68x68xf32, #tpu.memory_space<vmem>>, %arg25: memref<68x132xf32, #tpu.memory_space<vmem>>, %arg26: memref<3x66x34xf32, #tpu.memory_space<vmem>>, %arg27: memref<3x132x198xf32, #tpu.memory_space<vmem>>, %arg28: memref<1x198xf32, #tpu.memory_space<vmem>>, %arg29: memref<1x66x198xf32, #tpu.memory_space<vmem>>) attributes {dimension_semantics = [#tpu.dimension_semantics<parallel>], iteration_bounds = array<i64: 2>, scalar_prefetch = 1 : i64, scratch_operands = 0 : i64, tpu.core_type = #tpu.core_type<tc>, window_params = [{pipeline_mode = #tpu.pipeline_mode<synchronous>, transform_indices = @transform_0, window_bounds = array<i64: 32, 6, 96>}, {pipeline_mode = #tpu.pipeline_mode<synchronous>, transform_indices = @transform_1, window_bounds = array<i64: 6, 96>}, {pipeline_mode = #tpu.pipeline_mode<synchronous>, transform_indices = @transform_2, window_bounds = array<i64: 96, 96>}, {pipeline_mode = #tpu.pipeline_mode<synchronous>, transform_indices = @transform_3, window_bounds = array<i64: 96, 160>}, {pipeline_mode = #tpu.pipeline_mode<synchronous>, transform_indices = @transform_4, window_bounds = array<i64: 3, 10, 6>}, {pipeline_mode = #tpu.pipeline_mode<synchronous>, transform_indices = @transform_5, window_bounds = array<i64: 3, 160, 160>}, {pipeline_mode = #tpu.pipeline_mode<synchronous>, transform_indices = @transform_6, window_bounds = array<i64: 1, 160>}, {pipeline_mode = #tpu.pipeline_mode<synchronous>, transform_indices = @transform_7, window_bounds = array<i64: 160, 160>}, {pipeline_mode = #tpu.pipeline_mode<synchronous>, transform_indices = @transform_8, window_bounds = array<i64: 160, 288>}, {pipeline_mode = #tpu.pipeline_mode<synchronous>, transform_indices = @transform_9, window_bounds = array<i64: 3, 18, 10>}, {pipeline_mode = #tpu.pipeline_mode<synchronous>, transform_indices = @transform_10, window_bounds = array<i64: 3, 288, 144>}, {pipeline_mode = #tpu.pipeline_mode<synchronous>, transform_indices = @transform_11, window_bounds = array<i64: 1, 144>}, {pipeline_mode = #tpu.pipeline_mode<synchronous>, transform_indices = @transform_12, window_bounds = array<i64: 144, 144>}, {pipeline_mode = #tpu.pipeline_mode<synchronous>, transform_indices = @transform_13, window_bounds = array<i64: 144, 272>}, {pipeline_mode = #tpu.pipeline_mode<synchronous>, transform_indices = @transform_14, window_bounds = array<i64: 3, 34, 18>}, {pipeline_mode = #tpu.pipeline_mode<synchronous>, transform_indices = @transform_15, window_bounds = array<i64: 3, 272, 136>}, {pipeline_mode = #tpu.pipeline_mode<synchronous>, transform_indices = @transform_16, window_bounds = array<i64: 1, 136>}, {pipeline_mode = #tpu.pipeline_mode<synchronous>, transform_indices = @transform_17, window_bounds = array<i64: 136, 136>}, {pipeline_mode = #tpu.pipeline_mode<synchronous>, transform_indices = @transform_18, window_bounds = array<i64: 136, 136>}, {pipeline_mode = #tpu.pipeline_mode<synchronous>, transform_indices = @transform_19, window_bounds = array<i64: 3, 34, 34>}, {pipeline_mode = #tpu.pipeline_mode<synchronous>, transform_indices = @transform_20, window_bounds = array<i64: 3, 136, 68>}, {pipeline_mode = #tpu.pipeline_mode<synchronous>, transform_indices = @transform_21, window_bounds = array<i64: 1, 68>}, {pipeline_mode = #tpu.pipeline_mode<synchronous>, transform_indices = @transform_22, window_bounds = array<i64: 68, 68>}, {pipeline_mode = #tpu.pipeline_mode<synchronous>, transform_indices = @transform_23, window_bounds = array<i64: 68, 132>}, {pipeline_mode = #tpu.pipeline_mode<synchronous>, transform_indices = @transform_24, window_bounds = array<i64: 3, 66, 34>}, {pipeline_mode = #tpu.pipeline_mode<synchronous>, transform_indices = @transform_25, window_bounds = array<i64: 3, 132, 198>}, {pipeline_mode = #tpu.pipeline_mode<synchronous>, transform_indices = @transform_26, window_bounds = array<i64: 1, 198>}, {transform_indices = @transform_27, window_bounds = array<i64: 1, 66, 198>}]} {
    %c0 = arith.constant 0 : index
    %c0_0 = arith.constant 0 : index
    %0 = vector.load %arg3[%c0, %c0_0] : memref<6x96xf32, #tpu.memory_space<vmem>>, vector<6x96xf32>
    %1 = arith.index_cast %arg0 : i32 to index
    %c0_1 = arith.constant 0 : index
    %2 = memref.load %arg1[%1, %c0_1] : memref<2x32xf32, #tpu.memory_space<smem>>
    %c0_2 = arith.constant 0 : index
    %c0_3 = arith.constant 0 : index
    %c0_4 = arith.constant 0 : index
    %3 = vector.load %arg2[%c0_2, %c0_3, %c0_4] : memref<32x6x96xf32, #tpu.memory_space<vmem>>, vector<1x6x96xf32>
    %4 = vector.shape_cast %3 : vector<1x6x96xf32> to vector<6x96xf32>
    %5 = vector.broadcast %2 : f32 to vector<6x96xf32>
    %6 = arith.mulf %5, %4 : vector<6x96xf32>
    %7 = arith.addf %0, %6 : vector<6x96xf32>
    %8 = arith.index_cast %arg0 : i32 to index
    %c1 = arith.constant 1 : index
    %9 = memref.load %arg1[%8, %c1] : memref<2x32xf32, #tpu.memory_space<smem>>
    %c1_5 = arith.constant 1 : index
    %c0_6 = arith.constant 0 : index
    %c0_7 = arith.constant 0 : index
    %10 = vector.load %arg2[%c1_5, %c0_6, %c0_7] : memref<32x6x96xf32, #tpu.memory_space<vmem>>, vector<1x6x96xf32>
    %11 = vector.shape_cast %10 : vector<1x6x96xf32> to vector<6x96xf32>
    %12 = vector.broadcast %9 : f32 to vector<6x96xf32>
    %13 = arith.mulf %12, %11 : vector<6x96xf32>
    %14 = arith.addf %7, %13 : vector<6x96xf32>
    %15 = arith.index_cast %arg0 : i32 to index
    %c2 = arith.constant 2 : index
    %16 = memref.load %arg1[%15, %c2] : memref<2x32xf32, #tpu.memory_space<smem>>
    %c2_8 = arith.constant 2 : index
    %c0_9 = arith.constant 0 : index
    %c0_10 = arith.constant 0 : index
    %17 = vector.load %arg2[%c2_8, %c0_9, %c0_10] : memref<32x6x96xf32, #tpu.memory_space<vmem>>, vector<1x6x96xf32>
    %18 = vector.shape_cast %17 : vector<1x6x96xf32> to vector<6x96xf32>
    %19 = vector.broadcast %16 : f32 to vector<6x96xf32>
    %20 = arith.mulf %19, %18 : vector<6x96xf32>
    %21 = arith.addf %14, %20 : vector<6x96xf32>
    %22 = arith.index_cast %arg0 : i32 to index
    %c3 = arith.constant 3 : index
    %23 = memref.load %arg1[%22, %c3] : memref<2x32xf32, #tpu.memory_space<smem>>
    %c3_11 = arith.constant 3 : index
    %c0_12 = arith.constant 0 : index
    %c0_13 = arith.constant 0 : index
    %24 = vector.load %arg2[%c3_11, %c0_12, %c0_13] : memref<32x6x96xf32, #tpu.memory_space<vmem>>, vector<1x6x96xf32>
    %25 = vector.shape_cast %24 : vector<1x6x96xf32> to vector<6x96xf32>
    %26 = vector.broadcast %23 : f32 to vector<6x96xf32>
    %27 = arith.mulf %26, %25 : vector<6x96xf32>
    %28 = arith.addf %21, %27 : vector<6x96xf32>
    %29 = arith.index_cast %arg0 : i32 to index
    %c4 = arith.constant 4 : index
    %30 = memref.load %arg1[%29, %c4] : memref<2x32xf32, #tpu.memory_space<smem>>
    %c4_14 = arith.constant 4 : index
    %c0_15 = arith.constant 0 : index
    %c0_16 = arith.constant 0 : index
    %31 = vector.load %arg2[%c4_14, %c0_15, %c0_16] : memref<32x6x96xf32, #tpu.memory_space<vmem>>, vector<1x6x96xf32>
    %32 = vector.shape_cast %31 : vector<1x6x96xf32> to vector<6x96xf32>
    %33 = vector.broadcast %30 : f32 to vector<6x96xf32>
    %34 = arith.mulf %33, %32 : vector<6x96xf32>
    %35 = arith.addf %28, %34 : vector<6x96xf32>
    %36 = arith.index_cast %arg0 : i32 to index
    %c5 = arith.constant 5 : index
    %37 = memref.load %arg1[%36, %c5] : memref<2x32xf32, #tpu.memory_space<smem>>
    %c5_17 = arith.constant 5 : index
    %c0_18 = arith.constant 0 : index
    %c0_19 = arith.constant 0 : index
    %38 = vector.load %arg2[%c5_17, %c0_18, %c0_19] : memref<32x6x96xf32, #tpu.memory_space<vmem>>, vector<1x6x96xf32>
    %39 = vector.shape_cast %38 : vector<1x6x96xf32> to vector<6x96xf32>
    %40 = vector.broadcast %37 : f32 to vector<6x96xf32>
    %41 = arith.mulf %40, %39 : vector<6x96xf32>
    %42 = arith.addf %35, %41 : vector<6x96xf32>
    %43 = arith.index_cast %arg0 : i32 to index
    %c6 = arith.constant 6 : index
    %44 = memref.load %arg1[%43, %c6] : memref<2x32xf32, #tpu.memory_space<smem>>
    %c6_20 = arith.constant 6 : index
    %c0_21 = arith.constant 0 : index
    %c0_22 = arith.constant 0 : index
    %45 = vector.load %arg2[%c6_20, %c0_21, %c0_22] : memref<32x6x96xf32, #tpu.memory_space<vmem>>, vector<1x6x96xf32>
    %46 = vector.shape_cast %45 : vector<1x6x96xf32> to vector<6x96xf32>
    %47 = vector.broadcast %44 : f32 to vector<6x96xf32>
    %48 = arith.mulf %47, %46 : vector<6x96xf32>
    %49 = arith.addf %42, %48 : vector<6x96xf32>
    %50 = arith.index_cast %arg0 : i32 to index
    %c7 = arith.constant 7 : index
    %51 = memref.load %arg1[%50, %c7] : memref<2x32xf32, #tpu.memory_space<smem>>
    %c7_23 = arith.constant 7 : index
    %c0_24 = arith.constant 0 : index
    %c0_25 = arith.constant 0 : index
    %52 = vector.load %arg2[%c7_23, %c0_24, %c0_25] : memref<32x6x96xf32, #tpu.memory_space<vmem>>, vector<1x6x96xf32>
    %53 = vector.shape_cast %52 : vector<1x6x96xf32> to vector<6x96xf32>
    %54 = vector.broadcast %51 : f32 to vector<6x96xf32>
    %55 = arith.mulf %54, %53 : vector<6x96xf32>
    %56 = arith.addf %49, %55 : vector<6x96xf32>
    %57 = arith.index_cast %arg0 : i32 to index
    %c8 = arith.constant 8 : index
    %58 = memref.load %arg1[%57, %c8] : memref<2x32xf32, #tpu.memory_space<smem>>
    %c8_26 = arith.constant 8 : index
    %c0_27 = arith.constant 0 : index
    %c0_28 = arith.constant 0 : index
    %59 = vector.load %arg2[%c8_26, %c0_27, %c0_28] : memref<32x6x96xf32, #tpu.memory_space<vmem>>, vector<1x6x96xf32>
    %60 = vector.shape_cast %59 : vector<1x6x96xf32> to vector<6x96xf32>
    %61 = vector.broadcast %58 : f32 to vector<6x96xf32>
    %62 = arith.mulf %61, %60 : vector<6x96xf32>
    %63 = arith.addf %56, %62 : vector<6x96xf32>
    %64 = arith.index_cast %arg0 : i32 to index
    %c9 = arith.constant 9 : index
    %65 = memref.load %arg1[%64, %c9] : memref<2x32xf32, #tpu.memory_space<smem>>
    %c9_29 = arith.constant 9 : index
    %c0_30 = arith.constant 0 : index
    %c0_31 = arith.constant 0 : index
    %66 = vector.load %arg2[%c9_29, %c0_30, %c0_31] : memref<32x6x96xf32, #tpu.memory_space<vmem>>, vector<1x6x96xf32>
    %67 = vector.shape_cast %66 : vector<1x6x96xf32> to vector<6x96xf32>
    %68 = vector.broadcast %65 : f32 to vector<6x96xf32>
    %69 = arith.mulf %68, %67 : vector<6x96xf32>
    %70 = arith.addf %63, %69 : vector<6x96xf32>
    %71 = arith.index_cast %arg0 : i32 to index
    %c10 = arith.constant 10 : index
    %72 = memref.load %arg1[%71, %c10] : memref<2x32xf32, #tpu.memory_space<smem>>
    %c10_32 = arith.constant 10 : index
    %c0_33 = arith.constant 0 : index
    %c0_34 = arith.constant 0 : index
    %73 = vector.load %arg2[%c10_32, %c0_33, %c0_34] : memref<32x6x96xf32, #tpu.memory_space<vmem>>, vector<1x6x96xf32>
    %74 = vector.shape_cast %73 : vector<1x6x96xf32> to vector<6x96xf32>
    %75 = vector.broadcast %72 : f32 to vector<6x96xf32>
    %76 = arith.mulf %75, %74 : vector<6x96xf32>
    %77 = arith.addf %70, %76 : vector<6x96xf32>
    %78 = arith.index_cast %arg0 : i32 to index
    %c11 = arith.constant 11 : index
    %79 = memref.load %arg1[%78, %c11] : memref<2x32xf32, #tpu.memory_space<smem>>
    %c11_35 = arith.constant 11 : index
    %c0_36 = arith.constant 0 : index
    %c0_37 = arith.constant 0 : index
    %80 = vector.load %arg2[%c11_35, %c0_36, %c0_37] : memref<32x6x96xf32, #tpu.memory_space<vmem>>, vector<1x6x96xf32>
    %81 = vector.shape_cast %80 : vector<1x6x96xf32> to vector<6x96xf32>
    %82 = vector.broadcast %79 : f32 to vector<6x96xf32>
    %83 = arith.mulf %82, %81 : vector<6x96xf32>
    %84 = arith.addf %77, %83 : vector<6x96xf32>
    %85 = arith.index_cast %arg0 : i32 to index
    %c12 = arith.constant 12 : index
    %86 = memref.load %arg1[%85, %c12] : memref<2x32xf32, #tpu.memory_space<smem>>
    %c12_38 = arith.constant 12 : index
    %c0_39 = arith.constant 0 : index
    %c0_40 = arith.constant 0 : index
    %87 = vector.load %arg2[%c12_38, %c0_39, %c0_40] : memref<32x6x96xf32, #tpu.memory_space<vmem>>, vector<1x6x96xf32>
    %88 = vector.shape_cast %87 : vector<1x6x96xf32> to vector<6x96xf32>
    %89 = vector.broadcast %86 : f32 to vector<6x96xf32>
    %90 = arith.mulf %89, %88 : vector<6x96xf32>
    %91 = arith.addf %84, %90 : vector<6x96xf32>
    %92 = arith.index_cast %arg0 : i32 to index
    %c13 = arith.constant 13 : index
    %93 = memref.load %arg1[%92, %c13] : memref<2x32xf32, #tpu.memory_space<smem>>
    %c13_41 = arith.constant 13 : index
    %c0_42 = arith.constant 0 : index
    %c0_43 = arith.constant 0 : index
    %94 = vector.load %arg2[%c13_41, %c0_42, %c0_43] : memref<32x6x96xf32, #tpu.memory_space<vmem>>, vector<1x6x96xf32>
    %95 = vector.shape_cast %94 : vector<1x6x96xf32> to vector<6x96xf32>
    %96 = vector.broadcast %93 : f32 to vector<6x96xf32>
    %97 = arith.mulf %96, %95 : vector<6x96xf32>
    %98 = arith.addf %91, %97 : vector<6x96xf32>
    %99 = arith.index_cast %arg0 : i32 to index
    %c14 = arith.constant 14 : index
    %100 = memref.load %arg1[%99, %c14] : memref<2x32xf32, #tpu.memory_space<smem>>
    %c14_44 = arith.constant 14 : index
    %c0_45 = arith.constant 0 : index
    %c0_46 = arith.constant 0 : index
    %101 = vector.load %arg2[%c14_44, %c0_45, %c0_46] : memref<32x6x96xf32, #tpu.memory_space<vmem>>, vector<1x6x96xf32>
    %102 = vector.shape_cast %101 : vector<1x6x96xf32> to vector<6x96xf32>
    %103 = vector.broadcast %100 : f32 to vector<6x96xf32>
    %104 = arith.mulf %103, %102 : vector<6x96xf32>
    %105 = arith.addf %98, %104 : vector<6x96xf32>
    %106 = arith.index_cast %arg0 : i32 to index
    %c15 = arith.constant 15 : index
    %107 = memref.load %arg1[%106, %c15] : memref<2x32xf32, #tpu.memory_space<smem>>
    %c15_47 = arith.constant 15 : index
    %c0_48 = arith.constant 0 : index
    %c0_49 = arith.constant 0 : index
    %108 = vector.load %arg2[%c15_47, %c0_48, %c0_49] : memref<32x6x96xf32, #tpu.memory_space<vmem>>, vector<1x6x96xf32>
    %109 = vector.shape_cast %108 : vector<1x6x96xf32> to vector<6x96xf32>
    %110 = vector.broadcast %107 : f32 to vector<6x96xf32>
    %111 = arith.mulf %110, %109 : vector<6x96xf32>
    %112 = arith.addf %105, %111 : vector<6x96xf32>
    %113 = arith.index_cast %arg0 : i32 to index
    %c16 = arith.constant 16 : index
    %114 = memref.load %arg1[%113, %c16] : memref<2x32xf32, #tpu.memory_space<smem>>
    %c16_50 = arith.constant 16 : index
    %c0_51 = arith.constant 0 : index
    %c0_52 = arith.constant 0 : index
    %115 = vector.load %arg2[%c16_50, %c0_51, %c0_52] : memref<32x6x96xf32, #tpu.memory_space<vmem>>, vector<1x6x96xf32>
    %116 = vector.shape_cast %115 : vector<1x6x96xf32> to vector<6x96xf32>
    %117 = vector.broadcast %114 : f32 to vector<6x96xf32>
    %118 = arith.mulf %117, %116 : vector<6x96xf32>
    %119 = arith.addf %112, %118 : vector<6x96xf32>
    %120 = arith.index_cast %arg0 : i32 to index
    %c17 = arith.constant 17 : index
    %121 = memref.load %arg1[%120, %c17] : memref<2x32xf32, #tpu.memory_space<smem>>
    %c17_53 = arith.constant 17 : index
    %c0_54 = arith.constant 0 : index
    %c0_55 = arith.constant 0 : index
    %122 = vector.load %arg2[%c17_53, %c0_54, %c0_55] : memref<32x6x96xf32, #tpu.memory_space<vmem>>, vector<1x6x96xf32>
    %123 = vector.shape_cast %122 : vector<1x6x96xf32> to vector<6x96xf32>
    %124 = vector.broadcast %121 : f32 to vector<6x96xf32>
    %125 = arith.mulf %124, %123 : vector<6x96xf32>
    %126 = arith.addf %119, %125 : vector<6x96xf32>
    %127 = arith.index_cast %arg0 : i32 to index
    %c18 = arith.constant 18 : index
    %128 = memref.load %arg1[%127, %c18] : memref<2x32xf32, #tpu.memory_space<smem>>
    %c18_56 = arith.constant 18 : index
    %c0_57 = arith.constant 0 : index
    %c0_58 = arith.constant 0 : index
    %129 = vector.load %arg2[%c18_56, %c0_57, %c0_58] : memref<32x6x96xf32, #tpu.memory_space<vmem>>, vector<1x6x96xf32>
    %130 = vector.shape_cast %129 : vector<1x6x96xf32> to vector<6x96xf32>
    %131 = vector.broadcast %128 : f32 to vector<6x96xf32>
    %132 = arith.mulf %131, %130 : vector<6x96xf32>
    %133 = arith.addf %126, %132 : vector<6x96xf32>
    %134 = arith.index_cast %arg0 : i32 to index
    %c19 = arith.constant 19 : index
    %135 = memref.load %arg1[%134, %c19] : memref<2x32xf32, #tpu.memory_space<smem>>
    %c19_59 = arith.constant 19 : index
    %c0_60 = arith.constant 0 : index
    %c0_61 = arith.constant 0 : index
    %136 = vector.load %arg2[%c19_59, %c0_60, %c0_61] : memref<32x6x96xf32, #tpu.memory_space<vmem>>, vector<1x6x96xf32>
    %137 = vector.shape_cast %136 : vector<1x6x96xf32> to vector<6x96xf32>
    %138 = vector.broadcast %135 : f32 to vector<6x96xf32>
    %139 = arith.mulf %138, %137 : vector<6x96xf32>
    %140 = arith.addf %133, %139 : vector<6x96xf32>
    %141 = arith.index_cast %arg0 : i32 to index
    %c20 = arith.constant 20 : index
    %142 = memref.load %arg1[%141, %c20] : memref<2x32xf32, #tpu.memory_space<smem>>
    %c20_62 = arith.constant 20 : index
    %c0_63 = arith.constant 0 : index
    %c0_64 = arith.constant 0 : index
    %143 = vector.load %arg2[%c20_62, %c0_63, %c0_64] : memref<32x6x96xf32, #tpu.memory_space<vmem>>, vector<1x6x96xf32>
    %144 = vector.shape_cast %143 : vector<1x6x96xf32> to vector<6x96xf32>
    %145 = vector.broadcast %142 : f32 to vector<6x96xf32>
    %146 = arith.mulf %145, %144 : vector<6x96xf32>
    %147 = arith.addf %140, %146 : vector<6x96xf32>
    %148 = arith.index_cast %arg0 : i32 to index
    %c21 = arith.constant 21 : index
    %149 = memref.load %arg1[%148, %c21] : memref<2x32xf32, #tpu.memory_space<smem>>
    %c21_65 = arith.constant 21 : index
    %c0_66 = arith.constant 0 : index
    %c0_67 = arith.constant 0 : index
    %150 = vector.load %arg2[%c21_65, %c0_66, %c0_67] : memref<32x6x96xf32, #tpu.memory_space<vmem>>, vector<1x6x96xf32>
    %151 = vector.shape_cast %150 : vector<1x6x96xf32> to vector<6x96xf32>
    %152 = vector.broadcast %149 : f32 to vector<6x96xf32>
    %153 = arith.mulf %152, %151 : vector<6x96xf32>
    %154 = arith.addf %147, %153 : vector<6x96xf32>
    %155 = arith.index_cast %arg0 : i32 to index
    %c22 = arith.constant 22 : index
    %156 = memref.load %arg1[%155, %c22] : memref<2x32xf32, #tpu.memory_space<smem>>
    %c22_68 = arith.constant 22 : index
    %c0_69 = arith.constant 0 : index
    %c0_70 = arith.constant 0 : index
    %157 = vector.load %arg2[%c22_68, %c0_69, %c0_70] : memref<32x6x96xf32, #tpu.memory_space<vmem>>, vector<1x6x96xf32>
    %158 = vector.shape_cast %157 : vector<1x6x96xf32> to vector<6x96xf32>
    %159 = vector.broadcast %156 : f32 to vector<6x96xf32>
    %160 = arith.mulf %159, %158 : vector<6x96xf32>
    %161 = arith.addf %154, %160 : vector<6x96xf32>
    %162 = arith.index_cast %arg0 : i32 to index
    %c23 = arith.constant 23 : index
    %163 = memref.load %arg1[%162, %c23] : memref<2x32xf32, #tpu.memory_space<smem>>
    %c23_71 = arith.constant 23 : index
    %c0_72 = arith.constant 0 : index
    %c0_73 = arith.constant 0 : index
    %164 = vector.load %arg2[%c23_71, %c0_72, %c0_73] : memref<32x6x96xf32, #tpu.memory_space<vmem>>, vector<1x6x96xf32>
    %165 = vector.shape_cast %164 : vector<1x6x96xf32> to vector<6x96xf32>
    %166 = vector.broadcast %163 : f32 to vector<6x96xf32>
    %167 = arith.mulf %166, %165 : vector<6x96xf32>
    %168 = arith.addf %161, %167 : vector<6x96xf32>
    %169 = arith.index_cast %arg0 : i32 to index
    %c24 = arith.constant 24 : index
    %170 = memref.load %arg1[%169, %c24] : memref<2x32xf32, #tpu.memory_space<smem>>
    %c24_74 = arith.constant 24 : index
    %c0_75 = arith.constant 0 : index
    %c0_76 = arith.constant 0 : index
    %171 = vector.load %arg2[%c24_74, %c0_75, %c0_76] : memref<32x6x96xf32, #tpu.memory_space<vmem>>, vector<1x6x96xf32>
    %172 = vector.shape_cast %171 : vector<1x6x96xf32> to vector<6x96xf32>
    %173 = vector.broadcast %170 : f32 to vector<6x96xf32>
    %174 = arith.mulf %173, %172 : vector<6x96xf32>
    %175 = arith.addf %168, %174 : vector<6x96xf32>
    %176 = arith.index_cast %arg0 : i32 to index
    %c25 = arith.constant 25 : index
    %177 = memref.load %arg1[%176, %c25] : memref<2x32xf32, #tpu.memory_space<smem>>
    %c25_77 = arith.constant 25 : index
    %c0_78 = arith.constant 0 : index
    %c0_79 = arith.constant 0 : index
    %178 = vector.load %arg2[%c25_77, %c0_78, %c0_79] : memref<32x6x96xf32, #tpu.memory_space<vmem>>, vector<1x6x96xf32>
    %179 = vector.shape_cast %178 : vector<1x6x96xf32> to vector<6x96xf32>
    %180 = vector.broadcast %177 : f32 to vector<6x96xf32>
    %181 = arith.mulf %180, %179 : vector<6x96xf32>
    %182 = arith.addf %175, %181 : vector<6x96xf32>
    %183 = arith.index_cast %arg0 : i32 to index
    %c26 = arith.constant 26 : index
    %184 = memref.load %arg1[%183, %c26] : memref<2x32xf32, #tpu.memory_space<smem>>
    %c26_80 = arith.constant 26 : index
    %c0_81 = arith.constant 0 : index
    %c0_82 = arith.constant 0 : index
    %185 = vector.load %arg2[%c26_80, %c0_81, %c0_82] : memref<32x6x96xf32, #tpu.memory_space<vmem>>, vector<1x6x96xf32>
    %186 = vector.shape_cast %185 : vector<1x6x96xf32> to vector<6x96xf32>
    %187 = vector.broadcast %184 : f32 to vector<6x96xf32>
    %188 = arith.mulf %187, %186 : vector<6x96xf32>
    %189 = arith.addf %182, %188 : vector<6x96xf32>
    %190 = arith.index_cast %arg0 : i32 to index
    %c27 = arith.constant 27 : index
    %191 = memref.load %arg1[%190, %c27] : memref<2x32xf32, #tpu.memory_space<smem>>
    %c27_83 = arith.constant 27 : index
    %c0_84 = arith.constant 0 : index
    %c0_85 = arith.constant 0 : index
    %192 = vector.load %arg2[%c27_83, %c0_84, %c0_85] : memref<32x6x96xf32, #tpu.memory_space<vmem>>, vector<1x6x96xf32>
    %193 = vector.shape_cast %192 : vector<1x6x96xf32> to vector<6x96xf32>
    %194 = vector.broadcast %191 : f32 to vector<6x96xf32>
    %195 = arith.mulf %194, %193 : vector<6x96xf32>
    %196 = arith.addf %189, %195 : vector<6x96xf32>
    %197 = arith.index_cast %arg0 : i32 to index
    %c28 = arith.constant 28 : index
    %198 = memref.load %arg1[%197, %c28] : memref<2x32xf32, #tpu.memory_space<smem>>
    %c28_86 = arith.constant 28 : index
    %c0_87 = arith.constant 0 : index
    %c0_88 = arith.constant 0 : index
    %199 = vector.load %arg2[%c28_86, %c0_87, %c0_88] : memref<32x6x96xf32, #tpu.memory_space<vmem>>, vector<1x6x96xf32>
    %200 = vector.shape_cast %199 : vector<1x6x96xf32> to vector<6x96xf32>
    %201 = vector.broadcast %198 : f32 to vector<6x96xf32>
    %202 = arith.mulf %201, %200 : vector<6x96xf32>
    %203 = arith.addf %196, %202 : vector<6x96xf32>
    %204 = arith.index_cast %arg0 : i32 to index
    %c29 = arith.constant 29 : index
    %205 = memref.load %arg1[%204, %c29] : memref<2x32xf32, #tpu.memory_space<smem>>
    %c29_89 = arith.constant 29 : index
    %c0_90 = arith.constant 0 : index
    %c0_91 = arith.constant 0 : index
    %206 = vector.load %arg2[%c29_89, %c0_90, %c0_91] : memref<32x6x96xf32, #tpu.memory_space<vmem>>, vector<1x6x96xf32>
    %207 = vector.shape_cast %206 : vector<1x6x96xf32> to vector<6x96xf32>
    %208 = vector.broadcast %205 : f32 to vector<6x96xf32>
    %209 = arith.mulf %208, %207 : vector<6x96xf32>
    %210 = arith.addf %203, %209 : vector<6x96xf32>
    %211 = arith.index_cast %arg0 : i32 to index
    %c30 = arith.constant 30 : index
    %212 = memref.load %arg1[%211, %c30] : memref<2x32xf32, #tpu.memory_space<smem>>
    %c30_92 = arith.constant 30 : index
    %c0_93 = arith.constant 0 : index
    %c0_94 = arith.constant 0 : index
    %213 = vector.load %arg2[%c30_92, %c0_93, %c0_94] : memref<32x6x96xf32, #tpu.memory_space<vmem>>, vector<1x6x96xf32>
    %214 = vector.shape_cast %213 : vector<1x6x96xf32> to vector<6x96xf32>
    %215 = vector.broadcast %212 : f32 to vector<6x96xf32>
    %216 = arith.mulf %215, %214 : vector<6x96xf32>
    %217 = arith.addf %210, %216 : vector<6x96xf32>
    %218 = arith.index_cast %arg0 : i32 to index
    %c31 = arith.constant 31 : index
    %219 = memref.load %arg1[%218, %c31] : memref<2x32xf32, #tpu.memory_space<smem>>
    %c31_95 = arith.constant 31 : index
    %c0_96 = arith.constant 0 : index
    %c0_97 = arith.constant 0 : index
    %220 = vector.load %arg2[%c31_95, %c0_96, %c0_97] : memref<32x6x96xf32, #tpu.memory_space<vmem>>, vector<1x6x96xf32>
    %221 = vector.shape_cast %220 : vector<1x6x96xf32> to vector<6x96xf32>
    %222 = vector.broadcast %219 : f32 to vector<6x96xf32>
    %223 = arith.mulf %222, %221 : vector<6x96xf32>
    %224 = arith.addf %217, %223 : vector<6x96xf32>
    %c0_98 = arith.constant 0 : index
    %c0_99 = arith.constant 0 : index
    %225 = vector.load %arg4[%c0_98, %c0_99] : memref<96x96xf32, #tpu.memory_space<vmem>>, vector<96x96xf32>
    %226 = arith.mulf %224, %224 : vector<6x96xf32>
    %cst = arith.constant dense<0.000000e+00> : vector<6x96xf32>
    %227 = tpu.matmul %226, %225, %cst {dimension_numbers = #tpu.dot_dimension_numbers<[1], [0], [0], [1], [0, 0, 1, 1], [], []>} : vector<6x96xf32>, vector<96x96xf32>, vector<6x96xf32> -> vector<6x96xf32>
    %cst_100 = arith.constant 9.99999993E-9 : f32
    %228 = vector.broadcast %cst_100 : f32 to vector<6x96xf32>
    %229 = arith.addf %227, %228 : vector<6x96xf32>
    %230 = math.rsqrt %229 : vector<6x96xf32>
    %231 = arith.mulf %224, %230 : vector<6x96xf32>
    %cst_101 = arith.constant 0.000000e+00 : f32
    %232 = vector.broadcast %cst_101 : f32 to vector<6x96xf32>
    %233 = arith.cmpf oge, %231, %232 : vector<6x96xf32>
    %cst_102 = arith.constant 2.000000e-01 : f32
    %234 = vector.broadcast %cst_102 : f32 to vector<6x96xf32>
    %235 = arith.mulf %234, %231 : vector<6x96xf32>
    %236 = arith.select %233, %231, %235 : vector<6x96xi1>, vector<6x96xf32>
    %c0_103 = arith.constant 0 : index
    %c0_104 = arith.constant 0 : index
    %237 = vector.load %arg5[%c0_103, %c0_104] : memref<96x160xf32, #tpu.memory_space<vmem>>, vector<96x160xf32>
    %cst_105 = arith.constant dense<0.000000e+00> : vector<6x160xf32>
    %238 = tpu.matmul %236, %237, %cst_105 {dimension_numbers = #tpu.dot_dimension_numbers<[1], [0], [0], [1], [0, 0, 1, 1], [], []>} : vector<6x96xf32>, vector<96x160xf32>, vector<6x160xf32> -> vector<6x160xf32>
    %c0_106 = arith.constant 0 : index
    %c0_107 = arith.constant 0 : index
    %c0_108 = arith.constant 0 : index
    %239 = vector.load %arg6[%c0_106, %c0_107, %c0_108] : memref<3x10x6xf32, #tpu.memory_space<vmem>>, vector<1x10x6xf32>
    %240 = vector.shape_cast %239 : vector<1x10x6xf32> to vector<10x6xf32>
    %cst_109 = arith.constant dense<0.000000e+00> : vector<10x160xf32>
    %241 = tpu.matmul %240, %238, %cst_109 {dimension_numbers = #tpu.dot_dimension_numbers<[1], [0], [0], [1], [0, 0, 1, 1], [], []>} : vector<10x6xf32>, vector<6x160xf32>, vector<10x160xf32> -> vector<10x160xf32>
    %c0_110 = arith.constant 0 : index
    %c0_111 = arith.constant 0 : index
    %c0_112 = arith.constant 0 : index
    %242 = vector.load %arg7[%c0_110, %c0_111, %c0_112] : memref<3x160x160xf32, #tpu.memory_space<vmem>>, vector<1x160x160xf32>
    %243 = vector.shape_cast %242 : vector<1x160x160xf32> to vector<160x160xf32>
    %cst_113 = arith.constant dense<0.000000e+00> : vector<10x160xf32>
    %244 = tpu.matmul %241, %243, %cst_113 {dimension_numbers = #tpu.dot_dimension_numbers<[1], [0], [0], [1], [0, 0, 1, 1], [], []>} : vector<10x160xf32>, vector<160x160xf32>, vector<10x160xf32> -> vector<10x160xf32>
    %c1_114 = arith.constant 1 : index
    %c0_115 = arith.constant 0 : index
    %c0_116 = arith.constant 0 : index
    %245 = vector.load %arg6[%c1_114, %c0_115, %c0_116] : memref<3x10x6xf32, #tpu.memory_space<vmem>>, vector<1x10x6xf32>
    %246 = vector.shape_cast %245 : vector<1x10x6xf32> to vector<10x6xf32>
    %cst_117 = arith.constant dense<0.000000e+00> : vector<10x160xf32>
    %247 = tpu.matmul %246, %238, %cst_117 {dimension_numbers = #tpu.dot_dimension_numbers<[1], [0], [0], [1], [0, 0, 1, 1], [], []>} : vector<10x6xf32>, vector<6x160xf32>, vector<10x160xf32> -> vector<10x160xf32>
    %c1_118 = arith.constant 1 : index
    %c0_119 = arith.constant 0 : index
    %c0_120 = arith.constant 0 : index
    %248 = vector.load %arg7[%c1_118, %c0_119, %c0_120] : memref<3x160x160xf32, #tpu.memory_space<vmem>>, vector<1x160x160xf32>
    %249 = vector.shape_cast %248 : vector<1x160x160xf32> to vector<160x160xf32>
    %cst_121 = arith.constant dense<0.000000e+00> : vector<10x160xf32>
    %250 = tpu.matmul %247, %249, %cst_121 {dimension_numbers = #tpu.dot_dimension_numbers<[1], [0], [0], [1], [0, 0, 1, 1], [], []>} : vector<10x160xf32>, vector<160x160xf32>, vector<10x160xf32> -> vector<10x160xf32>
    %251 = arith.addf %244, %250 : vector<10x160xf32>
    %c2_122 = arith.constant 2 : index
    %c0_123 = arith.constant 0 : index
    %c0_124 = arith.constant 0 : index
    %252 = vector.load %arg6[%c2_122, %c0_123, %c0_124] : memref<3x10x6xf32, #tpu.memory_space<vmem>>, vector<1x10x6xf32>
    %253 = vector.shape_cast %252 : vector<1x10x6xf32> to vector<10x6xf32>
    %cst_125 = arith.constant dense<0.000000e+00> : vector<10x160xf32>
    %254 = tpu.matmul %253, %238, %cst_125 {dimension_numbers = #tpu.dot_dimension_numbers<[1], [0], [0], [1], [0, 0, 1, 1], [], []>} : vector<10x6xf32>, vector<6x160xf32>, vector<10x160xf32> -> vector<10x160xf32>
    %c2_126 = arith.constant 2 : index
    %c0_127 = arith.constant 0 : index
    %c0_128 = arith.constant 0 : index
    %255 = vector.load %arg7[%c2_126, %c0_127, %c0_128] : memref<3x160x160xf32, #tpu.memory_space<vmem>>, vector<1x160x160xf32>
    %256 = vector.shape_cast %255 : vector<1x160x160xf32> to vector<160x160xf32>
    %cst_129 = arith.constant dense<0.000000e+00> : vector<10x160xf32>
    %257 = tpu.matmul %254, %256, %cst_129 {dimension_numbers = #tpu.dot_dimension_numbers<[1], [0], [0], [1], [0, 0, 1, 1], [], []>} : vector<10x160xf32>, vector<160x160xf32>, vector<10x160xf32> -> vector<10x160xf32>
    %258 = arith.addf %251, %257 : vector<10x160xf32>
    %c0_130 = arith.constant 0 : index
    %c0_131 = arith.constant 0 : index
    %259 = vector.load %arg8[%c0_130, %c0_131] : memref<1x160xf32, #tpu.memory_space<vmem>>, vector<1x160xf32>
    %260 = vector.broadcast %259 : vector<1x160xf32> to vector<10x160xf32>
    %261 = arith.addf %258, %260 : vector<10x160xf32>
    %c0_132 = arith.constant 0 : index
    %c0_133 = arith.constant 0 : index
    %262 = vector.load %arg9[%c0_132, %c0_133] : memref<160x160xf32, #tpu.memory_space<vmem>>, vector<160x160xf32>
    %263 = arith.mulf %261, %261 : vector<10x160xf32>
    %cst_134 = arith.constant dense<0.000000e+00> : vector<10x160xf32>
    %264 = tpu.matmul %263, %262, %cst_134 {dimension_numbers = #tpu.dot_dimension_numbers<[1], [0], [0], [1], [0, 0, 1, 1], [], []>} : vector<10x160xf32>, vector<160x160xf32>, vector<10x160xf32> -> vector<10x160xf32>
    %cst_135 = arith.constant 9.99999993E-9 : f32
    %265 = vector.broadcast %cst_135 : f32 to vector<10x160xf32>
    %266 = arith.addf %264, %265 : vector<10x160xf32>
    %267 = math.rsqrt %266 : vector<10x160xf32>
    %268 = arith.mulf %261, %267 : vector<10x160xf32>
    %cst_136 = arith.constant 0.000000e+00 : f32
    %269 = vector.broadcast %cst_136 : f32 to vector<10x160xf32>
    %270 = arith.cmpf oge, %268, %269 : vector<10x160xf32>
    %cst_137 = arith.constant 2.000000e-01 : f32
    %271 = vector.broadcast %cst_137 : f32 to vector<10x160xf32>
    %272 = arith.mulf %271, %268 : vector<10x160xf32>
    %273 = arith.select %270, %268, %272 : vector<10x160xi1>, vector<10x160xf32>
    %c0_138 = arith.constant 0 : index
    %c0_139 = arith.constant 0 : index
    %274 = vector.load %arg10[%c0_138, %c0_139] : memref<160x288xf32, #tpu.memory_space<vmem>>, vector<160x288xf32>
    %cst_140 = arith.constant dense<0.000000e+00> : vector<10x288xf32>
    %275 = tpu.matmul %273, %274, %cst_140 {dimension_numbers = #tpu.dot_dimension_numbers<[1], [0], [0], [1], [0, 0, 1, 1], [], []>} : vector<10x160xf32>, vector<160x288xf32>, vector<10x288xf32> -> vector<10x288xf32>
    %c0_141 = arith.constant 0 : index
    %c0_142 = arith.constant 0 : index
    %c0_143 = arith.constant 0 : index
    %276 = vector.load %arg11[%c0_141, %c0_142, %c0_143] : memref<3x18x10xf32, #tpu.memory_space<vmem>>, vector<1x18x10xf32>
    %277 = vector.shape_cast %276 : vector<1x18x10xf32> to vector<18x10xf32>
    %cst_144 = arith.constant dense<0.000000e+00> : vector<18x288xf32>
    %278 = tpu.matmul %277, %275, %cst_144 {dimension_numbers = #tpu.dot_dimension_numbers<[1], [0], [0], [1], [0, 0, 1, 1], [], []>} : vector<18x10xf32>, vector<10x288xf32>, vector<18x288xf32> -> vector<18x288xf32>
    %c0_145 = arith.constant 0 : index
    %c0_146 = arith.constant 0 : index
    %c0_147 = arith.constant 0 : index
    %279 = vector.load %arg12[%c0_145, %c0_146, %c0_147] : memref<3x288x144xf32, #tpu.memory_space<vmem>>, vector<1x288x144xf32>
    %280 = vector.shape_cast %279 : vector<1x288x144xf32> to vector<288x144xf32>
    %cst_148 = arith.constant dense<0.000000e+00> : vector<18x144xf32>
    %281 = tpu.matmul %278, %280, %cst_148 {dimension_numbers = #tpu.dot_dimension_numbers<[1], [0], [0], [1], [0, 0, 1, 1], [], []>} : vector<18x288xf32>, vector<288x144xf32>, vector<18x144xf32> -> vector<18x144xf32>
    %c1_149 = arith.constant 1 : index
    %c0_150 = arith.constant 0 : index
    %c0_151 = arith.constant 0 : index
    %282 = vector.load %arg11[%c1_149, %c0_150, %c0_151] : memref<3x18x10xf32, #tpu.memory_space<vmem>>, vector<1x18x10xf32>
    %283 = vector.shape_cast %282 : vector<1x18x10xf32> to vector<18x10xf32>
    %cst_152 = arith.constant dense<0.000000e+00> : vector<18x288xf32>
    %284 = tpu.matmul %283, %275, %cst_152 {dimension_numbers = #tpu.dot_dimension_numbers<[1], [0], [0], [1], [0, 0, 1, 1], [], []>} : vector<18x10xf32>, vector<10x288xf32>, vector<18x288xf32> -> vector<18x288xf32>
    %c1_153 = arith.constant 1 : index
    %c0_154 = arith.constant 0 : index
    %c0_155 = arith.constant 0 : index
    %285 = vector.load %arg12[%c1_153, %c0_154, %c0_155] : memref<3x288x144xf32, #tpu.memory_space<vmem>>, vector<1x288x144xf32>
    %286 = vector.shape_cast %285 : vector<1x288x144xf32> to vector<288x144xf32>
    %cst_156 = arith.constant dense<0.000000e+00> : vector<18x144xf32>
    %287 = tpu.matmul %284, %286, %cst_156 {dimension_numbers = #tpu.dot_dimension_numbers<[1], [0], [0], [1], [0, 0, 1, 1], [], []>} : vector<18x288xf32>, vector<288x144xf32>, vector<18x144xf32> -> vector<18x144xf32>
    %288 = arith.addf %281, %287 : vector<18x144xf32>
    %c2_157 = arith.constant 2 : index
    %c0_158 = arith.constant 0 : index
    %c0_159 = arith.constant 0 : index
    %289 = vector.load %arg11[%c2_157, %c0_158, %c0_159] : memref<3x18x10xf32, #tpu.memory_space<vmem>>, vector<1x18x10xf32>
    %290 = vector.shape_cast %289 : vector<1x18x10xf32> to vector<18x10xf32>
    %cst_160 = arith.constant dense<0.000000e+00> : vector<18x288xf32>
    %291 = tpu.matmul %290, %275, %cst_160 {dimension_numbers = #tpu.dot_dimension_numbers<[1], [0], [0], [1], [0, 0, 1, 1], [], []>} : vector<18x10xf32>, vector<10x288xf32>, vector<18x288xf32> -> vector<18x288xf32>
    %c2_161 = arith.constant 2 : index
    %c0_162 = arith.constant 0 : index
    %c0_163 = arith.constant 0 : index
    %292 = vector.load %arg12[%c2_161, %c0_162, %c0_163] : memref<3x288x144xf32, #tpu.memory_space<vmem>>, vector<1x288x144xf32>
    %293 = vector.shape_cast %292 : vector<1x288x144xf32> to vector<288x144xf32>
    %cst_164 = arith.constant dense<0.000000e+00> : vector<18x144xf32>
    %294 = tpu.matmul %291, %293, %cst_164 {dimension_numbers = #tpu.dot_dimension_numbers<[1], [0], [0], [1], [0, 0, 1, 1], [], []>} : vector<18x288xf32>, vector<288x144xf32>, vector<18x144xf32> -> vector<18x144xf32>
    %295 = arith.addf %288, %294 : vector<18x144xf32>
    %c0_165 = arith.constant 0 : index
    %c0_166 = arith.constant 0 : index
    %296 = vector.load %arg13[%c0_165, %c0_166] : memref<1x144xf32, #tpu.memory_space<vmem>>, vector<1x144xf32>
    %297 = vector.broadcast %296 : vector<1x144xf32> to vector<18x144xf32>
    %298 = arith.addf %295, %297 : vector<18x144xf32>
    %c0_167 = arith.constant 0 : index
    %c0_168 = arith.constant 0 : index
    %299 = vector.load %arg14[%c0_167, %c0_168] : memref<144x144xf32, #tpu.memory_space<vmem>>, vector<144x144xf32>
    %300 = arith.mulf %298, %298 : vector<18x144xf32>
    %cst_169 = arith.constant dense<0.000000e+00> : vector<18x144xf32>
    %301 = tpu.matmul %300, %299, %cst_169 {dimension_numbers = #tpu.dot_dimension_numbers<[1], [0], [0], [1], [0, 0, 1, 1], [], []>} : vector<18x144xf32>, vector<144x144xf32>, vector<18x144xf32> -> vector<18x144xf32>
    %cst_170 = arith.constant 9.99999993E-9 : f32
    %302 = vector.broadcast %cst_170 : f32 to vector<18x144xf32>
    %303 = arith.addf %301, %302 : vector<18x144xf32>
    %304 = math.rsqrt %303 : vector<18x144xf32>
    %305 = arith.mulf %298, %304 : vector<18x144xf32>
    %cst_171 = arith.constant 0.000000e+00 : f32
    %306 = vector.broadcast %cst_171 : f32 to vector<18x144xf32>
    %307 = arith.cmpf oge, %305, %306 : vector<18x144xf32>
    %cst_172 = arith.constant 2.000000e-01 : f32
    %308 = vector.broadcast %cst_172 : f32 to vector<18x144xf32>
    %309 = arith.mulf %308, %305 : vector<18x144xf32>
    %310 = arith.select %307, %305, %309 : vector<18x144xi1>, vector<18x144xf32>
    %c0_173 = arith.constant 0 : index
    %c0_174 = arith.constant 0 : index
    %311 = vector.load %arg15[%c0_173, %c0_174] : memref<144x272xf32, #tpu.memory_space<vmem>>, vector<144x272xf32>
    %cst_175 = arith.constant dense<0.000000e+00> : vector<18x272xf32>
    %312 = tpu.matmul %310, %311, %cst_175 {dimension_numbers = #tpu.dot_dimension_numbers<[1], [0], [0], [1], [0, 0, 1, 1], [], []>} : vector<18x144xf32>, vector<144x272xf32>, vector<18x272xf32> -> vector<18x272xf32>
    %c0_176 = arith.constant 0 : index
    %c0_177 = arith.constant 0 : index
    %c0_178 = arith.constant 0 : index
    %313 = vector.load %arg16[%c0_176, %c0_177, %c0_178] : memref<3x34x18xf32, #tpu.memory_space<vmem>>, vector<1x34x18xf32>
    %314 = vector.shape_cast %313 : vector<1x34x18xf32> to vector<34x18xf32>
    %cst_179 = arith.constant dense<0.000000e+00> : vector<34x272xf32>
    %315 = tpu.matmul %314, %312, %cst_179 {dimension_numbers = #tpu.dot_dimension_numbers<[1], [0], [0], [1], [0, 0, 1, 1], [], []>} : vector<34x18xf32>, vector<18x272xf32>, vector<34x272xf32> -> vector<34x272xf32>
    %c0_180 = arith.constant 0 : index
    %c0_181 = arith.constant 0 : index
    %c0_182 = arith.constant 0 : index
    %316 = vector.load %arg17[%c0_180, %c0_181, %c0_182] : memref<3x272x136xf32, #tpu.memory_space<vmem>>, vector<1x272x136xf32>
    %317 = vector.shape_cast %316 : vector<1x272x136xf32> to vector<272x136xf32>
    %cst_183 = arith.constant dense<0.000000e+00> : vector<34x136xf32>
    %318 = tpu.matmul %315, %317, %cst_183 {dimension_numbers = #tpu.dot_dimension_numbers<[1], [0], [0], [1], [0, 0, 1, 1], [], []>} : vector<34x272xf32>, vector<272x136xf32>, vector<34x136xf32> -> vector<34x136xf32>
    %c1_184 = arith.constant 1 : index
    %c0_185 = arith.constant 0 : index
    %c0_186 = arith.constant 0 : index
    %319 = vector.load %arg16[%c1_184, %c0_185, %c0_186] : memref<3x34x18xf32, #tpu.memory_space<vmem>>, vector<1x34x18xf32>
    %320 = vector.shape_cast %319 : vector<1x34x18xf32> to vector<34x18xf32>
    %cst_187 = arith.constant dense<0.000000e+00> : vector<34x272xf32>
    %321 = tpu.matmul %320, %312, %cst_187 {dimension_numbers = #tpu.dot_dimension_numbers<[1], [0], [0], [1], [0, 0, 1, 1], [], []>} : vector<34x18xf32>, vector<18x272xf32>, vector<34x272xf32> -> vector<34x272xf32>
    %c1_188 = arith.constant 1 : index
    %c0_189 = arith.constant 0 : index
    %c0_190 = arith.constant 0 : index
    %322 = vector.load %arg17[%c1_188, %c0_189, %c0_190] : memref<3x272x136xf32, #tpu.memory_space<vmem>>, vector<1x272x136xf32>
    %323 = vector.shape_cast %322 : vector<1x272x136xf32> to vector<272x136xf32>
    %cst_191 = arith.constant dense<0.000000e+00> : vector<34x136xf32>
    %324 = tpu.matmul %321, %323, %cst_191 {dimension_numbers = #tpu.dot_dimension_numbers<[1], [0], [0], [1], [0, 0, 1, 1], [], []>} : vector<34x272xf32>, vector<272x136xf32>, vector<34x136xf32> -> vector<34x136xf32>
    %325 = arith.addf %318, %324 : vector<34x136xf32>
    %c2_192 = arith.constant 2 : index
    %c0_193 = arith.constant 0 : index
    %c0_194 = arith.constant 0 : index
    %326 = vector.load %arg16[%c2_192, %c0_193, %c0_194] : memref<3x34x18xf32, #tpu.memory_space<vmem>>, vector<1x34x18xf32>
    %327 = vector.shape_cast %326 : vector<1x34x18xf32> to vector<34x18xf32>
    %cst_195 = arith.constant dense<0.000000e+00> : vector<34x272xf32>
    %328 = tpu.matmul %327, %312, %cst_195 {dimension_numbers = #tpu.dot_dimension_numbers<[1], [0], [0], [1], [0, 0, 1, 1], [], []>} : vector<34x18xf32>, vector<18x272xf32>, vector<34x272xf32> -> vector<34x272xf32>
    %c2_196 = arith.constant 2 : index
    %c0_197 = arith.constant 0 : index
    %c0_198 = arith.constant 0 : index
    %329 = vector.load %arg17[%c2_196, %c0_197, %c0_198] : memref<3x272x136xf32, #tpu.memory_space<vmem>>, vector<1x272x136xf32>
    %330 = vector.shape_cast %329 : vector<1x272x136xf32> to vector<272x136xf32>
    %cst_199 = arith.constant dense<0.000000e+00> : vector<34x136xf32>
    %331 = tpu.matmul %328, %330, %cst_199 {dimension_numbers = #tpu.dot_dimension_numbers<[1], [0], [0], [1], [0, 0, 1, 1], [], []>} : vector<34x272xf32>, vector<272x136xf32>, vector<34x136xf32> -> vector<34x136xf32>
    %332 = arith.addf %325, %331 : vector<34x136xf32>
    %c0_200 = arith.constant 0 : index
    %c0_201 = arith.constant 0 : index
    %333 = vector.load %arg18[%c0_200, %c0_201] : memref<1x136xf32, #tpu.memory_space<vmem>>, vector<1x136xf32>
    %334 = vector.broadcast %333 : vector<1x136xf32> to vector<34x136xf32>
    %335 = arith.addf %332, %334 : vector<34x136xf32>
    %c0_202 = arith.constant 0 : index
    %c0_203 = arith.constant 0 : index
    %336 = vector.load %arg19[%c0_202, %c0_203] : memref<136x136xf32, #tpu.memory_space<vmem>>, vector<136x136xf32>
    %337 = arith.mulf %335, %335 : vector<34x136xf32>
    %cst_204 = arith.constant dense<0.000000e+00> : vector<34x136xf32>
    %338 = tpu.matmul %337, %336, %cst_204 {dimension_numbers = #tpu.dot_dimension_numbers<[1], [0], [0], [1], [0, 0, 1, 1], [], []>} : vector<34x136xf32>, vector<136x136xf32>, vector<34x136xf32> -> vector<34x136xf32>
    %cst_205 = arith.constant 9.99999993E-9 : f32
    %339 = vector.broadcast %cst_205 : f32 to vector<34x136xf32>
    %340 = arith.addf %338, %339 : vector<34x136xf32>
    %341 = math.rsqrt %340 : vector<34x136xf32>
    %342 = arith.mulf %335, %341 : vector<34x136xf32>
    %cst_206 = arith.constant 0.000000e+00 : f32
    %343 = vector.broadcast %cst_206 : f32 to vector<34x136xf32>
    %344 = arith.cmpf oge, %342, %343 : vector<34x136xf32>
    %cst_207 = arith.constant 2.000000e-01 : f32
    %345 = vector.broadcast %cst_207 : f32 to vector<34x136xf32>
    %346 = arith.mulf %345, %342 : vector<34x136xf32>
    %347 = arith.select %344, %342, %346 : vector<34x136xi1>, vector<34x136xf32>
    %c0_208 = arith.constant 0 : index
    %c0_209 = arith.constant 0 : index
    %348 = vector.load %arg20[%c0_208, %c0_209] : memref<136x136xf32, #tpu.memory_space<vmem>>, vector<136x136xf32>
    %cst_210 = arith.constant dense<0.000000e+00> : vector<34x136xf32>
    %349 = tpu.matmul %347, %348, %cst_210 {dimension_numbers = #tpu.dot_dimension_numbers<[1], [0], [0], [1], [0, 0, 1, 1], [], []>} : vector<34x136xf32>, vector<136x136xf32>, vector<34x136xf32> -> vector<34x136xf32>
    %c0_211 = arith.constant 0 : index
    %c0_212 = arith.constant 0 : index
    %c0_213 = arith.constant 0 : index
    %350 = vector.load %arg21[%c0_211, %c0_212, %c0_213] : memref<3x34x34xf32, #tpu.memory_space<vmem>>, vector<1x34x34xf32>
    %351 = vector.shape_cast %350 : vector<1x34x34xf32> to vector<34x34xf32>
    %cst_214 = arith.constant dense<0.000000e+00> : vector<34x136xf32>
    %352 = tpu.matmul %351, %349, %cst_214 {dimension_numbers = #tpu.dot_dimension_numbers<[1], [0], [0], [1], [0, 0, 1, 1], [], []>} : vector<34x34xf32>, vector<34x136xf32>, vector<34x136xf32> -> vector<34x136xf32>
    %c0_215 = arith.constant 0 : index
    %c0_216 = arith.constant 0 : index
    %c0_217 = arith.constant 0 : index
    %353 = vector.load %arg22[%c0_215, %c0_216, %c0_217] : memref<3x136x68xf32, #tpu.memory_space<vmem>>, vector<1x136x68xf32>
    %354 = vector.shape_cast %353 : vector<1x136x68xf32> to vector<136x68xf32>
    %cst_218 = arith.constant dense<0.000000e+00> : vector<34x68xf32>
    %355 = tpu.matmul %352, %354, %cst_218 {dimension_numbers = #tpu.dot_dimension_numbers<[1], [0], [0], [1], [0, 0, 1, 1], [], []>} : vector<34x136xf32>, vector<136x68xf32>, vector<34x68xf32> -> vector<34x68xf32>
    %c1_219 = arith.constant 1 : index
    %c0_220 = arith.constant 0 : index
    %c0_221 = arith.constant 0 : index
    %356 = vector.load %arg21[%c1_219, %c0_220, %c0_221] : memref<3x34x34xf32, #tpu.memory_space<vmem>>, vector<1x34x34xf32>
    %357 = vector.shape_cast %356 : vector<1x34x34xf32> to vector<34x34xf32>
    %cst_222 = arith.constant dense<0.000000e+00> : vector<34x136xf32>
    %358 = tpu.matmul %357, %349, %cst_222 {dimension_numbers = #tpu.dot_dimension_numbers<[1], [0], [0], [1], [0, 0, 1, 1], [], []>} : vector<34x34xf32>, vector<34x136xf32>, vector<34x136xf32> -> vector<34x136xf32>
    %c1_223 = arith.constant 1 : index
    %c0_224 = arith.constant 0 : index
    %c0_225 = arith.constant 0 : index
    %359 = vector.load %arg22[%c1_223, %c0_224, %c0_225] : memref<3x136x68xf32, #tpu.memory_space<vmem>>, vector<1x136x68xf32>
    %360 = vector.shape_cast %359 : vector<1x136x68xf32> to vector<136x68xf32>
    %cst_226 = arith.constant dense<0.000000e+00> : vector<34x68xf32>
    %361 = tpu.matmul %358, %360, %cst_226 {dimension_numbers = #tpu.dot_dimension_numbers<[1], [0], [0], [1], [0, 0, 1, 1], [], []>} : vector<34x136xf32>, vector<136x68xf32>, vector<34x68xf32> -> vector<34x68xf32>
    %362 = arith.addf %355, %361 : vector<34x68xf32>
    %c2_227 = arith.constant 2 : index
    %c0_228 = arith.constant 0 : index
    %c0_229 = arith.constant 0 : index
    %363 = vector.load %arg21[%c2_227, %c0_228, %c0_229] : memref<3x34x34xf32, #tpu.memory_space<vmem>>, vector<1x34x34xf32>
    %364 = vector.shape_cast %363 : vector<1x34x34xf32> to vector<34x34xf32>
    %cst_230 = arith.constant dense<0.000000e+00> : vector<34x136xf32>
    %365 = tpu.matmul %364, %349, %cst_230 {dimension_numbers = #tpu.dot_dimension_numbers<[1], [0], [0], [1], [0, 0, 1, 1], [], []>} : vector<34x34xf32>, vector<34x136xf32>, vector<34x136xf32> -> vector<34x136xf32>
    %c2_231 = arith.constant 2 : index
    %c0_232 = arith.constant 0 : index
    %c0_233 = arith.constant 0 : index
    %366 = vector.load %arg22[%c2_231, %c0_232, %c0_233] : memref<3x136x68xf32, #tpu.memory_space<vmem>>, vector<1x136x68xf32>
    %367 = vector.shape_cast %366 : vector<1x136x68xf32> to vector<136x68xf32>
    %cst_234 = arith.constant dense<0.000000e+00> : vector<34x68xf32>
    %368 = tpu.matmul %365, %367, %cst_234 {dimension_numbers = #tpu.dot_dimension_numbers<[1], [0], [0], [1], [0, 0, 1, 1], [], []>} : vector<34x136xf32>, vector<136x68xf32>, vector<34x68xf32> -> vector<34x68xf32>
    %369 = arith.addf %362, %368 : vector<34x68xf32>
    %c0_235 = arith.constant 0 : index
    %c0_236 = arith.constant 0 : index
    %370 = vector.load %arg23[%c0_235, %c0_236] : memref<1x68xf32, #tpu.memory_space<vmem>>, vector<1x68xf32>
    %371 = vector.broadcast %370 : vector<1x68xf32> to vector<34x68xf32>
    %372 = arith.addf %369, %371 : vector<34x68xf32>
    %c0_237 = arith.constant 0 : index
    %c0_238 = arith.constant 0 : index
    %373 = vector.load %arg24[%c0_237, %c0_238] : memref<68x68xf32, #tpu.memory_space<vmem>>, vector<68x68xf32>
    %374 = arith.mulf %372, %372 : vector<34x68xf32>
    %cst_239 = arith.constant dense<0.000000e+00> : vector<34x68xf32>
    %375 = tpu.matmul %374, %373, %cst_239 {dimension_numbers = #tpu.dot_dimension_numbers<[1], [0], [0], [1], [0, 0, 1, 1], [], []>} : vector<34x68xf32>, vector<68x68xf32>, vector<34x68xf32> -> vector<34x68xf32>
    %cst_240 = arith.constant 9.99999993E-9 : f32
    %376 = vector.broadcast %cst_240 : f32 to vector<34x68xf32>
    %377 = arith.addf %375, %376 : vector<34x68xf32>
    %378 = math.rsqrt %377 : vector<34x68xf32>
    %379 = arith.mulf %372, %378 : vector<34x68xf32>
    %cst_241 = arith.constant 0.000000e+00 : f32
    %380 = vector.broadcast %cst_241 : f32 to vector<34x68xf32>
    %381 = arith.cmpf oge, %379, %380 : vector<34x68xf32>
    %cst_242 = arith.constant 2.000000e-01 : f32
    %382 = vector.broadcast %cst_242 : f32 to vector<34x68xf32>
    %383 = arith.mulf %382, %379 : vector<34x68xf32>
    %384 = arith.select %381, %379, %383 : vector<34x68xi1>, vector<34x68xf32>
    %c0_243 = arith.constant 0 : index
    %c0_244 = arith.constant 0 : index
    %385 = vector.load %arg25[%c0_243, %c0_244] : memref<68x132xf32, #tpu.memory_space<vmem>>, vector<68x132xf32>
    %cst_245 = arith.constant dense<0.000000e+00> : vector<34x132xf32>
    %386 = tpu.matmul %384, %385, %cst_245 {dimension_numbers = #tpu.dot_dimension_numbers<[1], [0], [0], [1], [0, 0, 1, 1], [], []>} : vector<34x68xf32>, vector<68x132xf32>, vector<34x132xf32> -> vector<34x132xf32>
    %c0_246 = arith.constant 0 : index
    %c0_247 = arith.constant 0 : index
    %c0_248 = arith.constant 0 : index
    %387 = vector.load %arg26[%c0_246, %c0_247, %c0_248] : memref<3x66x34xf32, #tpu.memory_space<vmem>>, vector<1x66x34xf32>
    %388 = vector.shape_cast %387 : vector<1x66x34xf32> to vector<66x34xf32>
    %cst_249 = arith.constant dense<0.000000e+00> : vector<66x132xf32>
    %389 = tpu.matmul %388, %386, %cst_249 {dimension_numbers = #tpu.dot_dimension_numbers<[1], [0], [0], [1], [0, 0, 1, 1], [], []>} : vector<66x34xf32>, vector<34x132xf32>, vector<66x132xf32> -> vector<66x132xf32>
    %c0_250 = arith.constant 0 : index
    %c0_251 = arith.constant 0 : index
    %c0_252 = arith.constant 0 : index
    %390 = vector.load %arg27[%c0_250, %c0_251, %c0_252] : memref<3x132x198xf32, #tpu.memory_space<vmem>>, vector<1x132x198xf32>
    %391 = vector.shape_cast %390 : vector<1x132x198xf32> to vector<132x198xf32>
    %cst_253 = arith.constant dense<0.000000e+00> : vector<66x198xf32>
    %392 = tpu.matmul %389, %391, %cst_253 {dimension_numbers = #tpu.dot_dimension_numbers<[1], [0], [0], [1], [0, 0, 1, 1], [], []>} : vector<66x132xf32>, vector<132x198xf32>, vector<66x198xf32> -> vector<66x198xf32>
    %c1_254 = arith.constant 1 : index
    %c0_255 = arith.constant 0 : index
    %c0_256 = arith.constant 0 : index
    %393 = vector.load %arg26[%c1_254, %c0_255, %c0_256] : memref<3x66x34xf32, #tpu.memory_space<vmem>>, vector<1x66x34xf32>
    %394 = vector.shape_cast %393 : vector<1x66x34xf32> to vector<66x34xf32>
    %cst_257 = arith.constant dense<0.000000e+00> : vector<66x132xf32>
    %395 = tpu.matmul %394, %386, %cst_257 {dimension_numbers = #tpu.dot_dimension_numbers<[1], [0], [0], [1], [0, 0, 1, 1], [], []>} : vector<66x34xf32>, vector<34x132xf32>, vector<66x132xf32> -> vector<66x132xf32>
    %c1_258 = arith.constant 1 : index
    %c0_259 = arith.constant 0 : index
    %c0_260 = arith.constant 0 : index
    %396 = vector.load %arg27[%c1_258, %c0_259, %c0_260] : memref<3x132x198xf32, #tpu.memory_space<vmem>>, vector<1x132x198xf32>
    %397 = vector.shape_cast %396 : vector<1x132x198xf32> to vector<132x198xf32>
    %cst_261 = arith.constant dense<0.000000e+00> : vector<66x198xf32>
    %398 = tpu.matmul %395, %397, %cst_261 {dimension_numbers = #tpu.dot_dimension_numbers<[1], [0], [0], [1], [0, 0, 1, 1], [], []>} : vector<66x132xf32>, vector<132x198xf32>, vector<66x198xf32> -> vector<66x198xf32>
    %399 = arith.addf %392, %398 : vector<66x198xf32>
    %c2_262 = arith.constant 2 : index
    %c0_263 = arith.constant 0 : index
    %c0_264 = arith.constant 0 : index
    %400 = vector.load %arg26[%c2_262, %c0_263, %c0_264] : memref<3x66x34xf32, #tpu.memory_space<vmem>>, vector<1x66x34xf32>
    %401 = vector.shape_cast %400 : vector<1x66x34xf32> to vector<66x34xf32>
    %cst_265 = arith.constant dense<0.000000e+00> : vector<66x132xf32>
    %402 = tpu.matmul %401, %386, %cst_265 {dimension_numbers = #tpu.dot_dimension_numbers<[1], [0], [0], [1], [0, 0, 1, 1], [], []>} : vector<66x34xf32>, vector<34x132xf32>, vector<66x132xf32> -> vector<66x132xf32>
    %c2_266 = arith.constant 2 : index
    %c0_267 = arith.constant 0 : index
    %c0_268 = arith.constant 0 : index
    %403 = vector.load %arg27[%c2_266, %c0_267, %c0_268] : memref<3x132x198xf32, #tpu.memory_space<vmem>>, vector<1x132x198xf32>
    %404 = vector.shape_cast %403 : vector<1x132x198xf32> to vector<132x198xf32>
    %cst_269 = arith.constant dense<0.000000e+00> : vector<66x198xf32>
    %405 = tpu.matmul %402, %404, %cst_269 {dimension_numbers = #tpu.dot_dimension_numbers<[1], [0], [0], [1], [0, 0, 1, 1], [], []>} : vector<66x132xf32>, vector<132x198xf32>, vector<66x198xf32> -> vector<66x198xf32>
    %406 = arith.addf %399, %405 : vector<66x198xf32>
    %c0_270 = arith.constant 0 : index
    %c0_271 = arith.constant 0 : index
    %407 = vector.load %arg28[%c0_270, %c0_271] : memref<1x198xf32, #tpu.memory_space<vmem>>, vector<1x198xf32>
    %408 = vector.broadcast %407 : vector<1x198xf32> to vector<66x198xf32>
    %409 = arith.addf %406, %408 : vector<66x198xf32>
    %cst_272 = arith.constant -1.000000e+00 : f32
    %cst_273 = arith.constant 1.000000e+00 : f32
    %410 = vector.broadcast %cst_272 : f32 to vector<66x198xf32>
    %411 = arith.maximumf %410, %409 : vector<66x198xf32>
    %412 = vector.broadcast %cst_273 : f32 to vector<66x198xf32>
    %413 = arith.minimumf %412, %411 : vector<66x198xf32>
    %c0_274 = arith.constant 0 : index
    %c0_275 = arith.constant 0 : index
    %c0_276 = arith.constant 0 : index
    %414 = vector.load %arg29[%c0_274, %c0_275, %c0_276] : memref<1x66x198xf32, #tpu.memory_space<vmem>>, vector<1x66x198xf32>
    %415 = vector.shape_cast %414 : vector<1x66x198xf32> to vector<66x198xf32>
    %416 = vector.shape_cast %413 : vector<66x198xf32> to vector<1x66x198xf32>
    tpu.vector_store %arg29[%c0_274, %c0_275, %c0_276], %416 {strides = array<i32>} : memref<1x66x198xf32, #tpu.memory_space<vmem>>, vector<1x66x198xf32>,
    return
  }
  func.func @transform_0(%arg0: i32, %arg1: memref<2x32xf32, #tpu.memory_space<smem>>) -> (i32, i32, i32) {
    %c0_i32 = arith.constant 0 : i32
    %c0_i32_0 = arith.constant 0 : i32
    %c0_i32_1 = arith.constant 0 : i32
    %c0_i32_2 = arith.constant 0 : i32
    return %c0_i32, %c0_i32_0, %c0_i32_1 : i32, i32, i32
  }
  func.func @transform_1(%arg0: i32, %arg1: memref<2x32xf32, #tpu.memory_space<smem>>) -> (i32, i32) {
    %c0_i32 = arith.constant 0 : i32
    %c0_i32_0 = arith.constant 0 : i32
    %c0_i32_1 = arith.constant 0 : i32
    return %c0_i32, %c0_i32_0 : i32, i32
  }
  func.func @transform_2(%arg0: i32, %arg1: memref<2x32xf32, #tpu.memory_space<smem>>) -> (i32, i32) {
    %c0_i32 = arith.constant 0 : i32
    %c0_i32_0 = arith.constant 0 : i32
    %c0_i32_1 = arith.constant 0 : i32
    return %c0_i32, %c0_i32_0 : i32, i32
  }
  func.func @transform_3(%arg0: i32, %arg1: memref<2x32xf32, #tpu.memory_space<smem>>) -> (i32, i32) {
    %c0_i32 = arith.constant 0 : i32
    %c0_i32_0 = arith.constant 0 : i32
    %c0_i32_1 = arith.constant 0 : i32
    return %c0_i32, %c0_i32_0 : i32, i32
  }
  func.func @transform_4(%arg0: i32, %arg1: memref<2x32xf32, #tpu.memory_space<smem>>) -> (i32, i32, i32) {
    %c0_i32 = arith.constant 0 : i32
    %c0_i32_0 = arith.constant 0 : i32
    %c0_i32_1 = arith.constant 0 : i32
    %c0_i32_2 = arith.constant 0 : i32
    return %c0_i32, %c0_i32_0, %c0_i32_1 : i32, i32, i32
  }
  func.func @transform_5(%arg0: i32, %arg1: memref<2x32xf32, #tpu.memory_space<smem>>) -> (i32, i32, i32) {
    %c0_i32 = arith.constant 0 : i32
    %c0_i32_0 = arith.constant 0 : i32
    %c0_i32_1 = arith.constant 0 : i32
    %c0_i32_2 = arith.constant 0 : i32
    return %c0_i32, %c0_i32_0, %c0_i32_1 : i32, i32, i32
  }
  func.func @transform_6(%arg0: i32, %arg1: memref<2x32xf32, #tpu.memory_space<smem>>) -> (i32, i32) {
    %c0_i32 = arith.constant 0 : i32
    %c0_i32_0 = arith.constant 0 : i32
    %c0_i32_1 = arith.constant 0 : i32
    return %c0_i32, %c0_i32_0 : i32, i32
  }
  func.func @transform_7(%arg0: i32, %arg1: memref<2x32xf32, #tpu.memory_space<smem>>) -> (i32, i32) {
    %c0_i32 = arith.constant 0 : i32
    %c0_i32_0 = arith.constant 0 : i32
    %c0_i32_1 = arith.constant 0 : i32
    return %c0_i32, %c0_i32_0 : i32, i32
  }
  func.func @transform_8(%arg0: i32, %arg1: memref<2x32xf32, #tpu.memory_space<smem>>) -> (i32, i32) {
    %c0_i32 = arith.constant 0 : i32
    %c0_i32_0 = arith.constant 0 : i32
    %c0_i32_1 = arith.constant 0 : i32
    return %c0_i32, %c0_i32_0 : i32, i32
  }
  func.func @transform_9(%arg0: i32, %arg1: memref<2x32xf32, #tpu.memory_space<smem>>) -> (i32, i32, i32) {
    %c0_i32 = arith.constant 0 : i32
    %c0_i32_0 = arith.constant 0 : i32
    %c0_i32_1 = arith.constant 0 : i32
    %c0_i32_2 = arith.constant 0 : i32
    return %c0_i32, %c0_i32_0, %c0_i32_1 : i32, i32, i32
  }
  func.func @transform_10(%arg0: i32, %arg1: memref<2x32xf32, #tpu.memory_space<smem>>) -> (i32, i32, i32) {
    %c0_i32 = arith.constant 0 : i32
    %c0_i32_0 = arith.constant 0 : i32
    %c0_i32_1 = arith.constant 0 : i32
    %c0_i32_2 = arith.constant 0 : i32
    return %c0_i32, %c0_i32_0, %c0_i32_1 : i32, i32, i32
  }
  func.func @transform_11(%arg0: i32, %arg1: memref<2x32xf32, #tpu.memory_space<smem>>) -> (i32, i32) {
    %c0_i32 = arith.constant 0 : i32
    %c0_i32_0 = arith.constant 0 : i32
    %c0_i32_1 = arith.constant 0 : i32
    return %c0_i32, %c0_i32_0 : i32, i32
  }
  func.func @transform_12(%arg0: i32, %arg1: memref<2x32xf32, #tpu.memory_space<smem>>) -> (i32, i32) {
    %c0_i32 = arith.constant 0 : i32
    %c0_i32_0 = arith.constant 0 : i32
    %c0_i32_1 = arith.constant 0 : i32
    return %c0_i32, %c0_i32_0 : i32, i32
  }
  func.func @transform_13(%arg0: i32, %arg1: memref<2x32xf32, #tpu.memory_space<smem>>) -> (i32, i32) {
    %c0_i32 = arith.constant 0 : i32
    %c0_i32_0 = arith.constant 0 : i32
    %c0_i32_1 = arith.constant 0 : i32
    return %c0_i32, %c0_i32_0 : i32, i32
  }
  func.func @transform_14(%arg0: i32, %arg1: memref<2x32xf32, #tpu.memory_space<smem>>) -> (i32, i32, i32) {
    %c0_i32 = arith.constant 0 : i32
    %c0_i32_0 = arith.constant 0 : i32
    %c0_i32_1 = arith.constant 0 : i32
    %c0_i32_2 = arith.constant 0 : i32
    return %c0_i32, %c0_i32_0, %c0_i32_1 : i32, i32, i32
  }
  func.func @transform_15(%arg0: i32, %arg1: memref<2x32xf32, #tpu.memory_space<smem>>) -> (i32, i32, i32) {
    %c0_i32 = arith.constant 0 : i32
    %c0_i32_0 = arith.constant 0 : i32
    %c0_i32_1 = arith.constant 0 : i32
    %c0_i32_2 = arith.constant 0 : i32
    return %c0_i32, %c0_i32_0, %c0_i32_1 : i32, i32, i32
  }
  func.func @transform_16(%arg0: i32, %arg1: memref<2x32xf32, #tpu.memory_space<smem>>) -> (i32, i32) {
    %c0_i32 = arith.constant 0 : i32
    %c0_i32_0 = arith.constant 0 : i32
    %c0_i32_1 = arith.constant 0 : i32
    return %c0_i32, %c0_i32_0 : i32, i32
  }
  func.func @transform_17(%arg0: i32, %arg1: memref<2x32xf32, #tpu.memory_space<smem>>) -> (i32, i32) {
    %c0_i32 = arith.constant 0 : i32
    %c0_i32_0 = arith.constant 0 : i32
    %c0_i32_1 = arith.constant 0 : i32
    return %c0_i32, %c0_i32_0 : i32, i32
  }
  func.func @transform_18(%arg0: i32, %arg1: memref<2x32xf32, #tpu.memory_space<smem>>) -> (i32, i32) {
    %c0_i32 = arith.constant 0 : i32
    %c0_i32_0 = arith.constant 0 : i32
    %c0_i32_1 = arith.constant 0 : i32
    return %c0_i32, %c0_i32_0 : i32, i32
  }
  func.func @transform_19(%arg0: i32, %arg1: memref<2x32xf32, #tpu.memory_space<smem>>) -> (i32, i32, i32) {
    %c0_i32 = arith.constant 0 : i32
    %c0_i32_0 = arith.constant 0 : i32
    %c0_i32_1 = arith.constant 0 : i32
    %c0_i32_2 = arith.constant 0 : i32
    return %c0_i32, %c0_i32_0, %c0_i32_1 : i32, i32, i32
  }
  func.func @transform_20(%arg0: i32, %arg1: memref<2x32xf32, #tpu.memory_space<smem>>) -> (i32, i32, i32) {
    %c0_i32 = arith.constant 0 : i32
    %c0_i32_0 = arith.constant 0 : i32
    %c0_i32_1 = arith.constant 0 : i32
    %c0_i32_2 = arith.constant 0 : i32
    return %c0_i32, %c0_i32_0, %c0_i32_1 : i32, i32, i32
  }
  func.func @transform_21(%arg0: i32, %arg1: memref<2x32xf32, #tpu.memory_space<smem>>) -> (i32, i32) {
    %c0_i32 = arith.constant 0 : i32
    %c0_i32_0 = arith.constant 0 : i32
    %c0_i32_1 = arith.constant 0 : i32
    return %c0_i32, %c0_i32_0 : i32, i32
  }
  func.func @transform_22(%arg0: i32, %arg1: memref<2x32xf32, #tpu.memory_space<smem>>) -> (i32, i32) {
    %c0_i32 = arith.constant 0 : i32
    %c0_i32_0 = arith.constant 0 : i32
    %c0_i32_1 = arith.constant 0 : i32
    return %c0_i32, %c0_i32_0 : i32, i32
  }
  func.func @transform_23(%arg0: i32, %arg1: memref<2x32xf32, #tpu.memory_space<smem>>) -> (i32, i32) {
    %c0_i32 = arith.constant 0 : i32
    %c0_i32_0 = arith.constant 0 : i32
    %c0_i32_1 = arith.constant 0 : i32
    return %c0_i32, %c0_i32_0 : i32, i32
  }
  func.func @transform_24(%arg0: i32, %arg1: memref<2x32xf32, #tpu.memory_space<smem>>) -> (i32, i32, i32) {
    %c0_i32 = arith.constant 0 : i32
    %c0_i32_0 = arith.constant 0 : i32
    %c0_i32_1 = arith.constant 0 : i32
    %c0_i32_2 = arith.constant 0 : i32
    return %c0_i32, %c0_i32_0, %c0_i32_1 : i32, i32, i32
  }
  func.func @transform_25(%arg0: i32, %arg1: memref<2x32xf32, #tpu.memory_space<smem>>) -> (i32, i32, i32) {
    %c0_i32 = arith.constant 0 : i32
    %c0_i32_0 = arith.constant 0 : i32
    %c0_i32_1 = arith.constant 0 : i32
    %c0_i32_2 = arith.constant 0 : i32
    return %c0_i32, %c0_i32_0, %c0_i32_1 : i32, i32, i32
  }
  func.func @transform_26(%arg0: i32, %arg1: memref<2x32xf32, #tpu.memory_space<smem>>) -> (i32, i32) {
    %c0_i32 = arith.constant 0 : i32
    %c0_i32_0 = arith.constant 0 : i32
    %c0_i32_1 = arith.constant 0 : i32
    return %c0_i32, %c0_i32_0 : i32, i32
  }
  func.func @transform_27(%arg0: i32, %arg1: memref<2x32xf32, #tpu.memory_space<smem>>) -> (i32, i32, i32) {
    %c0_i32 = arith.constant 0 : i32
    %c0_i32_0 = arith.constant 0 : i32
    %c0_i32_1 = arith.constant 0 : i32
    return %arg0, %c0_i32, %c0_i32_0 : i32, i32, i32
  }
}

</mosaic_0001>

<llo_original>
// kernel: generate.1
$region0: #{generate.1}
  #allocation0 [shape = 'u32[]', space=smem, size = 0x4, offset = 0x4, fixed_abs, tag = 'smem constant byte address 0x4 - core index']
  #allocation1 [shape = 'u32[144,128]{1,0:T(1,128)}', space=vmem, size = 0x12000, scoped, tag = 'internal scratch']
  #allocation2 [shape = 's32[1]{0}', space=sflag, size = 0x4, scoped, tag = 'scoped memory for generate.1']
  #allocation3 [shape = 'u8[1024]{0}', space=smem, size = 0x400, scoped, tag = 'prefetched SMEM operand 0']
  %s0 = inlined_call_operand.hbm [shape: f32[2,32], index: 0, kind: input, shape index: {}]
  %s1 = inlined_call_operand.hbm [shape: f32[32,6,96], index: 1, kind: input, shape index: {}]
  %s2 = inlined_call_operand.hbm [shape: f32[6,96], index: 2, kind: input, shape index: {}]
  %s3 = inlined_call_operand.hbm [shape: f32[96,96], index: 3, kind: input, shape index: {}]
  %s4 = inlined_call_operand.hbm [shape: f32[96,160], index: 4, kind: input, shape index: {}]
  %s5 = inlined_call_operand.hbm [shape: f32[3,10,6], index: 5, kind: input, shape index: {}]
  %s6 = inlined_call_operand.hbm [shape: f32[3,160,160], index: 6, kind: input, shape index: {}]
  %s7 = inlined_call_operand.vmem [shape: f32[1,160], index: 7, kind: input, shape index: {}]
  %s8 = inlined_call_operand.hbm [shape: f32[160,160], index: 8, kind: input, shape index: {}]
  %s9 = inlined_call_operand.hbm [shape: f32[160,288], index: 9, kind: input, shape index: {}]
  %s10 = inlined_call_operand.hbm [shape: f32[3,18,10], index: 10, kind: input, shape index: {}]
  %s11 = inlined_call_operand.hbm [shape: f32[3,288,144], index: 11, kind: input, shape index: {}]
  %s12 = inlined_call_operand.vmem [shape: f32[1,144], index: 12, kind: input, shape index: {}]
  %s13 = inlined_call_operand.hbm [shape: f32[144,144], index: 13, kind: input, shape index: {}]
  %s14 = inlined_call_operand.hbm [shape: f32[144,272], index: 14, kind: input, shape index: {}]
  %s15 = inlined_call_operand.hbm [shape: f32[3,34,18], index: 15, kind: input, shape index: {}]
  %s16 = inlined_call_operand.hbm [shape: f32[3,272,136], index: 16, kind: input, shape index: {}]
  %s17 = inlined_call_operand.vmem [shape: f32[1,136], index: 17, kind: input, shape index: {}]
  %s18 = inlined_call_operand.hbm [shape: f32[136,136], index: 18, kind: input, shape index: {}]
  %s19 = inlined_call_operand.hbm [shape: f32[136,136], index: 19, kind: input, shape index: {}]
  %s20 = inlined_call_operand.hbm [shape: f32[3,34,34], index: 20, kind: input, shape index: {}]
  %s21 = inlined_call_operand.hbm [shape: f32[3,136,68], index: 21, kind: input, shape index: {}]
  %s22 = inlined_call_operand.vmem [shape: f32[1,68], index: 22, kind: input, shape index: {}]
  %s23 = inlined_call_operand.vmem [shape: f32[68,68], index: 23, kind: input, shape index: {}]
  %s24 = inlined_call_operand.hbm [shape: f32[68,132], index: 24, kind: input, shape index: {}]
  %s25 = inlined_call_operand.hbm [shape: f32[3,66,34], index: 25, kind: input, shape index: {}]
  %s26 = inlined_call_operand.hbm [shape: f32[3,132,198], index: 26, kind: input, shape index: {}]
  %s27 = inlined_call_operand.vmem [shape: f32[1,198], index: 27, kind: input, shape index: {}]
  %s28 = inlined_call_operand.vmem [shape: f32[2,66,198], index: 28, kind: output, shape index: {}]
  %s29 = sld [smem:[#allocation0]]
  $region225: #{generate.1} parent=0
    _
  %s31 = ssub.s32 1, %s29
  %s32 = scalar_select 0, %s31, %s29
  %34 = dma.hbm_to_smem %s0, 32, [#allocation3], [#allocation2]
  %35 = dma.done [#allocation2], 32
  %36 = sfence
  $region1: #{generate.1} parent=0
    #allocation4 [shape = 'u8[131072]{0}', space=vmem, size = 0x20000, scoped, tag = 'input window, operand 1, single buffered']
    #allocation5 [shape = 's32[2]{0}', space=sflag, size = 0x8, scoped, tag = 'scoped memory for generate.1']
    #allocation6 [shape = 'u8[4096]{0}', space=vmem, size = 0x1000, scoped, tag = 'input window, operand 2, single buffered']
    #allocation7 [shape = 's32[1]{0}', space=sflag, size = 0x4, scoped, tag = 'scoped memory for generate.1']
    #allocation8 [shape = 'u8[49152]{0}', space=vmem, size = 0xc000, scoped, tag = 'input window, operand 3, single buffered']
    #allocation9 [shape = 'u8[98304]{0}', space=vmem, size = 0x18000, scoped, tag = 'input window, operand 4, single buffered']
    #allocation10 [shape = 's32[1]{0}', space=sflag, size = 0x4, scoped, tag = 'scoped memory for generate.1']
    #allocation11 [shape = 'u8[24576]{0}', space=vmem, size = 0x6000, scoped, tag = 'input window, operand 5, single buffered']
    #allocation12 [shape = 'u8[491520]{0}', space=vmem, size = 0x78000, scoped, tag = 'input window, operand 6, single buffered']
    #allocation13 [shape = 's32[1]{0}', space=sflag, size = 0x4, scoped, tag = 'scoped memory for generate.1']
    #allocation14 [shape = 'u8[163840]{0}', space=vmem, size = 0x28000, scoped, tag = 'input window, operand 8, single buffered']
    #allocation15 [shape = 'u8[245760]{0}', space=vmem, size = 0x3c000, scoped, tag = 'input window, operand 9, single buffered']
    #allocation16 [shape = 's32[1]{0}', space=sflag, size = 0x4, scoped, tag = 'scoped memory for generate.1']
    #allocation17 [shape = 'u8[36864]{0}', space=vmem, size = 0x9000, scoped, tag = 'input window, operand 10, single buffered']
    #allocation18 [shape = 'u8[884736]{0}', space=vmem, size = 0xd8000, scoped, tag = 'input window, operand 11, single buffered']
    #allocation19 [shape = 's32[1]{0}', space=sflag, size = 0x4, scoped, tag = 'scoped memory for generate.1']
    #allocation20 [shape = 'u8[147456]{0}', space=vmem, size = 0x24000, scoped, tag = 'input window, operand 13, single buffered']
    #allocation21 [shape = 'u8[221184]{0}', space=vmem, size = 0x36000, scoped, tag = 'input window, operand 14, single buffered']
    #allocation22 [shape = 's32[1]{0}', space=sflag, size = 0x4, scoped, tag = 'scoped memory for generate.1']
    #allocation23 [shape = 'u8[61440]{0}', space=vmem, size = 0xf000, scoped, tag = 'input window, operand 15, single buffered']
    #allocation24 [shape = 'u8[835584]{0}', space=vmem, size = 0xcc000, scoped, tag = 'input window, operand 16, single buffered']
    #allocation25 [shape = 's32[1]{0}', space=sflag, size = 0x4, scoped, tag = 'scoped memory for generate.1']
    #allocation26 [shape = 'u8[139264]{0}', space=vmem, size = 0x22000, scoped, tag = 'input window, operand 18, single buffered']
    #allocation27 [shape = 'u8[139264]{0}', space=vmem, size = 0x22000, scoped, tag = 'input window, operand 19, single buffered']
    #allocation28 [shape = 's32[1]{0}', space=sflag, size = 0x4, scoped, tag = 'scoped memory for generate.1']
    #allocation29 [shape = 'u8[61440]{0}', space=vmem, size = 0xf000, scoped, tag = 'input window, operand 20, single buffered']
    #allocation30 [shape = 'u8[208896]{0}', space=vmem, size = 0x33000, scoped, tag = 'input window, operand 21, single buffered']
    #allocation31 [shape = 's32[1]{0}', space=sflag, size = 0x4, scoped, tag = 'scoped memory for generate.1']
    #allocation32 [shape = 'u8[73728]{0}', space=vmem, size = 0x12000, scoped, tag = 'input window, operand 24, single buffered']
    #allocation33 [shape = 'u8[110592]{0}', space=vmem, size = 0x1b000, scoped, tag = 'input window, operand 25, single buffered']
    #allocation34 [shape = 's32[1]{0}', space=sflag, size = 0x4, scoped, tag = 'scoped memory for generate.1']
    #allocation35 [shape = 'u8[417792]{0}', space=vmem, size = 0x66000, scoped, tag = 'input window, operand 26, single buffered']
    %37 = vsyncpa [#allocation5], 0
    %38 = vsyncpa [#allocation7], 0
    %39 = vsyncpa [#allocation10], 0
    %40 = vsyncpa [#allocation13], 0
    %41 = vsyncpa [#allocation16], 0
    %42 = vsyncpa [#allocation19], 0
    %43 = vsyncpa [#allocation22], 0
    %44 = vsyncpa [#allocation25], 0
    %45 = vsyncpa [#allocation28], 0
    %46 = vsyncpa [#allocation31], 0
    %47 = vsyncpa [#allocation34], 0
    loop: start=0, step=1, limit=4
    $region2: #{generate.1} parent=1 // loop_pre_header
      _
    $region3: #{generate.1} parent=1 // loop_header
      %s49 = sphi 0, %s53
      %p50 = scmp.ge.s32.totalorder %s49, 4
      %s57 = sphi 0, %s57
      %s59 = sphi 0, %s57
      %s60 = sphi 0, %s59
      %s74 = sphi 0, %s60
      %s78 = sphi 0, %s78
      %s80 = sphi 0, %s78
      %s81 = sphi 0, %s80
      %s95 = sphi 0, %s81
      %s99 = sphi 0, %s99
      %s101 = sphi 0, %s99
      %s102 = sphi 0, %s101
      %s116 = sphi 0, %s102
      %s120 = sphi 0, %s120
      %s122 = sphi 0, %s120
      %s123 = sphi 0, %s122
      %s137 = sphi 0, %s123
      %s141 = sphi 0, %s141
      %s143 = sphi 0, %s141
      %s144 = sphi 0, %s143
      %s158 = sphi 0, %s144
      %s162 = sphi 0, %s162
      %s164 = sphi 0, %s162
      %s165 = sphi 0, %s164
      %s179 = sphi 0, %s165
      %s183 = sphi 0, %s183
      %s185 = sphi 0, %s183
      %s186 = sphi 0, %s185
      %s200 = sphi 0, %s186
      %s204 = sphi 0, %s204
      %s206 = sphi 0, %s204
      %s207 = sphi 0, %s206
      %s221 = sphi 0, %s207
      %s225 = sphi 0, %s225
      %s227 = sphi 0, %s225
      %s228 = sphi 0, %s227
      %s242 = sphi 0, %s228
      %s246 = sphi 0, %s246
      %s248 = sphi 0, %s246
      %s249 = sphi 0, %s248
      %s263 = sphi 0, %s249
      %s267 = sphi 0, %s267
      %s269 = sphi 0, %s267
      %s270 = sphi 0, %s269
      %s284 = sphi 0, %s270
      %s288 = sphi 0, %s288
      %s290 = sphi 0, %s288
      %s291 = sphi 0, %s290
      %s305 = sphi 0, %s291
      %s309 = sphi 0, %s309
      %s311 = sphi 0, %s309
      %s312 = sphi 0, %s311
      %s326 = sphi 0, %s312
      %s330 = sphi 0, %s330
      %s332 = sphi 0, %s330
      %s333 = sphi 0, %s332
      %s347 = sphi 0, %s333
      %s351 = sphi 0, %s351
      %s353 = sphi 0, %s351
      %s354 = sphi 0, %s353
      %s368 = sphi 0, %s354
      %s372 = sphi 0, %s372
      %s374 = sphi 0, %s372
      %s375 = sphi 0, %s374
      %s389 = sphi 0, %s375
      %s393 = sphi 0, %s393
      %s395 = sphi 0, %s393
      %s396 = sphi 0, %s395
      %s410 = sphi 0, %s396
      %s414 = sphi 0, %s414
      %s416 = sphi 0, %s414
      %s417 = sphi 0, %s416
      %s431 = sphi 0, %s417
      %s435 = sphi 0, %s435
      %s437 = sphi 0, %s435
      %s438 = sphi 0, %s437
      %s452 = sphi 0, %s438
      %s456 = sphi 0, %s456
      %s458 = sphi 0, %s456
      %s459 = sphi 0, %s458
      %s473 = sphi 0, %s459
      %s477 = sphi 0, %s477
      %s479 = sphi 0, %s477
      %s480 = sphi 0, %s479
      %s494 = sphi 0, %s480
      %s498 = sphi 0, %s498
      %s500 = sphi 0, %s498
      %s501 = sphi 0, %s500
      %s515 = sphi 0, %s501
      %s519 = sphi 0, %s519
      %s521 = sphi 0, %s519
      %s522 = sphi 0, %s521
      %s536 = sphi 0, %s522
      %s540 = sphi 0, %s540
      %s542 = sphi 0, %s540
      %s543 = sphi 0, %s542
      %s557 = sphi 0, %s543
      %s561 = sphi 0, %s561
      %s563 = sphi 0, %s561
      %s564 = sphi 0, %s563
      %s578 = sphi 0, %s564
      %s582 = sphi 0, %s582
      %s584 = sphi 0, %s582
      %s585 = sphi 0, %s584
      %s599 = sphi 0, %s585
      %s603 = sphi 0, %s603
      %s605 = sphi 0, %s603
      %s606 = sphi 0, %s605
      %s620 = sphi 0, %s606
      %s626 = sphi 0, %s628
      %s629 = sphi 0, %s626
      %s630 = sphi 0, %s629
      %s646 = sphi 0, %s630
    $region4: #{generate.1} parent=1 // loop_header_branch
      %52 = sbr.rel (%p50) target = $region8
    $region5: #{generate.1} parent=1 // loop_body
      %s54 = ssub.s32 %s49, 1
      %s55 = ssub.s32 %s49, 2
      %s56 = sadd.s32 %s49, 1
      %s58 = sadd.s32 %s57, 1
      %p61 = scmp.eq.s32.totalorder %s49, 1
      %p62 = scmp.ne.s32.totalorder %s57, %s59
      %p63 = scmp.eq.s32.totalorder %s49, 0
      %p64 = por %p62, %p63
      %p65 = scmp.ne.s32.totalorder %s57, %s59
      %p66 = scmp.eq.s32.totalorder %s54, 1
      %p67 = por %p65, %p66
      %p68 = scmp.ne.s32.totalorder %s59, %s60
      %p69 = scmp.eq.s32.totalorder %s54, 0
      %p70 = por %p68, %p69
      %p71 = scmp.ne.s32.totalorder %s59, %s60
      %p72 = scmp.eq.s32.totalorder %s55, 1
      %p73 = por %p71, %p72
      %p75 = scmp.ne.s32.totalorder %s60, %s74
      %p76 = scmp.eq.s32.totalorder %s55, 0
      %p77 = por %p75, %p76
      %s79 = sadd.s32 %s78, 1
      %p82 = scmp.eq.s32.totalorder %s49, 1
      %p83 = scmp.ne.s32.totalorder %s78, %s80
      %p84 = scmp.eq.s32.totalorder %s49, 0
      %p85 = por %p83, %p84
      %p86 = scmp.ne.s32.totalorder %s78, %s80
      %p87 = scmp.eq.s32.totalorder %s54, 1
      %p88 = por %p86, %p87
      %p89 = scmp.ne.s32.totalorder %s80, %s81
      %p90 = scmp.eq.s32.totalorder %s54, 0
      %p91 = por %p89, %p90
      %p92 = scmp.ne.s32.totalorder %s80, %s81
      %p93 = scmp.eq.s32.totalorder %s55, 1
      %p94 = por %p92, %p93
      %p96 = scmp.ne.s32.totalorder %s81, %s95
      %p97 = scmp.eq.s32.totalorder %s55, 0
      %p98 = por %p96, %p97
      %s100 = sadd.s32 %s99, 1
      %p103 = scmp.eq.s32.totalorder %s49, 1
      %p104 = scmp.ne.s32.totalorder %s99, %s101
      %p105 = scmp.eq.s32.totalorder %s49, 0
      %p106 = por %p104, %p105
      %p107 = scmp.ne.s32.totalorder %s99, %s101
      %p108 = scmp.eq.s32.totalorder %s54, 1
      %p109 = por %p107, %p108
      %p110 = scmp.ne.s32.totalorder %s101, %s102
      %p111 = scmp.eq.s32.totalorder %s54, 0
      %p112 = por %p110, %p111
      %p113 = scmp.ne.s32.totalorder %s101, %s102
      %p114 = scmp.eq.s32.totalorder %s55, 1
      %p115 = por %p113, %p114
      %p117 = scmp.ne.s32.totalorder %s102, %s116
      %p118 = scmp.eq.s32.totalorder %s55, 0
      %p119 = por %p117, %p118
      %s121 = sadd.s32 %s120, 1
      %p124 = scmp.eq.s32.totalorder %s49, 1
      %p125 = scmp.ne.s32.totalorder %s120, %s122
      %p126 = scmp.eq.s32.totalorder %s49, 0
      %p127 = por %p125, %p126
      %p128 = scmp.ne.s32.totalorder %s120, %s122
      %p129 = scmp.eq.s32.totalorder %s54, 1
      %p130 = por %p128, %p129
      %p131 = scmp.ne.s32.totalorder %s122, %s123
      %p132 = scmp.eq.s32.totalorder %s54, 0
      %p133 = por %p131, %p132
      %p134 = scmp.ne.s32.totalorder %s122, %s123
      %p135 = scmp.eq.s32.totalorder %s55, 1
      %p136 = por %p134, %p135
      %p138 = scmp.ne.s32.totalorder %s123, %s137
      %p139 = scmp.eq.s32.totalorder %s55, 0
      %p140 = por %p138, %p139
      %s142 = sadd.s32 %s141, 1
      %p145 = scmp.eq.s32.totalorder %s49, 1
      %p146 = scmp.ne.s32.totalorder %s141, %s143
      %p147 = scmp.eq.s32.totalorder %s49, 0
      %p148 = por %p146, %p147
      %p149 = scmp.ne.s32.totalorder %s141, %s143
      %p150 = scmp.eq.s32.totalorder %s54, 1
      %p151 = por %p149, %p150
      %p152 = scmp.ne.s32.totalorder %s143, %s144
      %p153 = scmp.eq.s32.totalorder %s54, 0
      %p154 = por %p152, %p153
      %p155 = scmp.ne.s32.totalorder %s143, %s144
      %p156 = scmp.eq.s32.totalorder %s55, 1
      %p157 = por %p155, %p156
      %p159 = scmp.ne.s32.totalorder %s144, %s158
      %p160 = scmp.eq.s32.totalorder %s55, 0
      %p161 = por %p159, %p160
      %s163 = sadd.s32 %s162, 1
      %p166 = scmp.eq.s32.totalorder %s49, 1
      %p167 = scmp.ne.s32.totalorder %s162, %s164
      %p168 = scmp.eq.s32.totalorder %s49, 0
      %p169 = por %p167, %p168
      %p170 = scmp.ne.s32.totalorder %s162, %s164
      %p171 = scmp.eq.s32.totalorder %s54, 1
      %p172 = por %p170, %p171
      %p173 = scmp.ne.s32.totalorder %s164, %s165
      %p174 = scmp.eq.s32.totalorder %s54, 0
      %p175 = por %p173, %p174
      %p176 = scmp.ne.s32.totalorder %s164, %s165
      %p177 = scmp.eq.s32.totalorder %s55, 1
      %p178 = por %p176, %p177
      %p180 = scmp.ne.s32.totalorder %s165, %s179
      %p181 = scmp.eq.s32.totalorder %s55, 0
      %p182 = por %p180, %p181
      %s184 = sadd.s32 %s183, 1
      %p187 = scmp.eq.s32.totalorder %s49, 1
      %p188 = scmp.ne.s32.totalorder %s183, %s185
      %p189 = scmp.eq.s32.totalorder %s49, 0
      %p190 = por %p188, %p189
      %p191 = scmp.ne.s32.totalorder %s183, %s185
      %p192 = scmp.eq.s32.totalorder %s54, 1
      %p193 = por %p191, %p192
      %p194 = scmp.ne.s32.totalorder %s185, %s186
      %p195 = scmp.eq.s32.totalorder %s54, 0
      %p196 = por %p194, %p195
      %p197 = scmp.ne.s32.totalorder %s185, %s186
      %p198 = scmp.eq.s32.totalorder %s55, 1
      %p199 = por %p197, %p198
      %p201 = scmp.ne.s32.totalorder %s186, %s200
      %p202 = scmp.eq.s32.totalorder %s55, 0
      %p203 = por %p201, %p202
      %s205 = sadd.s32 %s204, 1
      %p208 = scmp.eq.s32.totalorder %s49, 1
      %p209 = scmp.ne.s32.totalorder %s204, %s206
      %p210 = scmp.eq.s32.totalorder %s49, 0
      %p211 = por %p209, %p210
      %p212 = scmp.ne.s32.totalorder %s204, %s206
      %p213 = scmp.eq.s32.totalorder %s54, 1
      %p214 = por %p212, %p213
      %p215 = scmp.ne.s32.totalorder %s206, %s207
      %p216 = scmp.eq.s32.totalorder %s54, 0
      %p217 = por %p215, %p216
      %p218 = scmp.ne.s32.totalorder %s206, %s207
      %p219 = scmp.eq.s32.totalorder %s55, 1
      %p220 = por %p218, %p219
      %p222 = scmp.ne.s32.totalorder %s207, %s221
      %p223 = scmp.eq.s32.totalorder %s55, 0
      %p224 = por %p222, %p223
      %s226 = sadd.s32 %s225, 1
      %p229 = scmp.eq.s32.totalorder %s49, 1
      %p230 = scmp.ne.s32.totalorder %s225, %s227
      %p231 = scmp.eq.s32.totalorder %s49, 0
      %p232 = por %p230, %p231
      %p233 = scmp.ne.s32.totalorder %s225, %s227
      %p234 = scmp.eq.s32.totalorder %s54, 1
      %p235 = por %p233, %p234
      %p236 = scmp.ne.s32.totalorder %s227, %s228
      %p237 = scmp.eq.s32.totalorder %s54, 0
      %p238 = por %p236, %p237
      %p239 = scmp.ne.s32.totalorder %s227, %s228
      %p240 = scmp.eq.s32.totalorder %s55, 1
      %p241 = por %p239, %p240
      %p243 = scmp.ne.s32.totalorder %s228, %s242
      %p244 = scmp.eq.s32.totalorder %s55, 0
      %p245 = por %p243, %p244
      %s247 = sadd.s32 %s246, 1
      %p250 = scmp.eq.s32.totalorder %s49, 1
      %p251 = scmp.ne.s32.totalorder %s246, %s248
      %p252 = scmp.eq.s32.totalorder %s49, 0
      %p253 = por %p251, %p252
      %p254 = scmp.ne.s32.totalorder %s246, %s248
      %p255 = scmp.eq.s32.totalorder %s54, 1
      %p256 = por %p254, %p255
      %p257 = scmp.ne.s32.totalorder %s248, %s249
      %p258 = scmp.eq.s32.totalorder %s54, 0
      %p259 = por %p257, %p258
      %p260 = scmp.ne.s32.totalorder %s248, %s249
      %p261 = scmp.eq.s32.totalorder %s55, 1
      %p262 = por %p260, %p261
      %p264 = scmp.ne.s32.totalorder %s249, %s263
      %p265 = scmp.eq.s32.totalorder %s55, 0
      %p266 = por %p264, %p265
      %s268 = sadd.s32 %s267, 1
      %p271 = scmp.eq.s32.totalorder %s49, 1
      %p272 = scmp.ne.s32.totalorder %s267, %s269
      %p273 = scmp.eq.s32.totalorder %s49, 0
      %p274 = por %p272, %p273
      %p275 = scmp.ne.s32.totalorder %s267, %s269
      %p276 = scmp.eq.s32.totalorder %s54, 1
      %p277 = por %p275, %p276
      %p278 = scmp.ne.s32.totalorder %s269, %s270
      %p279 = scmp.eq.s32.totalorder %s54, 0
      %p280 = por %p278, %p279
      %p281 = scmp.ne.s32.totalorder %s269, %s270
      %p282 = scmp.eq.s32.totalorder %s55, 1
      %p283 = por %p281, %p282
      %p285 = scmp.ne.s32.totalorder %s270, %s284
      %p286 = scmp.eq.s32.totalorder %s55, 0
      %p287 = por %p285, %p286
      %s289 = sadd.s32 %s288, 1
      %p292 = scmp.eq.s32.totalorder %s49, 1
      %p293 = scmp.ne.s32.totalorder %s288, %s290
      %p294 = scmp.eq.s32.totalorder %s49, 0
      %p295 = por %p293, %p294
      %p296 = scmp.ne.s32.totalorder %s288, %s290
      %p297 = scmp.eq.s32.totalorder %s54, 1
      %p298 = por %p296, %p297
      %p299 = scmp.ne.s32.totalorder %s290, %s291
      %p300 = scmp.eq.s32.totalorder %s54, 0
      %p301 = por %p299, %p300
      %p302 = scmp.ne.s32.totalorder %s290, %s291
      %p303 = scmp.eq.s32.totalorder %s55, 1
      %p304 = por %p302, %p303
      %p306 = scmp.ne.s32.totalorder %s291, %s305
      %p307 = scmp.eq.s32.totalorder %s55, 0
      %p308 = por %p306, %p307
      %s310 = sadd.s32 %s309, 1
      %p313 = scmp.eq.s32.totalorder %s49, 1
      %p314 = scmp.ne.s32.totalorder %s309, %s311
      %p315 = scmp.eq.s32.totalorder %s49, 0
      %p316 = por %p314, %p315
      %p317 = scmp.ne.s32.totalorder %s309, %s311
      %p318 = scmp.eq.s32.totalorder %s54, 1
      %p319 = por %p317, %p318
      %p320 = scmp.ne.s32.totalorder %s311, %s312
      %p321 = scmp.eq.s32.totalorder %s54, 0
      %p322 = por %p320, %p321
      %p323 = scmp.ne.s32.totalorder %s311, %s312
      %p324 = scmp.eq.s32.totalorder %s55, 1
      %p325 = por %p323, %p324
      %p327 = scmp.ne.s32.totalorder %s312, %s326
      %p328 = scmp.eq.s32.totalorder %s55, 0
      %p329 = por %p327, %p328
      %s331 = sadd.s32 %s330, 1
      %p334 = scmp.eq.s32.totalorder %s49, 1
      %p335 = scmp.ne.s32.totalorder %s330, %s332
      %p336 = scmp.eq.s32.totalorder %s49, 0
      %p337 = por %p335, %p336
      %p338 = scmp.ne.s32.totalorder %s330, %s332
      %p339 = scmp.eq.s32.totalorder %s54, 1
      %p340 = por %p338, %p339
      %p341 = scmp.ne.s32.totalorder %s332, %s333
      %p342 = scmp.eq.s32.totalorder %s54, 0
      %p343 = por %p341, %p342
      %p344 = scmp.ne.s32.totalorder %s332, %s333
      %p345 = scmp.eq.s32.totalorder %s55, 1
      %p346 = por %p344, %p345
      %p348 = scmp.ne.s32.totalorder %s333, %s347
      %p349 = scmp.eq.s32.totalorder %s55, 0
      %p350 = por %p348, %p349
      %s352 = sadd.s32 %s351, 1
      %p355 = scmp.eq.s32.totalorder %s49, 1
      %p356 = scmp.ne.s32.totalorder %s351, %s353
      %p357 = scmp.eq.s32.totalorder %s49, 0
      %p358 = por %p356, %p357
      %p359 = scmp.ne.s32.totalorder %s351, %s353
      %p360 = scmp.eq.s32.totalorder %s54, 1
      %p361 = por %p359, %p360
      %p362 = scmp.ne.s32.totalorder %s353, %s354
      %p363 = scmp.eq.s32.totalorder %s54, 0
      %p364 = por %p362, %p363
      %p365 = scmp.ne.s32.totalorder %s353, %s354
      %p366 = scmp.eq.s32.totalorder %s55, 1
      %p367 = por %p365, %p366
      %p369 = scmp.ne.s32.totalorder %s354, %s368
      %p370 = scmp.eq.s32.totalorder %s55, 0
      %p371 = por %p369, %p370
      %s373 = sadd.s32 %s372, 1
      %p376 = scmp.eq.s32.totalorder %s49, 1
      %p377 = scmp.ne.s32.totalorder %s372, %s374
      %p378 = scmp.eq.s32.totalorder %s49, 0
      %p379 = por %p377, %p378
      %p380 = scmp.ne.s32.totalorder %s372, %s374
      %p381 = scmp.eq.s32.totalorder %s54, 1
      %p382 = por %p380, %p381
      %p383 = scmp.ne.s32.totalorder %s374, %s375
      %p384 = scmp.eq.s32.totalorder %s54, 0
      %p385 = por %p383, %p384
      %p386 = scmp.ne.s32.totalorder %s374, %s375
      %p387 = scmp.eq.s32.totalorder %s55, 1
      %p388 = por %p386, %p387
      %p390 = scmp.ne.s32.totalorder %s375, %s389
      %p391 = scmp.eq.s32.totalorder %s55, 0
      %p392 = por %p390, %p391
      %s394 = sadd.s32 %s393, 1
      %p397 = scmp.eq.s32.totalorder %s49, 1
      %p398 = scmp.ne.s32.totalorder %s393, %s395
      %p399 = scmp.eq.s32.totalorder %s49, 0
      %p400 = por %p398, %p399
      %p401 = scmp.ne.s32.totalorder %s393, %s395
      %p402 = scmp.eq.s32.totalorder %s54, 1
      %p403 = por %p401, %p402
      %p404 = scmp.ne.s32.totalorder %s395, %s396
      %p405 = scmp.eq.s32.totalorder %s54, 0
      %p406 = por %p404, %p405
      %p407 = scmp.ne.s32.totalorder %s395, %s396
      %p408 = scmp.eq.s32.totalorder %s55, 1
      %p409 = por %p407, %p408
      %p411 = scmp.ne.s32.totalorder %s396, %s410
      %p412 = scmp.eq.s32.totalorder %s55, 0
      %p413 = por %p411, %p412
      %s415 = sadd.s32 %s414, 1
      %p418 = scmp.eq.s32.totalorder %s49, 1
      %p419 = scmp.ne.s32.totalorder %s414, %s416
      %p420 = scmp.eq.s32.totalorder %s49, 0
      %p421 = por %p419, %p420
      %p422 = scmp.ne.s32.totalorder %s414, %s416
      %p423 = scmp.eq.s32.totalorder %s54, 1
      %p424 = por %p422, %p423
      %p425 = scmp.ne.s32.totalorder %s416, %s417
      %p426 = scmp.eq.s32.totalorder %s54, 0
      %p427 = por %p425, %p426
      %p428 = scmp.ne.s32.totalorder %s416, %s417
      %p429 = scmp.eq.s32.totalorder %s55, 1
      %p430 = por %p428, %p429
      %p432 = scmp.ne.s32.totalorder %s417, %s431
      %p433 = scmp.eq.s32.totalorder %s55, 0
      %p434 = por %p432, %p433
      %s436 = sadd.s32 %s435, 1
      %p439 = scmp.eq.s32.totalorder %s49, 1
      %p440 = scmp.ne.s32.totalorder %s435, %s437
      %p441 = scmp.eq.s32.totalorder %s49, 0
      %p442 = por %p440, %p441
      %p443 = scmp.ne.s32.totalorder %s435, %s437
      %p444 = scmp.eq.s32.totalorder %s54, 1
      %p445 = por %p443, %p444
      %p446 = scmp.ne.s32.totalorder %s437, %s438
      %p447 = scmp.eq.s32.totalorder %s54, 0
      %p448 = por %p446, %p447
      %p449 = scmp.ne.s32.totalorder %s437, %s438
      %p450 = scmp.eq.s32.totalorder %s55, 1
      %p451 = por %p449, %p450
      %p453 = scmp.ne.s32.totalorder %s438, %s452
      %p454 = scmp.eq.s32.totalorder %s55, 0
      %p455 = por %p453, %p454
      %s457 = sadd.s32 %s456, 1
      %p460 = scmp.eq.s32.totalorder %s49, 1
      %p461 = scmp.ne.s32.totalorder %s456, %s458
      %p462 = scmp.eq.s32.totalorder %s49, 0
      %p463 = por %p461, %p462
      %p464 = scmp.ne.s32.totalorder %s456, %s458
      %p465 = scmp.eq.s32.totalorder %s54, 1
      %p466 = por %p464, %p465
      %p467 = scmp.ne.s32.totalorder %s458, %s459
      %p468 = scmp.eq.s32.totalorder %s54, 0
      %p469 = por %p467, %p468
      %p470 = scmp.ne.s32.totalorder %s458, %s459
      %p471 = scmp.eq.s32.totalorder %s55, 1
      %p472 = por %p470, %p471
      %p474 = scmp.ne.s32.totalorder %s459, %s473
      %p475 = scmp.eq.s32.totalorder %s55, 0
      %p476 = por %p474, %p475
      %s478 = sadd.s32 %s477, 1
      %p481 = scmp.eq.s32.totalorder %s49, 1
      %p482 = scmp.ne.s32.totalorder %s477, %s479
      %p483 = scmp.eq.s32.totalorder %s49, 0
      %p484 = por %p482, %p483
      %p485 = scmp.ne.s32.totalorder %s477, %s479
      %p486 = scmp.eq.s32.totalorder %s54, 1
      %p487 = por %p485, %p486
      %p488 = scmp.ne.s32.totalorder %s479, %s480
      %p489 = scmp.eq.s32.totalorder %s54, 0
      %p490 = por %p488, %p489
      %p491 = scmp.ne.s32.totalorder %s479, %s480
      %p492 = scmp.eq.s32.totalorder %s55, 1
      %p493 = por %p491, %p492
      %p495 = scmp.ne.s32.totalorder %s480, %s494
      %p496 = scmp.eq.s32.totalorder %s55, 0
      %p497 = por %p495, %p496
      %s499 = sadd.s32 %s498, 1
      %p502 = scmp.eq.s32.totalorder %s49, 1
      %p503 = scmp.ne.s32.totalorder %s498, %s500
      %p504 = scmp.eq.s32.totalorder %s49, 0
      %p505 = por %p503, %p504
      %p506 = scmp.ne.s32.totalorder %s498, %s500
      %p507 = scmp.eq.s32.totalorder %s54, 1
      %p508 = por %p506, %p507
      %p509 = scmp.ne.s32.totalorder %s500, %s501
      %p510 = scmp.eq.s32.totalorder %s54, 0
      %p511 = por %p509, %p510
      %p512 = scmp.ne.s32.totalorder %s500, %s501
      %p513 = scmp.eq.s32.totalorder %s55, 1
      %p514 = por %p512, %p513
      %p516 = scmp.ne.s32.totalorder %s501, %s515
      %p517 = scmp.eq.s32.totalorder %s55, 0
      %p518 = por %p516, %p517
      %s520 = sadd.s32 %s519, 1
      %p523 = scmp.eq.s32.totalorder %s49, 1
      %p524 = scmp.ne.s32.totalorder %s519, %s521
      %p525 = scmp.eq.s32.totalorder %s49, 0
      %p526 = por %p524, %p525
      %p527 = scmp.ne.s32.totalorder %s519, %s521
      %p528 = scmp.eq.s32.totalorder %s54, 1
      %p529 = por %p527, %p528
      %p530 = scmp.ne.s32.totalorder %s521, %s522
      %p531 = scmp.eq.s32.totalorder %s54, 0
      %p532 = por %p530, %p531
      %p533 = scmp.ne.s32.totalorder %s521, %s522
      %p534 = scmp.eq.s32.totalorder %s55, 1
      %p535 = por %p533, %p534
      %p537 = scmp.ne.s32.totalorder %s522, %s536
      %p538 = scmp.eq.s32.totalorder %s55, 0
      %p539 = por %p537, %p538
      %s541 = sadd.s32 %s540, 1
      %p544 = scmp.eq.s32.totalorder %s49, 1
      %p545 = scmp.ne.s32.totalorder %s540, %s542
      %p546 = scmp.eq.s32.totalorder %s49, 0
      %p547 = por %p545, %p546
      %p548 = scmp.ne.s32.totalorder %s540, %s542
      %p549 = scmp.eq.s32.totalorder %s54, 1
      %p550 = por %p548, %p549
      %p551 = scmp.ne.s32.totalorder %s542, %s543
      %p552 = scmp.eq.s32.totalorder %s54, 0
      %p553 = por %p551, %p552
      %p554 = scmp.ne.s32.totalorder %s542, %s543
      %p555 = scmp.eq.s32.totalorder %s55, 1
      %p556 = por %p554, %p555
      %p558 = scmp.ne.s32.totalorder %s543, %s557
      %p559 = scmp.eq.s32.totalorder %s55, 0
      %p560 = por %p558, %p559
      %s562 = sadd.s32 %s561, 1
      %p565 = scmp.eq.s32.totalorder %s49, 1
      %p566 = scmp.ne.s32.totalorder %s561, %s563
      %p567 = scmp.eq.s32.totalorder %s49, 0
      %p568 = por %p566, %p567
      %p569 = scmp.ne.s32.totalorder %s561, %s563
      %p570 = scmp.eq.s32.totalorder %s54, 1
      %p571 = por %p569, %p570
      %p572 = scmp.ne.s32.totalorder %s563, %s564
      %p573 = scmp.eq.s32.totalorder %s54, 0
      %p574 = por %p572, %p573
      %p575 = scmp.ne.s32.totalorder %s563, %s564
      %p576 = scmp.eq.s32.totalorder %s55, 1
      %p577 = por %p575, %p576
      %p579 = scmp.ne.s32.totalorder %s564, %s578
      %p580 = scmp.eq.s32.totalorder %s55, 0
      %p581 = por %p579, %p580
      %s583 = sadd.s32 %s582, 1
      %p586 = scmp.eq.s32.totalorder %s49, 1
      %p587 = scmp.ne.s32.totalorder %s582, %s584
      %p588 = scmp.eq.s32.totalorder %s49, 0
      %p589 = por %p587, %p588
      %p590 = scmp.ne.s32.totalorder %s582, %s584
      %p591 = scmp.eq.s32.totalorder %s54, 1
      %p592 = por %p590, %p591
      %p593 = scmp.ne.s32.totalorder %s584, %s585
      %p594 = scmp.eq.s32.totalorder %s54, 0
      %p595 = por %p593, %p594
      %p596 = scmp.ne.s32.totalorder %s584, %s585
      %p597 = scmp.eq.s32.totalorder %s55, 1
      %p598 = por %p596, %p597
      %p600 = scmp.ne.s32.totalorder %s585, %s599
      %p601 = scmp.eq.s32.totalorder %s55, 0
      %p602 = por %p600, %p601
      %s604 = sadd.s32 %s603, 1
      %p607 = scmp.eq.s32.totalorder %s49, 1
      %p608 = scmp.ne.s32.totalorder %s603, %s605
      %p609 = scmp.eq.s32.totalorder %s49, 0
      %p610 = por %p608, %p609
      %p611 = scmp.ne.s32.totalorder %s603, %s605
      %p612 = scmp.eq.s32.totalorder %s54, 1
      %p613 = por %p611, %p612
      %p614 = scmp.ne.s32.totalorder %s605, %s606
      %p615 = scmp.eq.s32.totalorder %s54, 0
      %p616 = por %p614, %p615
      %p617 = scmp.ne.s32.totalorder %s605, %s606
      %p618 = scmp.eq.s32.totalorder %s55, 1
      %p619 = por %p617, %p618
      %p621 = scmp.ne.s32.totalorder %s606, %s620
      %p622 = scmp.eq.s32.totalorder %s55, 0
      %p623 = por %p621, %p622
      %s624 = ssub.s32 %s49, %s56
      %p625 = scmp.eq.s32.totalorder %s624, 0
      %s627 = sadd.s32 %s626, 1
      %s628 = scalar_select %p625, %s626, %s627
      %p631 = pneg %p625
      %p632 = scmp.eq.s32.totalorder %s49, 1
      %p633 = por %p631, %p632
      %p634 = scmp.ne.s32.totalorder %s626, %s629
      %p635 = scmp.eq.s32.totalorder %s49, 0
      %p636 = por %p634, %p635
      %p637 = scmp.ne.s32.totalorder %s626, %s629
      %p638 = scmp.eq.s32.totalorder %s54, 1
      %p639 = por %p637, %p638
      %p640 = scmp.ne.s32.totalorder %s629, %s630
      %p641 = scmp.eq.s32.totalorder %s54, 0
      %p642 = por %p640, %p641
      %p643 = scmp.ne.s32.totalorder %s629, %s630
      %p644 = scmp.eq.s32.totalorder %s55, 1
      %p645 = por %p643, %p644
      %p647 = scmp.ne.s32.totalorder %s630, %s646
      %p648 = scmp.eq.s32.totalorder %s55, 0
      %p649 = por %p647, %p648
      %p650 = scmp.le.s32.totalorder 1, %s49
      %p651 = scmp.lt.s32.totalorder %s49, 3
      %p652 = pnand %p650, %p651
      %p653 = pneg %p652
      // Predicated region
      $region9: #{generate.1} parent=5 // pred_check
        _
      $region10: #{generate.1} parent=5 // pred_check_branch
        %655 = sbr.rel (%p652) target = $region12
      $region11: #{generate.1} parent=5 // pred_region
        %s656 = ssub.s32 %s49, 1
        // Predicated region
        $region13: #{generate.1} parent=11 // pred_check
          %p657 = pneg %p70
        $region14: #{generate.1} parent=11 // pred_check_branch
          %659 = sbr.rel (%p657) target = $region16
        $region15: #{generate.1} parent=11 // pred_region
          %s661 = ssub.s32 4096, 4096
          %662 = vsyncadd [#allocation5], %s661
          %s663 = sshll.u32 [#allocation4], 4
          %s664 = int_to_ptr.vmem [resolvable:$true] %s663
          %669 = dma.hbm_to_vmem [thread:$0]  %s1, 4096, %s664, [#allocation5], 128, 128, 8
        $region16: #{generate.1} parent=11 // pred_fallthru
          _
        // Predicated region
        $region17: #{generate.1} parent=11 // pred_check
          %p670 = pneg %p91
        $region18: #{generate.1} parent=11 // pred_check_branch
          %672 = sbr.rel (%p670) target = $region20
        $region19: #{generate.1} parent=11 // pred_region
          %s674 = ssub.s32 128, 128
          %675 = vsyncadd [#allocation7], %s674
          %s677 = sshll.u32 [#allocation6], 4
          %s678 = int_to_ptr.vmem [resolvable:$true] %s677
          %680 = dma.hbm_to_vmem [thread:$0]  %s2, 128, %s678, [#allocation7]
        $region20: #{generate.1} parent=11 // pred_fallthru
          _
        // Predicated region
        $region21: #{generate.1} parent=11 // pred_check
          %p681 = pneg %p112
        $region22: #{generate.1} parent=11 // pred_check_branch
          %683 = sbr.rel (%p681) target = $region24
        $region23: #{generate.1} parent=11 // pred_region
          %s685 = ssub.s32 1536, 1536
          %686 = vsyncadd [#allocation7], %s685
          %s687 = sshll.u32 [#allocation8], 4
          %s688 = int_to_ptr.vmem [resolvable:$true] %s687
          %693 = dma.hbm_to_vmem [thread:$0]  %s3, 1536, %s688, [#allocation7], 128, 128, 8
        $region24: #{generate.1} parent=11 // pred_fallthru
          _
        // Predicated region
        $region25: #{generate.1} parent=11 // pred_check
          %p694 = pneg %p133
        $region26: #{generate.1} parent=11 // pred_check_branch
          %696 = sbr.rel (%p694) target = $region28
        $region27: #{generate.1} parent=11 // pred_region
          %s698 = ssub.s32 3072, 3072
          %699 = vsyncadd [#allocation10], %s698
          %s700 = sshll.u32 [#allocation9], 4
          %s701 = int_to_ptr.vmem [resolvable:$true] %s700
          %706 = dma.hbm_to_vmem [thread:$0]  %s4, 3072, %s701, [#allocation10], 256, 256, 16
        $region28: #{generate.1} parent=11 // pred_fallthru
          _
        // Predicated region
        $region29: #{generate.1} parent=11 // pred_check
          %p707 = pneg %p154
        $region30: #{generate.1} parent=11 // pred_check_branch
          %709 = sbr.rel (%p707) target = $region32
        $region31: #{generate.1} parent=11 // pred_region
          %s711 = ssub.s32 768, 768
          %712 = vsyncadd [#allocation10], %s711
          %s713 = sshll.u32 [#allocation11], 4
          %s714 = int_to_ptr.vmem [resolvable:$true] %s713
          %719 = dma.hbm_to_vmem [thread:$0]  %s5, 768, %s714, [#allocation10], 128, 128, 8
        $region32: #{generate.1} parent=11 // pred_fallthru
          _
        // Predicated region
        $region33: #{generate.1} parent=11 // pred_check
          %p720 = pneg %p175
        $region34: #{generate.1} parent=11 // pred_check_branch
          %722 = sbr.rel (%p720) target = $region36
        $region35: #{generate.1} parent=11 // pred_region
          %s724 = ssub.s32 15360, 15360
          %725 = vsyncadd [#allocation13], %s724
          %s726 = sshll.u32 [#allocation12], 4
          %s727 = int_to_ptr.vmem [resolvable:$true] %s726
          %732 = dma.hbm_to_vmem [thread:$0]  %s6, 15360, %s727, [#allocation13], 256, 256, 16
        $region36: #{generate.1} parent=11 // pred_fallthru
          _
        // Predicated region
        $region37: #{generate.1} parent=11 // pred_check
          %p733 = pneg %p196
        $region38: #{generate.1} parent=11 // pred_check_branch
          %735 = sbr.rel (%p733) target = $region40
        $region39: #{generate.1} parent=11 // pred_region
          _
        $region40: #{generate.1} parent=11 // pred_fallthru
          _
        // Predicated region
        $region41: #{generate.1} parent=11 // pred_check
          %p736 = pneg %p217
        $region42: #{generate.1} parent=11 // pred_check_branch
          %738 = sbr.rel (%p736) target = $region44
        $region43: #{generate.1} parent=11 // pred_region
          %s740 = ssub.s32 5120, 5120
          %741 = vsyncadd [#allocation13], %s740
          %s742 = sshll.u32 [#allocation14], 4
          %s743 = int_to_ptr.vmem [resolvable:$true] %s742
          %748 = dma.hbm_to_vmem [thread:$0]  %s8, 5120, %s743, [#allocation13], 256, 256, 16
        $region44: #{generate.1} parent=11 // pred_fallthru
          _
        // Predicated region
        $region45: #{generate.1} parent=11 // pred_check
          %p749 = pneg %p238
        $region46: #{generate.1} parent=11 // pred_check_branch
          %751 = sbr.rel (%p749) target = $region48
        $region47: #{generate.1} parent=11 // pred_region
          %s753 = ssub.s32 7680, 7680
          %754 = vsyncadd [#allocation16], %s753
          %s755 = sshll.u32 [#allocation15], 4
          %s756 = int_to_ptr.vmem [resolvable:$true] %s755
          %761 = dma.hbm_to_vmem [thread:$0]  %s9, 7680, %s756, [#allocation16], 384, 384, 24
        $region48: #{generate.1} parent=11 // pred_fallthru
          _
        // Predicated region
        $region49: #{generate.1} parent=11 // pred_check
          %p762 = pneg %p259
        $region50: #{generate.1} parent=11 // pred_check_branch
          %764 = sbr.rel (%p762) target = $region52
        $region51: #{generate.1} parent=11 // pred_region
          %s766 = ssub.s32 1152, 1152
          %767 = vsyncadd [#allocation16], %s766
          %s768 = sshll.u32 [#allocation17], 4
          %s769 = int_to_ptr.vmem [resolvable:$true] %s768
          %774 = dma.hbm_to_vmem [thread:$0]  %s10, 1152, %s769, [#allocation16], 128, 128, 8
        $region52: #{generate.1} parent=11 // pred_fallthru
          _
        // Predicated region
        $region53: #{generate.1} parent=11 // pred_check
          %p775 = pneg %p280
        $region54: #{generate.1} parent=11 // pred_check_branch
          %777 = sbr.rel (%p775) target = $region56
        $region55: #{generate.1} parent=11 // pred_region
          %s779 = ssub.s32 27648, 27648
          %780 = vsyncadd [#allocation19], %s779
          %s781 = sshll.u32 [#allocation18], 4
          %s782 = int_to_ptr.vmem [resolvable:$true] %s781
          %787 = dma.hbm_to_vmem [thread:$0]  %s11, 27648, %s782, [#allocation19], 256, 256, 16
        $region56: #{generate.1} parent=11 // pred_fallthru
          _
        // Predicated region
        $region57: #{generate.1} parent=11 // pred_check
          %p788 = pneg %p301
        $region58: #{generate.1} parent=11 // pred_check_branch
          %790 = sbr.rel (%p788) target = $region60
        $region59: #{generate.1} parent=11 // pred_region
          _
        $region60: #{generate.1} parent=11 // pred_fallthru
          _
        // Predicated region
        $region61: #{generate.1} parent=11 // pred_check
          %p791 = pneg %p322
        $region62: #{generate.1} parent=11 // pred_check_branch
          %793 = sbr.rel (%p791) target = $region64
        $region63: #{generate.1} parent=11 // pred_region
          %s795 = ssub.s32 4608, 4608
          %796 = vsyncadd [#allocation19], %s795
          %s797 = sshll.u32 [#allocation20], 4
          %s798 = int_to_ptr.vmem [resolvable:$true] %s797
          %803 = dma.hbm_to_vmem [thread:$0]  %s13, 4608, %s798, [#allocation19], 256, 256, 16
        $region64: #{generate.1} parent=11 // pred_fallthru
          _
        // Predicated region
        $region65: #{generate.1} parent=11 // pred_check
          %p804 = pneg %p343
        $region66: #{generate.1} parent=11 // pred_check_branch
          %806 = sbr.rel (%p804) target = $region68
        $region67: #{generate.1} parent=11 // pred_region
          %s808 = ssub.s32 6912, 6912
          %809 = vsyncadd [#allocation22], %s808
          %s810 = sshll.u32 [#allocation21], 4
          %s811 = int_to_ptr.vmem [resolvable:$true] %s810
          %816 = dma.hbm_to_vmem [thread:$0]  %s14, 6912, %s811, [#allocation22], 384, 384, 24
        $region68: #{generate.1} parent=11 // pred_fallthru
          _
        // Predicated region
        $region69: #{generate.1} parent=11 // pred_check
          %p817 = pneg %p364
        $region70: #{generate.1} parent=11 // pred_check_branch
          %819 = sbr.rel (%p817) target = $region72
        $region71: #{generate.1} parent=11 // pred_region
          %s821 = ssub.s32 1920, 1920
          %822 = vsyncadd [#allocation22], %s821
          %s823 = sshll.u32 [#allocation23], 4
          %s824 = int_to_ptr.vmem [resolvable:$true] %s823
          %829 = dma.hbm_to_vmem [thread:$0]  %s15, 1920, %s824, [#allocation22], 128, 128, 8
        $region72: #{generate.1} parent=11 // pred_fallthru
          _
        // Predicated region
        $region73: #{generate.1} parent=11 // pred_check
          %p830 = pneg %p385
        $region74: #{generate.1} parent=11 // pred_check_branch
          %832 = sbr.rel (%p830) target = $region76
        $region75: #{generate.1} parent=11 // pred_region
          %s834 = ssub.s32 26112, 26112
          %835 = vsyncadd [#allocation25], %s834
          %s836 = sshll.u32 [#allocation24], 4
          %s837 = int_to_ptr.vmem [resolvable:$true] %s836
          %842 = dma.hbm_to_vmem [thread:$0]  %s16, 26112, %s837, [#allocation25], 256, 256, 16
        $region76: #{generate.1} parent=11 // pred_fallthru
          _
        // Predicated region
        $region77: #{generate.1} parent=11 // pred_check
          %p843 = pneg %p406
        $region78: #{generate.1} parent=11 // pred_check_branch
          %845 = sbr.rel (%p843) target = $region80
        $region79: #{generate.1} parent=11 // pred_region
          _
        $region80: #{generate.1} parent=11 // pred_fallthru
          _
        // Predicated region
        $region81: #{generate.1} parent=11 // pred_check
          %p846 = pneg %p427
        $region82: #{generate.1} parent=11 // pred_check_branch
          %848 = sbr.rel (%p846) target = $region84
        $region83: #{generate.1} parent=11 // pred_region
          %s850 = ssub.s32 4352, 4352
          %851 = vsyncadd [#allocation25], %s850
          %s852 = sshll.u32 [#allocation26], 4
          %s853 = int_to_ptr.vmem [resolvable:$true] %s852
          %858 = dma.hbm_to_vmem [thread:$0]  %s18, 4352, %s853, [#allocation25], 256, 256, 16
        $region84: #{generate.1} parent=11 // pred_fallthru
          _
        // Predicated region
        $region85: #{generate.1} parent=11 // pred_check
          %p859 = pneg %p448
        $region86: #{generate.1} parent=11 // pred_check_branch
          %861 = sbr.rel (%p859) target = $region88
        $region87: #{generate.1} parent=11 // pred_region
          %s863 = ssub.s32 4352, 4352
          %864 = vsyncadd [#allocation28], %s863
          %s865 = sshll.u32 [#allocation27], 4
          %s866 = int_to_ptr.vmem [resolvable:$true] %s865
          %871 = dma.hbm_to_vmem [thread:$0]  %s19, 4352, %s866, [#allocation28], 256, 256, 16
        $region88: #{generate.1} parent=11 // pred_fallthru
          _
        // Predicated region
        $region89: #{generate.1} parent=11 // pred_check
          %p872 = pneg %p469
        $region90: #{generate.1} parent=11 // pred_check_branch
          %874 = sbr.rel (%p872) target = $region92
        $region91: #{generate.1} parent=11 // pred_region
          %s876 = ssub.s32 1920, 1920
          %877 = vsyncadd [#allocation28], %s876
          %s878 = sshll.u32 [#allocation29], 4
          %s879 = int_to_ptr.vmem [resolvable:$true] %s878
          %884 = dma.hbm_to_vmem [thread:$0]  %s20, 1920, %s879, [#allocation28], 128, 128, 8
        $region92: #{generate.1} parent=11 // pred_fallthru
          _
        // Predicated region
        $region93: #{generate.1} parent=11 // pred_check
          %p885 = pneg %p490
        $region94: #{generate.1} parent=11 // pred_check_branch
          %887 = sbr.rel (%p885) target = $region96
        $region95: #{generate.1} parent=11 // pred_region
          %s889 = ssub.s32 6528, 6528
          %890 = vsyncadd [#allocation31], %s889
          %s891 = sshll.u32 [#allocation30], 4
          %s892 = int_to_ptr.vmem [resolvable:$true] %s891
          %897 = dma.hbm_to_vmem [thread:$0]  %s21, 6528, %s892, [#allocation31], 128, 128, 8
        $region96: #{generate.1} parent=11 // pred_fallthru
          _
        // Predicated region
        $region97: #{generate.1} parent=11 // pred_check
          %p898 = pneg %p511
        $region98: #{generate.1} parent=11 // pred_check_branch
          %900 = sbr.rel (%p898) target = $region100
        $region99: #{generate.1} parent=11 // pred_region
          _
        $region100: #{generate.1} parent=11 // pred_fallthru
          _
        // Predicated region
        $region101: #{generate.1} parent=11 // pred_check
          %p901 = pneg %p532
        $region102: #{generate.1} parent=11 // pred_check_branch
          %903 = sbr.rel (%p901) target = $region104
        $region103: #{generate.1} parent=11 // pred_region
          _
        $region104: #{generate.1} parent=11 // pred_fallthru
          _
        // Predicated region
        $region105: #{generate.1} parent=11 // pred_check
          %p904 = pneg %p553
        $region106: #{generate.1} parent=11 // pred_check_branch
          %906 = sbr.rel (%p904) target = $region108
        $region107: #{generate.1} parent=11 // pred_region
          %s908 = ssub.s32 2304, 2304
          %909 = vsyncadd [#allocation31], %s908
          %s910 = sshll.u32 [#allocation32], 4
          %s911 = int_to_ptr.vmem [resolvable:$true] %s910
          %916 = dma.hbm_to_vmem [thread:$0]  %s24, 2304, %s911, [#allocation31], 256, 256, 16
        $region108: #{generate.1} parent=11 // pred_fallthru
          _
        // Predicated region
        $region109: #{generate.1} parent=11 // pred_check
          %p917 = pneg %p574
        $region110: #{generate.1} parent=11 // pred_check_branch
          %919 = sbr.rel (%p917) target = $region112
        $region111: #{generate.1} parent=11 // pred_region
          %s921 = ssub.s32 3456, 3456
          %922 = vsyncadd [#allocation34], %s921
          %s923 = sshll.u32 [#allocation33], 4
          %s924 = int_to_ptr.vmem [resolvable:$true] %s923
          %929 = dma.hbm_to_vmem [thread:$0]  %s25, 3456, %s924, [#allocation34], 128, 128, 8
        $region112: #{generate.1} parent=11 // pred_fallthru
          _
        // Predicated region
        $region113: #{generate.1} parent=11 // pred_check
          %p930 = pneg %p595
        $region114: #{generate.1} parent=11 // pred_check_branch
          %932 = sbr.rel (%p930) target = $region116
        $region115: #{generate.1} parent=11 // pred_region
          %s934 = ssub.s32 13056, 13056
          %935 = vsyncadd [#allocation34], %s934
          %s936 = sshll.u32 [#allocation35], 4
          %s937 = int_to_ptr.vmem [resolvable:$true] %s936
          %942 = dma.hbm_to_vmem [thread:$0]  %s26, 13056, %s937, [#allocation34], 256, 256, 16
        $region116: #{generate.1} parent=11 // pred_fallthru
          _
        // Predicated region
        $region117: #{generate.1} parent=11 // pred_check
          %p943 = pneg %p616
        $region118: #{generate.1} parent=11 // pred_check_branch
          %945 = sbr.rel (%p943) target = $region120
        $region119: #{generate.1} parent=11 // pred_region
          _
        $region120: #{generate.1} parent=11 // pred_fallthru
          _
      $region12: #{generate.1} parent=5 // pred_fallthru
        _
      %p946 = scmp.lt.s32.totalorder %s49, 2
      // Predicated region
      $region121: #{generate.1} parent=5 // pred_check
        %p947 = pneg %p946
      $region122: #{generate.1} parent=5 // pred_check_branch
        %949 = sbr.rel (%p947) target = $region124
      $region123: #{generate.1} parent=5 // pred_region
        _
      $region124: #{generate.1} parent=5 // pred_fallthru
        _
      %p950 = scmp.le.s32.totalorder 1, %s49
      %p951 = scmp.lt.s32.totalorder %s49, 3
      %p952 = pnand %p950, %p951
      %p953 = pneg %p952
      // Predicated region
      $region125: #{generate.1} parent=5 // pred_check
        _
      $region126: #{generate.1} parent=5 // pred_check_branch
        %955 = sbr.rel (%p952) target = $region128
      $region127: #{generate.1} parent=5 // pred_region
        %s956 = ssub.s32 %s49, 1
        // Predicated region
        $region129: #{generate.1} parent=127 // pred_check
          %p957 = pneg %p70
        $region130: #{generate.1} parent=127 // pred_check_branch
          %959 = sbr.rel (%p957) target = $region132
        $region131: #{generate.1} parent=127 // pred_region
          %960 = dma.done [#allocation5], 4096
        $region132: #{generate.1} parent=127 // pred_fallthru
          _
        // Predicated region
        $region133: #{generate.1} parent=127 // pred_check
          %p961 = pneg %p91
        $region134: #{generate.1} parent=127 // pred_check_branch
          %963 = sbr.rel (%p961) target = $region136
        $region135: #{generate.1} parent=127 // pred_region
          %964 = dma.done [#allocation7], 128
        $region136: #{generate.1} parent=127 // pred_fallthru
          _
        // Predicated region
        $region137: #{generate.1} parent=127 // pred_check
          %p965 = pneg %p112
        $region138: #{generate.1} parent=127 // pred_check_branch
          %967 = sbr.rel (%p965) target = $region140
        $region139: #{generate.1} parent=127 // pred_region
          %968 = dma.done [#allocation7], 1536
        $region140: #{generate.1} parent=127 // pred_fallthru
          _
        // Predicated region
        $region141: #{generate.1} parent=127 // pred_check
          %p969 = pneg %p133
        $region142: #{generate.1} parent=127 // pred_check_branch
          %971 = sbr.rel (%p969) target = $region144
        $region143: #{generate.1} parent=127 // pred_region
          %972 = dma.done [#allocation10], 3072
        $region144: #{generate.1} parent=127 // pred_fallthru
          _
        // Predicated region
        $region145: #{generate.1} parent=127 // pred_check
          %p973 = pneg %p154
        $region146: #{generate.1} parent=127 // pred_check_branch
          %975 = sbr.rel (%p973) target = $region148
        $region147: #{generate.1} parent=127 // pred_region
          %976 = dma.done [#allocation10], 768
        $region148: #{generate.1} parent=127 // pred_fallthru
          _
        // Predicated region
        $region149: #{generate.1} parent=127 // pred_check
          %p977 = pneg %p175
        $region150: #{generate.1} parent=127 // pred_check_branch
          %979 = sbr.rel (%p977) target = $region152
        $region151: #{generate.1} parent=127 // pred_region
          %980 = dma.done [#allocation13], 15360
        $region152: #{generate.1} parent=127 // pred_fallthru
          _
        // Predicated region
        $region153: #{generate.1} parent=127 // pred_check
          %p981 = pneg %p217
        $region154: #{generate.1} parent=127 // pred_check_branch
          %983 = sbr.rel (%p981) target = $region156
        $region155: #{generate.1} parent=127 // pred_region
          %984 = dma.done [#allocation13], 5120
        $region156: #{generate.1} parent=127 // pred_fallthru
          _
        // Predicated region
        $region157: #{generate.1} parent=127 // pred_check
          %p985 = pneg %p238
        $region158: #{generate.1} parent=127 // pred_check_branch
          %987 = sbr.rel (%p985) target = $region160
        $region159: #{generate.1} parent=127 // pred_region
          %988 = dma.done [#allocation16], 7680
        $region160: #{generate.1} parent=127 // pred_fallthru
          _
        // Predicated region
        $region161: #{generate.1} parent=127 // pred_check
          %p989 = pneg %p259
        $region162: #{generate.1} parent=127 // pred_check_branch
          %991 = sbr.rel (%p989) target = $region164
        $region163: #{generate.1} parent=127 // pred_region
          %992 = dma.done [#allocation16], 1152
        $region164: #{generate.1} parent=127 // pred_fallthru
          _
        // Predicated region
        $region165: #{generate.1} parent=127 // pred_check
          %p993 = pneg %p280
        $region166: #{generate.1} parent=127 // pred_check_branch
          %995 = sbr.rel (%p993) target = $region168
        $region167: #{generate.1} parent=127 // pred_region
          %996 = dma.done [#allocation19], 27648
        $region168: #{generate.1} parent=127 // pred_fallthru
          _
        // Predicated region
        $region169: #{generate.1} parent=127 // pred_check
          %p997 = pneg %p322
        $region170: #{generate.1} parent=127 // pred_check_branch
          %999 = sbr.rel (%p997) target = $region172
        $region171: #{generate.1} parent=127 // pred_region
          %1000 = dma.done [#allocation19], 4608
        $region172: #{generate.1} parent=127 // pred_fallthru
          _
        // Predicated region
        $region173: #{generate.1} parent=127 // pred_check
          %p1001 = pneg %p343
        $region174: #{generate.1} parent=127 // pred_check_branch
          %1003 = sbr.rel (%p1001) target = $region176
        $region175: #{generate.1} parent=127 // pred_region
          %1004 = dma.done [#allocation22], 6912
        $region176: #{generate.1} parent=127 // pred_fallthru
          _
        // Predicated region
        $region177: #{generate.1} parent=127 // pred_check
          %p1005 = pneg %p364
        $region178: #{generate.1} parent=127 // pred_check_branch
          %1007 = sbr.rel (%p1005) target = $region180
        $region179: #{generate.1} parent=127 // pred_region
          %1008 = dma.done [#allocation22], 1920
        $region180: #{generate.1} parent=127 // pred_fallthru
          _
        // Predicated region
        $region181: #{generate.1} parent=127 // pred_check
          %p1009 = pneg %p385
        $region182: #{generate.1} parent=127 // pred_check_branch
          %1011 = sbr.rel (%p1009) target = $region184
        $region183: #{generate.1} parent=127 // pred_region
          %1012 = dma.done [#allocation25], 26112
        $region184: #{generate.1} parent=127 // pred_fallthru
          _
        // Predicated region
        $region185: #{generate.1} parent=127 // pred_check
          %p1013 = pneg %p427
        $region186: #{generate.1} parent=127 // pred_check_branch
          %1015 = sbr.rel (%p1013) target = $region188
        $region187: #{generate.1} parent=127 // pred_region
          %1016 = dma.done [#allocation25], 4352
        $region188: #{generate.1} parent=127 // pred_fallthru
          _
        // Predicated region
        $region189: #{generate.1} parent=127 // pred_check
          %p1017 = pneg %p448
        $region190: #{generate.1} parent=127 // pred_check_branch
          %1019 = sbr.rel (%p1017) target = $region192
        $region191: #{generate.1} parent=127 // pred_region
          %1020 = dma.done [#allocation28], 4352
        $region192: #{generate.1} parent=127 // pred_fallthru
          _
        // Predicated region
        $region193: #{generate.1} parent=127 // pred_check
          %p1021 = pneg %p469
        $region194: #{generate.1} parent=127 // pred_check_branch
          %1023 = sbr.rel (%p1021) target = $region196
        $region195: #{generate.1} parent=127 // pred_region
          %1024 = dma.done [#allocation28], 1920
        $region196: #{generate.1} parent=127 // pred_fallthru
          _
        // Predicated region
        $region197: #{generate.1} parent=127 // pred_check
          %p1025 = pneg %p490
        $region198: #{generate.1} parent=127 // pred_check_branch
          %1027 = sbr.rel (%p1025) target = $region200
        $region199: #{generate.1} parent=127 // pred_region
          %1028 = dma.done [#allocation31], 6528
        $region200: #{generate.1} parent=127 // pred_fallthru
          _
        // Predicated region
        $region201: #{generate.1} parent=127 // pred_check
          %p1029 = pneg %p553
        $region202: #{generate.1} parent=127 // pred_check_branch
          %1031 = sbr.rel (%p1029) target = $region204
        $region203: #{generate.1} parent=127 // pred_region
          %1032 = dma.done [#allocation31], 2304
        $region204: #{generate.1} parent=127 // pred_fallthru
          _
        // Predicated region
        $region205: #{generate.1} parent=127 // pred_check
          %p1033 = pneg %p574
        $region206: #{generate.1} parent=127 // pred_check_branch
          %1035 = sbr.rel (%p1033) target = $region208
        $region207: #{generate.1} parent=127 // pred_region
          %1036 = dma.done [#allocation34], 3456
        $region208: #{generate.1} parent=127 // pred_fallthru
          _
        // Predicated region
        $region209: #{generate.1} parent=127 // pred_check
          %p1037 = pneg %p595
        $region210: #{generate.1} parent=127 // pred_check_branch
          %1039 = sbr.rel (%p1037) target = $region212
        $region211: #{generate.1} parent=127 // pred_region
          %1040 = dma.done [#allocation34], 13056
        $region212: #{generate.1} parent=127 // pred_fallthru
          _
        %p1041 = pneg %p70
        %p1042 = pneg %p67
        %p1043 = pneg %p91
        %p1044 = pneg %p88
        %p1045 = pneg %p112
        %p1046 = pneg %p109
        %p1047 = pneg %p133
        %p1048 = pneg %p130
        %p1049 = pneg %p154
        %p1050 = pneg %p151
        %p1051 = pneg %p175
        %p1052 = pneg %p172
        %p1053 = pneg %p196
        %p1054 = pneg %p193
        %p1055 = pneg %p217
        %p1056 = pneg %p214
        %p1057 = pneg %p238
        %p1058 = pneg %p235
        %p1059 = pneg %p259
        %p1060 = pneg %p256
        %p1061 = pneg %p280
        %p1062 = pneg %p277
        %p1063 = pneg %p301
        %p1064 = pneg %p298
        %p1065 = pneg %p322
        %p1066 = pneg %p319
        %p1067 = pneg %p343
        %p1068 = pneg %p340
        %p1069 = pneg %p364
        %p1070 = pneg %p361
        %p1071 = pneg %p385
        %p1072 = pneg %p382
        %p1073 = pneg %p406
        %p1074 = pneg %p403
        %p1075 = pneg %p427
        %p1076 = pneg %p424
        %p1077 = pneg %p448
        %p1078 = pneg %p445
        %p1079 = pneg %p469
        %p1080 = pneg %p466
        %p1081 = pneg %p490
        %p1082 = pneg %p487
        %p1083 = pneg %p511
        %p1084 = pneg %p508
        %p1085 = pneg %p532
        %p1086 = pneg %p529
        %p1087 = pneg %p553
        %p1088 = pneg %p550
        %p1089 = pneg %p574
        %p1090 = pneg %p571
        %p1091 = pneg %p595
        %p1092 = pneg %p592
        %p1093 = pneg %p616
        %p1094 = pneg %p613
        %p1095 = pneg %p642
        %p1096 = pneg %p639
        %p1097 = scmp.lt.s32.totalorder %s54, 1
        %s1098 = scalar_select %p1097, %s54, 1
        %s1099 = smul.addr %s1098, 18
        %s1100 = smul.addr %s1099, 8
        %s1101 = scalar_lea.vmem %s28, %s1100
        %p1102 = scmp.lt.s32.totalorder %s54, 1
        %s1103 = scalar_select %p1102, %s54, 1
        %s1104 = smul.addr %s1103, 18
        %s1105 = smul.addr %s1104, 8
        %s1106 = scalar_lea.vmem %s28, %s1105
        %v1107 = vld [vmem:[#allocation6] sm:$0x3f]
        %s1108 = smul.u32 %s54, 128
        %s1109 = sld [smem:[#allocation3 + %s1108]]
        %v1110 = vld [vmem:[#allocation4] sm:$0x3f]
        %v1111 = vstv %s1109
        %v1112 = vmul.f32 %v1111, %v1110
        %v1113 = vadd.f32 %v1107, %v1112
        %s1114 = sadd.s32 %s1108, 1
        %s1115 = sld [smem:[#allocation3 + %s1114]]
        %s1116 = scalar_lea.vmem [#allocation4], 8
        %v1117 = vld [vmem:[%s1116] sm:$0x3f]
        %v1118 = vstv %s1115
        %v1119 = vmul.f32 %v1118, %v1117
        %v1120 = vadd.f32 %v1113, %v1119
        %s1121 = sadd.s32 %s1108, 2
        %s1122 = sld [smem:[#allocation3 + %s1121]]
        %s1123 = scalar_lea.vmem [#allocation4], 16
        %v1124 = vld [vmem:[%s1123] sm:$0x3f]
        %v1125 = vstv %s1122
        %v1126 = vmul.f32 %v1125, %v1124
        %v1127 = vadd.f32 %v1120, %v1126
        %s1128 = sadd.s32 %s1108, 3
        %s1129 = sld [smem:[#allocation3 + %s1128]]
        %s1130 = scalar_lea.vmem [#allocation4], 24
        %v1131 = vld [vmem:[%s1130] sm:$0x3f]
        %v1132 = vstv %s1129
        %v1133 = vmul.f32 %v1132, %v1131
        %v1134 = vadd.f32 %v1127, %v1133
        %s1135 = sadd.s32 %s1108, 4
        %s1136 = sld [smem:[#allocation3 + %s1135]]
        %s1137 = scalar_lea.vmem [#allocation4], 32
        %v1138 = vld [vmem:[%s1137] sm:$0x3f]
        %v1139 = vstv %s1136
        %v1140 = vmul.f32 %v1139, %v1138
        %v1141 = vadd.f32 %v1134, %v1140
        %s1142 = sadd.s32 %s1108, 5
        %s1143 = sld [smem:[#allocation3 + %s1142]]
        %s1144 = scalar_lea.vmem [#allocation4], 40
        %v1145 = vld [vmem:[%s1144] sm:$0x3f]
        %v1146 = vstv %s1143
        %v1147 = vmul.f32 %v1146, %v1145
        %v1148 = vadd.f32 %v1141, %v1147
        %s1149 = sadd.s32 %s1108, 6
        %s1150 = sld [smem:[#allocation3 + %s1149]]
        %s1151 = scalar_lea.vmem [#allocation4], 48
        %v1152 = vld [vmem:[%s1151] sm:$0x3f]
        %v1153 = vstv %s1150
        %v1154 = vmul.f32 %v1153, %v1152
        %v1155 = vadd.f32 %v1148, %v1154
        %s1156 = sadd.s32 %s1108, 7
        %s1157 = sld [smem:[#allocation3 + %s1156]]
        %s1158 = scalar_lea.vmem [#allocation4], 56
        %v1159 = vld [vmem:[%s1158] sm:$0x3f]
        %v1160 = vstv %s1157
        %v1161 = vmul.f32 %v1160, %v1159
        %v1162 = vadd.f32 %v1155, %v1161
        %s1163 = sadd.s32 %s1108, 8
        %s1164 = sld [smem:[#allocation3 + %s1163]]
        %s1165 = scalar_lea.vmem [#allocation4], 64
        %v1166 = vld [vmem:[%s1165] sm:$0x3f]
        %v1167 = vstv %s1164
        %v1168 = vmul.f32 %v1167, %v1166
        %v1169 = vadd.f32 %v1162, %v1168
        %s1170 = sadd.s32 %s1108, 9
        %s1171 = sld [smem:[#allocation3 + %s1170]]
        %s1172 = scalar_lea.vmem [#allocation4], 72
        %v1173 = vld [vmem:[%s1172] sm:$0x3f]
        %v1174 = vstv %s1171
        %v1175 = vmul.f32 %v1174, %v1173
        %v1176 = vadd.f32 %v1169, %v1175
        %s1177 = sadd.s32 %s1108, 10
        %s1178 = sld [smem:[#allocation3 + %s1177]]
        %s1179 = scalar_lea.vmem [#allocation4], 80
        %v1180 = vld [vmem:[%s1179] sm:$0x3f]
        %v1181 = vstv %s1178
        %v1182 = vmul.f32 %v1181, %v1180
        %v1183 = vadd.f32 %v1176, %v1182
        %s1184 = sadd.s32 %s1108, 11
        %s1185 = sld [smem:[#allocation3 + %s1184]]
        %s1186 = scalar_lea.vmem [#allocation4], 88
        %v1187 = vld [vmem:[%s1186] sm:$0x3f]
        %v1188 = vstv %s1185
        %v1189 = vmul.f32 %v1188, %v1187
        %v1190 = vadd.f32 %v1183, %v1189
        %s1191 = sadd.s32 %s1108, 12
        %s1192 = sld [smem:[#allocation3 + %s1191]]
        %s1193 = scalar_lea.vmem [#allocation4], 96
        %v1194 = vld [vmem:[%s1193] sm:$0x3f]
        %v1195 = vstv %s1192
        %v1196 = vmul.f32 %v1195, %v1194
        %v1197 = vadd.f32 %v1190, %v1196
        %s1198 = sadd.s32 %s1108, 13
        %s1199 = sld [smem:[#allocation3 + %s1198]]
        %s1200 = scalar_lea.vmem [#allocation4], 104
        %v1201 = vld [vmem:[%s1200] sm:$0x3f]
        %v1202 = vstv %s1199
        %v1203 = vmul.f32 %v1202, %v1201
        %v1204 = vadd.f32 %v1197, %v1203
        %s1205 = sadd.s32 %s1108, 14
        %s1206 = sld [smem:[#allocation3 + %s1205]]
        %s1207 = scalar_lea.vmem [#allocation4], 112
        %v1208 = vld [vmem:[%s1207] sm:$0x3f]
        %v1209 = vstv %s1206
        %v1210 = vmul.f32 %v1209, %v1208
        %v1211 = vadd.f32 %v1204, %v1210
        %s1212 = sadd.s32 %s1108, 15
        %s1213 = sld [smem:[#allocation3 + %s1212]]
        %s1214 = scalar_lea.vmem [#allocation4], 120
        %v1215 = vld [vmem:[%s1214] sm:$0x3f]
        %v1216 = vstv %s1213
        %v1217 = vmul.f32 %v1216, %v1215
        %v1218 = vadd.f32 %v1211, %v1217
        %s1219 = sadd.s32 %s1108, 16
        %s1220 = sld [smem:[#allocation3 + %s1219]]
        %s1221 = scalar_lea.vmem [#allocation4], 128
        %v1222 = vld [vmem:[%s1221] sm:$0x3f]
        %v1223 = vstv %s1220
        %v1224 = vmul.f32 %v1223, %v1222
        %v1225 = vadd.f32 %v1218, %v1224
        %s1226 = sadd.s32 %s1108, 17
        %s1227 = sld [smem:[#allocation3 + %s1226]]
        %s1228 = scalar_lea.vmem [#allocation4], 136
        %v1229 = vld [vmem:[%s1228] sm:$0x3f]
        %v1230 = vstv %s1227
        %v1231 = vmul.f32 %v1230, %v1229
        %v1232 = vadd.f32 %v1225, %v1231
        %s1233 = sadd.s32 %s1108, 18
        %s1234 = sld [smem:[#allocation3 + %s1233]]
        %s1235 = scalar_lea.vmem [#allocation4], 144
        %v1236 = vld [vmem:[%s1235] sm:$0x3f]
        %v1237 = vstv %s1234
        %v1238 = vmul.f32 %v1237, %v1236
        %v1239 = vadd.f32 %v1232, %v1238
        %s1240 = sadd.s32 %s1108, 19
        %s1241 = sld [smem:[#allocation3 + %s1240]]
        %s1242 = scalar_lea.vmem [#allocation4], 152
        %v1243 = vld [vmem:[%s1242] sm:$0x3f]
        %v1244 = vstv %s1241
        %v1245 = vmul.f32 %v1244, %v1243
        %v1246 = vadd.f32 %v1239, %v1245
        %s1247 = sadd.s32 %s1108, 20
        %s1248 = sld [smem:[#allocation3 + %s1247]]
        %s1249 = scalar_lea.vmem [#allocation4], 160
        %v1250 = vld [vmem:[%s1249] sm:$0x3f]
        %v1251 = vstv %s1248
        %v1252 = vmul.f32 %v1251, %v1250
        %v1253 = vadd.f32 %v1246, %v1252
        %s1254 = sadd.s32 %s1108, 21
        %s1255 = sld [smem:[#allocation3 + %s1254]]
        %s1256 = scalar_lea.vmem [#allocation4], 168
        %v1257 = vld [vmem:[%s1256] sm:$0x3f]
        %v1258 = vstv %s1255
        %v1259 = vmul.f32 %v1258, %v1257
        %v1260 = vadd.f32 %v1253, %v1259
        %s1261 = sadd.s32 %s1108, 22
        %s1262 = sld [smem:[#allocation3 + %s1261]]
        %s1263 = scalar_lea.vmem [#allocation4], 176
        %v1264 = vld [vmem:[%s1263] sm:$0x3f]
        %v1265 = vstv %s1262
        %v1266 = vmul.f32 %v1265, %v1264
        %v1267 = vadd.f32 %v1260, %v1266
        %s1268 = sadd.s32 %s1108, 23
        %s1269 = sld [smem:[#allocation3 + %s1268]]
        %s1270 = scalar_lea.vmem [#allocation4], 184
        %v1271 = vld [vmem:[%s1270] sm:$0x3f]
        %v1272 = vstv %s1269
        %v1273 = vmul.f32 %v1272, %v1271
        %v1274 = vadd.f32 %v1267, %v1273
        %s1275 = sadd.s32 %s1108, 24
        %s1276 = sld [smem:[#allocation3 + %s1275]]
        %s1277 = scalar_lea.vmem [#allocation4], 192
        %v1278 = vld [vmem:[%s1277] sm:$0x3f]
        %v1279 = vstv %s1276
        %v1280 = vmul.f32 %v1279, %v1278
        %v1281 = vadd.f32 %v1274, %v1280
        %s1282 = sadd.s32 %s1108, 25
        %s1283 = sld [smem:[#allocation3 + %s1282]]
        %s1284 = scalar_lea.vmem [#allocation4], 200
        %v1285 = vld [vmem:[%s1284] sm:$0x3f]
        %v1286 = vstv %s1283
        %v1287 = vmul.f32 %v1286, %v1285
        %v1288 = vadd.f32 %v1281, %v1287
        %s1289 = sadd.s32 %s1108, 26
        %s1290 = sld [smem:[#allocation3 + %s1289]]
        %s1291 = scalar_lea.vmem [#allocation4], 208
        %v1292 = vld [vmem:[%s1291] sm:$0x3f]
        %v1293 = vstv %s1290
        %v1294 = vmul.f32 %v1293, %v1292
        %v1295 = vadd.f32 %v1288, %v1294
        %s1296 = sadd.s32 %s1108, 27
        %s1297 = sld [smem:[#allocation3 + %s1296]]
        %s1298 = scalar_lea.vmem [#allocation4], 216
        %v1299 = vld [vmem:[%s1298] sm:$0x3f]
        %v1300 = vstv %s1297
        %v1301 = vmul.f32 %v1300, %v1299
        %v1302 = vadd.f32 %v1295, %v1301
        %s1303 = sadd.s32 %s1108, 28
        %s1304 = sld [smem:[#allocation3 + %s1303]]
        %s1305 = scalar_lea.vmem [#allocation4], 224
        %v1306 = vld [vmem:[%s1305] sm:$0x3f]
        %v1307 = vstv %s1304
        %v1308 = vmul.f32 %v1307, %v1306
        %v1309 = vadd.f32 %v1302, %v1308
        %s1310 = sadd.s32 %s1108, 29
        %s1311 = sld [smem:[#allocation3 + %s1310]]
        %s1312 = scalar_lea.vmem [#allocation4], 232
        %v1313 = vld [vmem:[%s1312] sm:$0x3f]
        %v1314 = vstv %s1311
        %v1315 = vmul.f32 %v1314, %v1313
        %v1316 = vadd.f32 %v1309, %v1315
        %s1317 = sadd.s32 %s1108, 30
        %s1318 = sld [smem:[#allocation3 + %s1317]]
        %s1319 = scalar_lea.vmem [#allocation4], 240
        %v1320 = vld [vmem:[%s1319] sm:$0x3f]
        %v1321 = vstv %s1318
        %v1322 = vmul.f32 %v1321, %v1320
        %v1323 = vadd.f32 %v1316, %v1322
        %s1324 = sadd.s32 %s1108, 31
        %s1325 = sld [smem:[#allocation3 + %s1324]]
        %s1326 = scalar_lea.vmem [#allocation4], 248
        %v1327 = vld [vmem:[%s1326] sm:$0x3f]
        %v1328 = vstv %s1325
        %v1329 = vmul.f32 %v1328, %v1327
        %v1330 = vadd.f32 %v1323, %v1329
        %v1331 = vld [vmem:[#allocation8] sm:$0xff]
        %v1332 = vld [vmem:[#allocation8 + $0x8] sm:$0xff]
        %v1333 = vld [vmem:[#allocation8 + $0x10] sm:$0xff]
        %v1334 = vld [vmem:[#allocation8 + $0x18] sm:$0xff]
        %v1335 = vld [vmem:[#allocation8 + $0x20] sm:$0xff]
        %v1336 = vld [vmem:[#allocation8 + $0x28] sm:$0xff]
        %v1337 = vld [vmem:[#allocation8 + $0x30] sm:$0xff]
        %v1338 = vld [vmem:[#allocation8 + $0x38] sm:$0xff]
        %v1339 = vld [vmem:[#allocation8 + $0x40] sm:$0xff]
        %v1340 = vld [vmem:[#allocation8 + $0x48] sm:$0xff]
        %v1341 = vld [vmem:[#allocation8 + $0x50] sm:$0xff]
        %v1342 = vld [vmem:[#allocation8 + $0x58] sm:$0xff]
        %v1343 = vmul.f32 %v1330, %v1330
        %vm1344 = vcmask 785408
        %v1346 = vsel %vm1344, %v1343, 0
        %1348 = vmatprep.subr.mxu0 0.0
        %1349 = vmatpush1.msra.mxu0 %v1331
        %1350 = vmatprep.subr.mxu0 0.0
        %1351 = vmatpush1.msra.mxu0 %v1332
        %1352 = vmatprep.subr.mxu0 0.0
        %1353 = vmatpush1.msra.mxu0 %v1333
        %1354 = vmatprep.subr.mxu0 0.0
        %1355 = vmatpush1.msra.mxu0 %v1334
        %1356 = vmatprep.subr.mxu0 0.0
        %1357 = vmatpush1.msra.mxu0 %v1335
        %1358 = vmatprep.subr.mxu0 0.0
        %1359 = vmatpush1.msra.mxu0 %v1336
        %1360 = vmatprep.subr.mxu0 0.0
        %1361 = vmatpush1.msra.mxu0 %v1337
        %1362 = vmatprep.subr.mxu0 0.0
        %1363 = vmatpush1.msra.mxu0 %v1338
        %1364 = vmatprep.subr.mxu0 0.0
        %1365 = vmatpush1.msra.mxu0 %v1339
        %1366 = vmatprep.subr.mxu0 0.0
        %1367 = vmatpush1.msra.mxu0 %v1340
        %1368 = vmatprep.subr.mxu0 0.0
        %1369 = vmatpush1.msra.mxu0 %v1341
        %1370 = vmatprep.subr.mxu0 0.0
        %1371 = vmatpush1.msra.mxu0 %v1342
        %1372 = vmatprep.subr.mxu0 0.0
        %1373 = vmatpush1.msra.mxu0 0.0
        %1374 = vmatprep.subr.mxu0 0.0
        %1375 = vmatpush1.msra.mxu0 0.0
        %1376 = vmatprep.subr.mxu0 0.0
        %1377 = vmatpush1.msra.mxu0 0.0
        %1378 = vmatprep.subr.mxu0 0.0
        %1379 = vmatpush1.msra.mxu0 0.0
        %1380 = vmatprep.subr.mxu0 0.0
        %1381 = vmatpush1.msra.mxu0 0.0
        %1382 = vmatprep.subr.mxu0 0.0
        %1383 = vmatpush1.msra.mxu0 0.0
        %1384 = vmatprep.subr.mxu0 0.0
        %1385 = vmatpush1.msra.mxu0 0.0
        %1386 = vmatprep.subr.mxu0 0.0
        %1387 = vmatpush1.msra.mxu0 0.0
        %1388 = vmatprep.subr.mxu0 0.0
        %1389 = vmatpush1.msra.mxu0 0.0
        %1390 = vmatprep.subr.mxu0 0.0
        %1391 = vmatpush1.msra.mxu0 0.0
        %1392 = vmatprep.subr.mxu0 0.0
        %1393 = vmatpush1.msra.mxu0 0.0
        %1394 = vmatprep.subr.mxu0 0.0
        %1395 = vmatpush1.msra.mxu0 0.0
        %1396 = vmatprep.subr.mxu0 0.0
        %1397 = vmatpush1.msra.mxu0 0.0
        %1398 = vmatprep.subr.mxu0 0.0
        %1399 = vmatpush1.msra.mxu0 0.0
        %1400 = vmatprep.subr.mxu0 0.0
        %1401 = vmatpush1.msra.mxu0 0.0
        %1402 = vmatprep.subr.mxu0 0.0
        %1403 = vmatpush1.msra.mxu0 0.0
        %1404 = vmatprep.subr.mxu0 0.0
        %1405 = vmatpush1.msra.mxu0 0.0
        %1406 = vmatprep.subr.mxu0 0.0
        %1407 = vmatpush1.msra.mxu0 0.0
        %1408 = vmatprep.subr.mxu0 0.0
        %1409 = vmatpush1.msra.mxu0 0.0
        %1410 = vmatprep.subr.mxu0 0.0
        %1411 = vmatpush1.msra.mxu0 0.0
        %1412 = vmatprep.mubr.f32.mxu0 0.0
        %1413 = vmatmul.mubr.f32.gmra.mrb[0].mxu0 %v1346
        %v1414 = vpop.f32.mrb[0].mxu0
        %v1415 = vadd.f32 1e-08, %v1414
        %v1416 = vpop.f32.mrb[0].mxu0
        %1417 = vdwg.mxu0
        %v1418 = vrsqrt.pop %v1415
        %v1419 = vmul.f32 %v1330, %v1418
        %vm1420 = vcmp.ge.f32.partialorder %v1419, 0.0
        %v1421 = vmul.f32 %v1419, 0.2
        %v1422 = vsel %vm1420, %v1419, %v1421
        %v1423 = vld [vmem:[#allocation9] sm:$0xff]
        %v1424 = vld [vmem:[#allocation9 + $0x8] sm:$0xff]
        %v1425 = vld [vmem:[#allocation9 + $0x10] sm:$0xff]
        %v1426 = vld [vmem:[#allocation9 + $0x18] sm:$0xff]
        %v1427 = vld [vmem:[#allocation9 + $0x20] sm:$0xff]
        %v1428 = vld [vmem:[#allocation9 + $0x28] sm:$0xff]
        %v1429 = vld [vmem:[#allocation9 + $0x30] sm:$0xff]
        %v1430 = vld [vmem:[#allocation9 + $0x38] sm:$0xff]
        %v1431 = vld [vmem:[#allocation9 + $0x40] sm:$0xff]
        %v1432 = vld [vmem:[#allocation9 + $0x48] sm:$0xff]
        %v1433 = vld [vmem:[#allocation9 + $0x50] sm:$0xff]
        %v1434 = vld [vmem:[#allocation9 + $0x58] sm:$0xff]
        %v1435 = vld [vmem:[#allocation9 + $0x60] sm:$0xff]
        %v1436 = vld [vmem:[#allocation9 + $0x68] sm:$0xff]
        %v1437 = vld [vmem:[#allocation9 + $0x70] sm:$0xff]
        %v1438 = vld [vmem:[#allocation9 + $0x78] sm:$0xff]
        %v1439 = vld [vmem:[#allocation9 + $0x80] sm:$0xff]
        %v1440 = vld [vmem:[#allocation9 + $0x88] sm:$0xff]
        %v1441 = vld [vmem:[#allocation9 + $0x90] sm:$0xff]
        %v1442 = vld [vmem:[#allocation9 + $0x98] sm:$0xff]
        %v1443 = vld [vmem:[#allocation9 + $0xa0] sm:$0xff]
        %v1444 = vld [vmem:[#allocation9 + $0xa8] sm:$0xff]
        %v1445 = vld [vmem:[#allocation9 + $0xb0] sm:$0xff]
        %v1446 = vld [vmem:[#allocation9 + $0xb8] sm:$0xff]
        %v1448 = vsel %vm1344, %v1422, 0
        %1450 = vmatprep.subr.mxu0 %v1424
        %1451 = vmatpush1.msra.mxu0 %v1423
        %1452 = vmatprep.subr.mxu0 %v1426
        %1453 = vmatpush1.msra.mxu0 %v1425
        %1454 = vmatprep.subr.mxu0 %v1428
        %1455 = vmatpush1.msra.mxu0 %v1427
        %1456 = vmatprep.subr.mxu0 %v1430
        %1457 = vmatpush1.msra.mxu0 %v1429
        %1458 = vmatprep.subr.mxu0 %v1432
        %1459 = vmatpush1.msra.mxu0 %v1431
        %1460 = vmatprep.subr.mxu0 %v1434
        %1461 = vmatpush1.msra.mxu0 %v1433
        %1462 = vmatprep.subr.mxu0 %v1436
        %1463 = vmatpush1.msra.mxu0 %v1435
        %1464 = vmatprep.subr.mxu0 %v1438
        %1465 = vmatpush1.msra.mxu0 %v1437
        %1466 = vmatprep.subr.mxu0 %v1440
        %1467 = vmatpush1.msra.mxu0 %v1439
        %1468 = vmatprep.subr.mxu0 %v1442
        %1469 = vmatpush1.msra.mxu0 %v1441
        %1470 = vmatprep.subr.mxu0 %v1444
        %1471 = vmatpush1.msra.mxu0 %v1443
        %1472 = vmatprep.subr.mxu0 %v1446
        %1473 = vmatpush1.msra.mxu0 %v1445
        %1474 = vmatprep.subr.mxu0 0.0
        %1475 = vmatpush1.msra.mxu0 0.0
        %1476 = vmatprep.subr.mxu0 0.0
        %1477 = vmatpush1.msra.mxu0 0.0
        %1478 = vmatprep.subr.mxu0 0.0
        %1479 = vmatpush1.msra.mxu0 0.0
        %1480 = vmatprep.subr.mxu0 0.0
        %1481 = vmatpush1.msra.mxu0 0.0
        %1482 = vmatprep.subr.mxu0 0.0
        %1483 = vmatpush1.msra.mxu0 0.0
        %1484 = vmatprep.subr.mxu0 0.0
        %1485 = vmatpush1.msra.mxu0 0.0
        %1486 = vmatprep.subr.mxu0 0.0
        %1487 = vmatpush1.msra.mxu0 0.0
        %1488 = vmatprep.subr.mxu0 0.0
        %1489 = vmatpush1.msra.mxu0 0.0
        %1490 = vmatprep.subr.mxu0 0.0
        %1491 = vmatpush1.msra.mxu0 0.0
        %1492 = vmatprep.subr.mxu0 0.0
        %1493 = vmatpush1.msra.mxu0 0.0
        %1494 = vmatprep.subr.mxu0 0.0
        %1495 = vmatpush1.msra.mxu0 0.0
        %1496 = vmatprep.subr.mxu0 0.0
        %1497 = vmatpush1.msra.mxu0 0.0
        %1498 = vmatprep.subr.mxu0 0.0
        %1499 = vmatpush1.msra.mxu0 0.0
        %1500 = vmatprep.subr.mxu0 0.0
        %1501 = vmatpush1.msra.mxu0 0.0
        %1502 = vmatprep.subr.mxu0 0.0
        %1503 = vmatpush1.msra.mxu0 0.0
        %1504 = vmatprep.subr.mxu0 0.0
        %1505 = vmatpush1.msra.mxu0 0.0
        %1506 = vmatprep.subr.mxu0 0.0
        %1507 = vmatpush1.msra.mxu0 0.0
        %1508 = vmatprep.subr.mxu0 0.0
        %1509 = vmatpush1.msra.mxu0 0.0
        %1510 = vmatprep.subr.mxu0 0.0
        %1511 = vmatpush1.msra.mxu0 0.0
        %1512 = vmatprep.subr.mxu0 0.0
        %1513 = vmatpush1.msra.mxu0 0.0
        %1514 = vmatprep.mubr.f32.mxu0 0.0
        %1515 = vmatmul.mubr.f32.gmra.mrb[0].mxu0 %v1448
        %v1516 = vpop.f32.mrb[0].mxu0
        %v1517 = vadd.f32 0.0, %v1516
        %v1518 = vpop.f32.mrb[0].mxu0
        %v1519 = vadd.f32 0.0, %v1518
        %1520 = vdwg.mxu0
        %v1521 = vld [vmem:[#allocation11] sm:$0xff]
        %v1522 = vld [vmem:[#allocation11 + $0x8] sm:$0x3]
        %vm1523 = vcmask 48128
        %v1525 = vsel %vm1523, %v1521, 0
        %v1528 = vsel %vm1523, %v1522, 0
        %vm1530 = vcmask 1045504
        %v1532 = vsel %vm1530, %v1517, 0
        %v1535 = vsel %vm1530, %v1519, 0
        %1537 = vmatprep.subr.mxu0 %v1535
        %1538 = vmatpush1.msra.mxu0 %v1532
        %1539 = vmatprep.subr.mxu0 0.0
        %1540 = vmatpush1.msra.mxu0 0.0
        %1541 = vmatprep.subr.mxu0 0.0
        %1542 = vmatpush1.msra.mxu0 0.0
        %1543 = vmatprep.subr.mxu0 0.0
        %1544 = vmatpush1.msra.mxu0 0.0
        %1545 = vmatprep.subr.mxu0 0.0
        %1546 = vmatpush1.msra.mxu0 0.0
        %1547 = vmatprep.subr.mxu0 0.0
        %1548 = vmatpush1.msra.mxu0 0.0
        %1549 = vmatprep.subr.mxu0 0.0
        %1550 = vmatpush1.msra.mxu0 0.0
        %1551 = vmatprep.subr.mxu0 0.0
        %1552 = vmatpush1.msra.mxu0 0.0
        %1553 = vmatprep.subr.mxu0 0.0
        %1554 = vmatpush1.msra.mxu0 0.0
        %1555 = vmatprep.subr.mxu0 0.0
        %1556 = vmatpush1.msra.mxu0 0.0
        %1557 = vmatprep.subr.mxu0 0.0
        %1558 = vmatpush1.msra.mxu0 0.0
        %1559 = vmatprep.subr.mxu0 0.0
        %1560 = vmatpush1.msra.mxu0 0.0
        %1561 = vmatprep.subr.mxu0 0.0
        %1562 = vmatpush1.msra.mxu0 0.0
        %1563 = vmatprep.subr.mxu0 0.0
        %1564 = vmatpush1.msra.mxu0 0.0
        %1565 = vmatprep.subr.mxu0 0.0
        %1566 = vmatpush1.msra.mxu0 0.0
        %1567 = vmatprep.subr.mxu0 0.0
        %1568 = vmatpush1.msra.mxu0 0.0
        %1569 = vmatprep.subr.mxu0 0.0
        %1570 = vmatpush1.msra.mxu0 0.0
        %1571 = vmatprep.subr.mxu0 0.0
        %1572 = vmatpush1.msra.mxu0 0.0
        %1573 = vmatprep.subr.mxu0 0.0
        %1574 = vmatpush1.msra.mxu0 0.0
        %1575 = vmatprep.subr.mxu0 0.0
        %1576 = vmatpush1.msra.mxu0 0.0
        %1577 = vmatprep.subr.mxu0 0.0
        %1578 = vmatpush1.msra.mxu0 0.0
        %1579 = vmatprep.subr.mxu0 0.0
        %1580 = vmatpush1.msra.mxu0 0.0
        %1581 = vmatprep.subr.mxu0 0.0
        %1582 = vmatpush1.msra.mxu0 0.0
        %1583 = vmatprep.subr.mxu0 0.0
        %1584 = vmatpush1.msra.mxu0 0.0
        %1585 = vmatprep.subr.mxu0 0.0
        %1586 = vmatpush1.msra.mxu0 0.0
        %1587 = vmatprep.subr.mxu0 0.0
        %1588 = vmatpush1.msra.mxu0 0.0
        %1589 = vmatprep.subr.mxu0 0.0
        %1590 = vmatpush1.msra.mxu0 0.0
        %1591 = vmatprep.subr.mxu0 0.0
        %1592 = vmatpush1.msra.mxu0 0.0
        %1593 = vmatprep.subr.mxu0 0.0
        %1594 = vmatpush1.msra.mxu0 0.0
        %1595 = vmatprep.subr.mxu0 0.0
        %1596 = vmatpush1.msra.mxu0 0.0
        %1597 = vmatprep.subr.mxu0 0.0
        %1598 = vmatpush1.msra.mxu0 0.0
        %1599 = vmatprep.subr.mxu0 0.0
        %1600 = vmatpush1.msra.mxu0 0.0
        %1601 = vmatprep.mubr.f32.mxu0 0.0
        %1602 = vmatmul.mubr.f32.gmra.mrb[0].mxu0 %v1525
        %v1603 = vpop.f32.mrb[0].mxu0
        %v1604 = vadd.f32 0.0, %v1603
        %v1605 = vpop.f32.mrb[0].mxu0
        %v1606 = vadd.f32 0.0, %v1605
        %1607 = vmatprep.mubr.f32.mxu0 0.0
        %1608 = vmatmul.mubr.f32.gmra.mrb[0].mxu0 %v1528
        %v1609 = vpop.f32.mrb[0].mxu0
        %v1610 = vadd.f32 0.0, %v1609
        %v1611 = vpop.f32.mrb[0].mxu0
        %v1612 = vadd.f32 0.0, %v1611
        %1613 = vdwg.mxu0
        %v1614 = vld [vmem:[#allocation12] sm:$0xff]
        %v1615 = vld [vmem:[#allocation12 + $0x8] sm:$0xff]
        %v1616 = vld [vmem:[#allocation12 + $0x10] sm:$0xff]
        %v1617 = vld [vmem:[#allocation12 + $0x18] sm:$0xff]
        %v1618 = vld [vmem:[#allocation12 + $0x20] sm:$0xff]
        %v1619 = vld [vmem:[#allocation12 + $0x28] sm:$0xff]
        %v1620 = vld [vmem:[#allocation12 + $0x30] sm:$0xff]
        %v1621 = vld [vmem:[#allocation12 + $0x38] sm:$0xff]
        %v1622 = vld [vmem:[#allocation12 + $0x40] sm:$0xff]
        %v1623 = vld [vmem:[#allocation12 + $0x48] sm:$0xff]
        %v1624 = vld [vmem:[#allocation12 + $0x50] sm:$0xff]
        %v1625 = vld [vmem:[#allocation12 + $0x58] sm:$0xff]
        %v1626 = vld [vmem:[#allocation12 + $0x60] sm:$0xff]
        %v1627 = vld [vmem:[#allocation12 + $0x68] sm:$0xff]
        %v1628 = vld [vmem:[#allocation12 + $0x70] sm:$0xff]
        %v1629 = vld [vmem:[#allocation12 + $0x78] sm:$0xff]
        %v1630 = vld [vmem:[#allocation12 + $0x80] sm:$0xff]
        %v1631 = vld [vmem:[#allocation12 + $0x88] sm:$0xff]
        %v1632 = vld [vmem:[#allocation12 + $0x90] sm:$0xff]
        %v1633 = vld [vmem:[#allocation12 + $0x98] sm:$0xff]
        %v1634 = vld [vmem:[#allocation12 + $0xa0] sm:$0xff]
        %v1635 = vld [vmem:[#allocation12 + $0xa8] sm:$0xff]
        %v1636 = vld [vmem:[#allocation12 + $0xb0] sm:$0xff]
        %v1637 = vld [vmem:[#allocation12 + $0xb8] sm:$0xff]
        %v1638 = vld [vmem:[#allocation12 + $0xc0] sm:$0xff]
        %v1639 = vld [vmem:[#allocation12 + $0xc8] sm:$0xff]
        %v1640 = vld [vmem:[#allocation12 + $0xd0] sm:$0xff]
        %v1641 = vld [vmem:[#allocation12 + $0xd8] sm:$0xff]
        %v1642 = vld [vmem:[#allocation12 + $0xe0] sm:$0xff]
        %v1643 = vld [vmem:[#allocation12 + $0xe8] sm:$0xff]
        %v1644 = vld [vmem:[#allocation12 + $0xf0] sm:$0xff]
        %v1645 = vld [vmem:[#allocation12 + $0xf8] sm:$0xff]
        %v1646 = vld [vmem:[#allocation12 + $0x100] sm:$0xff]
        %v1647 = vld [vmem:[#allocation12 + $0x108] sm:$0xff]
        %v1648 = vld [vmem:[#allocation12 + $0x110] sm:$0xff]
        %v1649 = vld [vmem:[#allocation12 + $0x118] sm:$0xff]
        %v1650 = vld [vmem:[#allocation12 + $0x120] sm:$0xff]
        %v1651 = vld [vmem:[#allocation12 + $0x128] sm:$0xff]
        %v1652 = vld [vmem:[#allocation12 + $0x130] sm:$0xff]
        %v1653 = vld [vmem:[#allocation12 + $0x138] sm:$0xff]
        %s1654 = scalar_lea.vmem [#allocation11], 16
        %v1655 = vld [vmem:[%s1654] sm:$0xff]
        %v1656 = vld [vmem:[%s1654 + $0x8] sm:$0x3]
        %v1658 = vsel %vm1523, %v1655, 0
        %v1661 = vsel %vm1523, %v1656, 0
        %1663 = vmatprep.subr.mxu0 %v1535
        %1664 = vmatpush1.msra.mxu0 %v1532
        %1665 = vmatprep.subr.mxu0 0.0
        %1666 = vmatpush1.msra.mxu0 0.0
        %1667 = vmatprep.subr.mxu0 0.0
        %1668 = vmatpush1.msra.mxu0 0.0
        %1669 = vmatprep.subr.mxu0 0.0
        %1670 = vmatpush1.msra.mxu0 0.0
        %1671 = vmatprep.subr.mxu0 0.0
        %1672 = vmatpush1.msra.mxu0 0.0
        %1673 = vmatprep.subr.mxu0 0.0
        %1674 = vmatpush1.msra.mxu0 0.0
        %1675 = vmatprep.subr.mxu0 0.0
        %1676 = vmatpush1.msra.mxu0 0.0
        %1677 = vmatprep.subr.mxu0 0.0
        %1678 = vmatpush1.msra.mxu0 0.0
        %1679 = vmatprep.subr.mxu0 0.0
        %1680 = vmatpush1.msra.mxu0 0.0
        %1681 = vmatprep.subr.mxu0 0.0
        %1682 = vmatpush1.msra.mxu0 0.0
        %1683 = vmatprep.subr.mxu0 0.0
        %1684 = vmatpush1.msra.mxu0 0.0
        %1685 = vmatprep.subr.mxu0 0.0
        %1686 = vmatpush1.msra.mxu0 0.0
        %1687 = vmatprep.subr.mxu0 0.0
        %1688 = vmatpush1.msra.mxu0 0.0
        %1689 = vmatprep.subr.mxu0 0.0
        %1690 = vmatpush1.msra.mxu0 0.0
        %1691 = vmatprep.subr.mxu0 0.0
        %1692 = vmatpush1.msra.mxu0 0.0
        %1693 = vmatprep.subr.mxu0 0.0
        %1694 = vmatpush1.msra.mxu0 0.0
        %1695 = vmatprep.subr.mxu0 0.0
        %1696 = vmatpush1.msra.mxu0 0.0
        %1697 = vmatprep.subr.mxu0 0.0
        %1698 = vmatpush1.msra.mxu0 0.0
        %1699 = vmatprep.subr.mxu0 0.0
        %1700 = vmatpush1.msra.mxu0 0.0
        %1701 = vmatprep.subr.mxu0 0.0
        %1702 = vmatpush1.msra.mxu0 0.0
        %1703 = vmatprep.subr.mxu0 0.0
        %1704 = vmatpush1.msra.mxu0 0.0
        %1705 = vmatprep.subr.mxu0 0.0
        %1706 = vmatpush1.msra.mxu0 0.0
        %1707 = vmatprep.subr.mxu0 0.0
        %1708 = vmatpush1.msra.mxu0 0.0
        %1709 = vmatprep.subr.mxu0 0.0
        %1710 = vmatpush1.msra.mxu0 0.0
        %1711 = vmatprep.subr.mxu0 0.0
        %1712 = vmatpush1.msra.mxu0 0.0
        %1713 = vmatprep.subr.mxu0 0.0
        %1714 = vmatpush1.msra.mxu0 0.0
        %1715 = vmatprep.subr.mxu0 0.0
        %1716 = vmatpush1.msra.mxu0 0.0
        %1717 = vmatprep.subr.mxu0 0.0
        %1718 = vmatpush1.msra.mxu0 0.0
        %1719 = vmatprep.subr.mxu0 0.0
        %1720 = vmatpush1.msra.mxu0 0.0
        %1721 = vmatprep.subr.mxu0 0.0
        %1722 = vmatpush1.msra.mxu0 0.0
        %1723 = vmatprep.subr.mxu0 0.0
        %1724 = vmatpush1.msra.mxu0 0.0
        %1725 = vmatprep.subr.mxu0 0.0
        %1726 = vmatpush1.msra.mxu0 0.0
        %1727 = vmatprep.mubr.f32.mxu0 0.0
        %1728 = vmatmul.mubr.f32.gmra.mrb[0].mxu0 %v1658
        %v1729 = vpop.f32.mrb[0].mxu0
        %v1730 = vadd.f32 0.0, %v1729
        %v1731 = vpop.f32.mrb[0].mxu0
        %v1732 = vadd.f32 0.0, %v1731
        %1733 = vmatprep.mubr.f32.mxu0 0.0
        %1734 = vmatmul.mubr.f32.gmra.mrb[0].mxu0 %v1661
        %v1735 = vpop.f32.mrb[0].mxu0
        %v1736 = vadd.f32 0.0, %v1735
        %v1737 = vpop.f32.mrb[0].mxu0
        %v1738 = vadd.f32 0.0, %v1737
        %1739 = vdwg.mxu0
        %s1740 = scalar_lea.vmem [#allocation12], 320
        %v1741 = vld [vmem:[%s1740] sm:$0xff]
        %v1742 = vld [vmem:[%s1740 + $0x8] sm:$0xff]
        %v1743 = vld [vmem:[%s1740 + $0x10] sm:$0xff]
        %v1744 = vld [vmem:[%s1740 + $0x18] sm:$0xff]
        %v1745 = vld [vmem:[%s1740 + $0x20] sm:$0xff]
        %v1746 = vld [vmem:[%s1740 + $0x28] sm:$0xff]
        %v1747 = vld [vmem:[%s1740 + $0x30] sm:$0xff]
        %v1748 = vld [vmem:[%s1740 + $0x38] sm:$0xff]
        %v1749 = vld [vmem:[%s1740 + $0x40] sm:$0xff]
        %v1750 = vld [vmem:[%s1740 + $0x48] sm:$0xff]
        %v1751 = vld [vmem:[%s1740 + $0x50] sm:$0xff]
        %v1752 = vld [vmem:[%s1740 + $0x58] sm:$0xff]
        %v1753 = vld [vmem:[%s1740 + $0x60] sm:$0xff]
        %v1754 = vld [vmem:[%s1740 + $0x68] sm:$0xff]
        %v1755 = vld [vmem:[%s1740 + $0x70] sm:$0xff]
        %v1756 = vld [vmem:[%s1740 + $0x78] sm:$0xff]
        %v1757 = vld [vmem:[%s1740 + $0x80] sm:$0xff]
        %v1758 = vld [vmem:[%s1740 + $0x88] sm:$0xff]
        %v1759 = vld [vmem:[%s1740 + $0x90] sm:$0xff]
        %v1760 = vld [vmem:[%s1740 + $0x98] sm:$0xff]
        %v1761 = vld [vmem:[%s1740 + $0xa0] sm:$0xff]
        %v1762 = vld [vmem:[%s1740 + $0xa8] sm:$0xff]
        %v1763 = vld [vmem:[%s1740 + $0xb0] sm:$0xff]
        %v1764 = vld [vmem:[%s1740 + $0xb8] sm:$0xff]
        %v1765 = vld [vmem:[%s1740 + $0xc0] sm:$0xff]
        %v1766 = vld [vmem:[%s1740 + $0xc8] sm:$0xff]
        %v1767 = vld [vmem:[%s1740 + $0xd0] sm:$0xff]
        %v1768 = vld [vmem:[%s1740 + $0xd8] sm:$0xff]
        %v1769 = vld [vmem:[%s1740 + $0xe0] sm:$0xff]
        %v1770 = vld [vmem:[%s1740 + $0xe8] sm:$0xff]
        %v1771 = vld [vmem:[%s1740 + $0xf0] sm:$0xff]
        %v1772 = vld [vmem:[%s1740 + $0xf8] sm:$0xff]
        %v1773 = vld [vmem:[%s1740 + $0x100] sm:$0xff]
        %v1774 = vld [vmem:[%s1740 + $0x108] sm:$0xff]
        %v1775 = vld [vmem:[%s1740 + $0x110] sm:$0xff]
        %v1776 = vld [vmem:[%s1740 + $0x118] sm:$0xff]
        %v1777 = vld [vmem:[%s1740 + $0x120] sm:$0xff]
        %v1778 = vld [vmem:[%s1740 + $0x128] sm:$0xff]
        %v1779 = vld [vmem:[%s1740 + $0x130] sm:$0xff]
        %v1780 = vld [vmem:[%s1740 + $0x138] sm:$0xff]
        %vm1781 = vcmask 261120
        %v1783 = vsel %vm1781, %v1732, 0
        %v1786 = vsel %vm1781, %v1738, 0
        %1788 = vmatprep.subr.mxu0 %v1742
        %1789 = vmatpush1.msra.mxu0 %v1741
        %1790 = vmatprep.subr.mxu0 %v1744
        %1791 = vmatpush1.msra.mxu0 %v1743
        %1792 = vmatprep.subr.mxu0 %v1746
        %1793 = vmatpush1.msra.mxu0 %v1745
        %1794 = vmatprep.subr.mxu0 %v1748
        %1795 = vmatpush1.msra.mxu0 %v1747
        %1796 = vmatprep.subr.mxu0 %v1750
        %1797 = vmatpush1.msra.mxu0 %v1749
        %1798 = vmatprep.subr.mxu0 %v1752
        %1799 = vmatpush1.msra.mxu0 %v1751
        %1800 = vmatprep.subr.mxu0 %v1754
        %1801 = vmatpush1.msra.mxu0 %v1753
        %1802 = vmatprep.subr.mxu0 %v1756
        %1803 = vmatpush1.msra.mxu0 %v1755
        %1804 = vmatprep.subr.mxu0 %v1758
        %1805 = vmatpush1.msra.mxu0 %v1757
        %1806 = vmatprep.subr.mxu0 %v1760
        %1807 = vmatpush1.msra.mxu0 %v1759
        %1808 = vmatprep.subr.mxu0 %v1762
        %1809 = vmatpush1.msra.mxu0 %v1761
        %1810 = vmatprep.subr.mxu0 %v1764
        %1811 = vmatpush1.msra.mxu0 %v1763
        %1812 = vmatprep.subr.mxu0 %v1766
        %1813 = vmatpush1.msra.mxu0 %v1765
        %1814 = vmatprep.subr.mxu0 %v1768
        %1815 = vmatpush1.msra.mxu0 %v1767
        %1816 = vmatprep.subr.mxu0 %v1770
        %1817 = vmatpush1.msra.mxu0 %v1769
        %1818 = vmatprep.subr.mxu0 %v1772
        %1819 = vmatpush1.msra.mxu0 %v1771
        %1820 = vmatprep.subr.mxu0 %v1774
        %1821 = vmatpush1.msra.mxu0 %v1773
        %1822 = vmatprep.subr.mxu0 %v1776
        %1823 = vmatpush1.msra.mxu0 %v1775
        %1824 = vmatprep.subr.mxu0 %v1778
        %1825 = vmatpush1.msra.mxu0 %v1777
        %1826 = vmatprep.subr.mxu0 %v1780
        %1827 = vmatpush1.msra.mxu0 %v1779
        %1828 = vmatprep.subr.mxu0 0.0
        %1829 = vmatpush1.msra.mxu0 0.0
        %1830 = vmatprep.subr.mxu0 0.0
        %1831 = vmatpush1.msra.mxu0 0.0
        %1832 = vmatprep.subr.mxu0 0.0
        %1833 = vmatpush1.msra.mxu0 0.0
        %1834 = vmatprep.subr.mxu0 0.0
        %1835 = vmatpush1.msra.mxu0 0.0
        %1836 = vmatprep.subr.mxu0 0.0
        %1837 = vmatpush1.msra.mxu0 0.0
        %1838 = vmatprep.subr.mxu0 0.0
        %1839 = vmatpush1.msra.mxu0 0.0
        %1840 = vmatprep.subr.mxu0 0.0
        %1841 = vmatpush1.msra.mxu0 0.0
        %1842 = vmatprep.subr.mxu0 0.0
        %1843 = vmatpush1.msra.mxu0 0.0
        %1844 = vmatprep.subr.mxu0 0.0
        %1845 = vmatpush1.msra.mxu0 0.0
        %1846 = vmatprep.subr.mxu0 0.0
        %1847 = vmatpush1.msra.mxu0 0.0
        %1848 = vmatprep.subr.mxu0 0.0
        %1849 = vmatpush1.msra.mxu0 0.0
        %1850 = vmatprep.subr.mxu0 0.0
        %1851 = vmatpush1.msra.mxu0 0.0
        %1852 = vmatprep.mubr.f32.mxu0 %v1783
        %1853 = vmatmul.mubr.f32.gmra.mrb[0].mxu0 %v1730
        %v1854 = vpop.f32.mrb[0].mxu0
        %v1855 = vadd.f32 0.0, %v1854
        %v1856 = vpop.f32.mrb[0].mxu0
        %v1857 = vadd.f32 0.0, %v1856
        %1858 = vmatprep.mubr.f32.mxu0 %v1786
        %1859 = vmatmul.mubr.f32.gmra.mrb[0].mxu0 %v1736
        %v1860 = vpop.f32.mrb[0].mxu0
        %v1861 = vadd.f32 0.0, %v1860
        %v1862 = vpop.f32.mrb[0].mxu0
        %v1863 = vadd.f32 0.0, %v1862
        %1864 = vdwg.mxu0
        %v1866 = vsel %vm1781, %v1606, 0
        %v1869 = vsel %vm1781, %v1612, 0
        %1871 = vmatprep.subr.mxu0 %v1615
        %1872 = vmatpush1.msra.mxu0 %v1614
        %1873 = vmatprep.subr.mxu0 %v1617
        %1874 = vmatpush1.msra.mxu0 %v1616
        %1875 = vmatprep.subr.mxu0 %v1619
        %1876 = vmatpush1.msra.mxu0 %v1618
        %1877 = vmatprep.subr.mxu0 %v1621
        %1878 = vmatpush1.msra.mxu0 %v1620
        %1879 = vmatprep.subr.mxu0 %v1623
        %1880 = vmatpush1.msra.mxu0 %v1622
        %1881 = vmatprep.subr.mxu0 %v1625
        %1882 = vmatpush1.msra.mxu0 %v1624
        %1883 = vmatprep.subr.mxu0 %v1627
        %1884 = vmatpush1.msra.mxu0 %v1626
        %1885 = vmatprep.subr.mxu0 %v1629
        %1886 = vmatpush1.msra.mxu0 %v1628
        %1887 = vmatprep.subr.mxu0 %v1631
        %1888 = vmatpush1.msra.mxu0 %v1630
        %1889 = vmatprep.subr.mxu0 %v1633
        %1890 = vmatpush1.msra.mxu0 %v1632
        %1891 = vmatprep.subr.mxu0 %v1635
        %1892 = vmatpush1.msra.mxu0 %v1634
        %1893 = vmatprep.subr.mxu0 %v1637
        %1894 = vmatpush1.msra.mxu0 %v1636
        %1895 = vmatprep.subr.mxu0 %v1639
        %1896 = vmatpush1.msra.mxu0 %v1638
        %1897 = vmatprep.subr.mxu0 %v1641
        %1898 = vmatpush1.msra.mxu0 %v1640
        %1899 = vmatprep.subr.mxu0 %v1643
        %1900 = vmatpush1.msra.mxu0 %v1642
        %1901 = vmatprep.subr.mxu0 %v1645
        %1902 = vmatpush1.msra.mxu0 %v1644
        %1903 = vmatprep.subr.mxu0 %v1647
        %1904 = vmatpush1.msra.mxu0 %v1646
        %1905 = vmatprep.subr.mxu0 %v1649
        %1906 = vmatpush1.msra.mxu0 %v1648
        %1907 = vmatprep.subr.mxu0 %v1651
        %1908 = vmatpush1.msra.mxu0 %v1650
        %1909 = vmatprep.subr.mxu0 %v1653
        %1910 = vmatpush1.msra.mxu0 %v1652
        %1911 = vmatprep.subr.mxu0 0.0
        %1912 = vmatpush1.msra.mxu0 0.0
        %1913 = vmatprep.subr.mxu0 0.0
        %1914 = vmatpush1.msra.mxu0 0.0
        %1915 = vmatprep.subr.mxu0 0.0
        %1916 = vmatpush1.msra.mxu0 0.0
        %1917 = vmatprep.subr.mxu0 0.0
        %1918 = vmatpush1.msra.mxu0 0.0
        %1919 = vmatprep.subr.mxu0 0.0
        %1920 = vmatpush1.msra.mxu0 0.0
        %1921 = vmatprep.subr.mxu0 0.0
        %1922 = vmatpush1.msra.mxu0 0.0
        %1923 = vmatprep.subr.mxu0 0.0
        %1924 = vmatpush1.msra.mxu0 0.0
        %1925 = vmatprep.subr.mxu0 0.0
        %1926 = vmatpush1.msra.mxu0 0.0
        %1927 = vmatprep.subr.mxu0 0.0
        %1928 = vmatpush1.msra.mxu0 0.0
        %1929 = vmatprep.subr.mxu0 0.0
        %1930 = vmatpush1.msra.mxu0 0.0
        %1931 = vmatprep.subr.mxu0 0.0
        %1932 = vmatpush1.msra.mxu0 0.0
        %1933 = vmatprep.subr.mxu0 0.0
        %1934 = vmatpush1.msra.mxu0 0.0
        %1935 = vmatprep.mubr.f32.mxu0 %v1866
        %1936 = vmatmul.mubr.f32.gmra.mrb[0].mxu0 %v1604
        %v1937 = vpop.f32.mrb[0].mxu0
        %v1938 = vadd.f32 %v1855, %v1937
        %v1939 = vpop.f32.mrb[0].mxu0
        %v1940 = vadd.f32 %v1857, %v1939
        %1941 = vmatprep.mubr.f32.mxu0 %v1869
        %1942 = vmatmul.mubr.f32.gmra.mrb[0].mxu0 %v1610
        %v1943 = vpop.f32.mrb[0].mxu0
        %v1944 = vadd.f32 %v1861, %v1943
        %v1945 = vpop.f32.mrb[0].mxu0
        %v1946 = vadd.f32 %v1863, %v1945
        %1947 = vdwg.mxu0
        %s1948 = scalar_lea.vmem [#allocation11], 32
        %v1949 = vld [vmem:[%s1948] sm:$0xff]
        %v1950 = vld [vmem:[%s1948 + $0x8] sm:$0x3]
        %v1952 = vsel %vm1523, %v1949, 0
        %v1955 = vsel %vm1523, %v1950, 0
        %1957 = vmatprep.subr.mxu0 %v1535
        %1958 = vmatpush1.msra.mxu0 %v1532
        %1959 = vmatprep.subr.mxu0 0.0
        %1960 = vmatpush1.msra.mxu0 0.0
        %1961 = vmatprep.subr.mxu0 0.0
        %1962 = vmatpush1.msra.mxu0 0.0
        %1963 = vmatprep.subr.mxu0 0.0
        %1964 = vmatpush1.msra.mxu0 0.0
        %1965 = vmatprep.subr.mxu0 0.0
        %1966 = vmatpush1.msra.mxu0 0.0
        %1967 = vmatprep.subr.mxu0 0.0
        %1968 = vmatpush1.msra.mxu0 0.0
        %1969 = vmatprep.subr.mxu0 0.0
        %1970 = vmatpush1.msra.mxu0 0.0
        %1971 = vmatprep.subr.mxu0 0.0
        %1972 = vmatpush1.msra.mxu0 0.0
        %1973 = vmatprep.subr.mxu0 0.0
        %1974 = vmatpush1.msra.mxu0 0.0
        %1975 = vmatprep.subr.mxu0 0.0
        %1976 = vmatpush1.msra.mxu0 0.0
        %1977 = vmatprep.subr.mxu0 0.0
        %1978 = vmatpush1.msra.mxu0 0.0
        %1979 = vmatprep.subr.mxu0 0.0
        %1980 = vmatpush1.msra.mxu0 0.0
        %1981 = vmatprep.subr.mxu0 0.0
        %1982 = vmatpush1.msra.mxu0 0.0
        %1983 = vmatprep.subr.mxu0 0.0
        %1984 = vmatpush1.msra.mxu0 0.0
        %1985 = vmatprep.subr.mxu0 0.0
        %1986 = vmatpush1.msra.mxu0 0.0
        %1987 = vmatprep.subr.mxu0 0.0
        %1988 = vmatpush1.msra.mxu0 0.0
        %1989 = vmatprep.subr.mxu0 0.0
        %1990 = vmatpush1.msra.mxu0 0.0
        %1991 = vmatprep.subr.mxu0 0.0
        %1992 = vmatpush1.msra.mxu0 0.0
        %1993 = vmatprep.subr.mxu0 0.0
        %1994 = vmatpush1.msra.mxu0 0.0
        %1995 = vmatprep.subr.mxu0 0.0
        %1996 = vmatpush1.msra.mxu0 0.0
        %1997 = vmatprep.subr.mxu0 0.0
        %1998 = vmatpush1.msra.mxu0 0.0
        %1999 = vmatprep.subr.mxu0 0.0
        %2000 = vmatpush1.msra.mxu0 0.0
        %2001 = vmatprep.subr.mxu0 0.0
        %2002 = vmatpush1.msra.mxu0 0.0
        %2003 = vmatprep.subr.mxu0 0.0
        %2004 = vmatpush1.msra.mxu0 0.0
        %2005 = vmatprep.subr.mxu0 0.0
        %2006 = vmatpush1.msra.mxu0 0.0
        %2007 = vmatprep.subr.mxu0 0.0
        %2008 = vmatpush1.msra.mxu0 0.0
        %2009 = vmatprep.subr.mxu0 0.0
        %2010 = vmatpush1.msra.mxu0 0.0
        %2011 = vmatprep.subr.mxu0 0.0
        %2012 = vmatpush1.msra.mxu0 0.0
        %2013 = vmatprep.subr.mxu0 0.0
        %2014 = vmatpush1.msra.mxu0 0.0
        %2015 = vmatprep.subr.mxu0 0.0
        %2016 = vmatpush1.msra.mxu0 0.0
        %2017 = vmatprep.subr.mxu0 0.0
        %2018 = vmatpush1.msra.mxu0 0.0
        %2019 = vmatprep.subr.mxu0 0.0
        %2020 = vmatpush1.msra.mxu0 0.0
        %2021 = vmatprep.mubr.f32.mxu0 0.0
        %2022 = vmatmul.mubr.f32.gmra.mrb[0].mxu0 %v1952
        %v2023 = vpop.f32.mrb[0].mxu0
        %v2024 = vadd.f32 0.0, %v2023
        %v2025 = vpop.f32.mrb[0].mxu0
        %v2026 = vadd.f32 0.0, %v2025
        %2027 = vmatprep.mubr.f32.mxu0 0.0
        %2028 = vmatmul.mubr.f32.gmra.mrb[0].mxu0 %v1955
        %v2029 = vpop.f32.mrb[0].mxu0
        %v2030 = vadd.f32 0.0, %v2029
        %v2031 = vpop.f32.mrb[0].mxu0
        %v2032 = vadd.f32 0.0, %v2031
        %2033 = vdwg.mxu0
        %s2034 = scalar_lea.vmem [#allocation12], 640
        %v2035 = vld [vmem:[%s2034] sm:$0xff]
        %v2036 = vld [vmem:[%s2034 + $0x8] sm:$0xff]
        %v2037 = vld [vmem:[%s2034 + $0x10] sm:$0xff]
        %v2038 = vld [vmem:[%s2034 + $0x18] sm:$0xff]
        %v2039 = vld [vmem:[%s2034 + $0x20] sm:$0xff]
        %v2040 = vld [vmem:[%s2034 + $0x28] sm:$0xff]
        %v2041 = vld [vmem:[%s2034 + $0x30] sm:$0xff]
        %v2042 = vld [vmem:[%s2034 + $0x38] sm:$0xff]
        %v2043 = vld [vmem:[%s2034 + $0x40] sm:$0xff]
        %v2044 = vld [vmem:[%s2034 + $0x48] sm:$0xff]
        %v2045 = vld [vmem:[%s2034 + $0x50] sm:$0xff]
        %v2046 = vld [vmem:[%s2034 + $0x58] sm:$0xff]
        %v2047 = vld [vmem:[%s2034 + $0x60] sm:$0xff]
        %v2048 = vld [vmem:[%s2034 + $0x68] sm:$0xff]
        %v2049 = vld [vmem:[%s2034 + $0x70] sm:$0xff]
        %v2050 = vld [vmem:[%s2034 + $0x78] sm:$0xff]
        %v2051 = vld [vmem:[%s2034 + $0x80] sm:$0xff]
        %v2052 = vld [vmem:[%s2034 + $0x88] sm:$0xff]
        %v2053 = vld [vmem:[%s2034 + $0x90] sm:$0xff]
        %v2054 = vld [vmem:[%s2034 + $0x98] sm:$0xff]
        %v2055 = vld [vmem:[%s2034 + $0xa0] sm:$0xff]
        %v2056 = vld [vmem:[%s2034 + $0xa8] sm:$0xff]
        %v2057 = vld [vmem:[%s2034 + $0xb0] sm:$0xff]
        %v2058 = vld [vmem:[%s2034 + $0xb8] sm:$0xff]
        %v2059 = vld [vmem:[%s2034 + $0xc0] sm:$0xff]
        %v2060 = vld [vmem:[%s2034 + $0xc8] sm:$0xff]
        %v2061 = vld [vmem:[%s2034 + $0xd0] sm:$0xff]
        %v2062 = vld [vmem:[%s2034 + $0xd8] sm:$0xff]
        %v2063 = vld [vmem:[%s2034 + $0xe0] sm:$0xff]
        %v2064 = vld [vmem:[%s2034 + $0xe8] sm:$0xff]
        %v2065 = vld [vmem:[%s2034 + $0xf0] sm:$0xff]
        %v2066 = vld [vmem:[%s2034 + $0xf8] sm:$0xff]
        %v2067 = vld [vmem:[%s2034 + $0x100] sm:$0xff]
        %v2068 = vld [vmem:[%s2034 + $0x108] sm:$0xff]
        %v2069 = vld [vmem:[%s2034 + $0x110] sm:$0xff]
        %v2070 = vld [vmem:[%s2034 + $0x118] sm:$0xff]
        %v2071 = vld [vmem:[%s2034 + $0x120] sm:$0xff]
        %v2072 = vld [vmem:[%s2034 + $0x128] sm:$0xff]
        %v2073 = vld [vmem:[%s2034 + $0x130] sm:$0xff]
        %v2074 = vld [vmem:[%s2034 + $0x138] sm:$0xff]
        %v2076 = vsel %vm1781, %v2026, 0
        %v2079 = vsel %vm1781, %v2032, 0
        %2081 = vmatprep.subr.mxu0 %v2036
        %2082 = vmatpush1.msra.mxu0 %v2035
        %2083 = vmatprep.subr.mxu0 %v2038
        %2084 = vmatpush1.msra.mxu0 %v2037
        %2085 = vmatprep.subr.mxu0 %v2040
        %2086 = vmatpush1.msra.mxu0 %v2039
        %2087 = vmatprep.subr.mxu0 %v2042
        %2088 = vmatpush1.msra.mxu0 %v2041
        %2089 = vmatprep.subr.mxu0 %v2044
        %2090 = vmatpush1.msra.mxu0 %v2043
        %2091 = vmatprep.subr.mxu0 %v2046
        %2092 = vmatpush1.msra.mxu0 %v2045
        %2093 = vmatprep.subr.mxu0 %v2048
        %2094 = vmatpush1.msra.mxu0 %v2047
        %2095 = vmatprep.subr.mxu0 %v2050
        %2096 = vmatpush1.msra.mxu0 %v2049
        %2097 = vmatprep.subr.mxu0 %v2052
        %2098 = vmatpush1.msra.mxu0 %v2051
        %2099 = vmatprep.subr.mxu0 %v2054
        %2100 = vmatpush1.msra.mxu0 %v2053
        %2101 = vmatprep.subr.mxu0 %v2056
        %2102 = vmatpush1.msra.mxu0 %v2055
        %2103 = vmatprep.subr.mxu0 %v2058
        %2104 = vmatpush1.msra.mxu0 %v2057
        %2105 = vmatprep.subr.mxu0 %v2060
        %2106 = vmatpush1.msra.mxu0 %v2059
        %2107 = vmatprep.subr.mxu0 %v2062
        %2108 = vmatpush1.msra.mxu0 %v2061
        %2109 = vmatprep.subr.mxu0 %v2064
        %2110 = vmatpush1.msra.mxu0 %v2063
        %2111 = vmatprep.subr.mxu0 %v2066
        %2112 = vmatpush1.msra.mxu0 %v2065
        %2113 = vmatprep.subr.mxu0 %v2068
        %2114 = vmatpush1.msra.mxu0 %v2067
        %2115 = vmatprep.subr.mxu0 %v2070
        %2116 = vmatpush1.msra.mxu0 %v2069
        %2117 = vmatprep.subr.mxu0 %v2072
        %2118 = vmatpush1.msra.mxu0 %v2071
        %2119 = vmatprep.subr.mxu0 %v2074
        %2120 = vmatpush1.msra.mxu0 %v2073
        %2121 = vmatprep.subr.mxu0 0.0
        %2122 = vmatpush1.msra.mxu0 0.0
        %2123 = vmatprep.subr.mxu0 0.0
        %2124 = vmatpush1.msra.mxu0 0.0
        %2125 = vmatprep.subr.mxu0 0.0
        %2126 = vmatpush1.msra.mxu0 0.0
        %2127 = vmatprep.subr.mxu0 0.0
        %2128 = vmatpush1.msra.mxu0 0.0
        %2129 = vmatprep.subr.mxu0 0.0
        %2130 = vmatpush1.msra.mxu0 0.0
        %2131 = vmatprep.subr.mxu0 0.0
        %2132 = vmatpush1.msra.mxu0 0.0
        %2133 = vmatprep.subr.mxu0 0.0
        %2134 = vmatpush1.msra.mxu0 0.0
        %2135 = vmatprep.subr.mxu0 0.0
        %2136 = vmatpush1.msra.mxu0 0.0
        %2137 = vmatprep.subr.mxu0 0.0
        %2138 = vmatpush1.msra.mxu0 0.0
        %2139 = vmatprep.subr.mxu0 0.0
        %2140 = vmatpush1.msra.mxu0 0.0
        %2141 = vmatprep.subr.mxu0 0.0
        %2142 = vmatpush1.msra.mxu0 0.0
        %2143 = vmatprep.subr.mxu0 0.0
        %2144 = vmatpush1.msra.mxu0 0.0
        %2145 = vmatprep.mubr.f32.mxu0 %v2076
        %2146 = vmatmul.mubr.f32.gmra.mrb[0].mxu0 %v2024
        %v2147 = vpop.f32.mrb[0].mxu0
        %v2148 = vadd.f32 0.0, %v2147
        %v2149 = vpop.f32.mrb[0].mxu0
        %v2150 = vadd.f32 0.0, %v2149
        %2151 = vmatprep.mubr.f32.mxu0 %v2079
        %2152 = vmatmul.mubr.f32.gmra.mrb[0].mxu0 %v2030
        %v2153 = vpop.f32.mrb[0].mxu0
        %v2154 = vadd.f32 0.0, %v2153
        %v2155 = vpop.f32.mrb[0].mxu0
        %v2156 = vadd.f32 0.0, %v2155
        %2157 = vdwg.mxu0
        %v2158 = vadd.f32 %v1938, %v2148
        %v2159 = vadd.f32 %v1940, %v2150
        %v2160 = vadd.f32 %v1944, %v2154
        %v2161 = vadd.f32 %v1946, %v2156
        %v2162 = vld [vmem:[%s7] sm:$0x3]
        %v2164 = vlaneseq
        %v2165 = vshrl.u32 %v2164, 7
        %v2166 = vsub.s32 0, %v2165
        %v2167 = vrot.slane %v2162, %v2166
        %v2168 = vlaneseq
        %v2169 = vshrl.u32 %v2168, 7
        %v2170 = vsub.s32 1, %v2169
        %v2171 = vrot.slane %v2162, %v2170
        %v2174 = vadd.f32 %v2158, %v2167
        %v2175 = vadd.f32 %v2159, %v2171
        %v2176 = vadd.f32 %v2160, %v2167
        %v2177 = vadd.f32 %v2161, %v2171
        %v2178 = vld [vmem:[#allocation14] sm:$0xff]
        %v2179 = vld [vmem:[#allocation14 + $0x8] sm:$0xff]
        %v2180 = vld [vmem:[#allocation14 + $0x10] sm:$0xff]
        %v2181 = vld [vmem:[#allocation14 + $0x18] sm:$0xff]
        %v2182 = vld [vmem:[#allocation14 + $0x20] sm:$0xff]
        %v2183 = vld [vmem:[#allocation14 + $0x28] sm:$0xff]
        %v2184 = vld [vmem:[#allocation14 + $0x30] sm:$0xff]
        %v2185 = vld [vmem:[#allocation14 + $0x38] sm:$0xff]
        %v2186 = vld [vmem:[#allocation14 + $0x40] sm:$0xff]
        %v2187 = vld [vmem:[#allocation14 + $0x48] sm:$0xff]
        %v2188 = vld [vmem:[#allocation14 + $0x50] sm:$0xff]
        %v2189 = vld [vmem:[#allocation14 + $0x58] sm:$0xff]
        %v2190 = vld [vmem:[#allocation14 + $0x60] sm:$0xff]
        %v2191 = vld [vmem:[#allocation14 + $0x68] sm:$0xff]
        %v2192 = vld [vmem:[#allocation14 + $0x70] sm:$0xff]
        %v2193 = vld [vmem:[#allocation14 + $0x78] sm:$0xff]
        %v2194 = vld [vmem:[#allocation14 + $0x80] sm:$0xff]
        %v2195 = vld [vmem:[#allocation14 + $0x88] sm:$0xff]
        %v2196 = vld [vmem:[#allocation14 + $0x90] sm:$0xff]
        %v2197 = vld [vmem:[#allocation14 + $0x98] sm:$0xff]
        %v2198 = vld [vmem:[#allocation14 + $0xa0] sm:$0xff]
        %v2199 = vld [vmem:[#allocation14 + $0xa8] sm:$0xff]
        %v2200 = vld [vmem:[#allocation14 + $0xb0] sm:$0xff]
        %v2201 = vld [vmem:[#allocation14 + $0xb8] sm:$0xff]
        %v2202 = vld [vmem:[#allocation14 + $0xc0] sm:$0xff]
        %v2203 = vld [vmem:[#allocation14 + $0xc8] sm:$0xff]
        %v2204 = vld [vmem:[#allocation14 + $0xd0] sm:$0xff]
        %v2205 = vld [vmem:[#allocation14 + $0xd8] sm:$0xff]
        %v2206 = vld [vmem:[#allocation14 + $0xe0] sm:$0xff]
        %v2207 = vld [vmem:[#allocation14 + $0xe8] sm:$0xff]
        %v2208 = vld [vmem:[#allocation14 + $0xf0] sm:$0xff]
        %v2209 = vld [vmem:[#allocation14 + $0xf8] sm:$0xff]
        %v2210 = vld [vmem:[#allocation14 + $0x100] sm:$0xff]
        %v2211 = vld [vmem:[#allocation14 + $0x108] sm:$0xff]
        %v2212 = vld [vmem:[#allocation14 + $0x110] sm:$0xff]
        %v2213 = vld [vmem:[#allocation14 + $0x118] sm:$0xff]
        %v2214 = vld [vmem:[#allocation14 + $0x120] sm:$0xff]
        %v2215 = vld [vmem:[#allocation14 + $0x128] sm:$0xff]
        %v2216 = vld [vmem:[#allocation14 + $0x130] sm:$0xff]
        %v2217 = vld [vmem:[#allocation14 + $0x138] sm:$0xff]
        %v2218 = vmul.f32 %v2174, %v2174
        %v2219 = vmul.f32 %v2175, %v2175
        %v2220 = vmul.f32 %v2176, %v2176
        %v2221 = vmul.f32 %v2177, %v2177
        %v2223 = vsel %vm1781, %v2219, 0
        %v2226 = vsel %vm1781, %v2221, 0
        %2228 = vmatprep.subr.mxu0 %v2179
        %2229 = vmatpush1.msra.mxu0 %v2178
        %2230 = vmatprep.subr.mxu0 %v2181
        %2231 = vmatpush1.msra.mxu0 %v2180
        %2232 = vmatprep.subr.mxu0 %v2183
        %2233 = vmatpush1.msra.mxu0 %v2182
        %2234 = vmatprep.subr.mxu0 %v2185
        %2235 = vmatpush1.msra.mxu0 %v2184
        %2236 = vmatprep.subr.mxu0 %v2187
        %2237 = vmatpush1.msra.mxu0 %v2186
        %2238 = vmatprep.subr.mxu0 %v2189
        %2239 = vmatpush1.msra.mxu0 %v2188
        %2240 = vmatprep.subr.mxu0 %v2191
        %2241 = vmatpush1.msra.mxu0 %v2190
        %2242 = vmatprep.subr.mxu0 %v2193
        %2243 = vmatpush1.msra.mxu0 %v2192
        %2244 = vmatprep.subr.mxu0 %v2195
        %2245 = vmatpush1.msra.mxu0 %v2194
        %2246 = vmatprep.subr.mxu0 %v2197
        %2247 = vmatpush1.msra.mxu0 %v2196
        %2248 = vmatprep.subr.mxu0 %v2199
        %2249 = vmatpush1.msra.mxu0 %v2198
        %2250 = vmatprep.subr.mxu0 %v2201
        %2251 = vmatpush1.msra.mxu0 %v2200
        %2252 = vmatprep.subr.mxu0 %v2203
        %2253 = vmatpush1.msra.mxu0 %v2202
        %2254 = vmatprep.subr.mxu0 %v2205
        %2255 = vmatpush1.msra.mxu0 %v2204
        %2256 = vmatprep.subr.mxu0 %v2207
        %2257 = vmatpush1.msra.mxu0 %v2206
        %2258 = vmatprep.subr.mxu0 %v2209
        %2259 = vmatpush1.msra.mxu0 %v2208
        %2260 = vmatprep.subr.mxu0 %v2211
        %2261 = vmatpush1.msra.mxu0 %v2210
        %2262 = vmatprep.subr.mxu0 %v2213
        %2263 = vmatpush1.msra.mxu0 %v2212
        %2264 = vmatprep.subr.mxu0 %v2215
        %2265 = vmatpush1.msra.mxu0 %v2214
        %2266 = vmatprep.subr.mxu0 %v2217
        %2267 = vmatpush1.msra.mxu0 %v2216
        %2268 = vmatprep.subr.mxu0 0.0
        %2269 = vmatpush1.msra.mxu0 0.0
        %2270 = vmatprep.subr.mxu0 0.0
        %2271 = vmatpush1.msra.mxu0 0.0
        %2272 = vmatprep.subr.mxu0 0.0
        %2273 = vmatpush1.msra.mxu0 0.0
        %2274 = vmatprep.subr.mxu0 0.0
        %2275 = vmatpush1.msra.mxu0 0.0
        %2276 = vmatprep.subr.mxu0 0.0
        %2277 = vmatpush1.msra.mxu0 0.0
        %2278 = vmatprep.subr.mxu0 0.0
        %2279 = vmatpush1.msra.mxu0 0.0
        %2280 = vmatprep.subr.mxu0 0.0
        %2281 = vmatpush1.msra.mxu0 0.0
        %2282 = vmatprep.subr.mxu0 0.0
        %2283 = vmatpush1.msra.mxu0 0.0
        %2284 = vmatprep.subr.mxu0 0.0
        %2285 = vmatpush1.msra.mxu0 0.0
        %2286 = vmatprep.subr.mxu0 0.0
        %2287 = vmatpush1.msra.mxu0 0.0
        %2288 = vmatprep.subr.mxu0 0.0
        %2289 = vmatpush1.msra.mxu0 0.0
        %2290 = vmatprep.subr.mxu0 0.0
        %2291 = vmatpush1.msra.mxu0 0.0
        %2292 = vmatprep.mubr.f32.mxu0 %v2223
        %2293 = vmatmul.mubr.f32.gmra.mrb[0].mxu0 %v2218
        %v2294 = vpop.f32.mrb[0].mxu0
        %v2295 = vadd.f32 1e-08, %v2294
        %v2296 = vpop.f32.mrb[0].mxu0
        %v2297 = vadd.f32 1e-08, %v2296
        %2298 = vmatprep.mubr.f32.mxu0 %v2226
        %2299 = vmatmul.mubr.f32.gmra.mrb[0].mxu0 %v2220
        %v2300 = vpop.f32.mrb[0].mxu0
        %v2301 = vadd.f32 1e-08, %v2300
        %v2302 = vpop.f32.mrb[0].mxu0
        %v2303 = vadd.f32 1e-08, %v2302
        %2304 = vdwg.mxu0
        %v2305 = vrsqrt.pop %v2295
        %v2306 = vrsqrt.pop %v2297
        %v2307 = vrsqrt.pop %v2301
        %v2308 = vrsqrt.pop %v2303
        %v2309 = vmul.f32 %v2174, %v2305
        %v2310 = vmul.f32 %v2175, %v2306
        %v2311 = vmul.f32 %v2176, %v2307
        %v2312 = vmul.f32 %v2177, %v2308
        %vm2313 = vcmp.ge.f32.partialorder %v2309, 0.0
        %vm2314 = vcmp.ge.f32.partialorder %v2310, 0.0
        %vm2315 = vcmp.ge.f32.partialorder %v2311, 0.0
        %vm2316 = vcmp.ge.f32.partialorder %v2312, 0.0
        %v2317 = vmul.f32 %v2309, 0.2
        %v2318 = vmul.f32 %v2310, 0.2
        %v2319 = vmul.f32 %v2311, 0.2
        %v2320 = vmul.f32 %v2312, 0.2
        %v2321 = vsel %vm2313, %v2309, %v2317
        %v2322 = vsel %vm2314, %v2310, %v2318
        %v2323 = vsel %vm2315, %v2311, %v2319
        %v2324 = vsel %vm2316, %v2312, %v2320
        %v2325 = vld [vmem:[#allocation15] sm:$0xff]
        %v2326 = vld [vmem:[#allocation15 + $0x8] sm:$0xff]
        %v2327 = vld [vmem:[#allocation15 + $0x10] sm:$0xff]
        %v2328 = vld [vmem:[#allocation15 + $0x18] sm:$0xff]
        %v2329 = vld [vmem:[#allocation15 + $0x20] sm:$0xff]
        %v2330 = vld [vmem:[#allocation15 + $0x28] sm:$0xff]
        %v2331 = vld [vmem:[#allocation15 + $0x30] sm:$0xff]
        %v2332 = vld [vmem:[#allocation15 + $0x38] sm:$0xff]
        %v2333 = vld [vmem:[#allocation15 + $0x40] sm:$0xff]
        %v2334 = vld [vmem:[#allocation15 + $0x48] sm:$0xff]
        %v2335 = vld [vmem:[#allocation15 + $0x50] sm:$0xff]
        %v2336 = vld [vmem:[#allocation15 + $0x58] sm:$0xff]
        %v2337 = vld [vmem:[#allocation15 + $0x60] sm:$0xff]
        %v2338 = vld [vmem:[#allocation15 + $0x68] sm:$0xff]
        %v2339 = vld [vmem:[#allocation15 + $0x70] sm:$0xff]
        %v2340 = vld [vmem:[#allocation15 + $0x78] sm:$0xff]
        %v2341 = vld [vmem:[#allocation15 + $0x80] sm:$0xff]
        %v2342 = vld [vmem:[#allocation15 + $0x88] sm:$0xff]
        %v2343 = vld [vmem:[#allocation15 + $0x90] sm:$0xff]
        %v2344 = vld [vmem:[#allocation15 + $0x98] sm:$0xff]
        %v2345 = vld [vmem:[#allocation15 + $0xa0] sm:$0xff]
        %v2346 = vld [vmem:[#allocation15 + $0xa8] sm:$0xff]
        %v2347 = vld [vmem:[#allocation15 + $0xb0] sm:$0xff]
        %v2348 = vld [vmem:[#allocation15 + $0xb8] sm:$0xff]
        %v2349 = vld [vmem:[#allocation15 + $0xc0] sm:$0xff]
        %v2350 = vld [vmem:[#allocation15 + $0xc8] sm:$0xff]
        %v2351 = vld [vmem:[#allocation15 + $0xd0] sm:$0xff]
        %v2352 = vld [vmem:[#allocation15 + $0xd8] sm:$0xff]
        %v2353 = vld [vmem:[#allocation15 + $0xe0] sm:$0xff]
        %v2354 = vld [vmem:[#allocation15 + $0xe8] sm:$0xff]
        %v2355 = vld [vmem:[#allocation15 + $0xf0] sm:$0xff]
        %v2356 = vld [vmem:[#allocation15 + $0xf8] sm:$0xff]
        %v2357 = vld [vmem:[#allocation15 + $0x100] sm:$0xff]
        %v2358 = vld [vmem:[#allocation15 + $0x108] sm:$0xff]
        %v2359 = vld [vmem:[#allocation15 + $0x110] sm:$0xff]
        %v2360 = vld [vmem:[#allocation15 + $0x118] sm:$0xff]
        %v2361 = vld [vmem:[#allocation15 + $0x120] sm:$0xff]
        %v2362 = vld [vmem:[#allocation15 + $0x128] sm:$0xff]
        %v2363 = vld [vmem:[#allocation15 + $0x130] sm:$0xff]
        %v2364 = vld [vmem:[#allocation15 + $0x138] sm:$0xff]
        %v2365 = vld [vmem:[#allocation15 + $0x140] sm:$0xff]
        %v2366 = vld [vmem:[#allocation15 + $0x148] sm:$0xff]
        %v2367 = vld [vmem:[#allocation15 + $0x150] sm:$0xff]
        %v2368 = vld [vmem:[#allocation15 + $0x158] sm:$0xff]
        %v2369 = vld [vmem:[#allocation15 + $0x160] sm:$0xff]
        %v2370 = vld [vmem:[#allocation15 + $0x168] sm:$0xff]
        %v2371 = vld [vmem:[#allocation15 + $0x170] sm:$0xff]
        %v2372 = vld [vmem:[#allocation15 + $0x178] sm:$0xff]
        %v2373 = vld [vmem:[#allocation15 + $0x180] sm:$0xff]
        %v2374 = vld [vmem:[#allocation15 + $0x188] sm:$0xff]
        %v2375 = vld [vmem:[#allocation15 + $0x190] sm:$0xff]
        %v2376 = vld [vmem:[#allocation15 + $0x198] sm:$0xff]
        %v2377 = vld [vmem:[#allocation15 + $0x1a0] sm:$0xff]
        %v2378 = vld [vmem:[#allocation15 + $0x1a8] sm:$0xff]
        %v2379 = vld [vmem:[#allocation15 + $0x1b0] sm:$0xff]
        %v2380 = vld [vmem:[#allocation15 + $0x1b8] sm:$0xff]
        %v2381 = vld [vmem:[#allocation15 + $0x1c0] sm:$0xff]
        %v2382 = vld [vmem:[#allocation15 + $0x1c8] sm:$0xff]
        %v2383 = vld [vmem:[#allocation15 + $0x1d0] sm:$0xff]
        %v2384 = vld [vmem:[#allocation15 + $0x1d8] sm:$0xff]
        %v2386 = vsel %vm1781, %v2322, 0
        %v2389 = vsel %vm1781, %v2324, 0
        %2391 = vmatprep.subr.mxu0 %v2326
        %2392 = vmatpush1.msra.mxu0 %v2325
        %2393 = vmatprep.subr.mxu0 %v2329
        %2394 = vmatpush1.msra.mxu0 %v2328
        %2395 = vmatprep.subr.mxu0 %v2332
        %2396 = vmatpush1.msra.mxu0 %v2331
        %2397 = vmatprep.subr.mxu0 %v2335
        %2398 = vmatpush1.msra.mxu0 %v2334
        %2399 = vmatprep.subr.mxu0 %v2338
        %2400 = vmatpush1.msra.mxu0 %v2337
        %2401 = vmatprep.subr.mxu0 %v2341
        %2402 = vmatpush1.msra.mxu0 %v2340
        %2403 = vmatprep.subr.mxu0 %v2344
        %2404 = vmatpush1.msra.mxu0 %v2343
        %2405 = vmatprep.subr.mxu0 %v2347
        %2406 = vmatpush1.msra.mxu0 %v2346
        %2407 = vmatprep.subr.mxu0 %v2350
        %2408 = vmatpush1.msra.mxu0 %v2349
        %2409 = vmatprep.subr.mxu0 %v2353
        %2410 = vmatpush1.msra.mxu0 %v2352
        %2411 = vmatprep.subr.mxu0 %v2356
        %2412 = vmatpush1.msra.mxu0 %v2355
        %2413 = vmatprep.subr.mxu0 %v2359
        %2414 = vmatpush1.msra.mxu0 %v2358
        %2415 = vmatprep.subr.mxu0 %v2362
        %2416 = vmatpush1.msra.mxu0 %v2361
        %2417 = vmatprep.subr.mxu0 %v2365
        %2418 = vmatpush1.msra.mxu0 %v2364
        %2419 = vmatprep.subr.mxu0 %v2368
        %2420 = vmatpush1.msra.mxu0 %v2367
        %2421 = vmatprep.subr.mxu0 %v2371
        %2422 = vmatpush1.msra.mxu0 %v2370
        %2423 = vmatprep.subr.mxu0 %v2374
        %2424 = vmatpush1.msra.mxu0 %v2373
        %2425 = vmatprep.subr.mxu0 %v2377
        %2426 = vmatpush1.msra.mxu0 %v2376
        %2427 = vmatprep.subr.mxu0 %v2380
        %2428 = vmatpush1.msra.mxu0 %v2379
        %2429 = vmatprep.subr.mxu0 %v2383
        %2430 = vmatpush1.msra.mxu0 %v2382
        %2431 = vmatprep.subr.mxu0 0.0
        %2432 = vmatpush1.msra.mxu0 0.0
        %2433 = vmatprep.subr.mxu0 0.0
        %2434 = vmatpush1.msra.mxu0 0.0
        %2435 = vmatprep.subr.mxu0 0.0
        %2436 = vmatpush1.msra.mxu0 0.0
        %2437 = vmatprep.subr.mxu0 0.0
        %2438 = vmatpush1.msra.mxu0 0.0
        %2439 = vmatprep.subr.mxu0 0.0
        %2440 = vmatpush1.msra.mxu0 0.0
        %2441 = vmatprep.subr.mxu0 0.0
        %2442 = vmatpush1.msra.mxu0 0.0
        %2443 = vmatprep.subr.mxu0 0.0
        %2444 = vmatpush1.msra.mxu0 0.0
        %2445 = vmatprep.subr.mxu0 0.0
        %2446 = vmatpush1.msra.mxu0 0.0
        %2447 = vmatprep.subr.mxu0 0.0
        %2448 = vmatpush1.msra.mxu0 0.0
        %2449 = vmatprep.subr.mxu0 0.0
        %2450 = vmatpush1.msra.mxu0 0.0
        %2451 = vmatprep.subr.mxu0 0.0
        %2452 = vmatpush1.msra.mxu0 0.0
        %2453 = vmatprep.subr.mxu0 0.0
        %2454 = vmatpush1.msra.mxu0 0.0
        %2455 = vmatprep.mubr.f32.mxu0 %v2386
        %2456 = vmatmul.mubr.f32.gmra.mrb[0].mxu0 %v2321
        %v2457 = vpop.f32.mrb[0].mxu0
        %v2458 = vadd.f32 0.0, %v2457
        %v2459 = vpop.f32.mrb[0].mxu0
        %v2460 = vadd.f32 0.0, %v2459
        %2461 = vmatprep.mubr.f32.mxu0 %v2389
        %2462 = vmatmul.mubr.f32.gmra.mrb[0].mxu0 %v2323
        %v2463 = vpop.f32.mrb[0].mxu0
        %v2464 = vadd.f32 0.0, %v2463
        %v2465 = vpop.f32.mrb[0].mxu0
        %v2466 = vadd.f32 0.0, %v2465
        %2467 = vdwg.mxu0
        %2468 = vmatprep.subr.mxu0 0.0
        %2469 = vmatpush1.msra.mxu0 %v2327
        %2470 = vmatprep.subr.mxu0 0.0
        %2471 = vmatpush1.msra.mxu0 %v2330
        %2472 = vmatprep.subr.mxu0 0.0
        %2473 = vmatpush1.msra.mxu0 %v2333
        %2474 = vmatprep.subr.mxu0 0.0
        %2475 = vmatpush1.msra.mxu0 %v2336
        %2476 = vmatprep.subr.mxu0 0.0
        %2477 = vmatpush1.msra.mxu0 %v2339
        %2478 = vmatprep.subr.mxu0 0.0
        %2479 = vmatpush1.msra.mxu0 %v2342
        %2480 = vmatprep.subr.mxu0 0.0
        %2481 = vmatpush1.msra.mxu0 %v2345
        %2482 = vmatprep.subr.mxu0 0.0
        %2483 = vmatpush1.msra.mxu0 %v2348
        %2484 = vmatprep.subr.mxu0 0.0
        %2485 = vmatpush1.msra.mxu0 %v2351
        %2486 = vmatprep.subr.mxu0 0.0
        %2487 = vmatpush1.msra.mxu0 %v2354
        %2488 = vmatprep.subr.mxu0 0.0
        %2489 = vmatpush1.msra.mxu0 %v2357
        %2490 = vmatprep.subr.mxu0 0.0
        %2491 = vmatpush1.msra.mxu0 %v2360
        %2492 = vmatprep.subr.mxu0 0.0
        %2493 = vmatpush1.msra.mxu0 %v2363
        %2494 = vmatprep.subr.mxu0 0.0
        %2495 = vmatpush1.msra.mxu0 %v2366
        %2496 = vmatprep.subr.mxu0 0.0
        %2497 = vmatpush1.msra.mxu0 %v2369
        %2498 = vmatprep.subr.mxu0 0.0
        %2499 = vmatpush1.msra.mxu0 %v2372
        %2500 = vmatprep.subr.mxu0 0.0
        %2501 = vmatpush1.msra.mxu0 %v2375
        %2502 = vmatprep.subr.mxu0 0.0
        %2503 = vmatpush1.msra.mxu0 %v2378
        %2504 = vmatprep.subr.mxu0 0.0
        %2505 = vmatpush1.msra.mxu0 %v2381
        %2506 = vmatprep.subr.mxu0 0.0
        %2507 = vmatpush1.msra.mxu0 %v2384
        %2508 = vmatprep.subr.mxu0 0.0
        %2509 = vmatpush1.msra.mxu0 0.0
        %2510 = vmatprep.subr.mxu0 0.0
        %2511 = vmatpush1.msra.mxu0 0.0
        %2512 = vmatprep.subr.mxu0 0.0
        %2513 = vmatpush1.msra.mxu0 0.0
        %2514 = vmatprep.subr.mxu0 0.0
        %2515 = vmatpush1.msra.mxu0 0.0
        %2516 = vmatprep.subr.mxu0 0.0
        %2517 = vmatpush1.msra.mxu0 0.0
        %2518 = vmatprep.subr.mxu0 0.0
        %2519 = vmatpush1.msra.mxu0 0.0
        %2520 = vmatprep.subr.mxu0 0.0
        %2521 = vmatpush1.msra.mxu0 0.0
        %2522 = vmatprep.subr.mxu0 0.0
        %2523 = vmatpush1.msra.mxu0 0.0
        %2524 = vmatprep.subr.mxu0 0.0
        %2525 = vmatpush1.msra.mxu0 0.0
        %2526 = vmatprep.subr.mxu0 0.0
        %2527 = vmatpush1.msra.mxu0 0.0
        %2528 = vmatprep.subr.mxu0 0.0
        %2529 = vmatpush1.msra.mxu0 0.0
        %2530 = vmatprep.subr.mxu0 0.0
        %2531 = vmatpush1.msra.mxu0 0.0
        %2532 = vmatprep.mubr.f32.mxu0 %v2386
        %2533 = vmatmul.mubr.f32.gmra.mrb[0].mxu0 %v2321
        %v2534 = vpop.f32.mrb[0].mxu0
        %v2535 = vadd.f32 0.0, %v2534
        %v2536 = vpop.f32.mrb[0].mxu0
        %2537 = vmatprep.mubr.f32.mxu0 %v2389
        %2538 = vmatmul.mubr.f32.gmra.mrb[0].mxu0 %v2323
        %v2539 = vpop.f32.mrb[0].mxu0
        %v2540 = vadd.f32 0.0, %v2539
        %v2541 = vpop.f32.mrb[0].mxu0
        %2542 = vdwg.mxu0
        %v2543 = vld [vmem:[#allocation17] sm:$0xff]
        %v2544 = vld [vmem:[#allocation17 + $0x8] sm:$0xff]
        %v2545 = vld [vmem:[#allocation17 + $0x10] sm:$0x3]
        %vm2546 = vcmask 80896
        %v2548 = vsel %vm2546, %v2543, 0
        %v2551 = vsel %vm2546, %v2544, 0
        %v2554 = vsel %vm2546, %v2545, 0
        %vm2556 = vcmask 1041408
        %v2558 = vsel %vm2556, %v2464, 0
        %v2561 = vsel %vm2556, %v2466, 0
        %v2564 = vsel %vm2556, %v2540, 0
        %2566 = vmatprep.subr.mxu0 %v2460
        %2567 = vmatpush1.msra.mxu0 %v2458
        %2568 = vmatprep.subr.mxu0 %v2561
        %2569 = vmatpush1.msra.mxu0 %v2558
        %2570 = vmatprep.subr.mxu0 0.0
        %2571 = vmatpush1.msra.mxu0 0.0
        %2572 = vmatprep.subr.mxu0 0.0
        %2573 = vmatpush1.msra.mxu0 0.0
        %2574 = vmatprep.subr.mxu0 0.0
        %2575 = vmatpush1.msra.mxu0 0.0
        %2576 = vmatprep.subr.mxu0 0.0
        %2577 = vmatpush1.msra.mxu0 0.0
        %2578 = vmatprep.subr.mxu0 0.0
        %2579 = vmatpush1.msra.mxu0 0.0
        %2580 = vmatprep.subr.mxu0 0.0
        %2581 = vmatpush1.msra.mxu0 0.0
        %2582 = vmatprep.subr.mxu0 0.0
        %2583 = vmatpush1.msra.mxu0 0.0
        %2584 = vmatprep.subr.mxu0 0.0
        %2585 = vmatpush1.msra.mxu0 0.0
        %2586 = vmatprep.subr.mxu0 0.0
        %2587 = vmatpush1.msra.mxu0 0.0
        %2588 = vmatprep.subr.mxu0 0.0
        %2589 = vmatpush1.msra.mxu0 0.0
        %2590 = vmatprep.subr.mxu0 0.0
        %2591 = vmatpush1.msra.mxu0 0.0
        %2592 = vmatprep.subr.mxu0 0.0
        %2593 = vmatpush1.msra.mxu0 0.0
        %2594 = vmatprep.subr.mxu0 0.0
        %2595 = vmatpush1.msra.mxu0 0.0
        %2596 = vmatprep.subr.mxu0 0.0
        %2597 = vmatpush1.msra.mxu0 0.0
        %2598 = vmatprep.subr.mxu0 0.0
        %2599 = vmatpush1.msra.mxu0 0.0
        %2600 = vmatprep.subr.mxu0 0.0
        %2601 = vmatpush1.msra.mxu0 0.0
        %2602 = vmatprep.subr.mxu0 0.0
        %2603 = vmatpush1.msra.mxu0 0.0
        %2604 = vmatprep.subr.mxu0 0.0
        %2605 = vmatpush1.msra.mxu0 0.0
        %2606 = vmatprep.subr.mxu0 0.0
        %2607 = vmatpush1.msra.mxu0 0.0
        %2608 = vmatprep.subr.mxu0 0.0
        %2609 = vmatpush1.msra.mxu0 0.0
        %2610 = vmatprep.subr.mxu0 0.0
        %2611 = vmatpush1.msra.mxu0 0.0
        %2612 = vmatprep.subr.mxu0 0.0
        %2613 = vmatpush1.msra.mxu0 0.0
        %2614 = vmatprep.subr.mxu0 0.0
        %2615 = vmatpush1.msra.mxu0 0.0
        %2616 = vmatprep.subr.mxu0 0.0
        %2617 = vmatpush1.msra.mxu0 0.0
        %2618 = vmatprep.subr.mxu0 0.0
        %2619 = vmatpush1.msra.mxu0 0.0
        %2620 = vmatprep.subr.mxu0 0.0
        %2621 = vmatpush1.msra.mxu0 0.0
        %2622 = vmatprep.subr.mxu0 0.0
        %2623 = vmatpush1.msra.mxu0 0.0
        %2624 = vmatprep.subr.mxu0 0.0
        %2625 = vmatpush1.msra.mxu0 0.0
        %2626 = vmatprep.subr.mxu0 0.0
        %2627 = vmatpush1.msra.mxu0 0.0
        %2628 = vmatprep.subr.mxu0 0.0
        %2629 = vmatpush1.msra.mxu0 0.0
        %2630 = vmatprep.mubr.f32.mxu0 0.0
        %2631 = vmatmul.mubr.f32.gmra.mrb[0].mxu0 %v2548
        %v2632 = vpop.f32.mrb[0].mxu0
        %v2633 = vadd.f32 0.0, %v2632
        %v2634 = vpop.f32.mrb[0].mxu0
        %v2635 = vadd.f32 0.0, %v2634
        %2636 = vmatprep.mubr.f32.mxu0 0.0
        %2637 = vmatmul.mubr.f32.gmra.mrb[0].mxu0 %v2551
        %v2638 = vpop.f32.mrb[0].mxu0
        %v2639 = vadd.f32 0.0, %v2638
        %v2640 = vpop.f32.mrb[0].mxu0
        %v2641 = vadd.f32 0.0, %v2640
        %2642 = vmatprep.mubr.f32.mxu0 0.0
        %2643 = vmatmul.mubr.f32.gmra.mrb[0].mxu0 %v2554
        %v2644 = vpop.f32.mrb[0].mxu0
        %v2645 = vadd.f32 0.0, %v2644
        %v2646 = vpop.f32.mrb[0].mxu0
        %v2647 = vadd.f32 0.0, %v2646
        %2648 = vdwg.mxu0
        %2649 = vmatprep.subr.mxu0 0.0
        %2650 = vmatpush1.msra.mxu0 %v2535
        %2651 = vmatprep.subr.mxu0 0.0
        %2652 = vmatpush1.msra.mxu0 %v2564
        %2653 = vmatprep.subr.mxu0 0.0
        %2654 = vmatpush1.msra.mxu0 0.0
        %2655 = vmatprep.subr.mxu0 0.0
        %2656 = vmatpush1.msra.mxu0 0.0
        %2657 = vmatprep.subr.mxu0 0.0
        %2658 = vmatpush1.msra.mxu0 0.0
        %2659 = vmatprep.subr.mxu0 0.0
        %2660 = vmatpush1.msra.mxu0 0.0
        %2661 = vmatprep.subr.mxu0 0.0
        %2662 = vmatpush1.msra.mxu0 0.0
        %2663 = vmatprep.subr.mxu0 0.0
        %2664 = vmatpush1.msra.mxu0 0.0
        %2665 = vmatprep.subr.mxu0 0.0
        %2666 = vmatpush1.msra.mxu0 0.0
        %2667 = vmatprep.subr.mxu0 0.0
        %2668 = vmatpush1.msra.mxu0 0.0
        %2669 = vmatprep.subr.mxu0 0.0
        %2670 = vmatpush1.msra.mxu0 0.0
        %2671 = vmatprep.subr.mxu0 0.0
        %2672 = vmatpush1.msra.mxu0 0.0
        %2673 = vmatprep.subr.mxu0 0.0
        %2674 = vmatpush1.msra.mxu0 0.0
        %2675 = vmatprep.subr.mxu0 0.0
        %2676 = vmatpush1.msra.mxu0 0.0
        %2677 = vmatprep.subr.mxu0 0.0
        %2678 = vmatpush1.msra.mxu0 0.0
        %2679 = vmatprep.subr.mxu0 0.0
        %2680 = vmatpush1.msra.mxu0 0.0
        %2681 = vmatprep.subr.mxu0 0.0
        %2682 = vmatpush1.msra.mxu0 0.0
        %2683 = vmatprep.subr.mxu0 0.0
        %2684 = vmatpush1.msra.mxu0 0.0
        %2685 = vmatprep.subr.mxu0 0.0
        %2686 = vmatpush1.msra.mxu0 0.0
        %2687 = vmatprep.subr.mxu0 0.0
        %2688 = vmatpush1.msra.mxu0 0.0
        %2689 = vmatprep.subr.mxu0 0.0
        %2690 = vmatpush1.msra.mxu0 0.0
        %2691 = vmatprep.subr.mxu0 0.0
        %2692 = vmatpush1.msra.mxu0 0.0
        %2693 = vmatprep.subr.mxu0 0.0
        %2694 = vmatpush1.msra.mxu0 0.0
        %2695 = vmatprep.subr.mxu0 0.0
        %2696 = vmatpush1.msra.mxu0 0.0
        %2697 = vmatprep.subr.mxu0 0.0
        %2698 = vmatpush1.msra.mxu0 0.0
        %2699 = vmatprep.subr.mxu0 0.0
        %2700 = vmatpush1.msra.mxu0 0.0
        %2701 = vmatprep.subr.mxu0 0.0
        %2702 = vmatpush1.msra.mxu0 0.0
        %2703 = vmatprep.subr.mxu0 0.0
        %2704 = vmatpush1.msra.mxu0 0.0
        %2705 = vmatprep.subr.mxu0 0.0
        %2706 = vmatpush1.msra.mxu0 0.0
        %2707 = vmatprep.subr.mxu0 0.0
        %2708 = vmatpush1.msra.mxu0 0.0
        %2709 = vmatprep.subr.mxu0 0.0
        %2710 = vmatpush1.msra.mxu0 0.0
        %2711 = vmatprep.subr.mxu0 0.0
        %2712 = vmatpush1.msra.mxu0 0.0
        %2713 = vmatprep.mubr.f32.mxu0 0.0
        %2714 = vmatmul.mubr.f32.gmra.mrb[0].mxu0 %v2548
        %v2715 = vpop.f32.mrb[0].mxu0
        %v2716 = vadd.f32 0.0, %v2715
        %v2717 = vpop.f32.mrb[0].mxu0
        %2718 = vmatprep.mubr.f32.mxu0 0.0
        %2719 = vmatmul.mubr.f32.gmra.mrb[0].mxu0 %v2551
        %v2720 = vpop.f32.mrb[0].mxu0
        %v2721 = vadd.f32 0.0, %v2720
        %v2722 = vpop.f32.mrb[0].mxu0
        %2723 = vmatprep.mubr.f32.mxu0 0.0
        %2724 = vmatmul.mubr.f32.gmra.mrb[0].mxu0 %v2554
        %v2725 = vpop.f32.mrb[0].mxu0
        %v2726 = vadd.f32 0.0, %v2725
        %v2727 = vpop.f32.mrb[0].mxu0
        %2728 = vdwg.mxu0
        %v2729 = vld [vmem:[#allocation18] sm:$0xff]
        %v2730 = vld [vmem:[#allocation18 + $0x8] sm:$0xff]
        %v2731 = vld [vmem:[#allocation18 + $0x10] sm:$0xff]
        %v2732 = vld [vmem:[#allocation18 + $0x18] sm:$0xff]
        %v2733 = vld [vmem:[#allocation18 + $0x20] sm:$0xff]
        %v2734 = vld [vmem:[#allocation18 + $0x28] sm:$0xff]
        %v2735 = vld [vmem:[#allocation18 + $0x30] sm:$0xff]
        %v2736 = vld [vmem:[#allocation18 + $0x38] sm:$0xff]
        %v2737 = vld [vmem:[#allocation18 + $0x40] sm:$0xff]
        %v2738 = vld [vmem:[#allocation18 + $0x48] sm:$0xff]
        %v2739 = vld [vmem:[#allocation18 + $0x50] sm:$0xff]
        %v2740 = vld [vmem:[#allocation18 + $0x58] sm:$0xff]
        %v2741 = vld [vmem:[#allocation18 + $0x60] sm:$0xff]
        %v2742 = vld [vmem:[#allocation18 + $0x68] sm:$0xff]
        %v2743 = vld [vmem:[#allocation18 + $0x70] sm:$0xff]
        %v2744 = vld [vmem:[#allocation18 + $0x78] sm:$0xff]
        %v2745 = vld [vmem:[#allocation18 + $0x80] sm:$0xff]
        %v2746 = vld [vmem:[#allocation18 + $0x88] sm:$0xff]
        %v2747 = vld [vmem:[#allocation18 + $0x90] sm:$0xff]
        %v2748 = vld [vmem:[#allocation18 + $0x98] sm:$0xff]
        %v2749 = vld [vmem:[#allocation18 + $0xa0] sm:$0xff]
        %v2750 = vld [vmem:[#allocation18 + $0xa8] sm:$0xff]
        %v2751 = vld [vmem:[#allocation18 + $0xb0] sm:$0xff]
        %v2752 = vld [vmem:[#allocation18 + $0xb8] sm:$0xff]
        %v2753 = vld [vmem:[#allocation18 + $0xc0] sm:$0xff]
        %v2754 = vld [vmem:[#allocation18 + $0xc8] sm:$0xff]
        %v2755 = vld [vmem:[#allocation18 + $0xd0] sm:$0xff]
        %v2756 = vld [vmem:[#allocation18 + $0xd8] sm:$0xff]
        %v2757 = vld [vmem:[#allocation18 + $0xe0] sm:$0xff]
        %v2758 = vld [vmem:[#allocation18 + $0xe8] sm:$0xff]
        %v2759 = vld [vmem:[#allocation18 + $0xf0] sm:$0xff]
        %v2760 = vld [vmem:[#allocation18 + $0xf8] sm:$0xff]
        %v2761 = vld [vmem:[#allocation18 + $0x100] sm:$0xff]
        %v2762 = vld [vmem:[#allocation18 + $0x108] sm:$0xff]
        %v2763 = vld [vmem:[#allocation18 + $0x110] sm:$0xff]
        %v2764 = vld [vmem:[#allocation18 + $0x118] sm:$0xff]
        %v2765 = vld [vmem:[#allocation18 + $0x120] sm:$0xff]
        %v2766 = vld [vmem:[#allocation18 + $0x128] sm:$0xff]
        %v2767 = vld [vmem:[#allocation18 + $0x130] sm:$0xff]
        %v2768 = vld [vmem:[#allocation18 + $0x138] sm:$0xff]
        %v2769 = vld [vmem:[#allocation18 + $0x140] sm:$0xff]
        %v2770 = vld [vmem:[#allocation18 + $0x148] sm:$0xff]
        %v2771 = vld [vmem:[#allocation18 + $0x150] sm:$0xff]
        %v2772 = vld [vmem:[#allocation18 + $0x158] sm:$0xff]
        %v2773 = vld [vmem:[#allocation18 + $0x160] sm:$0xff]
        %v2774 = vld [vmem:[#allocation18 + $0x168] sm:$0xff]
        %v2775 = vld [vmem:[#allocation18 + $0x170] sm:$0xff]
        %v2776 = vld [vmem:[#allocation18 + $0x178] sm:$0xff]
        %v2777 = vld [vmem:[#allocation18 + $0x180] sm:$0xff]
        %v2778 = vld [vmem:[#allocation18 + $0x188] sm:$0xff]
        %v2779 = vld [vmem:[#allocation18 + $0x190] sm:$0xff]
        %v2780 = vld [vmem:[#allocation18 + $0x198] sm:$0xff]
        %v2781 = vld [vmem:[#allocation18 + $0x1a0] sm:$0xff]
        %v2782 = vld [vmem:[#allocation18 + $0x1a8] sm:$0xff]
        %v2783 = vld [vmem:[#allocation18 + $0x1b0] sm:$0xff]
        %v2784 = vld [vmem:[#allocation18 + $0x1b8] sm:$0xff]
        %v2785 = vld [vmem:[#allocation18 + $0x1c0] sm:$0xff]
        %v2786 = vld [vmem:[#allocation18 + $0x1c8] sm:$0xff]
        %v2787 = vld [vmem:[#allocation18 + $0x1d0] sm:$0xff]
        %v2788 = vld [vmem:[#allocation18 + $0x1d8] sm:$0xff]
        %v2789 = vld [vmem:[#allocation18 + $0x1e0] sm:$0xff]
        %v2790 = vld [vmem:[#allocation18 + $0x1e8] sm:$0xff]
        %v2791 = vld [vmem:[#allocation18 + $0x1f0] sm:$0xff]
        %v2792 = vld [vmem:[#allocation18 + $0x1f8] sm:$0xff]
        %v2793 = vld [vmem:[#allocation18 + $0x200] sm:$0xff]
        %v2794 = vld [vmem:[#allocation18 + $0x208] sm:$0xff]
        %v2795 = vld [vmem:[#allocation18 + $0x210] sm:$0xff]
        %v2796 = vld [vmem:[#allocation18 + $0x218] sm:$0xff]
        %v2797 = vld [vmem:[#allocation18 + $0x220] sm:$0xff]
        %v2798 = vld [vmem:[#allocation18 + $0x228] sm:$0xff]
        %v2799 = vld [vmem:[#allocation18 + $0x230] sm:$0xff]
        %v2800 = vld [vmem:[#allocation18 + $0x238] sm:$0xff]
        %s2801 = scalar_lea.vmem [#allocation17], 24
        %v2802 = vld [vmem:[%s2801] sm:$0xff]
        %v2803 = vld [vmem:[%s2801 + $0x8] sm:$0xff]
        %v2804 = vld [vmem:[%s2801 + $0x10] sm:$0x3]
        %v2806 = vsel %vm2546, %v2802, 0
        %v2809 = vsel %vm2546, %v2803, 0
        %v2812 = vsel %vm2546, %v2804, 0
        %2814 = vmatprep.subr.mxu0 %v2460
        %2815 = vmatpush1.msra.mxu0 %v2458
        %2816 = vmatprep.subr.mxu0 %v2561
        %2817 = vmatpush1.msra.mxu0 %v2558
        %2818 = vmatprep.subr.mxu0 0.0
        %2819 = vmatpush1.msra.mxu0 0.0
        %2820 = vmatprep.subr.mxu0 0.0
        %2821 = vmatpush1.msra.mxu0 0.0
        %2822 = vmatprep.subr.mxu0 0.0
        %2823 = vmatpush1.msra.mxu0 0.0
        %2824 = vmatprep.subr.mxu0 0.0
        %2825 = vmatpush1.msra.mxu0 0.0
        %2826 = vmatprep.subr.mxu0 0.0
        %2827 = vmatpush1.msra.mxu0 0.0
        %2828 = vmatprep.subr.mxu0 0.0
        %2829 = vmatpush1.msra.mxu0 0.0
        %2830 = vmatprep.subr.mxu0 0.0
        %2831 = vmatpush1.msra.mxu0 0.0
        %2832 = vmatprep.subr.mxu0 0.0
        %2833 = vmatpush1.msra.mxu0 0.0
        %2834 = vmatprep.subr.mxu0 0.0
        %2835 = vmatpush1.msra.mxu0 0.0
        %2836 = vmatprep.subr.mxu0 0.0
        %2837 = vmatpush1.msra.mxu0 0.0
        %2838 = vmatprep.subr.mxu0 0.0
        %2839 = vmatpush1.msra.mxu0 0.0
        %2840 = vmatprep.subr.mxu0 0.0
        %2841 = vmatpush1.msra.mxu0 0.0
        %2842 = vmatprep.subr.mxu0 0.0
        %2843 = vmatpush1.msra.mxu0 0.0
        %2844 = vmatprep.subr.mxu0 0.0
        %2845 = vmatpush1.msra.mxu0 0.0
        %2846 = vmatprep.subr.mxu0 0.0
        %2847 = vmatpush1.msra.mxu0 0.0
        %2848 = vmatprep.subr.mxu0 0.0
        %2849 = vmatpush1.msra.mxu0 0.0
        %2850 = vmatprep.subr.mxu0 0.0
        %2851 = vmatpush1.msra.mxu0 0.0
        %2852 = vmatprep.subr.mxu0 0.0
        %2853 = vmatpush1.msra.mxu0 0.0
        %2854 = vmatprep.subr.mxu0 0.0
        %2855 = vmatpush1.msra.mxu0 0.0
        %2856 = vmatprep.subr.mxu0 0.0
        %2857 = vmatpush1.msra.mxu0 0.0
        %2858 = vmatprep.subr.mxu0 0.0
        %2859 = vmatpush1.msra.mxu0 0.0
        %2860 = vmatprep.subr.mxu0 0.0
        %2861 = vmatpush1.msra.mxu0 0.0
        %2862 = vmatprep.subr.mxu0 0.0
        %2863 = vmatpush1.msra.mxu0 0.0
        %2864 = vmatprep.subr.mxu0 0.0
        %2865 = vmatpush1.msra.mxu0 0.0
        %2866 = vmatprep.subr.mxu0 0.0
        %2867 = vmatpush1.msra.mxu0 0.0
        %2868 = vmatprep.subr.mxu0 0.0
        %2869 = vmatpush1.msra.mxu0 0.0
        %2870 = vmatprep.subr.mxu0 0.0
        %2871 = vmatpush1.msra.mxu0 0.0
        %2872 = vmatprep.subr.mxu0 0.0
        %2873 = vmatpush1.msra.mxu0 0.0
        %2874 = vmatprep.subr.mxu0 0.0
        %2875 = vmatpush1.msra.mxu0 0.0
        %2876 = vmatprep.subr.mxu0 0.0
        %2877 = vmatpush1.msra.mxu0 0.0
        %2878 = vmatprep.mubr.f32.mxu0 0.0
        %2879 = vmatmul.mubr.f32.gmra.mrb[0].mxu0 %v2806
        %v2880 = vpop.f32.mrb[0].mxu0
        %v2881 = vadd.f32 0.0, %v2880
        %v2882 = vpop.f32.mrb[0].mxu0
        %v2883 = vadd.f32 0.0, %v2882
        %2884 = vmatprep.mubr.f32.mxu0 0.0
        %2885 = vmatmul.mubr.f32.gmra.mrb[0].mxu0 %v2809
        %v2886 = vpop.f32.mrb[0].mxu0
        %v2887 = vadd.f32 0.0, %v2886
        %v2888 = vpop.f32.mrb[0].mxu0
        %v2889 = vadd.f32 0.0, %v2888
        %2890 = vmatprep.mubr.f32.mxu0 0.0
        %2891 = vmatmul.mubr.f32.gmra.mrb[0].mxu0 %v2812
        %v2892 = vpop.f32.mrb[0].mxu0
        %v2893 = vadd.f32 0.0, %v2892
        %v2894 = vpop.f32.mrb[0].mxu0
        %v2895 = vadd.f32 0.0, %v2894
        %2896 = vdwg.mxu0
        %2897 = vmatprep.subr.mxu0 0.0
        %2898 = vmatpush1.msra.mxu0 %v2535
        %2899 = vmatprep.subr.mxu0 0.0
        %2900 = vmatpush1.msra.mxu0 %v2564
        %2901 = vmatprep.subr.mxu0 0.0
        %2902 = vmatpush1.msra.mxu0 0.0
        %2903 = vmatprep.subr.mxu0 0.0
        %2904 = vmatpush1.msra.mxu0 0.0
        %2905 = vmatprep.subr.mxu0 0.0
        %2906 = vmatpush1.msra.mxu0 0.0
        %2907 = vmatprep.subr.mxu0 0.0
        %2908 = vmatpush1.msra.mxu0 0.0
        %2909 = vmatprep.subr.mxu0 0.0
        %2910 = vmatpush1.msra.mxu0 0.0
        %2911 = vmatprep.subr.mxu0 0.0
        %2912 = vmatpush1.msra.mxu0 0.0
        %2913 = vmatprep.subr.mxu0 0.0
        %2914 = vmatpush1.msra.mxu0 0.0
        %2915 = vmatprep.subr.mxu0 0.0
        %2916 = vmatpush1.msra.mxu0 0.0
        %2917 = vmatprep.subr.mxu0 0.0
        %2918 = vmatpush1.msra.mxu0 0.0
        %2919 = vmatprep.subr.mxu0 0.0
        %2920 = vmatpush1.msra.mxu0 0.0
        %2921 = vmatprep.subr.mxu0 0.0
        %2922 = vmatpush1.msra.mxu0 0.0
        %2923 = vmatprep.subr.mxu0 0.0
        %2924 = vmatpush1.msra.mxu0 0.0
        %2925 = vmatprep.subr.mxu0 0.0
        %2926 = vmatpush1.msra.mxu0 0.0
        %2927 = vmatprep.subr.mxu0 0.0
        %2928 = vmatpush1.msra.mxu0 0.0
        %2929 = vmatprep.subr.mxu0 0.0
        %2930 = vmatpush1.msra.mxu0 0.0
        %2931 = vmatprep.subr.mxu0 0.0
        %2932 = vmatpush1.msra.mxu0 0.0
        %2933 = vmatprep.subr.mxu0 0.0
        %2934 = vmatpush1.msra.mxu0 0.0
        %2935 = vmatprep.subr.mxu0 0.0
        %2936 = vmatpush1.msra.mxu0 0.0
        %2937 = vmatprep.subr.mxu0 0.0
        %2938 = vmatpush1.msra.mxu0 0.0
        %2939 = vmatprep.subr.mxu0 0.0
        %2940 = vmatpush1.msra.mxu0 0.0
        %2941 = vmatprep.subr.mxu0 0.0
        %2942 = vmatpush1.msra.mxu0 0.0
        %2943 = vmatprep.subr.mxu0 0.0
        %2944 = vmatpush1.msra.mxu0 0.0
        %2945 = vmatprep.subr.mxu0 0.0
        %2946 = vmatpush1.msra.mxu0 0.0
        %2947 = vmatprep.subr.mxu0 0.0
        %2948 = vmatpush1.msra.mxu0 0.0
        %2949 = vmatprep.subr.mxu0 0.0
        %2950 = vmatpush1.msra.mxu0 0.0
        %2951 = vmatprep.subr.mxu0 0.0
        %2952 = vmatpush1.msra.mxu0 0.0
        %2953 = vmatprep.subr.mxu0 0.0
        %2954 = vmatpush1.msra.mxu0 0.0
        %2955 = vmatprep.subr.mxu0 0.0
        %2956 = vmatpush1.msra.mxu0 0.0
        %2957 = vmatprep.subr.mxu0 0.0
        %2958 = vmatpush1.msra.mxu0 0.0
        %2959 = vmatprep.subr.mxu0 0.0
        %2960 = vmatpush1.msra.mxu0 0.0
        %2961 = vmatprep.mubr.f32.mxu0 0.0
        %2962 = vmatmul.mubr.f32.gmra.mrb[0].mxu0 %v2806
        %v2963 = vpop.f32.mrb[0].mxu0
        %v2964 = vadd.f32 0.0, %v2963
        %v2965 = vpop.f32.mrb[0].mxu0
        %2966 = vmatprep.mubr.f32.mxu0 0.0
        %2967 = vmatmul.mubr.f32.gmra.mrb[0].mxu0 %v2809
        %v2968 = vpop.f32.mrb[0].mxu0
        %v2969 = vadd.f32 0.0, %v2968
        %v2970 = vpop.f32.mrb[0].mxu0
        %2971 = vmatprep.mubr.f32.mxu0 0.0
        %2972 = vmatmul.mubr.f32.gmra.mrb[0].mxu0 %v2812
        %v2973 = vpop.f32.mrb[0].mxu0
        %v2974 = vadd.f32 0.0, %v2973
        %v2975 = vpop.f32.mrb[0].mxu0
        %2976 = vdwg.mxu0
        %s2977 = scalar_lea.vmem [#allocation18], 576
        %v2978 = vld [vmem:[%s2977] sm:$0xff]
        %v2979 = vld [vmem:[%s2977 + $0x8] sm:$0xff]
        %v2980 = vld [vmem:[%s2977 + $0x10] sm:$0xff]
        %v2981 = vld [vmem:[%s2977 + $0x18] sm:$0xff]
        %v2982 = vld [vmem:[%s2977 + $0x20] sm:$0xff]
        %v2983 = vld [vmem:[%s2977 + $0x28] sm:$0xff]
        %v2984 = vld [vmem:[%s2977 + $0x30] sm:$0xff]
        %v2985 = vld [vmem:[%s2977 + $0x38] sm:$0xff]
        %v2986 = vld [vmem:[%s2977 + $0x40] sm:$0xff]
        %v2987 = vld [vmem:[%s2977 + $0x48] sm:$0xff]
        %v2988 = vld [vmem:[%s2977 + $0x50] sm:$0xff]
        %v2989 = vld [vmem:[%s2977 + $0x58] sm:$0xff]
        %v2990 = vld [vmem:[%s2977 + $0x60] sm:$0xff]
        %v2991 = vld [vmem:[%s2977 + $0x68] sm:$0xff]
        %v2992 = vld [vmem:[%s2977 + $0x70] sm:$0xff]
        %v2993 = vld [vmem:[%s2977 + $0x78] sm:$0xff]
        %v2994 = vld [vmem:[%s2977 + $0x80] sm:$0xff]
        %v2995 = vld [vmem:[%s2977 + $0x88] sm:$0xff]
        %v2996 = vld [vmem:[%s2977 + $0x90] sm:$0xff]
        %v2997 = vld [vmem:[%s2977 + $0x98] sm:$0xff]
        %v2998 = vld [vmem:[%s2977 + $0xa0] sm:$0xff]
        %v2999 = vld [vmem:[%s2977 + $0xa8] sm:$0xff]
        %v3000 = vld [vmem:[%s2977 + $0xb0] sm:$0xff]
        %v3001 = vld [vmem:[%s2977 + $0xb8] sm:$0xff]
        %v3002 = vld [vmem:[%s2977 + $0xc0] sm:$0xff]
        %v3003 = vld [vmem:[%s2977 + $0xc8] sm:$0xff]
        %v3004 = vld [vmem:[%s2977 + $0xd0] sm:$0xff]
        %v3005 = vld [vmem:[%s2977 + $0xd8] sm:$0xff]
        %v3006 = vld [vmem:[%s2977 + $0xe0] sm:$0xff]
        %v3007 = vld [vmem:[%s2977 + $0xe8] sm:$0xff]
        %v3008 = vld [vmem:[%s2977 + $0xf0] sm:$0xff]
        %v3009 = vld [vmem:[%s2977 + $0xf8] sm:$0xff]
        %v3010 = vld [vmem:[%s2977 + $0x100] sm:$0xff]
        %v3011 = vld [vmem:[%s2977 + $0x108] sm:$0xff]
        %v3012 = vld [vmem:[%s2977 + $0x110] sm:$0xff]
        %v3013 = vld [vmem:[%s2977 + $0x118] sm:$0xff]
        %v3014 = vld [vmem:[%s2977 + $0x120] sm:$0xff]
        %v3015 = vld [vmem:[%s2977 + $0x128] sm:$0xff]
        %v3016 = vld [vmem:[%s2977 + $0x130] sm:$0xff]
        %v3017 = vld [vmem:[%s2977 + $0x138] sm:$0xff]
        %v3018 = vld [vmem:[%s2977 + $0x140] sm:$0xff]
        %v3019 = vld [vmem:[%s2977 + $0x148] sm:$0xff]
        %v3020 = vld [vmem:[%s2977 + $0x150] sm:$0xff]
        %v3021 = vld [vmem:[%s2977 + $0x158] sm:$0xff]
        %v3022 = vld [vmem:[%s2977 + $0x160] sm:$0xff]
        %v3023 = vld [vmem:[%s2977 + $0x168] sm:$0xff]
        %v3024 = vld [vmem:[%s2977 + $0x170] sm:$0xff]
        %v3025 = vld [vmem:[%s2977 + $0x178] sm:$0xff]
        %v3026 = vld [vmem:[%s2977 + $0x180] sm:$0xff]
        %v3027 = vld [vmem:[%s2977 + $0x188] sm:$0xff]
        %v3028 = vld [vmem:[%s2977 + $0x190] sm:$0xff]
        %v3029 = vld [vmem:[%s2977 + $0x198] sm:$0xff]
        %v3030 = vld [vmem:[%s2977 + $0x1a0] sm:$0xff]
        %v3031 = vld [vmem:[%s2977 + $0x1a8] sm:$0xff]
        %v3032 = vld [vmem:[%s2977 + $0x1b0] sm:$0xff]
        %v3033 = vld [vmem:[%s2977 + $0x1b8] sm:$0xff]
        %v3034 = vld [vmem:[%s2977 + $0x1c0] sm:$0xff]
        %v3035 = vld [vmem:[%s2977 + $0x1c8] sm:$0xff]
        %v3036 = vld [vmem:[%s2977 + $0x1d0] sm:$0xff]
        %v3037 = vld [vmem:[%s2977 + $0x1d8] sm:$0xff]
        %v3038 = vld [vmem:[%s2977 + $0x1e0] sm:$0xff]
        %v3039 = vld [vmem:[%s2977 + $0x1e8] sm:$0xff]
        %v3040 = vld [vmem:[%s2977 + $0x1f0] sm:$0xff]
        %v3041 = vld [vmem:[%s2977 + $0x1f8] sm:$0xff]
        %v3042 = vld [vmem:[%s2977 + $0x200] sm:$0xff]
        %v3043 = vld [vmem:[%s2977 + $0x208] sm:$0xff]
        %v3044 = vld [vmem:[%s2977 + $0x210] sm:$0xff]
        %v3045 = vld [vmem:[%s2977 + $0x218] sm:$0xff]
        %v3046 = vld [vmem:[%s2977 + $0x220] sm:$0xff]
        %v3047 = vld [vmem:[%s2977 + $0x228] sm:$0xff]
        %v3048 = vld [vmem:[%s2977 + $0x230] sm:$0xff]
        %v3049 = vld [vmem:[%s2977 + $0x238] sm:$0xff]
        %v3051 = vsel %vm1781, %v2964, 0
        %v3054 = vsel %vm1781, %v2969, 0
        %v3057 = vsel %vm1781, %v2974, 0
        %3059 = vmatprep.subr.mxu0 %v2979
        %3060 = vmatpush1.msra.mxu0 %v2978
        %3061 = vmatprep.subr.mxu0 %v2981
        %3062 = vmatpush1.msra.mxu0 %v2980
        %3063 = vmatprep.subr.mxu0 %v2983
        %3064 = vmatpush1.msra.mxu0 %v2982
        %3065 = vmatprep.subr.mxu0 %v2985
        %3066 = vmatpush1.msra.mxu0 %v2984
        %3067 = vmatprep.subr.mxu0 %v2987
        %3068 = vmatpush1.msra.mxu0 %v2986
        %3069 = vmatprep.subr.mxu0 %v2989
        %3070 = vmatpush1.msra.mxu0 %v2988
        %3071 = vmatprep.subr.mxu0 %v2991
        %3072 = vmatpush1.msra.mxu0 %v2990
        %3073 = vmatprep.subr.mxu0 %v2993
        %3074 = vmatpush1.msra.mxu0 %v2992
        %3075 = vmatprep.subr.mxu0 %v2995
        %3076 = vmatpush1.msra.mxu0 %v2994
        %3077 = vmatprep.subr.mxu0 %v2997
        %3078 = vmatpush1.msra.mxu0 %v2996
        %3079 = vmatprep.subr.mxu0 %v2999
        %3080 = vmatpush1.msra.mxu0 %v2998
        %3081 = vmatprep.subr.mxu0 %v3001
        %3082 = vmatpush1.msra.mxu0 %v3000
        %3083 = vmatprep.subr.mxu0 %v3003
        %3084 = vmatpush1.msra.mxu0 %v3002
        %3085 = vmatprep.subr.mxu0 %v3005
        %3086 = vmatpush1.msra.mxu0 %v3004
        %3087 = vmatprep.subr.mxu0 %v3007
        %3088 = vmatpush1.msra.mxu0 %v3006
        %3089 = vmatprep.subr.mxu0 %v3009
        %3090 = vmatpush1.msra.mxu0 %v3008
        %3091 = vmatprep.subr.mxu0 %v3011
        %3092 = vmatpush1.msra.mxu0 %v3010
        %3093 = vmatprep.subr.mxu0 %v3013
        %3094 = vmatpush1.msra.mxu0 %v3012
        %3095 = vmatprep.subr.mxu0 %v3015
        %3096 = vmatpush1.msra.mxu0 %v3014
        %3097 = vmatprep.subr.mxu0 %v3017
        %3098 = vmatpush1.msra.mxu0 %v3016
        %3099 = vmatprep.subr.mxu0 %v3019
        %3100 = vmatpush1.msra.mxu0 %v3018
        %3101 = vmatprep.subr.mxu0 %v3021
        %3102 = vmatpush1.msra.mxu0 %v3020
        %3103 = vmatprep.subr.mxu0 %v3023
        %3104 = vmatpush1.msra.mxu0 %v3022
        %3105 = vmatprep.subr.mxu0 %v3025
        %3106 = vmatpush1.msra.mxu0 %v3024
        %3107 = vmatprep.subr.mxu0 %v3027
        %3108 = vmatpush1.msra.mxu0 %v3026
        %3109 = vmatprep.subr.mxu0 %v3029
        %3110 = vmatpush1.msra.mxu0 %v3028
        %3111 = vmatprep.subr.mxu0 %v3031
        %3112 = vmatpush1.msra.mxu0 %v3030
        %3113 = vmatprep.subr.mxu0 %v3033
        %3114 = vmatpush1.msra.mxu0 %v3032
        %3115 = vmatprep.subr.mxu0 %v3035
        %3116 = vmatpush1.msra.mxu0 %v3034
        %3117 = vmatprep.subr.mxu0 %v3037
        %3118 = vmatpush1.msra.mxu0 %v3036
        %3119 = vmatprep.subr.mxu0 %v3039
        %3120 = vmatpush1.msra.mxu0 %v3038
        %3121 = vmatprep.subr.mxu0 %v3041
        %3122 = vmatpush1.msra.mxu0 %v3040
        %3123 = vmatprep.mubr.f32.mxu0 %v2883
        %3124 = vmatmul.mubr.f32.gmra.mrb[0].mxu0 %v2881
        %v3125 = vpop.f32.mrb[0].mxu0
        %v3126 = vadd.f32 0.0, %v3125
        %v3127 = vpop.f32.mrb[0].mxu0
        %v3128 = vadd.f32 0.0, %v3127
        %3129 = vmatprep.mubr.f32.mxu0 %v2889
        %3130 = vmatmul.mubr.f32.gmra.mrb[0].mxu0 %v2887
        %v3131 = vpop.f32.mrb[0].mxu0
        %v3132 = vadd.f32 0.0, %v3131
        %v3133 = vpop.f32.mrb[0].mxu0
        %v3134 = vadd.f32 0.0, %v3133
        %3135 = vmatprep.mubr.f32.mxu0 %v2895
        %3136 = vmatmul.mubr.f32.gmra.mrb[0].mxu0 %v2893
        %v3137 = vpop.f32.mrb[0].mxu0
        %v3138 = vadd.f32 0.0, %v3137
        %v3139 = vpop.f32.mrb[0].mxu0
        %v3140 = vadd.f32 0.0, %v3139
        %3141 = vdwg.mxu0
        %3142 = vmatprep.subr.mxu0 %v3043
        %3143 = vmatpush1.msra.mxu0 %v3042
        %3144 = vmatprep.subr.mxu0 %v3045
        %3145 = vmatpush1.msra.mxu0 %v3044
        %3146 = vmatprep.subr.mxu0 %v3047
        %3147 = vmatpush1.msra.mxu0 %v3046
        %3148 = vmatprep.subr.mxu0 %v3049
        %3149 = vmatpush1.msra.mxu0 %v3048
        %3150 = vmatprep.subr.mxu0 0.0
        %3151 = vmatpush1.msra.mxu0 0.0
        %3152 = vmatprep.subr.mxu0 0.0
        %3153 = vmatpush1.msra.mxu0 0.0
        %3154 = vmatprep.subr.mxu0 0.0
        %3155 = vmatpush1.msra.mxu0 0.0
        %3156 = vmatprep.subr.mxu0 0.0
        %3157 = vmatpush1.msra.mxu0 0.0
        %3158 = vmatprep.subr.mxu0 0.0
        %3159 = vmatpush1.msra.mxu0 0.0
        %3160 = vmatprep.subr.mxu0 0.0
        %3161 = vmatpush1.msra.mxu0 0.0
        %3162 = vmatprep.subr.mxu0 0.0
        %3163 = vmatpush1.msra.mxu0 0.0
        %3164 = vmatprep.subr.mxu0 0.0
        %3165 = vmatpush1.msra.mxu0 0.0
        %3166 = vmatprep.subr.mxu0 0.0
        %3167 = vmatpush1.msra.mxu0 0.0
        %3168 = vmatprep.subr.mxu0 0.0
        %3169 = vmatpush1.msra.mxu0 0.0
        %3170 = vmatprep.subr.mxu0 0.0
        %3171 = vmatpush1.msra.mxu0 0.0
        %3172 = vmatprep.subr.mxu0 0.0
        %3173 = vmatpush1.msra.mxu0 0.0
        %3174 = vmatprep.subr.mxu0 0.0
        %3175 = vmatpush1.msra.mxu0 0.0
        %3176 = vmatprep.subr.mxu0 0.0
        %3177 = vmatpush1.msra.mxu0 0.0
        %3178 = vmatprep.subr.mxu0 0.0
        %3179 = vmatpush1.msra.mxu0 0.0
        %3180 = vmatprep.subr.mxu0 0.0
        %3181 = vmatpush1.msra.mxu0 0.0
        %3182 = vmatprep.subr.mxu0 0.0
        %3183 = vmatpush1.msra.mxu0 0.0
        %3184 = vmatprep.subr.mxu0 0.0
        %3185 = vmatpush1.msra.mxu0 0.0
        %3186 = vmatprep.subr.mxu0 0.0
        %3187 = vmatpush1.msra.mxu0 0.0
        %3188 = vmatprep.subr.mxu0 0.0
        %3189 = vmatpush1.msra.mxu0 0.0
        %3190 = vmatprep.subr.mxu0 0.0
        %3191 = vmatpush1.msra.mxu0 0.0
        %3192 = vmatprep.subr.mxu0 0.0
        %3193 = vmatpush1.msra.mxu0 0.0
        %3194 = vmatprep.subr.mxu0 0.0
        %3195 = vmatpush1.msra.mxu0 0.0
        %3196 = vmatprep.subr.mxu0 0.0
        %3197 = vmatpush1.msra.mxu0 0.0
        %3198 = vmatprep.subr.mxu0 0.0
        %3199 = vmatpush1.msra.mxu0 0.0
        %3200 = vmatprep.subr.mxu0 0.0
        %3201 = vmatpush1.msra.mxu0 0.0
        %3202 = vmatprep.subr.mxu0 0.0
        %3203 = vmatpush1.msra.mxu0 0.0
        %3204 = vmatprep.subr.mxu0 0.0
        %3205 = vmatpush1.msra.mxu0 0.0
        %3206 = vmatprep.mubr.f32.mxu0 0.0
        %3207 = vmatmul.mubr.f32.gmra.mrb[0].mxu0 %v3051
        %v3208 = vpop.f32.mrb[0].mxu0
        %v3209 = vadd.f32 %v3126, %v3208
        %v3210 = vpop.f32.mrb[0].mxu0
        %v3211 = vadd.f32 %v3128, %v3210
        %3212 = vmatprep.mubr.f32.mxu0 0.0
        %3213 = vmatmul.mubr.f32.gmra.mrb[0].mxu0 %v3054
        %v3214 = vpop.f32.mrb[0].mxu0
        %v3215 = vadd.f32 %v3132, %v3214
        %v3216 = vpop.f32.mrb[0].mxu0
        %v3217 = vadd.f32 %v3134, %v3216
        %3218 = vmatprep.mubr.f32.mxu0 0.0
        %3219 = vmatmul.mubr.f32.gmra.mrb[0].mxu0 %v3057
        %v3220 = vpop.f32.mrb[0].mxu0
        %v3221 = vadd.f32 %v3138, %v3220
        %v3222 = vpop.f32.mrb[0].mxu0
        %v3223 = vadd.f32 %v3140, %v3222
        %3224 = vdwg.mxu0
        %v3226 = vsel %vm1781, %v2716, 0
        %v3229 = vsel %vm1781, %v2721, 0
        %v3232 = vsel %vm1781, %v2726, 0
        %3234 = vmatprep.subr.mxu0 %v2730
        %3235 = vmatpush1.msra.mxu0 %v2729
        %3236 = vmatprep.subr.mxu0 %v2732
        %3237 = vmatpush1.msra.mxu0 %v2731
        %3238 = vmatprep.subr.mxu0 %v2734
        %3239 = vmatpush1.msra.mxu0 %v2733
        %3240 = vmatprep.subr.mxu0 %v2736
        %3241 = vmatpush1.msra.mxu0 %v2735
        %3242 = vmatprep.subr.mxu0 %v2738
        %3243 = vmatpush1.msra.mxu0 %v2737
        %3244 = vmatprep.subr.mxu0 %v2740
        %3245 = vmatpush1.msra.mxu0 %v2739
        %3246 = vmatprep.subr.mxu0 %v2742
        %3247 = vmatpush1.msra.mxu0 %v2741
        %3248 = vmatprep.subr.mxu0 %v2744
        %3249 = vmatpush1.msra.mxu0 %v2743
        %3250 = vmatprep.subr.mxu0 %v2746
        %3251 = vmatpush1.msra.mxu0 %v2745
        %3252 = vmatprep.subr.mxu0 %v2748
        %3253 = vmatpush1.msra.mxu0 %v2747
        %3254 = vmatprep.subr.mxu0 %v2750
        %3255 = vmatpush1.msra.mxu0 %v2749
        %3256 = vmatprep.subr.mxu0 %v2752
        %3257 = vmatpush1.msra.mxu0 %v2751
        %3258 = vmatprep.subr.mxu0 %v2754
        %3259 = vmatpush1.msra.mxu0 %v2753
        %3260 = vmatprep.subr.mxu0 %v2756
        %3261 = vmatpush1.msra.mxu0 %v2755
        %3262 = vmatprep.subr.mxu0 %v2758
        %3263 = vmatpush1.msra.mxu0 %v2757
        %3264 = vmatprep.subr.mxu0 %v2760
        %3265 = vmatpush1.msra.mxu0 %v2759
        %3266 = vmatprep.subr.mxu0 %v2762
        %3267 = vmatpush1.msra.mxu0 %v2761
        %3268 = vmatprep.subr.mxu0 %v2764
        %3269 = vmatpush1.msra.mxu0 %v2763
        %3270 = vmatprep.subr.mxu0 %v2766
        %3271 = vmatpush1.msra.mxu0 %v2765
        %3272 = vmatprep.subr.mxu0 %v2768
        %3273 = vmatpush1.msra.mxu0 %v2767
        %3274 = vmatprep.subr.mxu0 %v2770
        %3275 = vmatpush1.msra.mxu0 %v2769
        %3276 = vmatprep.subr.mxu0 %v2772
        %3277 = vmatpush1.msra.mxu0 %v2771
        %3278 = vmatprep.subr.mxu0 %v2774
        %3279 = vmatpush1.msra.mxu0 %v2773
        %3280 = vmatprep.subr.mxu0 %v2776
        %3281 = vmatpush1.msra.mxu0 %v2775
        %3282 = vmatprep.subr.mxu0 %v2778
        %3283 = vmatpush1.msra.mxu0 %v2777
        %3284 = vmatprep.subr.mxu0 %v2780
        %3285 = vmatpush1.msra.mxu0 %v2779
        %3286 = vmatprep.subr.mxu0 %v2782
        %3287 = vmatpush1.msra.mxu0 %v2781
        %3288 = vmatprep.subr.mxu0 %v2784
        %3289 = vmatpush1.msra.mxu0 %v2783
        %3290 = vmatprep.subr.mxu0 %v2786
        %3291 = vmatpush1.msra.mxu0 %v2785
        %3292 = vmatprep.subr.mxu0 %v2788
        %3293 = vmatpush1.msra.mxu0 %v2787
        %3294 = vmatprep.subr.mxu0 %v2790
        %3295 = vmatpush1.msra.mxu0 %v2789
        %3296 = vmatprep.subr.mxu0 %v2792
        %3297 = vmatpush1.msra.mxu0 %v2791
        %3298 = vmatprep.mubr.f32.mxu0 %v2635
        %3299 = vmatmul.mubr.f32.gmra.mrb[0].mxu0 %v2633
        %v3300 = vpop.f32.mrb[0].mxu0
        %v3301 = vadd.f32 %v3209, %v3300
        %v3302 = vpop.f32.mrb[0].mxu0
        %v3303 = vadd.f32 %v3211, %v3302
        %3304 = vmatprep.mubr.f32.mxu0 %v2641
        %3305 = vmatmul.mubr.f32.gmra.mrb[0].mxu0 %v2639
        %v3306 = vpop.f32.mrb[0].mxu0
        %v3307 = vadd.f32 %v3215, %v3306
        %v3308 = vpop.f32.mrb[0].mxu0
        %v3309 = vadd.f32 %v3217, %v3308
        %3310 = vmatprep.mubr.f32.mxu0 %v2647
        %3311 = vmatmul.mubr.f32.gmra.mrb[0].mxu0 %v2645
        %v3312 = vpop.f32.mrb[0].mxu0
        %v3313 = vadd.f32 %v3221, %v3312
        %v3314 = vpop.f32.mrb[0].mxu0
        %v3315 = vadd.f32 %v3223, %v3314
        %3316 = vdwg.mxu0
        %3317 = vmatprep.subr.mxu0 %v2794
        %3318 = vmatpush1.msra.mxu0 %v2793
        %3319 = vmatprep.subr.mxu0 %v2796
        %3320 = vmatpush1.msra.mxu0 %v2795
        %3321 = vmatprep.subr.mxu0 %v2798
        %3322 = vmatpush1.msra.mxu0 %v2797
        %3323 = vmatprep.subr.mxu0 %v2800
        %3324 = vmatpush1.msra.mxu0 %v2799
        %3325 = vmatprep.subr.mxu0 0.0
        %3326 = vmatpush1.msra.mxu0 0.0
        %3327 = vmatprep.subr.mxu0 0.0
        %3328 = vmatpush1.msra.mxu0 0.0
        %3329 = vmatprep.subr.mxu0 0.0
        %3330 = vmatpush1.msra.mxu0 0.0
        %3331 = vmatprep.subr.mxu0 0.0
        %3332 = vmatpush1.msra.mxu0 0.0
        %3333 = vmatprep.subr.mxu0 0.0
        %3334 = vmatpush1.msra.mxu0 0.0
        %3335 = vmatprep.subr.mxu0 0.0
        %3336 = vmatpush1.msra.mxu0 0.0
        %3337 = vmatprep.subr.mxu0 0.0
        %3338 = vmatpush1.msra.mxu0 0.0
        %3339 = vmatprep.subr.mxu0 0.0
        %3340 = vmatpush1.msra.mxu0 0.0
        %3341 = vmatprep.subr.mxu0 0.0
        %3342 = vmatpush1.msra.mxu0 0.0
        %3343 = vmatprep.subr.mxu0 0.0
        %3344 = vmatpush1.msra.mxu0 0.0
        %3345 = vmatprep.subr.mxu0 0.0
        %3346 = vmatpush1.msra.mxu0 0.0
        %3347 = vmatprep.subr.mxu0 0.0
        %3348 = vmatpush1.msra.mxu0 0.0
        %3349 = vmatprep.subr.mxu0 0.0
        %3350 = vmatpush1.msra.mxu0 0.0
        %3351 = vmatprep.subr.mxu0 0.0
        %3352 = vmatpush1.msra.mxu0 0.0
        %3353 = vmatprep.subr.mxu0 0.0
        %3354 = vmatpush1.msra.mxu0 0.0
        %3355 = vmatprep.subr.mxu0 0.0
        %3356 = vmatpush1.msra.mxu0 0.0
        %3357 = vmatprep.subr.mxu0 0.0
        %3358 = vmatpush1.msra.mxu0 0.0
        %3359 = vmatprep.subr.mxu0 0.0
        %3360 = vmatpush1.msra.mxu0 0.0
        %3361 = vmatprep.subr.mxu0 0.0
        %3362 = vmatpush1.msra.mxu0 0.0
        %3363 = vmatprep.subr.mxu0 0.0
        %3364 = vmatpush1.msra.mxu0 0.0
        %3365 = vmatprep.subr.mxu0 0.0
        %3366 = vmatpush1.msra.mxu0 0.0
        %3367 = vmatprep.subr.mxu0 0.0
        %3368 = vmatpush1.msra.mxu0 0.0
        %3369 = vmatprep.subr.mxu0 0.0
        %3370 = vmatpush1.msra.mxu0 0.0
        %3371 = vmatprep.subr.mxu0 0.0
        %3372 = vmatpush1.msra.mxu0 0.0
        %3373 = vmatprep.subr.mxu0 0.0
        %3374 = vmatpush1.msra.mxu0 0.0
        %3375 = vmatprep.subr.mxu0 0.0
        %3376 = vmatpush1.msra.mxu0 0.0
        %3377 = vmatprep.subr.mxu0 0.0
        %3378 = vmatpush1.msra.mxu0 0.0
        %3379 = vmatprep.subr.mxu0 0.0
        %3380 = vmatpush1.msra.mxu0 0.0
        %3381 = vmatprep.mubr.f32.mxu0 0.0
        %3382 = vmatmul.mubr.f32.gmra.mrb[0].mxu0 %v3226
        %v3383 = vpop.f32.mrb[0].mxu0
        %v3384 = vadd.f32 %v3301, %v3383
        %v3385 = vpop.f32.mrb[0].mxu0
        %v3386 = vadd.f32 %v3303, %v3385
        %3387 = vmatprep.mubr.f32.mxu0 0.0
        %3388 = vmatmul.mubr.f32.gmra.mrb[0].mxu0 %v3229
        %v3389 = vpop.f32.mrb[0].mxu0
        %v3390 = vadd.f32 %v3307, %v3389
        %v3391 = vpop.f32.mrb[0].mxu0
        %v3392 = vadd.f32 %v3309, %v3391
        %3393 = vmatprep.mubr.f32.mxu0 0.0
        %3394 = vmatmul.mubr.f32.gmra.mrb[0].mxu0 %v3232
        %v3395 = vpop.f32.mrb[0].mxu0
        %v3396 = vadd.f32 %v3313, %v3395
        %v3397 = vpop.f32.mrb[0].mxu0
        %v3398 = vadd.f32 %v3315, %v3397
        %3399 = vdwg.mxu0
        %s3400 = scalar_lea.vmem [#allocation17], 48
        %v3401 = vld [vmem:[%s3400] sm:$0xff]
        %v3402 = vld [vmem:[%s3400 + $0x8] sm:$0xff]
        %v3403 = vld [vmem:[%s3400 + $0x10] sm:$0x3]
        %v3405 = vsel %vm2546, %v3401, 0
        %v3408 = vsel %vm2546, %v3402, 0
        %v3411 = vsel %vm2546, %v3403, 0
        %3413 = vmatprep.subr.mxu0 %v2460
        %3414 = vmatpush1.msra.mxu0 %v2458
        %3415 = vmatprep.subr.mxu0 %v2561
        %3416 = vmatpush1.msra.mxu0 %v2558
        %3417 = vmatprep.subr.mxu0 0.0
        %3418 = vmatpush1.msra.mxu0 0.0
        %3419 = vmatprep.subr.mxu0 0.0
        %3420 = vmatpush1.msra.mxu0 0.0
        %3421 = vmatprep.subr.mxu0 0.0
        %3422 = vmatpush1.msra.mxu0 0.0
        %3423 = vmatprep.subr.mxu0 0.0
        %3424 = vmatpush1.msra.mxu0 0.0
        %3425 = vmatprep.subr.mxu0 0.0
        %3426 = vmatpush1.msra.mxu0 0.0
        %3427 = vmatprep.subr.mxu0 0.0
        %3428 = vmatpush1.msra.mxu0 0.0
        %3429 = vmatprep.subr.mxu0 0.0
        %3430 = vmatpush1.msra.mxu0 0.0
        %3431 = vmatprep.subr.mxu0 0.0
        %3432 = vmatpush1.msra.mxu0 0.0
        %3433 = vmatprep.subr.mxu0 0.0
        %3434 = vmatpush1.msra.mxu0 0.0
        %3435 = vmatprep.subr.mxu0 0.0
        %3436 = vmatpush1.msra.mxu0 0.0
        %3437 = vmatprep.subr.mxu0 0.0
        %3438 = vmatpush1.msra.mxu0 0.0
        %3439 = vmatprep.subr.mxu0 0.0
        %3440 = vmatpush1.msra.mxu0 0.0
        %3441 = vmatprep.subr.mxu0 0.0
        %3442 = vmatpush1.msra.mxu0 0.0
        %3443 = vmatprep.subr.mxu0 0.0
        %3444 = vmatpush1.msra.mxu0 0.0
        %3445 = vmatprep.subr.mxu0 0.0
        %3446 = vmatpush1.msra.mxu0 0.0
        %3447 = vmatprep.subr.mxu0 0.0
        %3448 = vmatpush1.msra.mxu0 0.0
        %3449 = vmatprep.subr.mxu0 0.0
        %3450 = vmatpush1.msra.mxu0 0.0
        %3451 = vmatprep.subr.mxu0 0.0
        %3452 = vmatpush1.msra.mxu0 0.0
        %3453 = vmatprep.subr.mxu0 0.0
        %3454 = vmatpush1.msra.mxu0 0.0
        %3455 = vmatprep.subr.mxu0 0.0
        %3456 = vmatpush1.msra.mxu0 0.0
        %3457 = vmatprep.subr.mxu0 0.0
        %3458 = vmatpush1.msra.mxu0 0.0
        %3459 = vmatprep.subr.mxu0 0.0
        %3460 = vmatpush1.msra.mxu0 0.0
        %3461 = vmatprep.subr.mxu0 0.0
        %3462 = vmatpush1.msra.mxu0 0.0
        %3463 = vmatprep.subr.mxu0 0.0
        %3464 = vmatpush1.msra.mxu0 0.0
        %3465 = vmatprep.subr.mxu0 0.0
        %3466 = vmatpush1.msra.mxu0 0.0
        %3467 = vmatprep.subr.mxu0 0.0
        %3468 = vmatpush1.msra.mxu0 0.0
        %3469 = vmatprep.subr.mxu0 0.0
        %3470 = vmatpush1.msra.mxu0 0.0
        %3471 = vmatprep.subr.mxu0 0.0
        %3472 = vmatpush1.msra.mxu0 0.0
        %3473 = vmatprep.subr.mxu0 0.0
        %3474 = vmatpush1.msra.mxu0 0.0
        %3475 = vmatprep.subr.mxu0 0.0
        %3476 = vmatpush1.msra.mxu0 0.0
        %3477 = vmatprep.mubr.f32.mxu0 0.0
        %3478 = vmatmul.mubr.f32.gmra.mrb[0].mxu0 %v3405
        %v3479 = vpop.f32.mrb[0].mxu0
        %v3480 = vadd.f32 0.0, %v3479
        %v3481 = vpop.f32.mrb[0].mxu0
        %v3482 = vadd.f32 0.0, %v3481
        %3483 = vmatprep.mubr.f32.mxu0 0.0
        %3484 = vmatmul.mubr.f32.gmra.mrb[0].mxu0 %v3408
        %v3485 = vpop.f32.mrb[0].mxu0
        %v3486 = vadd.f32 0.0, %v3485
        %v3487 = vpop.f32.mrb[0].mxu0
        %v3488 = vadd.f32 0.0, %v3487
        %3489 = vmatprep.mubr.f32.mxu0 0.0
        %3490 = vmatmul.mubr.f32.gmra.mrb[0].mxu0 %v3411
        %v3491 = vpop.f32.mrb[0].mxu0
        %v3492 = vadd.f32 0.0, %v3491
        %v3493 = vpop.f32.mrb[0].mxu0
        %v3494 = vadd.f32 0.0, %v3493
        %3495 = vdwg.mxu0
        %3496 = vmatprep.subr.mxu0 0.0
        %3497 = vmatpush1.msra.mxu0 %v2535
        %3498 = vmatprep.subr.mxu0 0.0
        %3499 = vmatpush1.msra.mxu0 %v2564
        %3500 = vmatprep.subr.mxu0 0.0
        %3501 = vmatpush1.msra.mxu0 0.0
        %3502 = vmatprep.subr.mxu0 0.0
        %3503 = vmatpush1.msra.mxu0 0.0
        %3504 = vmatprep.subr.mxu0 0.0
        %3505 = vmatpush1.msra.mxu0 0.0
        %3506 = vmatprep.subr.mxu0 0.0
        %3507 = vmatpush1.msra.mxu0 0.0
        %3508 = vmatprep.subr.mxu0 0.0
        %3509 = vmatpush1.msra.mxu0 0.0
        %3510 = vmatprep.subr.mxu0 0.0
        %3511 = vmatpush1.msra.mxu0 0.0
        %3512 = vmatprep.subr.mxu0 0.0
        %3513 = vmatpush1.msra.mxu0 0.0
        %3514 = vmatprep.subr.mxu0 0.0
        %3515 = vmatpush1.msra.mxu0 0.0
        %3516 = vmatprep.subr.mxu0 0.0
        %3517 = vmatpush1.msra.mxu0 0.0
        %3518 = vmatprep.subr.mxu0 0.0
        %3519 = vmatpush1.msra.mxu0 0.0
        %3520 = vmatprep.subr.mxu0 0.0
        %3521 = vmatpush1.msra.mxu0 0.0
        %3522 = vmatprep.subr.mxu0 0.0
        %3523 = vmatpush1.msra.mxu0 0.0
        %3524 = vmatprep.subr.mxu0 0.0
        %3525 = vmatpush1.msra.mxu0 0.0
        %3526 = vmatprep.subr.mxu0 0.0
        %3527 = vmatpush1.msra.mxu0 0.0
        %3528 = vmatprep.subr.mxu0 0.0
        %3529 = vmatpush1.msra.mxu0 0.0
        %3530 = vmatprep.subr.mxu0 0.0
        %3531 = vmatpush1.msra.mxu0 0.0
        %3532 = vmatprep.subr.mxu0 0.0
        %3533 = vmatpush1.msra.mxu0 0.0
        %3534 = vmatprep.subr.mxu0 0.0
        %3535 = vmatpush1.msra.mxu0 0.0
        %3536 = vmatprep.subr.mxu0 0.0
        %3537 = vmatpush1.msra.mxu0 0.0
        %3538 = vmatprep.subr.mxu0 0.0
        %3539 = vmatpush1.msra.mxu0 0.0
        %3540 = vmatprep.subr.mxu0 0.0
        %3541 = vmatpush1.msra.mxu0 0.0
        %3542 = vmatprep.subr.mxu0 0.0
        %3543 = vmatpush1.msra.mxu0 0.0
        %3544 = vmatprep.subr.mxu0 0.0
        %3545 = vmatpush1.msra.mxu0 0.0
        %3546 = vmatprep.subr.mxu0 0.0
        %3547 = vmatpush1.msra.mxu0 0.0
        %3548 = vmatprep.subr.mxu0 0.0
        %3549 = vmatpush1.msra.mxu0 0.0
        %3550 = vmatprep.subr.mxu0 0.0
        %3551 = vmatpush1.msra.mxu0 0.0
        %3552 = vmatprep.subr.mxu0 0.0
        %3553 = vmatpush1.msra.mxu0 0.0
        %3554 = vmatprep.subr.mxu0 0.0
        %3555 = vmatpush1.msra.mxu0 0.0
        %3556 = vmatprep.subr.mxu0 0.0
        %3557 = vmatpush1.msra.mxu0 0.0
        %3558 = vmatprep.subr.mxu0 0.0
        %3559 = vmatpush1.msra.mxu0 0.0
        %3560 = vmatprep.mubr.f32.mxu0 0.0
        %3561 = vmatmul.mubr.f32.gmra.mrb[0].mxu0 %v3405
        %v3562 = vpop.f32.mrb[0].mxu0
        %v3563 = vadd.f32 0.0, %v3562
        %v3564 = vpop.f32.mrb[0].mxu0
        %3565 = vmatprep.mubr.f32.mxu0 0.0
        %3566 = vmatmul.mubr.f32.gmra.mrb[0].mxu0 %v3408
        %v3567 = vpop.f32.mrb[0].mxu0
        %v3568 = vadd.f32 0.0, %v3567
        %v3569 = vpop.f32.mrb[0].mxu0
        %3570 = vmatprep.mubr.f32.mxu0 0.0
        %3571 = vmatmul.mubr.f32.gmra.mrb[0].mxu0 %v3411
        %v3572 = vpop.f32.mrb[0].mxu0
        %v3573 = vadd.f32 0.0, %v3572
        %v3574 = vpop.f32.mrb[0].mxu0
        %3575 = vdwg.mxu0
        %s3576 = scalar_lea.vmem [#allocation18], 1152
        %v3577 = vld [vmem:[%s3576] sm:$0xff]
        %v3578 = vld [vmem:[%s3576 + $0x8] sm:$0xff]
        %v3579 = vld [vmem:[%s3576 + $0x10] sm:$0xff]
        %v3580 = vld [vmem:[%s3576 + $0x18] sm:$0xff]
        %v3581 = vld [vmem:[%s3576 + $0x20] sm:$0xff]
        %v3582 = vld [vmem:[%s3576 + $0x28] sm:$0xff]
        %v3583 = vld [vmem:[%s3576 + $0x30] sm:$0xff]
        %v3584 = vld [vmem:[%s3576 + $0x38] sm:$0xff]
        %v3585 = vld [vmem:[%s3576 + $0x40] sm:$0xff]
        %v3586 = vld [vmem:[%s3576 + $0x48] sm:$0xff]
        %v3587 = vld [vmem:[%s3576 + $0x50] sm:$0xff]
        %v3588 = vld [vmem:[%s3576 + $0x58] sm:$0xff]
        %v3589 = vld [vmem:[%s3576 + $0x60] sm:$0xff]
        %v3590 = vld [vmem:[%s3576 + $0x68] sm:$0xff]
        %v3591 = vld [vmem:[%s3576 + $0x70] sm:$0xff]
        %v3592 = vld [vmem:[%s3576 + $0x78] sm:$0xff]
        %v3593 = vld [vmem:[%s3576 + $0x80] sm:$0xff]
        %v3594 = vld [vmem:[%s3576 + $0x88] sm:$0xff]
        %v3595 = vld [vmem:[%s3576 + $0x90] sm:$0xff]
        %v3596 = vld [vmem:[%s3576 + $0x98] sm:$0xff]
        %v3597 = vld [vmem:[%s3576 + $0xa0] sm:$0xff]
        %v3598 = vld [vmem:[%s3576 + $0xa8] sm:$0xff]
        %v3599 = vld [vmem:[%s3576 + $0xb0] sm:$0xff]
        %v3600 = vld [vmem:[%s3576 + $0xb8] sm:$0xff]
        %v3601 = vld [vmem:[%s3576 + $0xc0] sm:$0xff]
        %v3602 = vld [vmem:[%s3576 + $0xc8] sm:$0xff]
        %v3603 = vld [vmem:[%s3576 + $0xd0] sm:$0xff]
        %v3604 = vld [vmem:[%s3576 + $0xd8] sm:$0xff]
        %v3605 = vld [vmem:[%s3576 + $0xe0] sm:$0xff]
        %v3606 = vld [vmem:[%s3576 + $0xe8] sm:$0xff]
        %v3607 = vld [vmem:[%s3576 + $0xf0] sm:$0xff]
        %v3608 = vld [vmem:[%s3576 + $0xf8] sm:$0xff]
        %v3609 = vld [vmem:[%s3576 + $0x100] sm:$0xff]
        %v3610 = vld [vmem:[%s3576 + $0x108] sm:$0xff]
        %v3611 = vld [vmem:[%s3576 + $0x110] sm:$0xff]
        %v3612 = vld [vmem:[%s3576 + $0x118] sm:$0xff]
        %v3613 = vld [vmem:[%s3576 + $0x120] sm:$0xff]
        %v3614 = vld [vmem:[%s3576 + $0x128] sm:$0xff]
        %v3615 = vld [vmem:[%s3576 + $0x130] sm:$0xff]
        %v3616 = vld [vmem:[%s3576 + $0x138] sm:$0xff]
        %v3617 = vld [vmem:[%s3576 + $0x140] sm:$0xff]
        %v3618 = vld [vmem:[%s3576 + $0x148] sm:$0xff]
        %v3619 = vld [vmem:[%s3576 + $0x150] sm:$0xff]
        %v3620 = vld [vmem:[%s3576 + $0x158] sm:$0xff]
        %v3621 = vld [vmem:[%s3576 + $0x160] sm:$0xff]
        %v3622 = vld [vmem:[%s3576 + $0x168] sm:$0xff]
        %v3623 = vld [vmem:[%s3576 + $0x170] sm:$0xff]
        %v3624 = vld [vmem:[%s3576 + $0x178] sm:$0xff]
        %v3625 = vld [vmem:[%s3576 + $0x180] sm:$0xff]
        %v3626 = vld [vmem:[%s3576 + $0x188] sm:$0xff]
        %v3627 = vld [vmem:[%s3576 + $0x190] sm:$0xff]
        %v3628 = vld [vmem:[%s3576 + $0x198] sm:$0xff]
        %v3629 = vld [vmem:[%s3576 + $0x1a0] sm:$0xff]
        %v3630 = vld [vmem:[%s3576 + $0x1a8] sm:$0xff]
        %v3631 = vld [vmem:[%s3576 + $0x1b0] sm:$0xff]
        %v3632 = vld [vmem:[%s3576 + $0x1b8] sm:$0xff]
        %v3633 = vld [vmem:[%s3576 + $0x1c0] sm:$0xff]
        %v3634 = vld [vmem:[%s3576 + $0x1c8] sm:$0xff]
        %v3635 = vld [vmem:[%s3576 + $0x1d0] sm:$0xff]
        %v3636 = vld [vmem:[%s3576 + $0x1d8] sm:$0xff]
        %v3637 = vld [vmem:[%s3576 + $0x1e0] sm:$0xff]
        %v3638 = vld [vmem:[%s3576 + $0x1e8] sm:$0xff]
        %v3639 = vld [vmem:[%s3576 + $0x1f0] sm:$0xff]
        %v3640 = vld [vmem:[%s3576 + $0x1f8] sm:$0xff]
        %v3641 = vld [vmem:[%s3576 + $0x200] sm:$0xff]
        %v3642 = vld [vmem:[%s3576 + $0x208] sm:$0xff]
        %v3643 = vld [vmem:[%s3576 + $0x210] sm:$0xff]
        %v3644 = vld [vmem:[%s3576 + $0x218] sm:$0xff]
        %v3645 = vld [vmem:[%s3576 + $0x220] sm:$0xff]
        %v3646 = vld [vmem:[%s3576 + $0x228] sm:$0xff]
        %v3647 = vld [vmem:[%s3576 + $0x230] sm:$0xff]
        %v3648 = vld [vmem:[%s3576 + $0x238] sm:$0xff]
        %v3650 = vsel %vm1781, %v3563, 0
        %v3653 = vsel %vm1781, %v3568, 0
        %v3656 = vsel %vm1781, %v3573, 0
        %3658 = vmatprep.subr.mxu0 %v3578
        %3659 = vmatpush1.msra.mxu0 %v3577
        %3660 = vmatprep.subr.mxu0 %v3580
        %3661 = vmatpush1.msra.mxu0 %v3579
        %3662 = vmatprep.subr.mxu0 %v3582
        %3663 = vmatpush1.msra.mxu0 %v3581
        %3664 = vmatprep.subr.mxu0 %v3584
        %3665 = vmatpush1.msra.mxu0 %v3583
        %3666 = vmatprep.subr.mxu0 %v3586
        %3667 = vmatpush1.msra.mxu0 %v3585
        %3668 = vmatprep.subr.mxu0 %v3588
        %3669 = vmatpush1.msra.mxu0 %v3587
        %3670 = vmatprep.subr.mxu0 %v3590
        %3671 = vmatpush1.msra.mxu0 %v3589
        %3672 = vmatprep.subr.mxu0 %v3592
        %3673 = vmatpush1.msra.mxu0 %v3591
        %3674 = vmatprep.subr.mxu0 %v3594
        %3675 = vmatpush1.msra.mxu0 %v3593
        %3676 = vmatprep.subr.mxu0 %v3596
        %3677 = vmatpush1.msra.mxu0 %v3595
        %3678 = vmatprep.subr.mxu0 %v3598
        %3679 = vmatpush1.msra.mxu0 %v3597
        %3680 = vmatprep.subr.mxu0 %v3600
        %3681 = vmatpush1.msra.mxu0 %v3599
        %3682 = vmatprep.subr.mxu0 %v3602
        %3683 = vmatpush1.msra.mxu0 %v3601
        %3684 = vmatprep.subr.mxu0 %v3604
        %3685 = vmatpush1.msra.mxu0 %v3603
        %3686 = vmatprep.subr.mxu0 %v3606
        %3687 = vmatpush1.msra.mxu0 %v3605
        %3688 = vmatprep.subr.mxu0 %v3608
        %3689 = vmatpush1.msra.mxu0 %v3607
        %3690 = vmatprep.subr.mxu0 %v3610
        %3691 = vmatpush1.msra.mxu0 %v3609
        %3692 = vmatprep.subr.mxu0 %v3612
        %3693 = vmatpush1.msra.mxu0 %v3611
        %3694 = vmatprep.subr.mxu0 %v3614
        %3695 = vmatpush1.msra.mxu0 %v3613
        %3696 = vmatprep.subr.mxu0 %v3616
        %3697 = vmatpush1.msra.mxu0 %v3615
        %3698 = vmatprep.subr.mxu0 %v3618
        %3699 = vmatpush1.msra.mxu0 %v3617
        %3700 = vmatprep.subr.mxu0 %v3620
        %3701 = vmatpush1.msra.mxu0 %v3619
        %3702 = vmatprep.subr.mxu0 %v3622
        %3703 = vmatpush1.msra.mxu0 %v3621
        %3704 = vmatprep.subr.mxu0 %v3624
        %3705 = vmatpush1.msra.mxu0 %v3623
        %3706 = vmatprep.subr.mxu0 %v3626
        %3707 = vmatpush1.msra.mxu0 %v3625
        %3708 = vmatprep.subr.mxu0 %v3628
        %3709 = vmatpush1.msra.mxu0 %v3627
        %3710 = vmatprep.subr.mxu0 %v3630
        %3711 = vmatpush1.msra.mxu0 %v3629
        %3712 = vmatprep.subr.mxu0 %v3632
        %3713 = vmatpush1.msra.mxu0 %v3631
        %3714 = vmatprep.subr.mxu0 %v3634
        %3715 = vmatpush1.msra.mxu0 %v3633
        %3716 = vmatprep.subr.mxu0 %v3636
        %3717 = vmatpush1.msra.mxu0 %v3635
        %3718 = vmatprep.subr.mxu0 %v3638
        %3719 = vmatpush1.msra.mxu0 %v3637
        %3720 = vmatprep.subr.mxu0 %v3640
        %3721 = vmatpush1.msra.mxu0 %v3639
        %3722 = vmatprep.mubr.f32.mxu0 %v3482
        %3723 = vmatmul.mubr.f32.gmra.mrb[0].mxu0 %v3480
        %v3724 = vpop.f32.mrb[0].mxu0
        %v3725 = vadd.f32 0.0, %v3724
        %v3726 = vpop.f32.mrb[0].mxu0
        %v3727 = vadd.f32 0.0, %v3726
        %3728 = vmatprep.mubr.f32.mxu0 %v3488
        %3729 = vmatmul.mubr.f32.gmra.mrb[0].mxu0 %v3486
        %v3730 = vpop.f32.mrb[0].mxu0
        %v3731 = vadd.f32 0.0, %v3730
        %v3732 = vpop.f32.mrb[0].mxu0
        %v3733 = vadd.f32 0.0, %v3732
        %3734 = vmatprep.mubr.f32.mxu0 %v3494
        %3735 = vmatmul.mubr.f32.gmra.mrb[0].mxu0 %v3492
        %v3736 = vpop.f32.mrb[0].mxu0
        %v3737 = vadd.f32 0.0, %v3736
        %v3738 = vpop.f32.mrb[0].mxu0
        %v3739 = vadd.f32 0.0, %v3738
        %3740 = vdwg.mxu0
        %3741 = vmatprep.subr.mxu0 %v3642
        %3742 = vmatpush1.msra.mxu0 %v3641
        %3743 = vmatprep.subr.mxu0 %v3644
        %3744 = vmatpush1.msra.mxu0 %v3643
        %3745 = vmatprep.subr.mxu0 %v3646
        %3746 = vmatpush1.msra.mxu0 %v3645
        %3747 = vmatprep.subr.mxu0 %v3648
        %3748 = vmatpush1.msra.mxu0 %v3647
        %3749 = vmatprep.subr.mxu0 0.0
        %3750 = vmatpush1.msra.mxu0 0.0
        %3751 = vmatprep.subr.mxu0 0.0
        %3752 = vmatpush1.msra.mxu0 0.0
        %3753 = vmatprep.subr.mxu0 0.0
        %3754 = vmatpush1.msra.mxu0 0.0
        %3755 = vmatprep.subr.mxu0 0.0
        %3756 = vmatpush1.msra.mxu0 0.0
        %3757 = vmatprep.subr.mxu0 0.0
        %3758 = vmatpush1.msra.mxu0 0.0
        %3759 = vmatprep.subr.mxu0 0.0
        %3760 = vmatpush1.msra.mxu0 0.0
        %3761 = vmatprep.subr.mxu0 0.0
        %3762 = vmatpush1.msra.mxu0 0.0
        %3763 = vmatprep.subr.mxu0 0.0
        %3764 = vmatpush1.msra.mxu0 0.0
        %3765 = vmatprep.subr.mxu0 0.0
        %3766 = vmatpush1.msra.mxu0 0.0
        %3767 = vmatprep.subr.mxu0 0.0
        %3768 = vmatpush1.msra.mxu0 0.0
        %3769 = vmatprep.subr.mxu0 0.0
        %3770 = vmatpush1.msra.mxu0 0.0
        %3771 = vmatprep.subr.mxu0 0.0
        %3772 = vmatpush1.msra.mxu0 0.0
        %3773 = vmatprep.subr.mxu0 0.0
        %3774 = vmatpush1.msra.mxu0 0.0
        %3775 = vmatprep.subr.mxu0 0.0
        %3776 = vmatpush1.msra.mxu0 0.0
        %3777 = vmatprep.subr.mxu0 0.0
        %3778 = vmatpush1.msra.mxu0 0.0
        %3779 = vmatprep.subr.mxu0 0.0
        %3780 = vmatpush1.msra.mxu0 0.0
        %3781 = vmatprep.subr.mxu0 0.0
        %3782 = vmatpush1.msra.mxu0 0.0
        %3783 = vmatprep.subr.mxu0 0.0
        %3784 = vmatpush1.msra.mxu0 0.0
        %3785 = vmatprep.subr.mxu0 0.0
        %3786 = vmatpush1.msra.mxu0 0.0
        %3787 = vmatprep.subr.mxu0 0.0
        %3788 = vmatpush1.msra.mxu0 0.0
        %3789 = vmatprep.subr.mxu0 0.0
        %3790 = vmatpush1.msra.mxu0 0.0
        %3791 = vmatprep.subr.mxu0 0.0
        %3792 = vmatpush1.msra.mxu0 0.0
        %3793 = vmatprep.subr.mxu0 0.0
        %3794 = vmatpush1.msra.mxu0 0.0
        %3795 = vmatprep.subr.mxu0 0.0
        %3796 = vmatpush1.msra.mxu0 0.0
        %3797 = vmatprep.subr.mxu0 0.0
        %3798 = vmatpush1.msra.mxu0 0.0
        %3799 = vmatprep.subr.mxu0 0.0
        %3800 = vmatpush1.msra.mxu0 0.0
        %3801 = vmatprep.subr.mxu0 0.0
        %3802 = vmatpush1.msra.mxu0 0.0
        %3803 = vmatprep.subr.mxu0 0.0
        %3804 = vmatpush1.msra.mxu0 0.0
        %3805 = vmatprep.mubr.f32.mxu0 0.0
        %3806 = vmatmul.mubr.f32.gmra.mrb[0].mxu0 %v3650
        %v3807 = vpop.f32.mrb[0].mxu0
        %v3808 = vadd.f32 %v3725, %v3807
        %v3809 = vpop.f32.mrb[0].mxu0
        %v3810 = vadd.f32 %v3727, %v3809
        %3811 = vmatprep.mubr.f32.mxu0 0.0
        %3812 = vmatmul.mubr.f32.gmra.mrb[0].mxu0 %v3653
        %v3813 = vpop.f32.mrb[0].mxu0
        %v3814 = vadd.f32 %v3731, %v3813
        %v3815 = vpop.f32.mrb[0].mxu0
        %v3816 = vadd.f32 %v3733, %v3815
        %3817 = vmatprep.mubr.f32.mxu0 0.0
        %3818 = vmatmul.mubr.f32.gmra.mrb[0].mxu0 %v3656
        %v3819 = vpop.f32.mrb[0].mxu0
        %v3820 = vadd.f32 %v3737, %v3819
        %v3821 = vpop.f32.mrb[0].mxu0
        %v3822 = vadd.f32 %v3739, %v3821
        %3823 = vdwg.mxu0
        %v3824 = vadd.f32 %v3384, %v3808
        %v3825 = vadd.f32 %v3386, %v3810
        %v3826 = vadd.f32 %v3390, %v3814
        %v3827 = vadd.f32 %v3392, %v3816
        %v3828 = vadd.f32 %v3396, %v3820
        %v3829 = vadd.f32 %v3398, %v3822
        %v3830 = vld [vmem:[%s12] sm:$0x3]
        %v3832 = vlaneseq
        %v3833 = vshrl.u32 %v3832, 7
        %v3834 = vsub.s32 0, %v3833
        %v3835 = vrot.slane %v3830, %v3834
        %v3836 = vlaneseq
        %v3837 = vshrl.u32 %v3836, 7
        %v3838 = vsub.s32 1, %v3837
        %v3839 = vrot.slane %v3830, %v3838
        %v3842 = vadd.f32 %v3824, %v3835
        %v3843 = vadd.f32 %v3825, %v3839
        %v3844 = vadd.f32 %v3826, %v3835
        %v3845 = vadd.f32 %v3827, %v3839
        %v3846 = vadd.f32 %v3828, %v3835
        %v3847 = vadd.f32 %v3829, %v3839
        %v3848 = vld [vmem:[#allocation20] sm:$0xff]
        %v3849 = vld [vmem:[#allocation20 + $0x8] sm:$0xff]
        %v3850 = vld [vmem:[#allocation20 + $0x10] sm:$0xff]
        %v3851 = vld [vmem:[#allocation20 + $0x18] sm:$0xff]
        %v3852 = vld [vmem:[#allocation20 + $0x20] sm:$0xff]
        %v3853 = vld [vmem:[#allocation20 + $0x28] sm:$0xff]
        %v3854 = vld [vmem:[#allocation20 + $0x30] sm:$0xff]
        %v3855 = vld [vmem:[#allocation20 + $0x38] sm:$0xff]
        %v3856 = vld [vmem:[#allocation20 + $0x40] sm:$0xff]
        %v3857 = vld [vmem:[#allocation20 + $0x48] sm:$0xff]
        %v3858 = vld [vmem:[#allocation20 + $0x50] sm:$0xff]
        %v3859 = vld [vmem:[#allocation20 + $0x58] sm:$0xff]
        %v3860 = vld [vmem:[#allocation20 + $0x60] sm:$0xff]
        %v3861 = vld [vmem:[#allocation20 + $0x68] sm:$0xff]
        %v3862 = vld [vmem:[#allocation20 + $0x70] sm:$0xff]
        %v3863 = vld [vmem:[#allocation20 + $0x78] sm:$0xff]
        %v3864 = vld [vmem:[#allocation20 + $0x80] sm:$0xff]
        %v3865 = vld [vmem:[#allocation20 + $0x88] sm:$0xff]
        %v3866 = vld [vmem:[#allocation20 + $0x90] sm:$0xff]
        %v3867 = vld [vmem:[#allocation20 + $0x98] sm:$0xff]
        %v3868 = vld [vmem:[#allocation20 + $0xa0] sm:$0xff]
        %v3869 = vld [vmem:[#allocation20 + $0xa8] sm:$0xff]
        %v3870 = vld [vmem:[#allocation20 + $0xb0] sm:$0xff]
        %v3871 = vld [vmem:[#allocation20 + $0xb8] sm:$0xff]
        %v3872 = vld [vmem:[#allocation20 + $0xc0] sm:$0xff]
        %v3873 = vld [vmem:[#allocation20 + $0xc8] sm:$0xff]
        %v3874 = vld [vmem:[#allocation20 + $0xd0] sm:$0xff]
        %v3875 = vld [vmem:[#allocation20 + $0xd8] sm:$0xff]
        %v3876 = vld [vmem:[#allocation20 + $0xe0] sm:$0xff]
        %v3877 = vld [vmem:[#allocation20 + $0xe8] sm:$0xff]
        %v3878 = vld [vmem:[#allocation20 + $0xf0] sm:$0xff]
        %v3879 = vld [vmem:[#allocation20 + $0xf8] sm:$0xff]
        %v3880 = vld [vmem:[#allocation20 + $0x100] sm:$0xff]
        %v3881 = vld [vmem:[#allocation20 + $0x108] sm:$0xff]
        %v3882 = vld [vmem:[#allocation20 + $0x110] sm:$0xff]
        %v3883 = vld [vmem:[#allocation20 + $0x118] sm:$0xff]
        %v3884 = vmul.f32 %v3842, %v3842
        %v3885 = vmul.f32 %v3843, %v3843
        %v3886 = vmul.f32 %v3844, %v3844
        %v3887 = vmul.f32 %v3845, %v3845
        %v3888 = vmul.f32 %v3846, %v3846
        %v3889 = vmul.f32 %v3847, %v3847
        %vm3890 = vcmask 130048
        %v3892 = vsel %vm3890, %v3885, 0
        %v3895 = vsel %vm3890, %v3887, 0
        %v3898 = vsel %vm3890, %v3889, 0
        %3900 = vmatprep.subr.mxu0 %v3849
        %3901 = vmatpush1.msra.mxu0 %v3848
        %3902 = vmatprep.subr.mxu0 %v3851
        %3903 = vmatpush1.msra.mxu0 %v3850
        %3904 = vmatprep.subr.mxu0 %v3853
        %3905 = vmatpush1.msra.mxu0 %v3852
        %3906 = vmatprep.subr.mxu0 %v3855
        %3907 = vmatpush1.msra.mxu0 %v3854
        %3908 = vmatprep.subr.mxu0 %v3857
        %3909 = vmatpush1.msra.mxu0 %v3856
        %3910 = vmatprep.subr.mxu0 %v3859
        %3911 = vmatpush1.msra.mxu0 %v3858
        %3912 = vmatprep.subr.mxu0 %v3861
        %3913 = vmatpush1.msra.mxu0 %v3860
        %3914 = vmatprep.subr.mxu0 %v3863
        %3915 = vmatpush1.msra.mxu0 %v3862
        %3916 = vmatprep.subr.mxu0 %v3865
        %3917 = vmatpush1.msra.mxu0 %v3864
        %3918 = vmatprep.subr.mxu0 %v3867
        %3919 = vmatpush1.msra.mxu0 %v3866
        %3920 = vmatprep.subr.mxu0 %v3869
        %3921 = vmatpush1.msra.mxu0 %v3868
        %3922 = vmatprep.subr.mxu0 %v3871
        %3923 = vmatpush1.msra.mxu0 %v3870
        %3924 = vmatprep.subr.mxu0 %v3873
        %3925 = vmatpush1.msra.mxu0 %v3872
        %3926 = vmatprep.subr.mxu0 %v3875
        %3927 = vmatpush1.msra.mxu0 %v3874
        %3928 = vmatprep.subr.mxu0 %v3877
        %3929 = vmatpush1.msra.mxu0 %v3876
        %3930 = vmatprep.subr.mxu0 %v3879
        %3931 = vmatpush1.msra.mxu0 %v3878
        %3932 = vmatprep.subr.mxu0 %v3881
        %3933 = vmatpush1.msra.mxu0 %v3880
        %3934 = vmatprep.subr.mxu0 %v3883
        %3935 = vmatpush1.msra.mxu0 %v3882
        %3936 = vmatprep.subr.mxu0 0.0
        %3937 = vmatpush1.msra.mxu0 0.0
        %3938 = vmatprep.subr.mxu0 0.0
        %3939 = vmatpush1.msra.mxu0 0.0
        %3940 = vmatprep.subr.mxu0 0.0
        %3941 = vmatpush1.msra.mxu0 0.0
        %3942 = vmatprep.subr.mxu0 0.0
        %3943 = vmatpush1.msra.mxu0 0.0
        %3944 = vmatprep.subr.mxu0 0.0
        %3945 = vmatpush1.msra.mxu0 0.0
        %3946 = vmatprep.subr.mxu0 0.0
        %3947 = vmatpush1.msra.mxu0 0.0
        %3948 = vmatprep.subr.mxu0 0.0
        %3949 = vmatpush1.msra.mxu0 0.0
        %3950 = vmatprep.subr.mxu0 0.0
        %3951 = vmatpush1.msra.mxu0 0.0
        %3952 = vmatprep.subr.mxu0 0.0
        %3953 = vmatpush1.msra.mxu0 0.0
        %3954 = vmatprep.subr.mxu0 0.0
        %3955 = vmatpush1.msra.mxu0 0.0
        %3956 = vmatprep.subr.mxu0 0.0
        %3957 = vmatpush1.msra.mxu0 0.0
        %3958 = vmatprep.subr.mxu0 0.0
        %3959 = vmatpush1.msra.mxu0 0.0
        %3960 = vmatprep.subr.mxu0 0.0
        %3961 = vmatpush1.msra.mxu0 0.0
        %3962 = vmatprep.subr.mxu0 0.0
        %3963 = vmatpush1.msra.mxu0 0.0
        %3964 = vmatprep.mubr.f32.mxu0 %v3892
        %3965 = vmatmul.mubr.f32.gmra.mrb[0].mxu0 %v3884
        %v3966 = vpop.f32.mrb[0].mxu0
        %v3967 = vadd.f32 1e-08, %v3966
        %v3968 = vpop.f32.mrb[0].mxu0
        %v3969 = vadd.f32 1e-08, %v3968
        %3970 = vmatprep.mubr.f32.mxu0 %v3895
        %3971 = vmatmul.mubr.f32.gmra.mrb[0].mxu0 %v3886
        %v3972 = vpop.f32.mrb[0].mxu0
        %v3973 = vadd.f32 1e-08, %v3972
        %v3974 = vpop.f32.mrb[0].mxu0
        %v3975 = vadd.f32 1e-08, %v3974
        %3976 = vmatprep.mubr.f32.mxu0 %v3898
        %3977 = vmatmul.mubr.f32.gmra.mrb[0].mxu0 %v3888
        %v3978 = vpop.f32.mrb[0].mxu0
        %v3979 = vadd.f32 1e-08, %v3978
        %v3980 = vpop.f32.mrb[0].mxu0
        %v3981 = vadd.f32 1e-08, %v3980
        %3982 = vdwg.mxu0
        %v3983 = vrsqrt.pop %v3967
        %v3984 = vrsqrt.pop %v3969
        %v3985 = vrsqrt.pop %v3973
        %v3986 = vrsqrt.pop %v3975
        %v3987 = vrsqrt.pop %v3979
        %v3988 = vrsqrt.pop %v3981
        %v3989 = vmul.f32 %v3842, %v3983
        %v3990 = vmul.f32 %v3843, %v3984
        %v3991 = vmul.f32 %v3844, %v3985
        %v3992 = vmul.f32 %v3845, %v3986
        %v3993 = vmul.f32 %v3846, %v3987
        %v3994 = vmul.f32 %v3847, %v3988
        %vm3995 = vcmp.ge.f32.partialorder %v3989, 0.0
        %vm3996 = vcmp.ge.f32.partialorder %v3990, 0.0
        %vm3997 = vcmp.ge.f32.partialorder %v3991, 0.0
        %vm3998 = vcmp.ge.f32.partialorder %v3992, 0.0
        %vm3999 = vcmp.ge.f32.partialorder %v3993, 0.0
        %vm4000 = vcmp.ge.f32.partialorder %v3994, 0.0
        %v4001 = vmul.f32 %v3989, 0.2
        %v4002 = vmul.f32 %v3990, 0.2
        %v4003 = vmul.f32 %v3991, 0.2
        %v4004 = vmul.f32 %v3992, 0.2
        %v4005 = vmul.f32 %v3993, 0.2
        %v4006 = vmul.f32 %v3994, 0.2
        %v4007 = vsel %vm3995, %v3989, %v4001
        %v4008 = vsel %vm3996, %v3990, %v4002
        %v4009 = vsel %vm3997, %v3991, %v4003
        %v4010 = vsel %vm3998, %v3992, %v4004
        %v4011 = vsel %vm3999, %v3993, %v4005
        %v4012 = vsel %vm4000, %v3994, %v4006
        %v4013 = vld [vmem:[#allocation21] sm:$0xff]
        %v4014 = vld [vmem:[#allocation21 + $0x8] sm:$0xff]
        %v4015 = vld [vmem:[#allocation21 + $0x10] sm:$0xff]
        %v4016 = vld [vmem:[#allocation21 + $0x18] sm:$0xff]
        %v4017 = vld [vmem:[#allocation21 + $0x20] sm:$0xff]
        %v4018 = vld [vmem:[#allocation21 + $0x28] sm:$0xff]
        %v4019 = vld [vmem:[#allocation21 + $0x30] sm:$0xff]
        %v4020 = vld [vmem:[#allocation21 + $0x38] sm:$0xff]
        %v4021 = vld [vmem:[#allocation21 + $0x40] sm:$0xff]
        %v4022 = vld [vmem:[#allocation21 + $0x48] sm:$0xff]
        %v4023 = vld [vmem:[#allocation21 + $0x50] sm:$0xff]
        %v4024 = vld [vmem:[#allocation21 + $0x58] sm:$0xff]
        %v4025 = vld [vmem:[#allocation21 + $0x60] sm:$0xff]
        %v4026 = vld [vmem:[#allocation21 + $0x68] sm:$0xff]
        %v4027 = vld [vmem:[#allocation21 + $0x70] sm:$0xff]
        %v4028 = vld [vmem:[#allocation21 + $0x78] sm:$0xff]
        %v4029 = vld [vmem:[#allocation21 + $0x80] sm:$0xff]
        %v4030 = vld [vmem:[#allocation21 + $0x88] sm:$0xff]
        %v4031 = vld [vmem:[#allocation21 + $0x90] sm:$0xff]
        %v4032 = vld [vmem:[#allocation21 + $0x98] sm:$0xff]
        %v4033 = vld [vmem:[#allocation21 + $0xa0] sm:$0xff]
        %v4034 = vld [vmem:[#allocation21 + $0xa8] sm:$0xff]
        %v4035 = vld [vmem:[#allocation21 + $0xb0] sm:$0xff]
        %v4036 = vld [vmem:[#allocation21 + $0xb8] sm:$0xff]
        %v4037 = vld [vmem:[#allocation21 + $0xc0] sm:$0xff]
        %v4038 = vld [vmem:[#allocation21 + $0xc8] sm:$0xff]
        %v4039 = vld [vmem:[#allocation21 + $0xd0] sm:$0xff]
        %v4040 = vld [vmem:[#allocation21 + $0xd8] sm:$0xff]
        %v4041 = vld [vmem:[#allocation21 + $0xe0] sm:$0xff]
        %v4042 = vld [vmem:[#allocation21 + $0xe8] sm:$0xff]
        %v4043 = vld [vmem:[#allocation21 + $0xf0] sm:$0xff]
        %v4044 = vld [vmem:[#allocation21 + $0xf8] sm:$0xff]
        %v4045 = vld [vmem:[#allocation21 + $0x100] sm:$0xff]
        %v4046 = vld [vmem:[#allocation21 + $0x108] sm:$0xff]
        %v4047 = vld [vmem:[#allocation21 + $0x110] sm:$0xff]
        %v4048 = vld [vmem:[#allocation21 + $0x118] sm:$0xff]
        %v4049 = vld [vmem:[#allocation21 + $0x120] sm:$0xff]
        %v4050 = vld [vmem:[#allocation21 + $0x128] sm:$0xff]
        %v4051 = vld [vmem:[#allocation21 + $0x130] sm:$0xff]
        %v4052 = vld [vmem:[#allocation21 + $0x138] sm:$0xff]
        %v4053 = vld [vmem:[#allocation21 + $0x140] sm:$0xff]
        %v4054 = vld [vmem:[#allocation21 + $0x148] sm:$0xff]
        %v4055 = vld [vmem:[#allocation21 + $0x150] sm:$0xff]
        %v4056 = vld [vmem:[#allocation21 + $0x158] sm:$0xff]
        %v4057 = vld [vmem:[#allocation21 + $0x160] sm:$0xff]
        %v4058 = vld [vmem:[#allocation21 + $0x168] sm:$0xff]
        %v4059 = vld [vmem:[#allocation21 + $0x170] sm:$0xff]
        %v4060 = vld [vmem:[#allocation21 + $0x178] sm:$0xff]
        %v4061 = vld [vmem:[#allocation21 + $0x180] sm:$0xff]
        %v4062 = vld [vmem:[#allocation21 + $0x188] sm:$0xff]
        %v4063 = vld [vmem:[#allocation21 + $0x190] sm:$0xff]
        %v4064 = vld [vmem:[#allocation21 + $0x198] sm:$0xff]
        %v4065 = vld [vmem:[#allocation21 + $0x1a0] sm:$0xff]
        %v4066 = vld [vmem:[#allocation21 + $0x1a8] sm:$0xff]
        %v4068 = vsel %vm3890, %v4008, 0
        %v4071 = vsel %vm3890, %v4010, 0
        %v4074 = vsel %vm3890, %v4012, 0
        %4076 = vmatprep.subr.mxu0 %v4014
        %4077 = vmatpush1.msra.mxu0 %v4013
        %4078 = vmatprep.subr.mxu0 %v4017
        %4079 = vmatpush1.msra.mxu0 %v4016
        %4080 = vmatprep.subr.mxu0 %v4020
        %4081 = vmatpush1.msra.mxu0 %v4019
        %4082 = vmatprep.subr.mxu0 %v4023
        %4083 = vmatpush1.msra.mxu0 %v4022
        %4084 = vmatprep.subr.mxu0 %v4026
        %4085 = vmatpush1.msra.mxu0 %v4025
        %4086 = vmatprep.subr.mxu0 %v4029
        %4087 = vmatpush1.msra.mxu0 %v4028
        %4088 = vmatprep.subr.mxu0 %v4032
        %4089 = vmatpush1.msra.mxu0 %v4031
        %4090 = vmatprep.subr.mxu0 %v4035
        %4091 = vmatpush1.msra.mxu0 %v4034
        %4092 = vmatprep.subr.mxu0 %v4038
        %4093 = vmatpush1.msra.mxu0 %v4037
        %4094 = vmatprep.subr.mxu0 %v4041
        %4095 = vmatpush1.msra.mxu0 %v4040
        %4096 = vmatprep.subr.mxu0 %v4044
        %4097 = vmatpush1.msra.mxu0 %v4043
        %4098 = vmatprep.subr.mxu0 %v4047
        %4099 = vmatpush1.msra.mxu0 %v4046
        %4100 = vmatprep.subr.mxu0 %v4050
        %4101 = vmatpush1.msra.mxu0 %v4049
        %4102 = vmatprep.subr.mxu0 %v4053
        %4103 = vmatpush1.msra.mxu0 %v4052
        %4104 = vmatprep.subr.mxu0 %v4056
        %4105 = vmatpush1.msra.mxu0 %v4055
        %4106 = vmatprep.subr.mxu0 %v4059
        %4107 = vmatpush1.msra.mxu0 %v4058
        %4108 = vmatprep.subr.mxu0 %v4062
        %4109 = vmatpush1.msra.mxu0 %v4061
        %4110 = vmatprep.subr.mxu0 %v4065
        %4111 = vmatpush1.msra.mxu0 %v4064
        %4112 = vmatprep.subr.mxu0 0.0
        %4113 = vmatpush1.msra.mxu0 0.0
        %4114 = vmatprep.subr.mxu0 0.0
        %4115 = vmatpush1.msra.mxu0 0.0
        %4116 = vmatprep.subr.mxu0 0.0
        %4117 = vmatpush1.msra.mxu0 0.0
        %4118 = vmatprep.subr.mxu0 0.0
        %4119 = vmatpush1.msra.mxu0 0.0
        %4120 = vmatprep.subr.mxu0 0.0
        %4121 = vmatpush1.msra.mxu0 0.0
        %4122 = vmatprep.subr.mxu0 0.0
        %4123 = vmatpush1.msra.mxu0 0.0
        %4124 = vmatprep.subr.mxu0 0.0
        %4125 = vmatpush1.msra.mxu0 0.0
        %4126 = vmatprep.subr.mxu0 0.0
        %4127 = vmatpush1.msra.mxu0 0.0
        %4128 = vmatprep.subr.mxu0 0.0
        %4129 = vmatpush1.msra.mxu0 0.0
        %4130 = vmatprep.subr.mxu0 0.0
        %4131 = vmatpush1.msra.mxu0 0.0
        %4132 = vmatprep.subr.mxu0 0.0
        %4133 = vmatpush1.msra.mxu0 0.0
        %4134 = vmatprep.subr.mxu0 0.0
        %4135 = vmatpush1.msra.mxu0 0.0
        %4136 = vmatprep.subr.mxu0 0.0
        %4137 = vmatpush1.msra.mxu0 0.0
        %4138 = vmatprep.subr.mxu0 0.0
        %4139 = vmatpush1.msra.mxu0 0.0
        %4140 = vmatprep.mubr.f32.mxu0 %v4068
        %4141 = vmatmul.mubr.f32.gmra.mrb[0].mxu0 %v4007
        %v4142 = vpop.f32.mrb[0].mxu0
        %v4143 = vadd.f32 0.0, %v4142
        %v4144 = vpop.f32.mrb[0].mxu0
        %v4145 = vadd.f32 0.0, %v4144
        %4146 = vmatprep.mubr.f32.mxu0 %v4071
        %4147 = vmatmul.mubr.f32.gmra.mrb[0].mxu0 %v4009
        %v4148 = vpop.f32.mrb[0].mxu0
        %v4149 = vadd.f32 0.0, %v4148
        %v4150 = vpop.f32.mrb[0].mxu0
        %v4151 = vadd.f32 0.0, %v4150
        %4152 = vmatprep.mubr.f32.mxu0 %v4074
        %4153 = vmatmul.mubr.f32.gmra.mrb[0].mxu0 %v4011
        %v4154 = vpop.f32.mrb[0].mxu0
        %v4155 = vadd.f32 0.0, %v4154
        %v4156 = vpop.f32.mrb[0].mxu0
        %v4157 = vadd.f32 0.0, %v4156
        %4158 = vdwg.mxu0
        %4159 = vmatprep.subr.mxu0 0.0
        %4160 = vmatpush1.msra.mxu0 %v4015
        %4161 = vmatprep.subr.mxu0 0.0
        %4162 = vmatpush1.msra.mxu0 %v4018
        %4163 = vmatprep.subr.mxu0 0.0
        %4164 = vmatpush1.msra.mxu0 %v4021
        %4165 = vmatprep.subr.mxu0 0.0
        %4166 = vmatpush1.msra.mxu0 %v4024
        %4167 = vmatprep.subr.mxu0 0.0
        %4168 = vmatpush1.msra.mxu0 %v4027
        %4169 = vmatprep.subr.mxu0 0.0
        %4170 = vmatpush1.msra.mxu0 %v4030
        %4171 = vmatprep.subr.mxu0 0.0
        %4172 = vmatpush1.msra.mxu0 %v4033
        %4173 = vmatprep.subr.mxu0 0.0
        %4174 = vmatpush1.msra.mxu0 %v4036
        %4175 = vmatprep.subr.mxu0 0.0
        %4176 = vmatpush1.msra.mxu0 %v4039
        %4177 = vmatprep.subr.mxu0 0.0
        %4178 = vmatpush1.msra.mxu0 %v4042
        %4179 = vmatprep.subr.mxu0 0.0
        %4180 = vmatpush1.msra.mxu0 %v4045
        %4181 = vmatprep.subr.mxu0 0.0
        %4182 = vmatpush1.msra.mxu0 %v4048
        %4183 = vmatprep.subr.mxu0 0.0
        %4184 = vmatpush1.msra.mxu0 %v4051
        %4185 = vmatprep.subr.mxu0 0.0
        %4186 = vmatpush1.msra.mxu0 %v4054
        %4187 = vmatprep.subr.mxu0 0.0
        %4188 = vmatpush1.msra.mxu0 %v4057
        %4189 = vmatprep.subr.mxu0 0.0
        %4190 = vmatpush1.msra.mxu0 %v4060
        %4191 = vmatprep.subr.mxu0 0.0
        %4192 = vmatpush1.msra.mxu0 %v4063
        %4193 = vmatprep.subr.mxu0 0.0
        %4194 = vmatpush1.msra.mxu0 %v4066
        %4195 = vmatprep.subr.mxu0 0.0
        %4196 = vmatpush1.msra.mxu0 0.0
        %4197 = vmatprep.subr.mxu0 0.0
        %4198 = vmatpush1.msra.mxu0 0.0
        %4199 = vmatprep.subr.mxu0 0.0
        %4200 = vmatpush1.msra.mxu0 0.0
        %4201 = vmatprep.subr.mxu0 0.0
        %4202 = vmatpush1.msra.mxu0 0.0
        %4203 = vmatprep.subr.mxu0 0.0
        %4204 = vmatpush1.msra.mxu0 0.0
        %4205 = vmatprep.subr.mxu0 0.0
        %4206 = vmatpush1.msra.mxu0 0.0
        %4207 = vmatprep.subr.mxu0 0.0
        %4208 = vmatpush1.msra.mxu0 0.0
        %4209 = vmatprep.subr.mxu0 0.0
        %4210 = vmatpush1.msra.mxu0 0.0
        %4211 = vmatprep.subr.mxu0 0.0
        %4212 = vmatpush1.msra.mxu0 0.0
        %4213 = vmatprep.subr.mxu0 0.0
        %4214 = vmatpush1.msra.mxu0 0.0
        %4215 = vmatprep.subr.mxu0 0.0
        %4216 = vmatpush1.msra.mxu0 0.0
        %4217 = vmatprep.subr.mxu0 0.0
        %4218 = vmatpush1.msra.mxu0 0.0
        %4219 = vmatprep.subr.mxu0 0.0
        %4220 = vmatpush1.msra.mxu0 0.0
        %4221 = vmatprep.subr.mxu0 0.0
        %4222 = vmatpush1.msra.mxu0 0.0
        %4223 = vmatprep.mubr.f32.mxu0 %v4068
        %4224 = vmatmul.mubr.f32.gmra.mrb[0].mxu0 %v4007
        %v4225 = vpop.f32.mrb[0].mxu0
        %v4226 = vadd.f32 0.0, %v4225
        %v4227 = vpop.f32.mrb[0].mxu0
        %4228 = vmatprep.mubr.f32.mxu0 %v4071
        %4229 = vmatmul.mubr.f32.gmra.mrb[0].mxu0 %v4009
        %v4230 = vpop.f32.mrb[0].mxu0
        %v4231 = vadd.f32 0.0, %v4230
        %v4232 = vpop.f32.mrb[0].mxu0
        %4233 = vmatprep.mubr.f32.mxu0 %v4074
        %4234 = vmatmul.mubr.f32.gmra.mrb[0].mxu0 %v4011
        %v4235 = vpop.f32.mrb[0].mxu0
        %v4236 = vadd.f32 0.0, %v4235
        %v4237 = vpop.f32.mrb[0].mxu0
        %4238 = vdwg.mxu0
        %v4239 = vld [vmem:[#allocation23] sm:$0xff]
        %v4240 = vld [vmem:[#allocation23 + $0x8] sm:$0xff]
        %v4241 = vld [vmem:[#allocation23 + $0x10] sm:$0xff]
        %v4242 = vld [vmem:[#allocation23 + $0x18] sm:$0xff]
        %v4243 = vld [vmem:[#allocation23 + $0x20] sm:$0x3]
        %vm4244 = vcmask 146432
        %v4246 = vsel %vm4244, %v4239, 0
        %v4249 = vsel %vm4244, %v4240, 0
        %v4252 = vsel %vm4244, %v4241, 0
        %v4255 = vsel %vm4244, %v4242, 0
        %v4258 = vsel %vm4244, %v4243, 0
        %v4261 = vsel %vm2556, %v4155, 0
        %v4264 = vsel %vm2556, %v4157, 0
        %v4267 = vsel %vm2556, %v4236, 0
        %4269 = vmatprep.subr.mxu0 %v4145
        %4270 = vmatpush1.msra.mxu0 %v4143
        %4271 = vmatprep.subr.mxu0 %v4151
        %4272 = vmatpush1.msra.mxu0 %v4149
        %4273 = vmatprep.subr.mxu0 %v4264
        %4274 = vmatpush1.msra.mxu0 %v4261
        %4275 = vmatprep.subr.mxu0 0.0
        %4276 = vmatpush1.msra.mxu0 0.0
        %4277 = vmatprep.subr.mxu0 0.0
        %4278 = vmatpush1.msra.mxu0 0.0
        %4279 = vmatprep.subr.mxu0 0.0
        %4280 = vmatpush1.msra.mxu0 0.0
        %4281 = vmatprep.subr.mxu0 0.0
        %4282 = vmatpush1.msra.mxu0 0.0
        %4283 = vmatprep.subr.mxu0 0.0
        %4284 = vmatpush1.msra.mxu0 0.0
        %4285 = vmatprep.subr.mxu0 0.0
        %4286 = vmatpush1.msra.mxu0 0.0
        %4287 = vmatprep.subr.mxu0 0.0
        %4288 = vmatpush1.msra.mxu0 0.0
        %4289 = vmatprep.subr.mxu0 0.0
        %4290 = vmatpush1.msra.mxu0 0.0
        %4291 = vmatprep.subr.mxu0 0.0
        %4292 = vmatpush1.msra.mxu0 0.0
        %4293 = vmatprep.subr.mxu0 0.0
        %4294 = vmatpush1.msra.mxu0 0.0
        %4295 = vmatprep.subr.mxu0 0.0
        %4296 = vmatpush1.msra.mxu0 0.0
        %4297 = vmatprep.subr.mxu0 0.0
        %4298 = vmatpush1.msra.mxu0 0.0
        %4299 = vmatprep.subr.mxu0 0.0
        %4300 = vmatpush1.msra.mxu0 0.0
        %4301 = vmatprep.subr.mxu0 0.0
        %4302 = vmatpush1.msra.mxu0 0.0
        %4303 = vmatprep.subr.mxu0 0.0
        %4304 = vmatpush1.msra.mxu0 0.0
        %4305 = vmatprep.subr.mxu0 0.0
        %4306 = vmatpush1.msra.mxu0 0.0
        %4307 = vmatprep.subr.mxu0 0.0
        %4308 = vmatpush1.msra.mxu0 0.0
        %4309 = vmatprep.subr.mxu0 0.0
        %4310 = vmatpush1.msra.mxu0 0.0
        %4311 = vmatprep.subr.mxu0 0.0
        %4312 = vmatpush1.msra.mxu0 0.0
        %4313 = vmatprep.subr.mxu0 0.0
        %4314 = vmatpush1.msra.mxu0 0.0
        %4315 = vmatprep.subr.mxu0 0.0
        %4316 = vmatpush1.msra.mxu0 0.0
        %4317 = vmatprep.subr.mxu0 0.0
        %4318 = vmatpush1.msra.mxu0 0.0
        %4319 = vmatprep.subr.mxu0 0.0
        %4320 = vmatpush1.msra.mxu0 0.0
        %4321 = vmatprep.subr.mxu0 0.0
        %4322 = vmatpush1.msra.mxu0 0.0
        %4323 = vmatprep.subr.mxu0 0.0
        %4324 = vmatpush1.msra.mxu0 0.0
        %4325 = vmatprep.subr.mxu0 0.0
        %4326 = vmatpush1.msra.mxu0 0.0
        %4327 = vmatprep.subr.mxu0 0.0
        %4328 = vmatpush1.msra.mxu0 0.0
        %4329 = vmatprep.subr.mxu0 0.0
        %4330 = vmatpush1.msra.mxu0 0.0
        %4331 = vmatprep.subr.mxu0 0.0
        %4332 = vmatpush1.msra.mxu0 0.0
        %4333 = vmatprep.mubr.f32.mxu0 0.0
        %4334 = vmatmul.mubr.f32.gmra.mrb[0].mxu0 %v4246
        %v4335 = vpop.f32.mrb[0].mxu0
        %v4336 = vadd.f32 0.0, %v4335
        %v4337 = vpop.f32.mrb[0].mxu0
        %v4338 = vadd.f32 0.0, %v4337
        %4339 = vmatprep.mubr.f32.mxu0 0.0
        %4340 = vmatmul.mubr.f32.gmra.mrb[0].mxu0 %v4249
        %v4341 = vpop.f32.mrb[0].mxu0
        %v4342 = vadd.f32 0.0, %v4341
        %v4343 = vpop.f32.mrb[0].mxu0
        %v4344 = vadd.f32 0.0, %v4343
        %4345 = vmatprep.mubr.f32.mxu0 0.0
        %4346 = vmatmul.mubr.f32.gmra.mrb[0].mxu0 %v4252
        %v4347 = vpop.f32.mrb[0].mxu0
        %v4348 = vadd.f32 0.0, %v4347
        %v4349 = vpop.f32.mrb[0].mxu0
        %v4350 = vadd.f32 0.0, %v4349
        %4351 = vmatprep.mubr.f32.mxu0 0.0
        %4352 = vmatmul.mubr.f32.gmra.mrb[0].mxu0 %v4255
        %v4353 = vpop.f32.mrb[0].mxu0
        %v4354 = vadd.f32 0.0, %v4353
        %v4355 = vpop.f32.mrb[0].mxu0
        %v4356 = vadd.f32 0.0, %v4355
        %4357 = vmatprep.mubr.f32.mxu0 0.0
        %4358 = vmatmul.mubr.f32.gmra.mrb[0].mxu0 %v4258
        %v4359 = vpop.f32.mrb[0].mxu0
        %v4360 = vadd.f32 0.0, %v4359
        %v4361 = vpop.f32.mrb[0].mxu0
        %v4362 = vadd.f32 0.0, %v4361
        %4363 = vdwg.mxu0
        %4364 = vmatprep.subr.mxu0 0.0
        %4365 = vmatpush1.msra.mxu0 %v4226
        %4366 = vmatprep.subr.mxu0 0.0
        %4367 = vmatpush1.msra.mxu0 %v4231
        %4368 = vmatprep.subr.mxu0 0.0
        %4369 = vmatpush1.msra.mxu0 %v4267
        %4370 = vmatprep.subr.mxu0 0.0
        %4371 = vmatpush1.msra.mxu0 0.0
        %4372 = vmatprep.subr.mxu0 0.0
        %4373 = vmatpush1.msra.mxu0 0.0
        %4374 = vmatprep.subr.mxu0 0.0
        %4375 = vmatpush1.msra.mxu0 0.0
        %4376 = vmatprep.subr.mxu0 0.0
        %4377 = vmatpush1.msra.mxu0 0.0
        %4378 = vmatprep.subr.mxu0 0.0
        %4379 = vmatpush1.msra.mxu0 0.0
        %4380 = vmatprep.subr.mxu0 0.0
        %4381 = vmatpush1.msra.mxu0 0.0
        %4382 = vmatprep.subr.mxu0 0.0
        %4383 = vmatpush1.msra.mxu0 0.0
        %4384 = vmatprep.subr.mxu0 0.0
        %4385 = vmatpush1.msra.mxu0 0.0
        %4386 = vmatprep.subr.mxu0 0.0
        %4387 = vmatpush1.msra.mxu0 0.0
        %4388 = vmatprep.subr.mxu0 0.0
        %4389 = vmatpush1.msra.mxu0 0.0
        %4390 = vmatprep.subr.mxu0 0.0
        %4391 = vmatpush1.msra.mxu0 0.0
        %4392 = vmatprep.subr.mxu0 0.0
        %4393 = vmatpush1.msra.mxu0 0.0
        %4394 = vmatprep.subr.mxu0 0.0
        %4395 = vmatpush1.msra.mxu0 0.0
        %4396 = vmatprep.subr.mxu0 0.0
        %4397 = vmatpush1.msra.mxu0 0.0
        %4398 = vmatprep.subr.mxu0 0.0
        %4399 = vmatpush1.msra.mxu0 0.0
        %4400 = vmatprep.subr.mxu0 0.0
        %4401 = vmatpush1.msra.mxu0 0.0
        %4402 = vmatprep.subr.mxu0 0.0
        %4403 = vmatpush1.msra.mxu0 0.0
        %4404 = vmatprep.subr.mxu0 0.0
        %4405 = vmatpush1.msra.mxu0 0.0
        %4406 = vmatprep.subr.mxu0 0.0
        %4407 = vmatpush1.msra.mxu0 0.0
        %4408 = vmatprep.subr.mxu0 0.0
        %4409 = vmatpush1.msra.mxu0 0.0
        %4410 = vmatprep.subr.mxu0 0.0
        %4411 = vmatpush1.msra.mxu0 0.0
        %4412 = vmatprep.subr.mxu0 0.0
        %4413 = vmatpush1.msra.mxu0 0.0
        %4414 = vmatprep.subr.mxu0 0.0
        %4415 = vmatpush1.msra.mxu0 0.0
        %4416 = vmatprep.subr.mxu0 0.0
        %4417 = vmatpush1.msra.mxu0 0.0
        %4418 = vmatprep.subr.mxu0 0.0
        %4419 = vmatpush1.msra.mxu0 0.0
        %4420 = vmatprep.subr.mxu0 0.0
        %4421 = vmatpush1.msra.mxu0 0.0
        %4422 = vmatprep.subr.mxu0 0.0
        %4423 = vmatpush1.msra.mxu0 0.0
        %4424 = vmatprep.subr.mxu0 0.0
        %4425 = vmatpush1.msra.mxu0 0.0
        %4426 = vmatprep.subr.mxu0 0.0
        %4427 = vmatpush1.msra.mxu0 0.0
        %4428 = vmatprep.mubr.f32.mxu0 0.0
        %4429 = vmatmul.mubr.f32.gmra.mrb[0].mxu0 %v4246
        %v4430 = vpop.f32.mrb[0].mxu0
        %v4431 = vadd.f32 0.0, %v4430
        %v4432 = vpop.f32.mrb[0].mxu0
        %4433 = vmatprep.mubr.f32.mxu0 0.0
        %4434 = vmatmul.mubr.f32.gmra.mrb[0].mxu0 %v4249
        %v4435 = vpop.f32.mrb[0].mxu0
        %v4436 = vadd.f32 0.0, %v4435
        %v4437 = vpop.f32.mrb[0].mxu0
        %4438 = vmatprep.mubr.f32.mxu0 0.0
        %4439 = vmatmul.mubr.f32.gmra.mrb[0].mxu0 %v4252
        %v4440 = vpop.f32.mrb[0].mxu0
        %v4441 = vadd.f32 0.0, %v4440
        %v4442 = vpop.f32.mrb[0].mxu0
        %4443 = vmatprep.mubr.f32.mxu0 0.0
        %4444 = vmatmul.mubr.f32.gmra.mrb[0].mxu0 %v4255
        %v4445 = vpop.f32.mrb[0].mxu0
        %v4446 = vadd.f32 0.0, %v4445
        %v4447 = vpop.f32.mrb[0].mxu0
        %4448 = vmatprep.mubr.f32.mxu0 0.0
        %4449 = vmatmul.mubr.f32.gmra.mrb[0].mxu0 %v4258
        %v4450 = vpop.f32.mrb[0].mxu0
        %v4451 = vadd.f32 0.0, %v4450
        %v4452 = vpop.f32.mrb[0].mxu0
        %4453 = vdwg.mxu0
        %v4454 = vld [vmem:[#allocation24] sm:$0xff]
        %v4455 = vld [vmem:[#allocation24 + $0x8] sm:$0xff]
        %v4456 = vld [vmem:[#allocation24 + $0x10] sm:$0xff]
        %v4457 = vld [vmem:[#allocation24 + $0x18] sm:$0xff]
        %v4458 = vld [vmem:[#allocation24 + $0x20] sm:$0xff]
        %v4459 = vld [vmem:[#allocation24 + $0x28] sm:$0xff]
        %v4460 = vld [vmem:[#allocation24 + $0x30] sm:$0xff]
        %v4461 = vld [vmem:[#allocation24 + $0x38] sm:$0xff]
        %v4462 = vld [vmem:[#allocation24 + $0x40] sm:$0xff]
        %v4463 = vld [vmem:[#allocation24 + $0x48] sm:$0xff]
        %v4464 = vld [vmem:[#allocation24 + $0x50] sm:$0xff]
        %v4465 = vld [vmem:[#allocation24 + $0x58] sm:$0xff]
        %v4466 = vld [vmem:[#allocation24 + $0x60] sm:$0xff]
        %v4467 = vld [vmem:[#allocation24 + $0x68] sm:$0xff]
        %v4468 = vld [vmem:[#allocation24 + $0x70] sm:$0xff]
        %v4469 = vld [vmem:[#allocation24 + $0x78] sm:$0xff]
        %v4470 = vld [vmem:[#allocation24 + $0x80] sm:$0xff]
        %v4471 = vld [vmem:[#allocation24 + $0x88] sm:$0xff]
        %v4472 = vld [vmem:[#allocation24 + $0x90] sm:$0xff]
        %v4473 = vld [vmem:[#allocation24 + $0x98] sm:$0xff]
        %v4474 = vld [vmem:[#allocation24 + $0xa0] sm:$0xff]
        %v4475 = vld [vmem:[#allocation24 + $0xa8] sm:$0xff]
        %v4476 = vld [vmem:[#allocation24 + $0xb0] sm:$0xff]
        %v4477 = vld [vmem:[#allocation24 + $0xb8] sm:$0xff]
        %v4478 = vld [vmem:[#allocation24 + $0xc0] sm:$0xff]
        %v4479 = vld [vmem:[#allocation24 + $0xc8] sm:$0xff]
        %v4480 = vld [vmem:[#allocation24 + $0xd0] sm:$0xff]
        %v4481 = vld [vmem:[#allocation24 + $0xd8] sm:$0xff]
        %v4482 = vld [vmem:[#allocation24 + $0xe0] sm:$0xff]
        %v4483 = vld [vmem:[#allocation24 + $0xe8] sm:$0xff]
        %v4484 = vld [vmem:[#allocation24 + $0xf0] sm:$0xff]
        %v4485 = vld [vmem:[#allocation24 + $0xf8] sm:$0xff]
        %v4486 = vld [vmem:[#allocation24 + $0x100] sm:$0xff]
        %v4487 = vld [vmem:[#allocation24 + $0x108] sm:$0xff]
        %v4488 = vld [vmem:[#allocation24 + $0x110] sm:$0xff]
        %v4489 = vld [vmem:[#allocation24 + $0x118] sm:$0xff]
        %v4490 = vld [vmem:[#allocation24 + $0x120] sm:$0xff]
        %v4491 = vld [vmem:[#allocation24 + $0x128] sm:$0xff]
        %v4492 = vld [vmem:[#allocation24 + $0x130] sm:$0xff]
        %v4493 = vld [vmem:[#allocation24 + $0x138] sm:$0xff]
        %v4494 = vld [vmem:[#allocation24 + $0x140] sm:$0xff]
        %v4495 = vld [vmem:[#allocation24 + $0x148] sm:$0xff]
        %v4496 = vld [vmem:[#allocation24 + $0x150] sm:$0xff]
        %v4497 = vld [vmem:[#allocation24 + $0x158] sm:$0xff]
        %v4498 = vld [vmem:[#allocation24 + $0x160] sm:$0xff]
        %v4499 = vld [vmem:[#allocation24 + $0x168] sm:$0xff]
        %v4500 = vld [vmem:[#allocation24 + $0x170] sm:$0xff]
        %v4501 = vld [vmem:[#allocation24 + $0x178] sm:$0xff]
        %v4502 = vld [vmem:[#allocation24 + $0x180] sm:$0xff]
        %v4503 = vld [vmem:[#allocation24 + $0x188] sm:$0xff]
        %v4504 = vld [vmem:[#allocation24 + $0x190] sm:$0xff]
        %v4505 = vld [vmem:[#allocation24 + $0x198] sm:$0xff]
        %v4506 = vld [vmem:[#allocation24 + $0x1a0] sm:$0xff]
        %v4507 = vld [vmem:[#allocation24 + $0x1a8] sm:$0xff]
        %v4508 = vld [vmem:[#allocation24 + $0x1b0] sm:$0xff]
        %v4509 = vld [vmem:[#allocation24 + $0x1b8] sm:$0xff]
        %v4510 = vld [vmem:[#allocation24 + $0x1c0] sm:$0xff]
        %v4511 = vld [vmem:[#allocation24 + $0x1c8] sm:$0xff]
        %v4512 = vld [vmem:[#allocation24 + $0x1d0] sm:$0xff]
        %v4513 = vld [vmem:[#allocation24 + $0x1d8] sm:$0xff]
        %v4514 = vld [vmem:[#allocation24 + $0x1e0] sm:$0xff]
        %v4515 = vld [vmem:[#allocation24 + $0x1e8] sm:$0xff]
        %v4516 = vld [vmem:[#allocation24 + $0x1f0] sm:$0xff]
        %v4517 = vld [vmem:[#allocation24 + $0x1f8] sm:$0xff]
        %v4518 = vld [vmem:[#allocation24 + $0x200] sm:$0xff]
        %v4519 = vld [vmem:[#allocation24 + $0x208] sm:$0xff]
        %v4520 = vld [vmem:[#allocation24 + $0x210] sm:$0xff]
        %v4521 = vld [vmem:[#allocation24 + $0x218] sm:$0xff]
        %s4522 = scalar_lea.vmem [#allocation23], 40
        %v4523 = vld [vmem:[%s4522] sm:$0xff]
        %v4524 = vld [vmem:[%s4522 + $0x8] sm:$0xff]
        %v4525 = vld [vmem:[%s4522 + $0x10] sm:$0xff]
        %v4526 = vld [vmem:[%s4522 + $0x18] sm:$0xff]
        %v4527 = vld [vmem:[%s4522 + $0x20] sm:$0x3]
        %v4529 = vsel %vm4244, %v4523, 0
        %v4532 = vsel %vm4244, %v4524, 0
        %v4535 = vsel %vm4244, %v4525, 0
        %v4538 = vsel %vm4244, %v4526, 0
        %v4541 = vsel %vm4244, %v4527, 0
        %4543 = vmatprep.subr.mxu0 %v4145
        %4544 = vmatpush1.msra.mxu0 %v4143
        %4545 = vmatprep.subr.mxu0 %v4151
        %4546 = vmatpush1.msra.mxu0 %v4149
        %4547 = vmatprep.subr.mxu0 %v4264
        %4548 = vmatpush1.msra.mxu0 %v4261
        %4549 = vmatprep.subr.mxu0 0.0
        %4550 = vmatpush1.msra.mxu0 0.0
        %4551 = vmatprep.subr.mxu0 0.0
        %4552 = vmatpush1.msra.mxu0 0.0
        %4553 = vmatprep.subr.mxu0 0.0
        %4554 = vmatpush1.msra.mxu0 0.0
        %4555 = vmatprep.subr.mxu0 0.0
        %4556 = vmatpush1.msra.mxu0 0.0
        %4557 = vmatprep.subr.mxu0 0.0
        %4558 = vmatpush1.msra.mxu0 0.0
        %4559 = vmatprep.subr.mxu0 0.0
        %4560 = vmatpush1.msra.mxu0 0.0
        %4561 = vmatprep.subr.mxu0 0.0
        %4562 = vmatpush1.msra.mxu0 0.0
        %4563 = vmatprep.subr.mxu0 0.0
        %4564 = vmatpush1.msra.mxu0 0.0
        %4565 = vmatprep.subr.mxu0 0.0
        %4566 = vmatpush1.msra.mxu0 0.0
        %4567 = vmatprep.subr.mxu0 0.0
        %4568 = vmatpush1.msra.mxu0 0.0
        %4569 = vmatprep.subr.mxu0 0.0
        %4570 = vmatpush1.msra.mxu0 0.0
        %4571 = vmatprep.subr.mxu0 0.0
        %4572 = vmatpush1.msra.mxu0 0.0
        %4573 = vmatprep.subr.mxu0 0.0
        %4574 = vmatpush1.msra.mxu0 0.0
        %4575 = vmatprep.subr.mxu0 0.0
        %4576 = vmatpush1.msra.mxu0 0.0
        %4577 = vmatprep.subr.mxu0 0.0
        %4578 = vmatpush1.msra.mxu0 0.0
        %4579 = vmatprep.subr.mxu0 0.0
        %4580 = vmatpush1.msra.mxu0 0.0
        %4581 = vmatprep.subr.mxu0 0.0
        %4582 = vmatpush1.msra.mxu0 0.0
        %4583 = vmatprep.subr.mxu0 0.0
        %4584 = vmatpush1.msra.mxu0 0.0
        %4585 = vmatprep.subr.mxu0 0.0
        %4586 = vmatpush1.msra.mxu0 0.0
        %4587 = vmatprep.subr.mxu0 0.0
        %4588 = vmatpush1.msra.mxu0 0.0
        %4589 = vmatprep.subr.mxu0 0.0
        %4590 = vmatpush1.msra.mxu0 0.0
        %4591 = vmatprep.subr.mxu0 0.0
        %4592 = vmatpush1.msra.mxu0 0.0
        %4593 = vmatprep.subr.mxu0 0.0
        %4594 = vmatpush1.msra.mxu0 0.0
        %4595 = vmatprep.subr.mxu0 0.0
        %4596 = vmatpush1.msra.mxu0 0.0
        %4597 = vmatprep.subr.mxu0 0.0
        %4598 = vmatpush1.msra.mxu0 0.0
        %4599 = vmatprep.subr.mxu0 0.0
        %4600 = vmatpush1.msra.mxu0 0.0
        %4601 = vmatprep.subr.mxu0 0.0
        %4602 = vmatpush1.msra.mxu0 0.0
        %4603 = vmatprep.subr.mxu0 0.0
        %4604 = vmatpush1.msra.mxu0 0.0
        %4605 = vmatprep.subr.mxu0 0.0
        %4606 = vmatpush1.msra.mxu0 0.0
        %4607 = vmatprep.mubr.f32.mxu0 0.0
        %4608 = vmatmul.mubr.f32.gmra.mrb[0].mxu0 %v4529
        %v4609 = vpop.f32.mrb[0].mxu0
        %v4610 = vadd.f32 0.0, %v4609
        %v4611 = vpop.f32.mrb[0].mxu0
        %v4612 = vadd.f32 0.0, %v4611
        %4613 = vmatprep.mubr.f32.mxu0 0.0
        %4614 = vmatmul.mubr.f32.gmra.mrb[0].mxu0 %v4532
        %v4615 = vpop.f32.mrb[0].mxu0
        %v4616 = vadd.f32 0.0, %v4615
        %v4617 = vpop.f32.mrb[0].mxu0
        %v4618 = vadd.f32 0.0, %v4617
        %4619 = vmatprep.mubr.f32.mxu0 0.0
        %4620 = vmatmul.mubr.f32.gmra.mrb[0].mxu0 %v4535
        %v4621 = vpop.f32.mrb[0].mxu0
        %v4622 = vadd.f32 0.0, %v4621
        %v4623 = vpop.f32.mrb[0].mxu0
        %v4624 = vadd.f32 0.0, %v4623
        %4625 = vmatprep.mubr.f32.mxu0 0.0
        %4626 = vmatmul.mubr.f32.gmra.mrb[0].mxu0 %v4538
        %v4627 = vpop.f32.mrb[0].mxu0
        %v4628 = vadd.f32 0.0, %v4627
        %v4629 = vpop.f32.mrb[0].mxu0
        %v4630 = vadd.f32 0.0, %v4629
        %4631 = vmatprep.mubr.f32.mxu0 0.0
        %4632 = vmatmul.mubr.f32.gmra.mrb[0].mxu0 %v4541
        %v4633 = vpop.f32.mrb[0].mxu0
        %v4634 = vadd.f32 0.0, %v4633
        %v4635 = vpop.f32.mrb[0].mxu0
        %v4636 = vadd.f32 0.0, %v4635
        %4637 = vdwg.mxu0
        %4638 = vmatprep.subr.mxu0 0.0
        %4639 = vmatpush1.msra.mxu0 %v4226
        %4640 = vmatprep.subr.mxu0 0.0
        %4641 = vmatpush1.msra.mxu0 %v4231
        %4642 = vmatprep.subr.mxu0 0.0
        %4643 = vmatpush1.msra.mxu0 %v4267
        %4644 = vmatprep.subr.mxu0 0.0
        %4645 = vmatpush1.msra.mxu0 0.0
        %4646 = vmatprep.subr.mxu0 0.0
        %4647 = vmatpush1.msra.mxu0 0.0
        %4648 = vmatprep.subr.mxu0 0.0
        %4649 = vmatpush1.msra.mxu0 0.0
        %4650 = vmatprep.subr.mxu0 0.0
        %4651 = vmatpush1.msra.mxu0 0.0
        %4652 = vmatprep.subr.mxu0 0.0
        %4653 = vmatpush1.msra.mxu0 0.0
        %4654 = vmatprep.subr.mxu0 0.0
        %4655 = vmatpush1.msra.mxu0 0.0
        %4656 = vmatprep.subr.mxu0 0.0
        %4657 = vmatpush1.msra.mxu0 0.0
        %4658 = vmatprep.subr.mxu0 0.0
        %4659 = vmatpush1.msra.mxu0 0.0
        %4660 = vmatprep.subr.mxu0 0.0
        %4661 = vmatpush1.msra.mxu0 0.0
        %4662 = vmatprep.subr.mxu0 0.0
        %4663 = vmatpush1.msra.mxu0 0.0
        %4664 = vmatprep.subr.mxu0 0.0
        %4665 = vmatpush1.msra.mxu0 0.0
        %4666 = vmatprep.subr.mxu0 0.0
        %4667 = vmatpush1.msra.mxu0 0.0
        %4668 = vmatprep.subr.mxu0 0.0
        %4669 = vmatpush1.msra.mxu0 0.0
        %4670 = vmatprep.subr.mxu0 0.0
        %4671 = vmatpush1.msra.mxu0 0.0
        %4672 = vmatprep.subr.mxu0 0.0
        %4673 = vmatpush1.msra.mxu0 0.0
        %4674 = vmatprep.subr.mxu0 0.0
        %4675 = vmatpush1.msra.mxu0 0.0
        %4676 = vmatprep.subr.mxu0 0.0
        %4677 = vmatpush1.msra.mxu0 0.0
        %4678 = vmatprep.subr.mxu0 0.0
        %4679 = vmatpush1.msra.mxu0 0.0
        %4680 = vmatprep.subr.mxu0 0.0
        %4681 = vmatpush1.msra.mxu0 0.0
        %4682 = vmatprep.subr.mxu0 0.0
        %4683 = vmatpush1.msra.mxu0 0.0
        %4684 = vmatprep.subr.mxu0 0.0
        %4685 = vmatpush1.msra.mxu0 0.0
        %4686 = vmatprep.subr.mxu0 0.0
        %4687 = vmatpush1.msra.mxu0 0.0
        %4688 = vmatprep.subr.mxu0 0.0
        %4689 = vmatpush1.msra.mxu0 0.0
        %4690 = vmatprep.subr.mxu0 0.0
        %4691 = vmatpush1.msra.mxu0 0.0
        %4692 = vmatprep.subr.mxu0 0.0
        %4693 = vmatpush1.msra.mxu0 0.0
        %4694 = vmatprep.subr.mxu0 0.0
        %4695 = vmatpush1.msra.mxu0 0.0
        %4696 = vmatprep.subr.mxu0 0.0
        %4697 = vmatpush1.msra.mxu0 0.0
        %4698 = vmatprep.subr.mxu0 0.0
        %4699 = vmatpush1.msra.mxu0 0.0
        %4700 = vmatprep.subr.mxu0 0.0
        %4701 = vmatpush1.msra.mxu0 0.0
        %4702 = vmatprep.mubr.f32.mxu0 0.0
        %4703 = vmatmul.mubr.f32.gmra.mrb[0].mxu0 %v4529
        %v4704 = vpop.f32.mrb[0].mxu0
        %v4705 = vadd.f32 0.0, %v4704
        %v4706 = vpop.f32.mrb[0].mxu0
        %4707 = vmatprep.mubr.f32.mxu0 0.0
        %4708 = vmatmul.mubr.f32.gmra.mrb[0].mxu0 %v4532
        %v4709 = vpop.f32.mrb[0].mxu0
        %v4710 = vadd.f32 0.0, %v4709
        %v4711 = vpop.f32.mrb[0].mxu0
        %4712 = vmatprep.mubr.f32.mxu0 0.0
        %4713 = vmatmul.mubr.f32.gmra.mrb[0].mxu0 %v4535
        %v4714 = vpop.f32.mrb[0].mxu0
        %v4715 = vadd.f32 0.0, %v4714
        %v4716 = vpop.f32.mrb[0].mxu0
        %4717 = vmatprep.mubr.f32.mxu0 0.0
        %4718 = vmatmul.mubr.f32.gmra.mrb[0].mxu0 %v4538
        %v4719 = vpop.f32.mrb[0].mxu0
        %v4720 = vadd.f32 0.0, %v4719
        %v4721 = vpop.f32.mrb[0].mxu0
        %4722 = vmatprep.mubr.f32.mxu0 0.0
        %4723 = vmatmul.mubr.f32.gmra.mrb[0].mxu0 %v4541
        %v4724 = vpop.f32.mrb[0].mxu0
        %v4725 = vadd.f32 0.0, %v4724
        %v4726 = vpop.f32.mrb[0].mxu0
        %4727 = vdwg.mxu0
        %s4728 = scalar_lea.vmem [#allocation24], 544
        %v4729 = vld [vmem:[%s4728] sm:$0xff]
        %v4730 = vld [vmem:[%s4728 + $0x8] sm:$0xff]
        %v4731 = vld [vmem:[%s4728 + $0x10] sm:$0xff]
        %v4732 = vld [vmem:[%s4728 + $0x18] sm:$0xff]
        %v4733 = vld [vmem:[%s4728 + $0x20] sm:$0xff]
        %v4734 = vld [vmem:[%s4728 + $0x28] sm:$0xff]
        %v4735 = vld [vmem:[%s4728 + $0x30] sm:$0xff]
        %v4736 = vld [vmem:[%s4728 + $0x38] sm:$0xff]
        %v4737 = vld [vmem:[%s4728 + $0x40] sm:$0xff]
        %v4738 = vld [vmem:[%s4728 + $0x48] sm:$0xff]
        %v4739 = vld [vmem:[%s4728 + $0x50] sm:$0xff]
        %v4740 = vld [vmem:[%s4728 + $0x58] sm:$0xff]
        %v4741 = vld [vmem:[%s4728 + $0x60] sm:$0xff]
        %v4742 = vld [vmem:[%s4728 + $0x68] sm:$0xff]
        %v4743 = vld [vmem:[%s4728 + $0x70] sm:$0xff]
        %v4744 = vld [vmem:[%s4728 + $0x78] sm:$0xff]
        %v4745 = vld [vmem:[%s4728 + $0x80] sm:$0xff]
        %v4746 = vld [vmem:[%s4728 + $0x88] sm:$0xff]
        %v4747 = vld [vmem:[%s4728 + $0x90] sm:$0xff]
        %v4748 = vld [vmem:[%s4728 + $0x98] sm:$0xff]
        %v4749 = vld [vmem:[%s4728 + $0xa0] sm:$0xff]
        %v4750 = vld [vmem:[%s4728 + $0xa8] sm:$0xff]
        %v4751 = vld [vmem:[%s4728 + $0xb0] sm:$0xff]
        %v4752 = vld [vmem:[%s4728 + $0xb8] sm:$0xff]
        %v4753 = vld [vmem:[%s4728 + $0xc0] sm:$0xff]
        %v4754 = vld [vmem:[%s4728 + $0xc8] sm:$0xff]
        %v4755 = vld [vmem:[%s4728 + $0xd0] sm:$0xff]
        %v4756 = vld [vmem:[%s4728 + $0xd8] sm:$0xff]
        %v4757 = vld [vmem:[%s4728 + $0xe0] sm:$0xff]
        %v4758 = vld [vmem:[%s4728 + $0xe8] sm:$0xff]
        %v4759 = vld [vmem:[%s4728 + $0xf0] sm:$0xff]
        %v4760 = vld [vmem:[%s4728 + $0xf8] sm:$0xff]
        %v4761 = vld [vmem:[%s4728 + $0x100] sm:$0xff]
        %v4762 = vld [vmem:[%s4728 + $0x108] sm:$0xff]
        %v4763 = vld [vmem:[%s4728 + $0x110] sm:$0xff]
        %v4764 = vld [vmem:[%s4728 + $0x118] sm:$0xff]
        %v4765 = vld [vmem:[%s4728 + $0x120] sm:$0xff]
        %v4766 = vld [vmem:[%s4728 + $0x128] sm:$0xff]
        %v4767 = vld [vmem:[%s4728 + $0x130] sm:$0xff]
        %v4768 = vld [vmem:[%s4728 + $0x138] sm:$0xff]
        %v4769 = vld [vmem:[%s4728 + $0x140] sm:$0xff]
        %v4770 = vld [vmem:[%s4728 + $0x148] sm:$0xff]
        %v4771 = vld [vmem:[%s4728 + $0x150] sm:$0xff]
        %v4772 = vld [vmem:[%s4728 + $0x158] sm:$0xff]
        %v4773 = vld [vmem:[%s4728 + $0x160] sm:$0xff]
        %v4774 = vld [vmem:[%s4728 + $0x168] sm:$0xff]
        %v4775 = vld [vmem:[%s4728 + $0x170] sm:$0xff]
        %v4776 = vld [vmem:[%s4728 + $0x178] sm:$0xff]
        %v4777 = vld [vmem:[%s4728 + $0x180] sm:$0xff]
        %v4778 = vld [vmem:[%s4728 + $0x188] sm:$0xff]
        %v4779 = vld [vmem:[%s4728 + $0x190] sm:$0xff]
        %v4780 = vld [vmem:[%s4728 + $0x198] sm:$0xff]
        %v4781 = vld [vmem:[%s4728 + $0x1a0] sm:$0xff]
        %v4782 = vld [vmem:[%s4728 + $0x1a8] sm:$0xff]
        %v4783 = vld [vmem:[%s4728 + $0x1b0] sm:$0xff]
        %v4784 = vld [vmem:[%s4728 + $0x1b8] sm:$0xff]
        %v4785 = vld [vmem:[%s4728 + $0x1c0] sm:$0xff]
        %v4786 = vld [vmem:[%s4728 + $0x1c8] sm:$0xff]
        %v4787 = vld [vmem:[%s4728 + $0x1d0] sm:$0xff]
        %v4788 = vld [vmem:[%s4728 + $0x1d8] sm:$0xff]
        %v4789 = vld [vmem:[%s4728 + $0x1e0] sm:$0xff]
        %v4790 = vld [vmem:[%s4728 + $0x1e8] sm:$0xff]
        %v4791 = vld [vmem:[%s4728 + $0x1f0] sm:$0xff]
        %v4792 = vld [vmem:[%s4728 + $0x1f8] sm:$0xff]
        %v4793 = vld [vmem:[%s4728 + $0x200] sm:$0xff]
        %v4794 = vld [vmem:[%s4728 + $0x208] sm:$0xff]
        %v4795 = vld [vmem:[%s4728 + $0x210] sm:$0xff]
        %v4796 = vld [vmem:[%s4728 + $0x218] sm:$0xff]
        %v4798 = vsel %vm3890, %v4705, 0
        %v4801 = vsel %vm3890, %v4710, 0
        %v4804 = vsel %vm3890, %v4715, 0
        %v4807 = vsel %vm3890, %v4720, 0
        %v4810 = vsel %vm3890, %v4725, 0
        %4812 = vmatprep.subr.mxu0 %v4730
        %4813 = vmatpush1.msra.mxu0 %v4729
        %4814 = vmatprep.subr.mxu0 %v4732
        %4815 = vmatpush1.msra.mxu0 %v4731
        %4816 = vmatprep.subr.mxu0 %v4734
        %4817 = vmatpush1.msra.mxu0 %v4733
        %4818 = vmatprep.subr.mxu0 %v4736
        %4819 = vmatpush1.msra.mxu0 %v4735
        %4820 = vmatprep.subr.mxu0 %v4738
        %4821 = vmatpush1.msra.mxu0 %v4737
        %4822 = vmatprep.subr.mxu0 %v4740
        %4823 = vmatpush1.msra.mxu0 %v4739
        %4824 = vmatprep.subr.mxu0 %v4742
        %4825 = vmatpush1.msra.mxu0 %v4741
        %4826 = vmatprep.subr.mxu0 %v4744
        %4827 = vmatpush1.msra.mxu0 %v4743
        %4828 = vmatprep.subr.mxu0 %v4746
        %4829 = vmatpush1.msra.mxu0 %v4745
        %4830 = vmatprep.subr.mxu0 %v4748
        %4831 = vmatpush1.msra.mxu0 %v4747
        %4832 = vmatprep.subr.mxu0 %v4750
        %4833 = vmatpush1.msra.mxu0 %v4749
        %4834 = vmatprep.subr.mxu0 %v4752
        %4835 = vmatpush1.msra.mxu0 %v4751
        %4836 = vmatprep.subr.mxu0 %v4754
        %4837 = vmatpush1.msra.mxu0 %v4753
        %4838 = vmatprep.subr.mxu0 %v4756
        %4839 = vmatpush1.msra.mxu0 %v4755
        %4840 = vmatprep.subr.mxu0 %v4758
        %4841 = vmatpush1.msra.mxu0 %v4757
        %4842 = vmatprep.subr.mxu0 %v4760
        %4843 = vmatpush1.msra.mxu0 %v4759
        %4844 = vmatprep.subr.mxu0 %v4762
        %4845 = vmatpush1.msra.mxu0 %v4761
        %4846 = vmatprep.subr.mxu0 %v4764
        %4847 = vmatpush1.msra.mxu0 %v4763
        %4848 = vmatprep.subr.mxu0 %v4766
        %4849 = vmatpush1.msra.mxu0 %v4765
        %4850 = vmatprep.subr.mxu0 %v4768
        %4851 = vmatpush1.msra.mxu0 %v4767
        %4852 = vmatprep.subr.mxu0 %v4770
        %4853 = vmatpush1.msra.mxu0 %v4769
        %4854 = vmatprep.subr.mxu0 %v4772
        %4855 = vmatpush1.msra.mxu0 %v4771
        %4856 = vmatprep.subr.mxu0 %v4774
        %4857 = vmatpush1.msra.mxu0 %v4773
        %4858 = vmatprep.subr.mxu0 %v4776
        %4859 = vmatpush1.msra.mxu0 %v4775
        %4860 = vmatprep.subr.mxu0 %v4778
        %4861 = vmatpush1.msra.mxu0 %v4777
        %4862 = vmatprep.subr.mxu0 %v4780
        %4863 = vmatpush1.msra.mxu0 %v4779
        %4864 = vmatprep.subr.mxu0 %v4782
        %4865 = vmatpush1.msra.mxu0 %v4781
        %4866 = vmatprep.subr.mxu0 %v4784
        %4867 = vmatpush1.msra.mxu0 %v4783
        %4868 = vmatprep.subr.mxu0 %v4786
        %4869 = vmatpush1.msra.mxu0 %v4785
        %4870 = vmatprep.subr.mxu0 %v4788
        %4871 = vmatpush1.msra.mxu0 %v4787
        %4872 = vmatprep.subr.mxu0 %v4790
        %4873 = vmatpush1.msra.mxu0 %v4789
        %4874 = vmatprep.subr.mxu0 %v4792
        %4875 = vmatpush1.msra.mxu0 %v4791
        %4876 = vmatprep.mubr.f32.mxu0 %v4612
        %4877 = vmatmul.mubr.f32.gmra.mrb[0].mxu0 %v4610
        %v4878 = vpop.f32.mrb[0].mxu0
        %v4879 = vadd.f32 0.0, %v4878
        %v4880 = vpop.f32.mrb[0].mxu0
        %v4881 = vadd.f32 0.0, %v4880
        %4882 = vmatprep.mubr.f32.mxu0 %v4618
        %4883 = vmatmul.mubr.f32.gmra.mrb[0].mxu0 %v4616
        %v4884 = vpop.f32.mrb[0].mxu0
        %v4885 = vadd.f32 0.0, %v4884
        %v4886 = vpop.f32.mrb[0].mxu0
        %v4887 = vadd.f32 0.0, %v4886
        %4888 = vmatprep.mubr.f32.mxu0 %v4624
        %4889 = vmatmul.mubr.f32.gmra.mrb[0].mxu0 %v4622
        %v4890 = vpop.f32.mrb[0].mxu0
        %v4891 = vadd.f32 0.0, %v4890
        %v4892 = vpop.f32.mrb[0].mxu0
        %v4893 = vadd.f32 0.0, %v4892
        %4894 = vmatprep.mubr.f32.mxu0 %v4630
        %4895 = vmatmul.mubr.f32.gmra.mrb[0].mxu0 %v4628
        %v4896 = vpop.f32.mrb[0].mxu0
        %v4897 = vadd.f32 0.0, %v4896
        %v4898 = vpop.f32.mrb[0].mxu0
        %v4899 = vadd.f32 0.0, %v4898
        %4900 = vmatprep.mubr.f32.mxu0 %v4636
        %4901 = vmatmul.mubr.f32.gmra.mrb[0].mxu0 %v4634
        %v4902 = vpop.f32.mrb[0].mxu0
        %v4903 = vadd.f32 0.0, %v4902
        %v4904 = vpop.f32.mrb[0].mxu0
        %v4905 = vadd.f32 0.0, %v4904
        %4906 = vdwg.mxu0
        %4907 = vmatprep.subr.mxu0 %v4794
        %4908 = vmatpush1.msra.mxu0 %v4793
        %4909 = vmatprep.subr.mxu0 %v4796
        %4910 = vmatpush1.msra.mxu0 %v4795
        %4911 = vmatprep.subr.mxu0 0.0
        %4912 = vmatpush1.msra.mxu0 0.0
        %4913 = vmatprep.subr.mxu0 0.0
        %4914 = vmatpush1.msra.mxu0 0.0
        %4915 = vmatprep.subr.mxu0 0.0
        %4916 = vmatpush1.msra.mxu0 0.0
        %4917 = vmatprep.subr.mxu0 0.0
        %4918 = vmatpush1.msra.mxu0 0.0
        %4919 = vmatprep.subr.mxu0 0.0
        %4920 = vmatpush1.msra.mxu0 0.0
        %4921 = vmatprep.subr.mxu0 0.0
        %4922 = vmatpush1.msra.mxu0 0.0
        %4923 = vmatprep.subr.mxu0 0.0
        %4924 = vmatpush1.msra.mxu0 0.0
        %4925 = vmatprep.subr.mxu0 0.0
        %4926 = vmatpush1.msra.mxu0 0.0
        %4927 = vmatprep.subr.mxu0 0.0
        %4928 = vmatpush1.msra.mxu0 0.0
        %4929 = vmatprep.subr.mxu0 0.0
        %4930 = vmatpush1.msra.mxu0 0.0
        %4931 = vmatprep.subr.mxu0 0.0
        %4932 = vmatpush1.msra.mxu0 0.0
        %4933 = vmatprep.subr.mxu0 0.0
        %4934 = vmatpush1.msra.mxu0 0.0
        %4935 = vmatprep.subr.mxu0 0.0
        %4936 = vmatpush1.msra.mxu0 0.0
        %4937 = vmatprep.subr.mxu0 0.0
        %4938 = vmatpush1.msra.mxu0 0.0
        %4939 = vmatprep.subr.mxu0 0.0
        %4940 = vmatpush1.msra.mxu0 0.0
        %4941 = vmatprep.subr.mxu0 0.0
        %4942 = vmatpush1.msra.mxu0 0.0
        %4943 = vmatprep.subr.mxu0 0.0
        %4944 = vmatpush1.msra.mxu0 0.0
        %4945 = vmatprep.subr.mxu0 0.0
        %4946 = vmatpush1.msra.mxu0 0.0
        %4947 = vmatprep.subr.mxu0 0.0
        %4948 = vmatpush1.msra.mxu0 0.0
        %4949 = vmatprep.subr.mxu0 0.0
        %4950 = vmatpush1.msra.mxu0 0.0
        %4951 = vmatprep.subr.mxu0 0.0
        %4952 = vmatpush1.msra.mxu0 0.0
        %4953 = vmatprep.subr.mxu0 0.0
        %4954 = vmatpush1.msra.mxu0 0.0
        %4955 = vmatprep.subr.mxu0 0.0
        %4956 = vmatpush1.msra.mxu0 0.0
        %4957 = vmatprep.subr.mxu0 0.0
        %4958 = vmatpush1.msra.mxu0 0.0
        %4959 = vmatprep.subr.mxu0 0.0
        %4960 = vmatpush1.msra.mxu0 0.0
        %4961 = vmatprep.subr.mxu0 0.0
        %4962 = vmatpush1.msra.mxu0 0.0
        %4963 = vmatprep.subr.mxu0 0.0
        %4964 = vmatpush1.msra.mxu0 0.0
        %4965 = vmatprep.subr.mxu0 0.0
        %4966 = vmatpush1.msra.mxu0 0.0
        %4967 = vmatprep.subr.mxu0 0.0
        %4968 = vmatpush1.msra.mxu0 0.0
        %4969 = vmatprep.subr.mxu0 0.0
        %4970 = vmatpush1.msra.mxu0 0.0
        %4971 = vmatprep.mubr.f32.mxu0 0.0
        %4972 = vmatmul.mubr.f32.gmra.mrb[0].mxu0 %v4798
        %v4973 = vpop.f32.mrb[0].mxu0
        %v4974 = vadd.f32 %v4879, %v4973
        %v4975 = vpop.f32.mrb[0].mxu0
        %v4976 = vadd.f32 %v4881, %v4975
        %4977 = vmatprep.mubr.f32.mxu0 0.0
        %4978 = vmatmul.mubr.f32.gmra.mrb[0].mxu0 %v4801
        %v4979 = vpop.f32.mrb[0].mxu0
        %v4980 = vadd.f32 %v4885, %v4979
        %v4981 = vpop.f32.mrb[0].mxu0
        %v4982 = vadd.f32 %v4887, %v4981
        %4983 = vmatprep.mubr.f32.mxu0 0.0
        %4984 = vmatmul.mubr.f32.gmra.mrb[0].mxu0 %v4804
        %v4985 = vpop.f32.mrb[0].mxu0
        %v4986 = vadd.f32 %v4891, %v4985
        %v4987 = vpop.f32.mrb[0].mxu0
        %v4988 = vadd.f32 %v4893, %v4987
        %4989 = vmatprep.mubr.f32.mxu0 0.0
        %4990 = vmatmul.mubr.f32.gmra.mrb[0].mxu0 %v4807
        %v4991 = vpop.f32.mrb[0].mxu0
        %v4992 = vadd.f32 %v4897, %v4991
        %v4993 = vpop.f32.mrb[0].mxu0
        %v4994 = vadd.f32 %v4899, %v4993
        %4995 = vmatprep.mubr.f32.mxu0 0.0
        %4996 = vmatmul.mubr.f32.gmra.mrb[0].mxu0 %v4810
        %v4997 = vpop.f32.mrb[0].mxu0
        %v4998 = vadd.f32 %v4903, %v4997
        %v4999 = vpop.f32.mrb[0].mxu0
        %v5000 = vadd.f32 %v4905, %v4999
        %5001 = vdwg.mxu0
        %v5003 = vsel %vm3890, %v4431, 0
        %v5006 = vsel %vm3890, %v4436, 0
        %v5009 = vsel %vm3890, %v4441, 0
        %v5012 = vsel %vm3890, %v4446, 0
        %v5015 = vsel %vm3890, %v4451, 0
        %5017 = vmatprep.subr.mxu0 %v4455
        %5018 = vmatpush1.msra.mxu0 %v4454
        %5019 = vmatprep.subr.mxu0 %v4457
        %5020 = vmatpush1.msra.mxu0 %v4456
        %5021 = vmatprep.subr.mxu0 %v4459
        %5022 = vmatpush1.msra.mxu0 %v4458
        %5023 = vmatprep.subr.mxu0 %v4461
        %5024 = vmatpush1.msra.mxu0 %v4460
        %5025 = vmatprep.subr.mxu0 %v4463
        %5026 = vmatpush1.msra.mxu0 %v4462
        %5027 = vmatprep.subr.mxu0 %v4465
        %5028 = vmatpush1.msra.mxu0 %v4464
        %5029 = vmatprep.subr.mxu0 %v4467
        %5030 = vmatpush1.msra.mxu0 %v4466
        %5031 = vmatprep.subr.mxu0 %v4469
        %5032 = vmatpush1.msra.mxu0 %v4468
        %5033 = vmatprep.subr.mxu0 %v4471
        %5034 = vmatpush1.msra.mxu0 %v4470
        %5035 = vmatprep.subr.mxu0 %v4473
        %5036 = vmatpush1.msra.mxu0 %v4472
        %5037 = vmatprep.subr.mxu0 %v4475
        %5038 = vmatpush1.msra.mxu0 %v4474
        %5039 = vmatprep.subr.mxu0 %v4477
        %5040 = vmatpush1.msra.mxu0 %v4476
        %5041 = vmatprep.subr.mxu0 %v4479
        %5042 = vmatpush1.msra.mxu0 %v4478
        %5043 = vmatprep.subr.mxu0 %v4481
        %5044 = vmatpush1.msra.mxu0 %v4480
        %5045 = vmatprep.subr.mxu0 %v4483
        %5046 = vmatpush1.msra.mxu0 %v4482
        %5047 = vmatprep.subr.mxu0 %v4485
        %5048 = vmatpush1.msra.mxu0 %v4484
        %5049 = vmatprep.subr.mxu0 %v4487
        %5050 = vmatpush1.msra.mxu0 %v4486
        %5051 = vmatprep.subr.mxu0 %v4489
        %5052 = vmatpush1.msra.mxu0 %v4488
        %5053 = vmatprep.subr.mxu0 %v4491
        %5054 = vmatpush1.msra.mxu0 %v4490
        %5055 = vmatprep.subr.mxu0 %v4493
        %5056 = vmatpush1.msra.mxu0 %v4492
        %5057 = vmatprep.subr.mxu0 %v4495
        %5058 = vmatpush1.msra.mxu0 %v4494
        %5059 = vmatprep.subr.mxu0 %v4497
        %5060 = vmatpush1.msra.mxu0 %v4496
        %5061 = vmatprep.subr.mxu0 %v4499
        %5062 = vmatpush1.msra.mxu0 %v4498
        %5063 = vmatprep.subr.mxu0 %v4501
        %5064 = vmatpush1.msra.mxu0 %v4500
        %5065 = vmatprep.subr.mxu0 %v4503
        %5066 = vmatpush1.msra.mxu0 %v4502
        %5067 = vmatprep.subr.mxu0 %v4505
        %5068 = vmatpush1.msra.mxu0 %v4504
        %5069 = vmatprep.subr.mxu0 %v4507
        %5070 = vmatpush1.msra.mxu0 %v4506
        %5071 = vmatprep.subr.mxu0 %v4509
        %5072 = vmatpush1.msra.mxu0 %v4508
        %5073 = vmatprep.subr.mxu0 %v4511
        %5074 = vmatpush1.msra.mxu0 %v4510
        %5075 = vmatprep.subr.mxu0 %v4513
        %5076 = vmatpush1.msra.mxu0 %v4512
        %5077 = vmatprep.subr.mxu0 %v4515
        %5078 = vmatpush1.msra.mxu0 %v4514
        %5079 = vmatprep.subr.mxu0 %v4517
        %5080 = vmatpush1.msra.mxu0 %v4516
        %5081 = vmatprep.mubr.f32.mxu0 %v4338
        %5082 = vmatmul.mubr.f32.gmra.mrb[0].mxu0 %v4336
        %v5083 = vpop.f32.mrb[0].mxu0
        %v5084 = vadd.f32 %v4974, %v5083
        %v5085 = vpop.f32.mrb[0].mxu0
        %v5086 = vadd.f32 %v4976, %v5085
        %5087 = vmatprep.mubr.f32.mxu0 %v4344
        %5088 = vmatmul.mubr.f32.gmra.mrb[0].mxu0 %v4342
        %v5089 = vpop.f32.mrb[0].mxu0
        %v5090 = vadd.f32 %v4980, %v5089
        %v5091 = vpop.f32.mrb[0].mxu0
        %v5092 = vadd.f32 %v4982, %v5091
        %5093 = vmatprep.mubr.f32.mxu0 %v4350
        %5094 = vmatmul.mubr.f32.gmra.mrb[0].mxu0 %v4348
        %v5095 = vpop.f32.mrb[0].mxu0
        %v5096 = vadd.f32 %v4986, %v5095
        %v5097 = vpop.f32.mrb[0].mxu0
        %v5098 = vadd.f32 %v4988, %v5097
        %5099 = vmatprep.mubr.f32.mxu0 %v4356
        %5100 = vmatmul.mubr.f32.gmra.mrb[0].mxu0 %v4354
        %v5101 = vpop.f32.mrb[0].mxu0
        %v5102 = vadd.f32 %v4992, %v5101
        %v5103 = vpop.f32.mrb[0].mxu0
        %v5104 = vadd.f32 %v4994, %v5103
        %5105 = vmatprep.mubr.f32.mxu0 %v4362
        %5106 = vmatmul.mubr.f32.gmra.mrb[0].mxu0 %v4360
        %v5107 = vpop.f32.mrb[0].mxu0
        %v5108 = vadd.f32 %v4998, %v5107
        %v5109 = vpop.f32.mrb[0].mxu0
        %v5110 = vadd.f32 %v5000, %v5109
        %5111 = vdwg.mxu0
        %5112 = vmatprep.subr.mxu0 %v4519
        %5113 = vmatpush1.msra.mxu0 %v4518
        %5114 = vmatprep.subr.mxu0 %v4521
        %5115 = vmatpush1.msra.mxu0 %v4520
        %5116 = vmatprep.subr.mxu0 0.0
        %5117 = vmatpush1.msra.mxu0 0.0
        %5118 = vmatprep.subr.mxu0 0.0
        %5119 = vmatpush1.msra.mxu0 0.0
        %5120 = vmatprep.subr.mxu0 0.0
        %5121 = vmatpush1.msra.mxu0 0.0
        %5122 = vmatprep.subr.mxu0 0.0
        %5123 = vmatpush1.msra.mxu0 0.0
        %5124 = vmatprep.subr.mxu0 0.0
        %5125 = vmatpush1.msra.mxu0 0.0
        %5126 = vmatprep.subr.mxu0 0.0
        %5127 = vmatpush1.msra.mxu0 0.0
        %5128 = vmatprep.subr.mxu0 0.0
        %5129 = vmatpush1.msra.mxu0 0.0
        %5130 = vmatprep.subr.mxu0 0.0
        %5131 = vmatpush1.msra.mxu0 0.0
        %5132 = vmatprep.subr.mxu0 0.0
        %5133 = vmatpush1.msra.mxu0 0.0
        %5134 = vmatprep.subr.mxu0 0.0
        %5135 = vmatpush1.msra.mxu0 0.0
        %5136 = vmatprep.subr.mxu0 0.0
        %5137 = vmatpush1.msra.mxu0 0.0
        %5138 = vmatprep.subr.mxu0 0.0
        %5139 = vmatpush1.msra.mxu0 0.0
        %5140 = vmatprep.subr.mxu0 0.0
        %5141 = vmatpush1.msra.mxu0 0.0
        %5142 = vmatprep.subr.mxu0 0.0
        %5143 = vmatpush1.msra.mxu0 0.0
        %5144 = vmatprep.subr.mxu0 0.0
        %5145 = vmatpush1.msra.mxu0 0.0
        %5146 = vmatprep.subr.mxu0 0.0
        %5147 = vmatpush1.msra.mxu0 0.0
        %5148 = vmatprep.subr.mxu0 0.0
        %5149 = vmatpush1.msra.mxu0 0.0
        %5150 = vmatprep.subr.mxu0 0.0
        %5151 = vmatpush1.msra.mxu0 0.0
        %5152 = vmatprep.subr.mxu0 0.0
        %5153 = vmatpush1.msra.mxu0 0.0
        %5154 = vmatprep.subr.mxu0 0.0
        %5155 = vmatpush1.msra.mxu0 0.0
        %5156 = vmatprep.subr.mxu0 0.0
        %5157 = vmatpush1.msra.mxu0 0.0
        %5158 = vmatprep.subr.mxu0 0.0
        %5159 = vmatpush1.msra.mxu0 0.0
        %5160 = vmatprep.subr.mxu0 0.0
        %5161 = vmatpush1.msra.mxu0 0.0
        %5162 = vmatprep.subr.mxu0 0.0
        %5163 = vmatpush1.msra.mxu0 0.0
        %5164 = vmatprep.subr.mxu0 0.0
        %5165 = vmatpush1.msra.mxu0 0.0
        %5166 = vmatprep.subr.mxu0 0.0
        %5167 = vmatpush1.msra.mxu0 0.0
        %5168 = vmatprep.subr.mxu0 0.0
        %5169 = vmatpush1.msra.mxu0 0.0
        %5170 = vmatprep.subr.mxu0 0.0
        %5171 = vmatpush1.msra.mxu0 0.0
        %5172 = vmatprep.subr.mxu0 0.0
        %5173 = vmatpush1.msra.mxu0 0.0
        %5174 = vmatprep.subr.mxu0 0.0
        %5175 = vmatpush1.msra.mxu0 0.0
        %5176 = vmatprep.mubr.f32.mxu0 0.0
        %5177 = vmatmul.mubr.f32.gmra.mrb[0].mxu0 %v5003
        %v5178 = vpop.f32.mrb[0].mxu0
        %v5179 = vadd.f32 %v5084, %v5178
        %v5180 = vpop.f32.mrb[0].mxu0
        %v5181 = vadd.f32 %v5086, %v5180
        %5182 = vmatprep.mubr.f32.mxu0 0.0
        %5183 = vmatmul.mubr.f32.gmra.mrb[0].mxu0 %v5006
        %v5184 = vpop.f32.mrb[0].mxu0
        %v5185 = vadd.f32 %v5090, %v5184
        %v5186 = vpop.f32.mrb[0].mxu0
        %v5187 = vadd.f32 %v5092, %v5186
        %5188 = vmatprep.mubr.f32.mxu0 0.0
        %5189 = vmatmul.mubr.f32.gmra.mrb[0].mxu0 %v5009
        %v5190 = vpop.f32.mrb[0].mxu0
        %v5191 = vadd.f32 %v5096, %v5190
        %v5192 = vpop.f32.mrb[0].mxu0
        %v5193 = vadd.f32 %v5098, %v5192
        %5194 = vmatprep.mubr.f32.mxu0 0.0
        %5195 = vmatmul.mubr.f32.gmra.mrb[0].mxu0 %v5012
        %v5196 = vpop.f32.mrb[0].mxu0
        %v5197 = vadd.f32 %v5102, %v5196
        %v5198 = vpop.f32.mrb[0].mxu0
        %v5199 = vadd.f32 %v5104, %v5198
        %5200 = vmatprep.mubr.f32.mxu0 0.0
        %5201 = vmatmul.mubr.f32.gmra.mrb[0].mxu0 %v5015
        %v5202 = vpop.f32.mrb[0].mxu0
        %v5203 = vadd.f32 %v5108, %v5202
        %v5204 = vpop.f32.mrb[0].mxu0
        %v5205 = vadd.f32 %v5110, %v5204
        %5206 = vdwg.mxu0
        %s5207 = scalar_lea.vmem [#allocation23], 80
        %v5208 = vld [vmem:[%s5207] sm:$0xff]
        %v5209 = vld [vmem:[%s5207 + $0x8] sm:$0xff]
        %v5210 = vld [vmem:[%s5207 + $0x10] sm:$0xff]
        %v5211 = vld [vmem:[%s5207 + $0x18] sm:$0xff]
        %v5212 = vld [vmem:[%s5207 + $0x20] sm:$0x3]
        %v5214 = vsel %vm4244, %v5208, 0
        %v5217 = vsel %vm4244, %v5209, 0
        %v5220 = vsel %vm4244, %v5210, 0
        %v5223 = vsel %vm4244, %v5211, 0
        %v5226 = vsel %vm4244, %v5212, 0
        %5228 = vmatprep.subr.mxu0 %v4145
        %5229 = vmatpush1.msra.mxu0 %v4143
        %5230 = vmatprep.subr.mxu0 %v4151
        %5231 = vmatpush1.msra.mxu0 %v4149
        %5232 = vmatprep.subr.mxu0 %v4264
        %5233 = vmatpush1.msra.mxu0 %v4261
        %5234 = vmatprep.subr.mxu0 0.0
        %5235 = vmatpush1.msra.mxu0 0.0
        %5236 = vmatprep.subr.mxu0 0.0
        %5237 = vmatpush1.msra.mxu0 0.0
        %5238 = vmatprep.subr.mxu0 0.0
        %5239 = vmatpush1.msra.mxu0 0.0
        %5240 = vmatprep.subr.mxu0 0.0
        %5241 = vmatpush1.msra.mxu0 0.0
        %5242 = vmatprep.subr.mxu0 0.0
        %5243 = vmatpush1.msra.mxu0 0.0
        %5244 = vmatprep.subr.mxu0 0.0
        %5245 = vmatpush1.msra.mxu0 0.0
        %5246 = vmatprep.subr.mxu0 0.0
        %5247 = vmatpush1.msra.mxu0 0.0
        %5248 = vmatprep.subr.mxu0 0.0
        %5249 = vmatpush1.msra.mxu0 0.0
        %5250 = vmatprep.subr.mxu0 0.0
        %5251 = vmatpush1.msra.mxu0 0.0
        %5252 = vmatprep.subr.mxu0 0.0
        %5253 = vmatpush1.msra.mxu0 0.0
        %5254 = vmatprep.subr.mxu0 0.0
        %5255 = vmatpush1.msra.mxu0 0.0
        %5256 = vmatprep.subr.mxu0 0.0
        %5257 = vmatpush1.msra.mxu0 0.0
        %5258 = vmatprep.subr.mxu0 0.0
        %5259 = vmatpush1.msra.mxu0 0.0
        %5260 = vmatprep.subr.mxu0 0.0
        %5261 = vmatpush1.msra.mxu0 0.0
        %5262 = vmatprep.subr.mxu0 0.0
        %5263 = vmatpush1.msra.mxu0 0.0
        %5264 = vmatprep.subr.mxu0 0.0
        %5265 = vmatpush1.msra.mxu0 0.0
        %5266 = vmatprep.subr.mxu0 0.0
        %5267 = vmatpush1.msra.mxu0 0.0
        %5268 = vmatprep.subr.mxu0 0.0
        %5269 = vmatpush1.msra.mxu0 0.0
        %5270 = vmatprep.subr.mxu0 0.0
        %5271 = vmatpush1.msra.mxu0 0.0
        %5272 = vmatprep.subr.mxu0 0.0
        %5273 = vmatpush1.msra.mxu0 0.0
        %5274 = vmatprep.subr.mxu0 0.0
        %5275 = vmatpush1.msra.mxu0 0.0
        %5276 = vmatprep.subr.mxu0 0.0
        %5277 = vmatpush1.msra.mxu0 0.0
        %5278 = vmatprep.subr.mxu0 0.0
        %5279 = vmatpush1.msra.mxu0 0.0
        %5280 = vmatprep.subr.mxu0 0.0
        %5281 = vmatpush1.msra.mxu0 0.0
        %5282 = vmatprep.subr.mxu0 0.0
        %5283 = vmatpush1.msra.mxu0 0.0
        %5284 = vmatprep.subr.mxu0 0.0
        %5285 = vmatpush1.msra.mxu0 0.0
        %5286 = vmatprep.subr.mxu0 0.0
        %5287 = vmatpush1.msra.mxu0 0.0
        %5288 = vmatprep.subr.mxu0 0.0
        %5289 = vmatpush1.msra.mxu0 0.0
        %5290 = vmatprep.subr.mxu0 0.0
        %5291 = vmatpush1.msra.mxu0 0.0
        %5292 = vmatprep.mubr.f32.mxu0 0.0
        %5293 = vmatmul.mubr.f32.gmra.mrb[0].mxu0 %v5214
        %v5294 = vpop.f32.mrb[0].mxu0
        %v5295 = vadd.f32 0.0, %v5294
        %v5296 = vpop.f32.mrb[0].mxu0
        %v5297 = vadd.f32 0.0, %v5296
        %5298 = vmatprep.mubr.f32.mxu0 0.0
        %5299 = vmatmul.mubr.f32.gmra.mrb[0].mxu0 %v5217
        %v5300 = vpop.f32.mrb[0].mxu0
        %v5301 = vadd.f32 0.0, %v5300
        %v5302 = vpop.f32.mrb[0].mxu0
        %v5303 = vadd.f32 0.0, %v5302
        %5304 = vmatprep.mubr.f32.mxu0 0.0
        %5305 = vmatmul.mubr.f32.gmra.mrb[0].mxu0 %v5220
        %v5306 = vpop.f32.mrb[0].mxu0
        %v5307 = vadd.f32 0.0, %v5306
        %v5308 = vpop.f32.mrb[0].mxu0
        %v5309 = vadd.f32 0.0, %v5308
        %5310 = vmatprep.mubr.f32.mxu0 0.0
        %5311 = vmatmul.mubr.f32.gmra.mrb[0].mxu0 %v5223
        %v5312 = vpop.f32.mrb[0].mxu0
        %v5313 = vadd.f32 0.0, %v5312
        %v5314 = vpop.f32.mrb[0].mxu0
        %v5315 = vadd.f32 0.0, %v5314
        %5316 = vmatprep.mubr.f32.mxu0 0.0
        %5317 = vmatmul.mubr.f32.gmra.mrb[0].mxu0 %v5226
        %v5318 = vpop.f32.mrb[0].mxu0
        %v5319 = vadd.f32 0.0, %v5318
        %v5320 = vpop.f32.mrb[0].mxu0
        %v5321 = vadd.f32 0.0, %v5320
        %5322 = vdwg.mxu0
        %5323 = vmatprep.subr.mxu0 0.0
        %5324 = vmatpush1.msra.mxu0 %v4226
        %5325 = vmatprep.subr.mxu0 0.0
        %5326 = vmatpush1.msra.mxu0 %v4231
        %5327 = vmatprep.subr.mxu0 0.0
        %5328 = vmatpush1.msra.mxu0 %v4267
        %5329 = vmatprep.subr.mxu0 0.0
        %5330 = vmatpush1.msra.mxu0 0.0
        %5331 = vmatprep.subr.mxu0 0.0
        %5332 = vmatpush1.msra.mxu0 0.0
        %5333 = vmatprep.subr.mxu0 0.0
        %5334 = vmatpush1.msra.mxu0 0.0
        %5335 = vmatprep.subr.mxu0 0.0
        %5336 = vmatpush1.msra.mxu0 0.0
        %5337 = vmatprep.subr.mxu0 0.0
        %5338 = vmatpush1.msra.mxu0 0.0
        %5339 = vmatprep.subr.mxu0 0.0
        %5340 = vmatpush1.msra.mxu0 0.0
        %5341 = vmatprep.subr.mxu0 0.0
        %5342 = vmatpush1.msra.mxu0 0.0
        %5343 = vmatprep.subr.mxu0 0.0
        %5344 = vmatpush1.msra.mxu0 0.0
        %5345 = vmatprep.subr.mxu0 0.0
        %5346 = vmatpush1.msra.mxu0 0.0
        %5347 = vmatprep.subr.mxu0 0.0
        %5348 = vmatpush1.msra.mxu0 0.0
        %5349 = vmatprep.subr.mxu0 0.0
        %5350 = vmatpush1.msra.mxu0 0.0
        %5351 = vmatprep.subr.mxu0 0.0
        %5352 = vmatpush1.msra.mxu0 0.0
        %5353 = vmatprep.subr.mxu0 0.0
        %5354 = vmatpush1.msra.mxu0 0.0
        %5355 = vmatprep.subr.mxu0 0.0
        %5356 = vmatpush1.msra.mxu0 0.0
        %5357 = vmatprep.subr.mxu0 0.0
        %5358 = vmatpush1.msra.mxu0 0.0
        %5359 = vmatprep.subr.mxu0 0.0
        %5360 = vmatpush1.msra.mxu0 0.0
        %5361 = vmatprep.subr.mxu0 0.0
        %5362 = vmatpush1.msra.mxu0 0.0
        %5363 = vmatprep.subr.mxu0 0.0
        %5364 = vmatpush1.msra.mxu0 0.0
        %5365 = vmatprep.subr.mxu0 0.0
        %5366 = vmatpush1.msra.mxu0 0.0
        %5367 = vmatprep.subr.mxu0 0.0
        %5368 = vmatpush1.msra.mxu0 0.0
        %5369 = vmatprep.subr.mxu0 0.0
        %5370 = vmatpush1.msra.mxu0 0.0
        %5371 = vmatprep.subr.mxu0 0.0
        %5372 = vmatpush1.msra.mxu0 0.0
        %5373 = vmatprep.subr.mxu0 0.0
        %5374 = vmatpush1.msra.mxu0 0.0
        %5375 = vmatprep.subr.mxu0 0.0
        %5376 = vmatpush1.msra.mxu0 0.0
        %5377 = vmatprep.subr.mxu0 0.0
        %5378 = vmatpush1.msra.mxu0 0.0
        %5379 = vmatprep.subr.mxu0 0.0
        %5380 = vmatpush1.msra.mxu0 0.0
        %5381 = vmatprep.subr.mxu0 0.0
        %5382 = vmatpush1.msra.mxu0 0.0
        %5383 = vmatprep.subr.mxu0 0.0
        %5384 = vmatpush1.msra.mxu0 0.0
        %5385 = vmatprep.subr.mxu0 0.0
        %5386 = vmatpush1.msra.mxu0 0.0
        %5387 = vmatprep.mubr.f32.mxu0 0.0
        %5388 = vmatmul.mubr.f32.gmra.mrb[0].mxu0 %v5214
        %v5389 = vpop.f32.mrb[0].mxu0
        %v5390 = vadd.f32 0.0, %v5389
        %v5391 = vpop.f32.mrb[0].mxu0
        %5392 = vmatprep.mubr.f32.mxu0 0.0
        %5393 = vmatmul.mubr.f32.gmra.mrb[0].mxu0 %v5217
        %v5394 = vpop.f32.mrb[0].mxu0
        %v5395 = vadd.f32 0.0, %v5394
        %v5396 = vpop.f32.mrb[0].mxu0
        %5397 = vmatprep.mubr.f32.mxu0 0.0
        %5398 = vmatmul.mubr.f32.gmra.mrb[0].mxu0 %v5220
        %v5399 = vpop.f32.mrb[0].mxu0
        %v5400 = vadd.f32 0.0, %v5399
        %v5401 = vpop.f32.mrb[0].mxu0
        %5402 = vmatprep.mubr.f32.mxu0 0.0
        %5403 = vmatmul.mubr.f32.gmra.mrb[0].mxu0 %v5223
        %v5404 = vpop.f32.mrb[0].mxu0
        %v5405 = vadd.f32 0.0, %v5404
        %v5406 = vpop.f32.mrb[0].mxu0
        %5407 = vmatprep.mubr.f32.mxu0 0.0
        %5408 = vmatmul.mubr.f32.gmra.mrb[0].mxu0 %v5226
        %v5409 = vpop.f32.mrb[0].mxu0
        %v5410 = vadd.f32 0.0, %v5409
        %v5411 = vpop.f32.mrb[0].mxu0
        %5412 = vdwg.mxu0
        %s5413 = scalar_lea.vmem [#allocation24], 1088
        %v5414 = vld [vmem:[%s5413] sm:$0xff]
        %v5415 = vld [vmem:[%s5413 + $0x8] sm:$0xff]
        %v5416 = vld [vmem:[%s5413 + $0x10] sm:$0xff]
        %v5417 = vld [vmem:[%s5413 + $0x18] sm:$0xff]
        %v5418 = vld [vmem:[%s5413 + $0x20] sm:$0xff]
        %v5419 = vld [vmem:[%s5413 + $0x28] sm:$0xff]
        %v5420 = vld [vmem:[%s5413 + $0x30] sm:$0xff]
        %v5421 = vld [vmem:[%s5413 + $0x38] sm:$0xff]
        %v5422 = vld [vmem:[%s5413 + $0x40] sm:$0xff]
        %v5423 = vld [vmem:[%s5413 + $0x48] sm:$0xff]
        %v5424 = vld [vmem:[%s5413 + $0x50] sm:$0xff]
        %v5425 = vld [vmem:[%s5413 + $0x58] sm:$0xff]
        %v5426 = vld [vmem:[%s5413 + $0x60] sm:$0xff]
        %v5427 = vld [vmem:[%s5413 + $0x68] sm:$0xff]
        %v5428 = vld [vmem:[%s5413 + $0x70] sm:$0xff]
        %v5429 = vld [vmem:[%s5413 + $0x78] sm:$0xff]
        %v5430 = vld [vmem:[%s5413 + $0x80] sm:$0xff]
        %v5431 = vld [vmem:[%s5413 + $0x88] sm:$0xff]
        %v5432 = vld [vmem:[%s5413 + $0x90] sm:$0xff]
        %v5433 = vld [vmem:[%s5413 + $0x98] sm:$0xff]
        %v5434 = vld [vmem:[%s5413 + $0xa0] sm:$0xff]
        %v5435 = vld [vmem:[%s5413 + $0xa8] sm:$0xff]
        %v5436 = vld [vmem:[%s5413 + $0xb0] sm:$0xff]
        %v5437 = vld [vmem:[%s5413 + $0xb8] sm:$0xff]
        %v5438 = vld [vmem:[%s5413 + $0xc0] sm:$0xff]
        %v5439 = vld [vmem:[%s5413 + $0xc8] sm:$0xff]
        %v5440 = vld [vmem:[%s5413 + $0xd0] sm:$0xff]
        %v5441 = vld [vmem:[%s5413 + $0xd8] sm:$0xff]
        %v5442 = vld [vmem:[%s5413 + $0xe0] sm:$0xff]
        %v5443 = vld [vmem:[%s5413 + $0xe8] sm:$0xff]
        %v5444 = vld [vmem:[%s5413 + $0xf0] sm:$0xff]
        %v5445 = vld [vmem:[%s5413 + $0xf8] sm:$0xff]
        %v5446 = vld [vmem:[%s5413 + $0x100] sm:$0xff]
        %v5447 = vld [vmem:[%s5413 + $0x108] sm:$0xff]
        %v5448 = vld [vmem:[%s5413 + $0x110] sm:$0xff]
        %v5449 = vld [vmem:[%s5413 + $0x118] sm:$0xff]
        %v5450 = vld [vmem:[%s5413 + $0x120] sm:$0xff]
        %v5451 = vld [vmem:[%s5413 + $0x128] sm:$0xff]
        %v5452 = vld [vmem:[%s5413 + $0x130] sm:$0xff]
        %v5453 = vld [vmem:[%s5413 + $0x138] sm:$0xff]
        %v5454 = vld [vmem:[%s5413 + $0x140] sm:$0xff]
        %v5455 = vld [vmem:[%s5413 + $0x148] sm:$0xff]
        %v5456 = vld [vmem:[%s5413 + $0x150] sm:$0xff]
        %v5457 = vld [vmem:[%s5413 + $0x158] sm:$0xff]
        %v5458 = vld [vmem:[%s5413 + $0x160] sm:$0xff]
        %v5459 = vld [vmem:[%s5413 + $0x168] sm:$0xff]
        %v5460 = vld [vmem:[%s5413 + $0x170] sm:$0xff]
        %v5461 = vld [vmem:[%s5413 + $0x178] sm:$0xff]
        %v5462 = vld [vmem:[%s5413 + $0x180] sm:$0xff]
        %v5463 = vld [vmem:[%s5413 + $0x188] sm:$0xff]
        %v5464 = vld [vmem:[%s5413 + $0x190] sm:$0xff]
        %v5465 = vld [vmem:[%s5413 + $0x198] sm:$0xff]
        %v5466 = vld [vmem:[%s5413 + $0x1a0] sm:$0xff]
        %v5467 = vld [vmem:[%s5413 + $0x1a8] sm:$0xff]
        %v5468 = vld [vmem:[%s5413 + $0x1b0] sm:$0xff]
        %v5469 = vld [vmem:[%s5413 + $0x1b8] sm:$0xff]
        %v5470 = vld [vmem:[%s5413 + $0x1c0] sm:$0xff]
        %v5471 = vld [vmem:[%s5413 + $0x1c8] sm:$0xff]
        %v5472 = vld [vmem:[%s5413 + $0x1d0] sm:$0xff]
        %v5473 = vld [vmem:[%s5413 + $0x1d8] sm:$0xff]
        %v5474 = vld [vmem:[%s5413 + $0x1e0] sm:$0xff]
        %v5475 = vld [vmem:[%s5413 + $0x1e8] sm:$0xff]
        %v5476 = vld [vmem:[%s5413 + $0x1f0] sm:$0xff]
        %v5477 = vld [vmem:[%s5413 + $0x1f8] sm:$0xff]
        %v5478 = vld [vmem:[%s5413 + $0x200] sm:$0xff]
        %v5479 = vld [vmem:[%s5413 + $0x208] sm:$0xff]
        %v5480 = vld [vmem:[%s5413 + $0x210] sm:$0xff]
        %v5481 = vld [vmem:[%s5413 + $0x218] sm:$0xff]
        %v5483 = vsel %vm3890, %v5390, 0
        %v5486 = vsel %vm3890, %v5395, 0
        %v5489 = vsel %vm3890, %v5400, 0
        %v5492 = vsel %vm3890, %v5405, 0
        %v5495 = vsel %vm3890, %v5410, 0
        %5497 = vmatprep.subr.mxu0 %v5415
        %5498 = vmatpush1.msra.mxu0 %v5414
        %5499 = vmatprep.subr.mxu0 %v5417
        %5500 = vmatpush1.msra.mxu0 %v5416
        %5501 = vmatprep.subr.mxu0 %v5419
        %5502 = vmatpush1.msra.mxu0 %v5418
        %5503 = vmatprep.subr.mxu0 %v5421
        %5504 = vmatpush1.msra.mxu0 %v5420
        %5505 = vmatprep.subr.mxu0 %v5423
        %5506 = vmatpush1.msra.mxu0 %v5422
        %5507 = vmatprep.subr.mxu0 %v5425
        %5508 = vmatpush1.msra.mxu0 %v5424
        %5509 = vmatprep.subr.mxu0 %v5427
        %5510 = vmatpush1.msra.mxu0 %v5426
        %5511 = vmatprep.subr.mxu0 %v5429
        %5512 = vmatpush1.msra.mxu0 %v5428
        %5513 = vmatprep.subr.mxu0 %v5431
        %5514 = vmatpush1.msra.mxu0 %v5430
        %5515 = vmatprep.subr.mxu0 %v5433
        %5516 = vmatpush1.msra.mxu0 %v5432
        %5517 = vmatprep.subr.mxu0 %v5435
        %5518 = vmatpush1.msra.mxu0 %v5434
        %5519 = vmatprep.subr.mxu0 %v5437
        %5520 = vmatpush1.msra.mxu0 %v5436
        %5521 = vmatprep.subr.mxu0 %v5439
        %5522 = vmatpush1.msra.mxu0 %v5438
        %5523 = vmatprep.subr.mxu0 %v5441
        %5524 = vmatpush1.msra.mxu0 %v5440
        %5525 = vmatprep.subr.mxu0 %v5443
        %5526 = vmatpush1.msra.mxu0 %v5442
        %5527 = vmatprep.subr.mxu0 %v5445
        %5528 = vmatpush1.msra.mxu0 %v5444
        %5529 = vmatprep.subr.mxu0 %v5447
        %5530 = vmatpush1.msra.mxu0 %v5446
        %5531 = vmatprep.subr.mxu0 %v5449
        %5532 = vmatpush1.msra.mxu0 %v5448
        %5533 = vmatprep.subr.mxu0 %v5451
        %5534 = vmatpush1.msra.mxu0 %v5450
        %5535 = vmatprep.subr.mxu0 %v5453
        %5536 = vmatpush1.msra.mxu0 %v5452
        %5537 = vmatprep.subr.mxu0 %v5455
        %5538 = vmatpush1.msra.mxu0 %v5454
        %5539 = vmatprep.subr.mxu0 %v5457
        %5540 = vmatpush1.msra.mxu0 %v5456
        %5541 = vmatprep.subr.mxu0 %v5459
        %5542 = vmatpush1.msra.mxu0 %v5458
        %5543 = vmatprep.subr.mxu0 %v5461
        %5544 = vmatpush1.msra.mxu0 %v5460
        %5545 = vmatprep.subr.mxu0 %v5463
        %5546 = vmatpush1.msra.mxu0 %v5462
        %5547 = vmatprep.subr.mxu0 %v5465
        %5548 = vmatpush1.msra.mxu0 %v5464
        %5549 = vmatprep.subr.mxu0 %v5467
        %5550 = vmatpush1.msra.mxu0 %v5466
        %5551 = vmatprep.subr.mxu0 %v5469
        %5552 = vmatpush1.msra.mxu0 %v5468
        %5553 = vmatprep.subr.mxu0 %v5471
        %5554 = vmatpush1.msra.mxu0 %v5470
        %5555 = vmatprep.subr.mxu0 %v5473
        %5556 = vmatpush1.msra.mxu0 %v5472
        %5557 = vmatprep.subr.mxu0 %v5475
        %5558 = vmatpush1.msra.mxu0 %v5474
        %5559 = vmatprep.subr.mxu0 %v5477
        %5560 = vmatpush1.msra.mxu0 %v5476
        %5561 = vmatprep.mubr.f32.mxu0 %v5297
        %5562 = vmatmul.mubr.f32.gmra.mrb[0].mxu0 %v5295
        %v5563 = vpop.f32.mrb[0].mxu0
        %v5564 = vadd.f32 0.0, %v5563
        %v5565 = vpop.f32.mrb[0].mxu0
        %v5566 = vadd.f32 0.0, %v5565
        %5567 = vmatprep.mubr.f32.mxu0 %v5303
        %5568 = vmatmul.mubr.f32.gmra.mrb[0].mxu0 %v5301
        %v5569 = vpop.f32.mrb[0].mxu0
        %v5570 = vadd.f32 0.0, %v5569
        %v5571 = vpop.f32.mrb[0].mxu0
        %v5572 = vadd.f32 0.0, %v5571
        %5573 = vmatprep.mubr.f32.mxu0 %v5309
        %5574 = vmatmul.mubr.f32.gmra.mrb[0].mxu0 %v5307
        %v5575 = vpop.f32.mrb[0].mxu0
        %v5576 = vadd.f32 0.0, %v5575
        %v5577 = vpop.f32.mrb[0].mxu0
        %v5578 = vadd.f32 0.0, %v5577
        %5579 = vmatprep.mubr.f32.mxu0 %v5315
        %5580 = vmatmul.mubr.f32.gmra.mrb[0].mxu0 %v5313
        %v5581 = vpop.f32.mrb[0].mxu0
        %v5582 = vadd.f32 0.0, %v5581
        %v5583 = vpop.f32.mrb[0].mxu0
        %v5584 = vadd.f32 0.0, %v5583
        %5585 = vmatprep.mubr.f32.mxu0 %v5321
        %5586 = vmatmul.mubr.f32.gmra.mrb[0].mxu0 %v5319
        %v5587 = vpop.f32.mrb[0].mxu0
        %v5588 = vadd.f32 0.0, %v5587
        %v5589 = vpop.f32.mrb[0].mxu0
        %v5590 = vadd.f32 0.0, %v5589
        %5591 = vdwg.mxu0
        %5592 = vmatprep.subr.mxu0 %v5479
        %5593 = vmatpush1.msra.mxu0 %v5478
        %5594 = vmatprep.subr.mxu0 %v5481
        %5595 = vmatpush1.msra.mxu0 %v5480
        %5596 = vmatprep.subr.mxu0 0.0
        %5597 = vmatpush1.msra.mxu0 0.0
        %5598 = vmatprep.subr.mxu0 0.0
        %5599 = vmatpush1.msra.mxu0 0.0
        %5600 = vmatprep.subr.mxu0 0.0
        %5601 = vmatpush1.msra.mxu0 0.0
        %5602 = vmatprep.subr.mxu0 0.0
        %5603 = vmatpush1.msra.mxu0 0.0
        %5604 = vmatprep.subr.mxu0 0.0
        %5605 = vmatpush1.msra.mxu0 0.0
        %5606 = vmatprep.subr.mxu0 0.0
        %5607 = vmatpush1.msra.mxu0 0.0
        %5608 = vmatprep.subr.mxu0 0.0
        %5609 = vmatpush1.msra.mxu0 0.0
        %5610 = vmatprep.subr.mxu0 0.0
        %5611 = vmatpush1.msra.mxu0 0.0
        %5612 = vmatprep.subr.mxu0 0.0
        %5613 = vmatpush1.msra.mxu0 0.0
        %5614 = vmatprep.subr.mxu0 0.0
        %5615 = vmatpush1.msra.mxu0 0.0
        %5616 = vmatprep.subr.mxu0 0.0
        %5617 = vmatpush1.msra.mxu0 0.0
        %5618 = vmatprep.subr.mxu0 0.0
        %5619 = vmatpush1.msra.mxu0 0.0
        %5620 = vmatprep.subr.mxu0 0.0
        %5621 = vmatpush1.msra.mxu0 0.0
        %5622 = vmatprep.subr.mxu0 0.0
        %5623 = vmatpush1.msra.mxu0 0.0
        %5624 = vmatprep.subr.mxu0 0.0
        %5625 = vmatpush1.msra.mxu0 0.0
        %5626 = vmatprep.subr.mxu0 0.0
        %5627 = vmatpush1.msra.mxu0 0.0
        %5628 = vmatprep.subr.mxu0 0.0
        %5629 = vmatpush1.msra.mxu0 0.0
        %5630 = vmatprep.subr.mxu0 0.0
        %5631 = vmatpush1.msra.mxu0 0.0
        %5632 = vmatprep.subr.mxu0 0.0
        %5633 = vmatpush1.msra.mxu0 0.0
        %5634 = vmatprep.subr.mxu0 0.0
        %5635 = vmatpush1.msra.mxu0 0.0
        %5636 = vmatprep.subr.mxu0 0.0
        %5637 = vmatpush1.msra.mxu0 0.0
        %5638 = vmatprep.subr.mxu0 0.0
        %5639 = vmatpush1.msra.mxu0 0.0
        %5640 = vmatprep.subr.mxu0 0.0
        %5641 = vmatpush1.msra.mxu0 0.0
        %5642 = vmatprep.subr.mxu0 0.0
        %5643 = vmatpush1.msra.mxu0 0.0
        %5644 = vmatprep.subr.mxu0 0.0
        %5645 = vmatpush1.msra.mxu0 0.0
        %5646 = vmatprep.subr.mxu0 0.0
        %5647 = vmatpush1.msra.mxu0 0.0
        %5648 = vmatprep.subr.mxu0 0.0
        %5649 = vmatpush1.msra.mxu0 0.0
        %5650 = vmatprep.subr.mxu0 0.0
        %5651 = vmatpush1.msra.mxu0 0.0
        %5652 = vmatprep.subr.mxu0 0.0
        %5653 = vmatpush1.msra.mxu0 0.0
        %5654 = vmatprep.subr.mxu0 0.0
        %5655 = vmatpush1.msra.mxu0 0.0
        %5656 = vmatprep.mubr.f32.mxu0 0.0
        %5657 = vmatmul.mubr.f32.gmra.mrb[0].mxu0 %v5483
        %v5658 = vpop.f32.mrb[0].mxu0
        %v5659 = vadd.f32 %v5564, %v5658
        %v5660 = vpop.f32.mrb[0].mxu0
        %v5661 = vadd.f32 %v5566, %v5660
        %5662 = vmatprep.mubr.f32.mxu0 0.0
        %5663 = vmatmul.mubr.f32.gmra.mrb[0].mxu0 %v5486
        %v5664 = vpop.f32.mrb[0].mxu0
        %v5665 = vadd.f32 %v5570, %v5664
        %v5666 = vpop.f32.mrb[0].mxu0
        %v5667 = vadd.f32 %v5572, %v5666
        %5668 = vmatprep.mubr.f32.mxu0 0.0
        %5669 = vmatmul.mubr.f32.gmra.mrb[0].mxu0 %v5489
        %v5670 = vpop.f32.mrb[0].mxu0
        %v5671 = vadd.f32 %v5576, %v5670
        %v5672 = vpop.f32.mrb[0].mxu0
        %v5673 = vadd.f32 %v5578, %v5672
        %5674 = vmatprep.mubr.f32.mxu0 0.0
        %5675 = vmatmul.mubr.f32.gmra.mrb[0].mxu0 %v5492
        %v5676 = vpop.f32.mrb[0].mxu0
        %v5677 = vadd.f32 %v5582, %v5676
        %v5678 = vpop.f32.mrb[0].mxu0
        %v5679 = vadd.f32 %v5584, %v5678
        %5680 = vmatprep.mubr.f32.mxu0 0.0
        %5681 = vmatmul.mubr.f32.gmra.mrb[0].mxu0 %v5495
        %v5682 = vpop.f32.mrb[0].mxu0
        %v5683 = vadd.f32 %v5588, %v5682
        %v5684 = vpop.f32.mrb[0].mxu0
        %v5685 = vadd.f32 %v5590, %v5684
        %5686 = vdwg.mxu0
        %v5687 = vadd.f32 %v5179, %v5659
        %v5688 = vadd.f32 %v5181, %v5661
        %v5689 = vadd.f32 %v5185, %v5665
        %v5690 = vadd.f32 %v5187, %v5667
        %v5691 = vadd.f32 %v5191, %v5671
        %v5692 = vadd.f32 %v5193, %v5673
        %v5693 = vadd.f32 %v5197, %v5677
        %v5694 = vadd.f32 %v5199, %v5679
        %v5695 = vadd.f32 %v5203, %v5683
        %v5696 = vadd.f32 %v5205, %v5685
        %v5697 = vld [vmem:[%s17] sm:$0x3]
        %v5699 = vlaneseq
        %v5700 = vshrl.u32 %v5699, 7
        %v5701 = vsub.s32 0, %v5700
        %v5702 = vrot.slane %v5697, %v5701
        %v5703 = vlaneseq
        %v5704 = vshrl.u32 %v5703, 7
        %v5705 = vsub.s32 1, %v5704
        %v5706 = vrot.slane %v5697, %v5705
        %v5709 = vadd.f32 %v5687, %v5702
        %v5710 = vadd.f32 %v5688, %v5706
        %v5711 = vadd.f32 %v5689, %v5702
        %v5712 = vadd.f32 %v5690, %v5706
        %v5713 = vadd.f32 %v5691, %v5702
        %v5714 = vadd.f32 %v5692, %v5706
        %v5715 = vadd.f32 %v5693, %v5702
        %v5716 = vadd.f32 %v5694, %v5706
        %v5717 = vadd.f32 %v5695, %v5702
        %v5718 = vadd.f32 %v5696, %v5706
        %v5719 = vld [vmem:[#allocation26] sm:$0xff]
        %v5720 = vld [vmem:[#allocation26 + $0x8] sm:$0xff]
        %v5721 = vld [vmem:[#allocation26 + $0x10] sm:$0xff]
        %v5722 = vld [vmem:[#allocation26 + $0x18] sm:$0xff]
        %v5723 = vld [vmem:[#allocation26 + $0x20] sm:$0xff]
        %v5724 = vld [vmem:[#allocation26 + $0x28] sm:$0xff]
        %v5725 = vld [vmem:[#allocation26 + $0x30] sm:$0xff]
        %v5726 = vld [vmem:[#allocation26 + $0x38] sm:$0xff]
        %v5727 = vld [vmem:[#allocation26 + $0x40] sm:$0xff]
        %v5728 = vld [vmem:[#allocation26 + $0x48] sm:$0xff]
        %v5729 = vld [vmem:[#allocation26 + $0x50] sm:$0xff]
        %v5730 = vld [vmem:[#allocation26 + $0x58] sm:$0xff]
        %v5731 = vld [vmem:[#allocation26 + $0x60] sm:$0xff]
        %v5732 = vld [vmem:[#allocation26 + $0x68] sm:$0xff]
        %v5733 = vld [vmem:[#allocation26 + $0x70] sm:$0xff]
        %v5734 = vld [vmem:[#allocation26 + $0x78] sm:$0xff]
        %v5735 = vld [vmem:[#allocation26 + $0x80] sm:$0xff]
        %v5736 = vld [vmem:[#allocation26 + $0x88] sm:$0xff]
        %v5737 = vld [vmem:[#allocation26 + $0x90] sm:$0xff]
        %v5738 = vld [vmem:[#allocation26 + $0x98] sm:$0xff]
        %v5739 = vld [vmem:[#allocation26 + $0xa0] sm:$0xff]
        %v5740 = vld [vmem:[#allocation26 + $0xa8] sm:$0xff]
        %v5741 = vld [vmem:[#allocation26 + $0xb0] sm:$0xff]
        %v5742 = vld [vmem:[#allocation26 + $0xb8] sm:$0xff]
        %v5743 = vld [vmem:[#allocation26 + $0xc0] sm:$0xff]
        %v5744 = vld [vmem:[#allocation26 + $0xc8] sm:$0xff]
        %v5745 = vld [vmem:[#allocation26 + $0xd0] sm:$0xff]
        %v5746 = vld [vmem:[#allocation26 + $0xd8] sm:$0xff]
        %v5747 = vld [vmem:[#allocation26 + $0xe0] sm:$0xff]
        %v5748 = vld [vmem:[#allocation26 + $0xe8] sm:$0xff]
        %v5749 = vld [vmem:[#allocation26 + $0xf0] sm:$0xff]
        %v5750 = vld [vmem:[#allocation26 + $0xf8] sm:$0xff]
        %v5751 = vld [vmem:[#allocation26 + $0x100] sm:$0xff]
        %v5752 = vld [vmem:[#allocation26 + $0x108] sm:$0xff]
        %v5753 = vmul.f32 %v5709, %v5709
        %v5754 = vmul.f32 %v5710, %v5710
        %v5755 = vmul.f32 %v5711, %v5711
        %v5756 = vmul.f32 %v5712, %v5712
        %v5757 = vmul.f32 %v5713, %v5713
        %v5758 = vmul.f32 %v5714, %v5714
        %v5759 = vmul.f32 %v5715, %v5715
        %v5760 = vmul.f32 %v5716, %v5716
        %v5761 = vmul.f32 %v5717, %v5717
        %v5762 = vmul.f32 %v5718, %v5718
        %vm5763 = vcmask 64512
        %v5765 = vsel %vm5763, %v5754, 0
        %v5768 = vsel %vm5763, %v5756, 0
        %v5771 = vsel %vm5763, %v5758, 0
        %v5774 = vsel %vm5763, %v5760, 0
        %v5777 = vsel %vm5763, %v5762, 0
        %5779 = vmatprep.subr.mxu0 %v5720
        %5780 = vmatpush1.msra.mxu0 %v5719
        %5781 = vmatprep.subr.mxu0 %v5722
        %5782 = vmatpush1.msra.mxu0 %v5721
        %5783 = vmatprep.subr.mxu0 %v5724
        %5784 = vmatpush1.msra.mxu0 %v5723
        %5785 = vmatprep.subr.mxu0 %v5726
        %5786 = vmatpush1.msra.mxu0 %v5725
        %5787 = vmatprep.subr.mxu0 %v5728
        %5788 = vmatpush1.msra.mxu0 %v5727
        %5789 = vmatprep.subr.mxu0 %v5730
        %5790 = vmatpush1.msra.mxu0 %v5729
        %5791 = vmatprep.subr.mxu0 %v5732
        %5792 = vmatpush1.msra.mxu0 %v5731
        %5793 = vmatprep.subr.mxu0 %v5734
        %5794 = vmatpush1.msra.mxu0 %v5733
        %5795 = vmatprep.subr.mxu0 %v5736
        %5796 = vmatpush1.msra.mxu0 %v5735
        %5797 = vmatprep.subr.mxu0 %v5738
        %5798 = vmatpush1.msra.mxu0 %v5737
        %5799 = vmatprep.subr.mxu0 %v5740
        %5800 = vmatpush1.msra.mxu0 %v5739
        %5801 = vmatprep.subr.mxu0 %v5742
        %5802 = vmatpush1.msra.mxu0 %v5741
        %5803 = vmatprep.subr.mxu0 %v5744
        %5804 = vmatpush1.msra.mxu0 %v5743
        %5805 = vmatprep.subr.mxu0 %v5746
        %5806 = vmatpush1.msra.mxu0 %v5745
        %5807 = vmatprep.subr.mxu0 %v5748
        %5808 = vmatpush1.msra.mxu0 %v5747
        %5809 = vmatprep.subr.mxu0 %v5750
        %5810 = vmatpush1.msra.mxu0 %v5749
        %5811 = vmatprep.subr.mxu0 %v5752
        %5812 = vmatpush1.msra.mxu0 %v5751
        %5813 = vmatprep.subr.mxu0 0.0
        %5814 = vmatpush1.msra.mxu0 0.0
        %5815 = vmatprep.subr.mxu0 0.0
        %5816 = vmatpush1.msra.mxu0 0.0
        %5817 = vmatprep.subr.mxu0 0.0
        %5818 = vmatpush1.msra.mxu0 0.0
        %5819 = vmatprep.subr.mxu0 0.0
        %5820 = vmatpush1.msra.mxu0 0.0
        %5821 = vmatprep.subr.mxu0 0.0
        %5822 = vmatpush1.msra.mxu0 0.0
        %5823 = vmatprep.subr.mxu0 0.0
        %5824 = vmatpush1.msra.mxu0 0.0
        %5825 = vmatprep.subr.mxu0 0.0
        %5826 = vmatpush1.msra.mxu0 0.0
        %5827 = vmatprep.subr.mxu0 0.0
        %5828 = vmatpush1.msra.mxu0 0.0
        %5829 = vmatprep.subr.mxu0 0.0
        %5830 = vmatpush1.msra.mxu0 0.0
        %5831 = vmatprep.subr.mxu0 0.0
        %5832 = vmatpush1.msra.mxu0 0.0
        %5833 = vmatprep.subr.mxu0 0.0
        %5834 = vmatpush1.msra.mxu0 0.0
        %5835 = vmatprep.subr.mxu0 0.0
        %5836 = vmatpush1.msra.mxu0 0.0
        %5837 = vmatprep.subr.mxu0 0.0
        %5838 = vmatpush1.msra.mxu0 0.0
        %5839 = vmatprep.subr.mxu0 0.0
        %5840 = vmatpush1.msra.mxu0 0.0
        %5841 = vmatprep.subr.mxu0 0.0
        %5842 = vmatpush1.msra.mxu0 0.0
        %5843 = vmatprep.mubr.f32.mxu0 %v5765
        %5844 = vmatmul.mubr.f32.gmra.mrb[0].mxu0 %v5753
        %v5845 = vpop.f32.mrb[0].mxu0
        %v5846 = vadd.f32 1e-08, %v5845
        %v5847 = vpop.f32.mrb[0].mxu0
        %v5848 = vadd.f32 1e-08, %v5847
        %5849 = vmatprep.mubr.f32.mxu0 %v5768
        %5850 = vmatmul.mubr.f32.gmra.mrb[0].mxu0 %v5755
        %v5851 = vpop.f32.mrb[0].mxu0
        %v5852 = vadd.f32 1e-08, %v5851
        %v5853 = vpop.f32.mrb[0].mxu0
        %v5854 = vadd.f32 1e-08, %v5853
        %5855 = vmatprep.mubr.f32.mxu0 %v5771
        %5856 = vmatmul.mubr.f32.gmra.mrb[0].mxu0 %v5757
        %v5857 = vpop.f32.mrb[0].mxu0
        %v5858 = vadd.f32 1e-08, %v5857
        %v5859 = vpop.f32.mrb[0].mxu0
        %v5860 = vadd.f32 1e-08, %v5859
        %5861 = vmatprep.mubr.f32.mxu0 %v5774
        %5862 = vmatmul.mubr.f32.gmra.mrb[0].mxu0 %v5759
        %v5863 = vpop.f32.mrb[0].mxu0
        %v5864 = vadd.f32 1e-08, %v5863
        %v5865 = vpop.f32.mrb[0].mxu0
        %v5866 = vadd.f32 1e-08, %v5865
        %5867 = vmatprep.mubr.f32.mxu0 %v5777
        %5868 = vmatmul.mubr.f32.gmra.mrb[0].mxu0 %v5761
        %v5869 = vpop.f32.mrb[0].mxu0
        %v5870 = vadd.f32 1e-08, %v5869
        %v5871 = vpop.f32.mrb[0].mxu0
        %v5872 = vadd.f32 1e-08, %v5871
        %5873 = vdwg.mxu0
        %v5874 = vrsqrt.pop %v5846
        %v5875 = vrsqrt.pop %v5848
        %v5876 = vrsqrt.pop %v5852
        %v5877 = vrsqrt.pop %v5854
        %v5878 = vrsqrt.pop %v5858
        %v5879 = vrsqrt.pop %v5860
        %v5880 = vrsqrt.pop %v5864
        %v5881 = vrsqrt.pop %v5866
        %v5882 = vrsqrt.pop %v5870
        %v5883 = vrsqrt.pop %v5872
        %v5884 = vmul.f32 %v5709, %v5874
        %v5885 = vmul.f32 %v5710, %v5875
        %v5886 = vmul.f32 %v5711, %v5876
        %v5887 = vmul.f32 %v5712, %v5877
        %v5888 = vmul.f32 %v5713, %v5878
        %v5889 = vmul.f32 %v5714, %v5879
        %v5890 = vmul.f32 %v5715, %v5880
        %v5891 = vmul.f32 %v5716, %v5881
        %v5892 = vmul.f32 %v5717, %v5882
        %v5893 = vmul.f32 %v5718, %v5883
        %vm5894 = vcmp.ge.f32.partialorder %v5884, 0.0
        %vm5895 = vcmp.ge.f32.partialorder %v5885, 0.0
        %vm5896 = vcmp.ge.f32.partialorder %v5886, 0.0
        %vm5897 = vcmp.ge.f32.partialorder %v5887, 0.0
        %vm5898 = vcmp.ge.f32.partialorder %v5888, 0.0
        %vm5899 = vcmp.ge.f32.partialorder %v5889, 0.0
        %vm5900 = vcmp.ge.f32.partialorder %v5890, 0.0
        %vm5901 = vcmp.ge.f32.partialorder %v5891, 0.0
        %vm5902 = vcmp.ge.f32.partialorder %v5892, 0.0
        %vm5903 = vcmp.ge.f32.partialorder %v5893, 0.0
        %v5904 = vmul.f32 %v5884, 0.2
        %v5905 = vmul.f32 %v5885, 0.2
        %v5906 = vmul.f32 %v5886, 0.2
        %v5907 = vmul.f32 %v5887, 0.2
        %v5908 = vmul.f32 %v5888, 0.2
        %v5909 = vmul.f32 %v5889, 0.2
        %v5910 = vmul.f32 %v5890, 0.2
        %v5911 = vmul.f32 %v5891, 0.2
        %v5912 = vmul.f32 %v5892, 0.2
        %v5913 = vmul.f32 %v5893, 0.2
        %v5914 = vsel %vm5894, %v5884, %v5904
        %v5915 = vsel %vm5895, %v5885, %v5905
        %v5916 = vsel %vm5896, %v5886, %v5906
        %v5917 = vsel %vm5897, %v5887, %v5907
        %v5918 = vsel %vm5898, %v5888, %v5908
        %v5919 = vsel %vm5899, %v5889, %v5909
        %v5920 = vsel %vm5900, %v5890, %v5910
        %v5921 = vsel %vm5901, %v5891, %v5911
        %v5922 = vsel %vm5902, %v5892, %v5912
        %v5923 = vsel %vm5903, %v5893, %v5913
        %v5924 = vld [vmem:[#allocation27] sm:$0xff]
        %v5925 = vld [vmem:[#allocation27 + $0x8] sm:$0xff]
        %v5926 = vld [vmem:[#allocation27 + $0x10] sm:$0xff]
        %v5927 = vld [vmem:[#allocation27 + $0x18] sm:$0xff]
        %v5928 = vld [vmem:[#allocation27 + $0x20] sm:$0xff]
        %v5929 = vld [vmem:[#allocation27 + $0x28] sm:$0xff]
        %v5930 = vld [vmem:[#allocation27 + $0x30] sm:$0xff]
        %v5931 = vld [vmem:[#allocation27 + $0x38] sm:$0xff]
        %v5932 = vld [vmem:[#allocation27 + $0x40] sm:$0xff]
        %v5933 = vld [vmem:[#allocation27 + $0x48] sm:$0xff]
        %v5934 = vld [vmem:[#allocation27 + $0x50] sm:$0xff]
        %v5935 = vld [vmem:[#allocation27 + $0x58] sm:$0xff]
        %v5936 = vld [vmem:[#allocation27 + $0x60] sm:$0xff]
        %v5937 = vld [vmem:[#allocation27 + $0x68] sm:$0xff]
        %v5938 = vld [vmem:[#allocation27 + $0x70] sm:$0xff]
        %v5939 = vld [vmem:[#allocation27 + $0x78] sm:$0xff]
        %v5940 = vld [vmem:[#allocation27 + $0x80] sm:$0xff]
        %v5941 = vld [vmem:[#allocation27 + $0x88] sm:$0xff]
        %v5942 = vld [vmem:[#allocation27 + $0x90] sm:$0xff]
        %v5943 = vld [vmem:[#allocation27 + $0x98] sm:$0xff]
        %v5944 = vld [vmem:[#allocation27 + $0xa0] sm:$0xff]
        %v5945 = vld [vmem:[#allocation27 + $0xa8] sm:$0xff]
        %v5946 = vld [vmem:[#allocation27 + $0xb0] sm:$0xff]
        %v5947 = vld [vmem:[#allocation27 + $0xb8] sm:$0xff]
        %v5948 = vld [vmem:[#allocation27 + $0xc0] sm:$0xff]
        %v5949 = vld [vmem:[#allocation27 + $0xc8] sm:$0xff]
        %v5950 = vld [vmem:[#allocation27 + $0xd0] sm:$0xff]
        %v5951 = vld [vmem:[#allocation27 + $0xd8] sm:$0xff]
        %v5952 = vld [vmem:[#allocation27 + $0xe0] sm:$0xff]
        %v5953 = vld [vmem:[#allocation27 + $0xe8] sm:$0xff]
        %v5954 = vld [vmem:[#allocation27 + $0xf0] sm:$0xff]
        %v5955 = vld [vmem:[#allocation27 + $0xf8] sm:$0xff]
        %v5956 = vld [vmem:[#allocation27 + $0x100] sm:$0xff]
        %v5957 = vld [vmem:[#allocation27 + $0x108] sm:$0xff]
        %v5959 = vsel %vm5763, %v5915, 0
        %v5962 = vsel %vm5763, %v5917, 0
        %v5965 = vsel %vm5763, %v5919, 0
        %v5968 = vsel %vm5763, %v5921, 0
        %v5971 = vsel %vm5763, %v5923, 0
        %5973 = vmatprep.subr.mxu0 %v5925
        %5974 = vmatpush1.msra.mxu0 %v5924
        %5975 = vmatprep.subr.mxu0 %v5927
        %5976 = vmatpush1.msra.mxu0 %v5926
        %5977 = vmatprep.subr.mxu0 %v5929
        %5978 = vmatpush1.msra.mxu0 %v5928
        %5979 = vmatprep.subr.mxu0 %v5931
        %5980 = vmatpush1.msra.mxu0 %v5930
        %5981 = vmatprep.subr.mxu0 %v5933
        %5982 = vmatpush1.msra.mxu0 %v5932
        %5983 = vmatprep.subr.mxu0 %v5935
        %5984 = vmatpush1.msra.mxu0 %v5934
        %5985 = vmatprep.subr.mxu0 %v5937
        %5986 = vmatpush1.msra.mxu0 %v5936
        %5987 = vmatprep.subr.mxu0 %v5939
        %5988 = vmatpush1.msra.mxu0 %v5938
        %5989 = vmatprep.subr.mxu0 %v5941
        %5990 = vmatpush1.msra.mxu0 %v5940
        %5991 = vmatprep.subr.mxu0 %v5943
        %5992 = vmatpush1.msra.mxu0 %v5942
        %5993 = vmatprep.subr.mxu0 %v5945
        %5994 = vmatpush1.msra.mxu0 %v5944
        %5995 = vmatprep.subr.mxu0 %v5947
        %5996 = vmatpush1.msra.mxu0 %v5946
        %5997 = vmatprep.subr.mxu0 %v5949
        %5998 = vmatpush1.msra.mxu0 %v5948
        %5999 = vmatprep.subr.mxu0 %v5951
        %6000 = vmatpush1.msra.mxu0 %v5950
        %6001 = vmatprep.subr.mxu0 %v5953
        %6002 = vmatpush1.msra.mxu0 %v5952
        %6003 = vmatprep.subr.mxu0 %v5955
        %6004 = vmatpush1.msra.mxu0 %v5954
        %6005 = vmatprep.subr.mxu0 %v5957
        %6006 = vmatpush1.msra.mxu0 %v5956
        %6007 = vmatprep.subr.mxu0 0.0
        %6008 = vmatpush1.msra.mxu0 0.0
        %6009 = vmatprep.subr.mxu0 0.0
        %6010 = vmatpush1.msra.mxu0 0.0
        %6011 = vmatprep.subr.mxu0 0.0
        %6012 = vmatpush1.msra.mxu0 0.0
        %6013 = vmatprep.subr.mxu0 0.0
        %6014 = vmatpush1.msra.mxu0 0.0
        %6015 = vmatprep.subr.mxu0 0.0
        %6016 = vmatpush1.msra.mxu0 0.0
        %6017 = vmatprep.subr.mxu0 0.0
        %6018 = vmatpush1.msra.mxu0 0.0
        %6019 = vmatprep.subr.mxu0 0.0
        %6020 = vmatpush1.msra.mxu0 0.0
        %6021 = vmatprep.subr.mxu0 0.0
        %6022 = vmatpush1.msra.mxu0 0.0
        %6023 = vmatprep.subr.mxu0 0.0
        %6024 = vmatpush1.msra.mxu0 0.0
        %6025 = vmatprep.subr.mxu0 0.0
        %6026 = vmatpush1.msra.mxu0 0.0
        %6027 = vmatprep.subr.mxu0 0.0
        %6028 = vmatpush1.msra.mxu0 0.0
        %6029 = vmatprep.subr.mxu0 0.0
        %6030 = vmatpush1.msra.mxu0 0.0
        %6031 = vmatprep.subr.mxu0 0.0
        %6032 = vmatpush1.msra.mxu0 0.0
        %6033 = vmatprep.subr.mxu0 0.0
        %6034 = vmatpush1.msra.mxu0 0.0
        %6035 = vmatprep.subr.mxu0 0.0
        %6036 = vmatpush1.msra.mxu0 0.0
        %6037 = vmatprep.mubr.f32.mxu0 %v5959
        %6038 = vmatmul.mubr.f32.gmra.mrb[0].mxu0 %v5914
        %v6039 = vpop.f32.mrb[0].mxu0
        %v6040 = vadd.f32 0.0, %v6039
        %v6041 = vpop.f32.mrb[0].mxu0
        %v6042 = vadd.f32 0.0, %v6041
        %6043 = vmatprep.mubr.f32.mxu0 %v5962
        %6044 = vmatmul.mubr.f32.gmra.mrb[0].mxu0 %v5916
        %v6045 = vpop.f32.mrb[0].mxu0
        %v6046 = vadd.f32 0.0, %v6045
        %v6047 = vpop.f32.mrb[0].mxu0
        %v6048 = vadd.f32 0.0, %v6047
        %6049 = vmatprep.mubr.f32.mxu0 %v5965
        %6050 = vmatmul.mubr.f32.gmra.mrb[0].mxu0 %v5918
        %v6051 = vpop.f32.mrb[0].mxu0
        %v6052 = vadd.f32 0.0, %v6051
        %v6053 = vpop.f32.mrb[0].mxu0
        %v6054 = vadd.f32 0.0, %v6053
        %6055 = vmatprep.mubr.f32.mxu0 %v5968
        %6056 = vmatmul.mubr.f32.gmra.mrb[0].mxu0 %v5920
        %v6057 = vpop.f32.mrb[0].mxu0
        %v6058 = vadd.f32 0.0, %v6057
        %v6059 = vpop.f32.mrb[0].mxu0
        %v6060 = vadd.f32 0.0, %v6059
        %6061 = vmatprep.mubr.f32.mxu0 %v5971
        %6062 = vmatmul.mubr.f32.gmra.mrb[0].mxu0 %v5922
        %v6063 = vpop.f32.mrb[0].mxu0
        %v6064 = vadd.f32 0.0, %v6063
        %v6065 = vpop.f32.mrb[0].mxu0
        %v6066 = vadd.f32 0.0, %v6065
        %6067 = vdwg.mxu0
        %v6068 = vld [vmem:[#allocation29] sm:$0xff]
        %v6069 = vld [vmem:[#allocation29 + $0x8] sm:$0xff]
        %v6070 = vld [vmem:[#allocation29 + $0x10] sm:$0xff]
        %v6071 = vld [vmem:[#allocation29 + $0x18] sm:$0xff]
        %v6072 = vld [vmem:[#allocation29 + $0x20] sm:$0x3]
        %vm6073 = vcmask 277504
        %v6075 = vsel %vm6073, %v6068, 0
        %v6078 = vsel %vm6073, %v6069, 0
        %v6081 = vsel %vm6073, %v6070, 0
        %v6084 = vsel %vm6073, %v6071, 0
        %v6087 = vsel %vm6073, %v6072, 0
        %v6090 = vsel %vm2556, %v6064, 0
        %v6093 = vsel %vm2556, %v6066, 0
        %6095 = vmatprep.subr.mxu0 %v6042
        %6096 = vmatpush1.msra.mxu0 %v6040
        %6097 = vmatprep.subr.mxu0 %v6048
        %6098 = vmatpush1.msra.mxu0 %v6046
        %6099 = vmatprep.subr.mxu0 %v6054
        %6100 = vmatpush1.msra.mxu0 %v6052
        %6101 = vmatprep.subr.mxu0 %v6060
        %6102 = vmatpush1.msra.mxu0 %v6058
        %6103 = vmatprep.subr.mxu0 %v6093
        %6104 = vmatpush1.msra.mxu0 %v6090
        %6105 = vmatprep.subr.mxu0 0.0
        %6106 = vmatpush1.msra.mxu0 0.0
        %6107 = vmatprep.subr.mxu0 0.0
        %6108 = vmatpush1.msra.mxu0 0.0
        %6109 = vmatprep.subr.mxu0 0.0
        %6110 = vmatpush1.msra.mxu0 0.0
        %6111 = vmatprep.subr.mxu0 0.0
        %6112 = vmatpush1.msra.mxu0 0.0
        %6113 = vmatprep.subr.mxu0 0.0
        %6114 = vmatpush1.msra.mxu0 0.0
        %6115 = vmatprep.subr.mxu0 0.0
        %6116 = vmatpush1.msra.mxu0 0.0
        %6117 = vmatprep.subr.mxu0 0.0
        %6118 = vmatpush1.msra.mxu0 0.0
        %6119 = vmatprep.subr.mxu0 0.0
        %6120 = vmatpush1.msra.mxu0 0.0
        %6121 = vmatprep.subr.mxu0 0.0
        %6122 = vmatpush1.msra.mxu0 0.0
        %6123 = vmatprep.subr.mxu0 0.0
        %6124 = vmatpush1.msra.mxu0 0.0
        %6125 = vmatprep.subr.mxu0 0.0
        %6126 = vmatpush1.msra.mxu0 0.0
        %6127 = vmatprep.subr.mxu0 0.0
        %6128 = vmatpush1.msra.mxu0 0.0
        %6129 = vmatprep.subr.mxu0 0.0
        %6130 = vmatpush1.msra.mxu0 0.0
        %6131 = vmatprep.subr.mxu0 0.0
        %6132 = vmatpush1.msra.mxu0 0.0
        %6133 = vmatprep.subr.mxu0 0.0
        %6134 = vmatpush1.msra.mxu0 0.0
        %6135 = vmatprep.subr.mxu0 0.0
        %6136 = vmatpush1.msra.mxu0 0.0
        %6137 = vmatprep.subr.mxu0 0.0
        %6138 = vmatpush1.msra.mxu0 0.0
        %6139 = vmatprep.subr.mxu0 0.0
        %6140 = vmatpush1.msra.mxu0 0.0
        %6141 = vmatprep.subr.mxu0 0.0
        %6142 = vmatpush1.msra.mxu0 0.0
        %6143 = vmatprep.subr.mxu0 0.0
        %6144 = vmatpush1.msra.mxu0 0.0
        %6145 = vmatprep.subr.mxu0 0.0
        %6146 = vmatpush1.msra.mxu0 0.0
        %6147 = vmatprep.subr.mxu0 0.0
        %6148 = vmatpush1.msra.mxu0 0.0
        %6149 = vmatprep.subr.mxu0 0.0
        %6150 = vmatpush1.msra.mxu0 0.0
        %6151 = vmatprep.subr.mxu0 0.0
        %6152 = vmatpush1.msra.mxu0 0.0
        %6153 = vmatprep.subr.mxu0 0.0
        %6154 = vmatpush1.msra.mxu0 0.0
        %6155 = vmatprep.subr.mxu0 0.0
        %6156 = vmatpush1.msra.mxu0 0.0
        %6157 = vmatprep.subr.mxu0 0.0
        %6158 = vmatpush1.msra.mxu0 0.0
        %6159 = vmatprep.mubr.f32.mxu0 0.0
        %6160 = vmatmul.mubr.f32.gmra.mrb[0].mxu0 %v6075
        %v6161 = vpop.f32.mrb[0].mxu0
        %v6162 = vadd.f32 0.0, %v6161
        %v6163 = vpop.f32.mrb[0].mxu0
        %v6164 = vadd.f32 0.0, %v6163
        %6165 = vmatprep.mubr.f32.mxu0 0.0
        %6166 = vmatmul.mubr.f32.gmra.mrb[0].mxu0 %v6078
        %v6167 = vpop.f32.mrb[0].mxu0
        %v6168 = vadd.f32 0.0, %v6167
        %v6169 = vpop.f32.mrb[0].mxu0
        %v6170 = vadd.f32 0.0, %v6169
        %6171 = vmatprep.mubr.f32.mxu0 0.0
        %6172 = vmatmul.mubr.f32.gmra.mrb[0].mxu0 %v6081
        %v6173 = vpop.f32.mrb[0].mxu0
        %v6174 = vadd.f32 0.0, %v6173
        %v6175 = vpop.f32.mrb[0].mxu0
        %v6176 = vadd.f32 0.0, %v6175
        %6177 = vmatprep.mubr.f32.mxu0 0.0
        %6178 = vmatmul.mubr.f32.gmra.mrb[0].mxu0 %v6084
        %v6179 = vpop.f32.mrb[0].mxu0
        %v6180 = vadd.f32 0.0, %v6179
        %v6181 = vpop.f32.mrb[0].mxu0
        %v6182 = vadd.f32 0.0, %v6181
        %6183 = vmatprep.mubr.f32.mxu0 0.0
        %6184 = vmatmul.mubr.f32.gmra.mrb[0].mxu0 %v6087
        %v6185 = vpop.f32.mrb[0].mxu0
        %v6186 = vadd.f32 0.0, %v6185
        %v6187 = vpop.f32.mrb[0].mxu0
        %v6188 = vadd.f32 0.0, %v6187
        %6189 = vdwg.mxu0
        %v6190 = vld [vmem:[#allocation30] sm:$0xff]
        %v6191 = vld [vmem:[#allocation30 + $0x8] sm:$0xff]
        %v6192 = vld [vmem:[#allocation30 + $0x10] sm:$0xff]
        %v6193 = vld [vmem:[#allocation30 + $0x18] sm:$0xff]
        %v6194 = vld [vmem:[#allocation30 + $0x20] sm:$0xff]
        %v6195 = vld [vmem:[#allocation30 + $0x28] sm:$0xff]
        %v6196 = vld [vmem:[#allocation30 + $0x30] sm:$0xff]
        %v6197 = vld [vmem:[#allocation30 + $0x38] sm:$0xff]
        %v6198 = vld [vmem:[#allocation30 + $0x40] sm:$0xff]
        %v6199 = vld [vmem:[#allocation30 + $0x48] sm:$0xff]
        %v6200 = vld [vmem:[#allocation30 + $0x50] sm:$0xff]
        %v6201 = vld [vmem:[#allocation30 + $0x58] sm:$0xff]
        %v6202 = vld [vmem:[#allocation30 + $0x60] sm:$0xff]
        %v6203 = vld [vmem:[#allocation30 + $0x68] sm:$0xff]
        %v6204 = vld [vmem:[#allocation30 + $0x70] sm:$0xff]
        %v6205 = vld [vmem:[#allocation30 + $0x78] sm:$0xff]
        %v6206 = vld [vmem:[#allocation30 + $0x80] sm:$0xff]
        %s6207 = scalar_lea.vmem [#allocation29], 40
        %v6208 = vld [vmem:[%s6207] sm:$0xff]
        %v6209 = vld [vmem:[%s6207 + $0x8] sm:$0xff]
        %v6210 = vld [vmem:[%s6207 + $0x10] sm:$0xff]
        %v6211 = vld [vmem:[%s6207 + $0x18] sm:$0xff]
        %v6212 = vld [vmem:[%s6207 + $0x20] sm:$0x3]
        %v6214 = vsel %vm6073, %v6208, 0
        %v6217 = vsel %vm6073, %v6209, 0
        %v6220 = vsel %vm6073, %v6210, 0
        %v6223 = vsel %vm6073, %v6211, 0
        %v6226 = vsel %vm6073, %v6212, 0
        %6228 = vmatprep.subr.mxu0 %v6042
        %6229 = vmatpush1.msra.mxu0 %v6040
        %6230 = vmatprep.subr.mxu0 %v6048
        %6231 = vmatpush1.msra.mxu0 %v6046
        %6232 = vmatprep.subr.mxu0 %v6054
        %6233 = vmatpush1.msra.mxu0 %v6052
        %6234 = vmatprep.subr.mxu0 %v6060
        %6235 = vmatpush1.msra.mxu0 %v6058
        %6236 = vmatprep.subr.mxu0 %v6093
        %6237 = vmatpush1.msra.mxu0 %v6090
        %6238 = vmatprep.subr.mxu0 0.0
        %6239 = vmatpush1.msra.mxu0 0.0
        %6240 = vmatprep.subr.mxu0 0.0
        %6241 = vmatpush1.msra.mxu0 0.0
        %6242 = vmatprep.subr.mxu0 0.0
        %6243 = vmatpush1.msra.mxu0 0.0
        %6244 = vmatprep.subr.mxu0 0.0
        %6245 = vmatpush1.msra.mxu0 0.0
        %6246 = vmatprep.subr.mxu0 0.0
        %6247 = vmatpush1.msra.mxu0 0.0
        %6248 = vmatprep.subr.mxu0 0.0
        %6249 = vmatpush1.msra.mxu0 0.0
        %6250 = vmatprep.subr.mxu0 0.0
        %6251 = vmatpush1.msra.mxu0 0.0
        %6252 = vmatprep.subr.mxu0 0.0
        %6253 = vmatpush1.msra.mxu0 0.0
        %6254 = vmatprep.subr.mxu0 0.0
        %6255 = vmatpush1.msra.mxu0 0.0
        %6256 = vmatprep.subr.mxu0 0.0
        %6257 = vmatpush1.msra.mxu0 0.0
        %6258 = vmatprep.subr.mxu0 0.0
        %6259 = vmatpush1.msra.mxu0 0.0
        %6260 = vmatprep.subr.mxu0 0.0
        %6261 = vmatpush1.msra.mxu0 0.0
        %6262 = vmatprep.subr.mxu0 0.0
        %6263 = vmatpush1.msra.mxu0 0.0
        %6264 = vmatprep.subr.mxu0 0.0
        %6265 = vmatpush1.msra.mxu0 0.0
        %6266 = vmatprep.subr.mxu0 0.0
        %6267 = vmatpush1.msra.mxu0 0.0
        %6268 = vmatprep.subr.mxu0 0.0
        %6269 = vmatpush1.msra.mxu0 0.0
        %6270 = vmatprep.subr.mxu0 0.0
        %6271 = vmatpush1.msra.mxu0 0.0
        %6272 = vmatprep.subr.mxu0 0.0
        %6273 = vmatpush1.msra.mxu0 0.0
        %6274 = vmatprep.subr.mxu0 0.0
        %6275 = vmatpush1.msra.mxu0 0.0
        %6276 = vmatprep.subr.mxu0 0.0
        %6277 = vmatpush1.msra.mxu0 0.0
        %6278 = vmatprep.subr.mxu0 0.0
        %6279 = vmatpush1.msra.mxu0 0.0
        %6280 = vmatprep.subr.mxu0 0.0
        %6281 = vmatpush1.msra.mxu0 0.0
        %6282 = vmatprep.subr.mxu0 0.0
        %6283 = vmatpush1.msra.mxu0 0.0
        %6284 = vmatprep.subr.mxu0 0.0
        %6285 = vmatpush1.msra.mxu0 0.0
        %6286 = vmatprep.subr.mxu0 0.0
        %6287 = vmatpush1.msra.mxu0 0.0
        %6288 = vmatprep.subr.mxu0 0.0
        %6289 = vmatpush1.msra.mxu0 0.0
        %6290 = vmatprep.subr.mxu0 0.0
        %6291 = vmatpush1.msra.mxu0 0.0
        %6292 = vmatprep.mubr.f32.mxu0 0.0
        %6293 = vmatmul.mubr.f32.gmra.mrb[0].mxu0 %v6214
        %v6294 = vpop.f32.mrb[0].mxu0
        %v6295 = vadd.f32 0.0, %v6294
        %v6296 = vpop.f32.mrb[0].mxu0
        %v6297 = vadd.f32 0.0, %v6296
        %6298 = vmatprep.mubr.f32.mxu0 0.0
        %6299 = vmatmul.mubr.f32.gmra.mrb[0].mxu0 %v6217
        %v6300 = vpop.f32.mrb[0].mxu0
        %v6301 = vadd.f32 0.0, %v6300
        %v6302 = vpop.f32.mrb[0].mxu0
        %v6303 = vadd.f32 0.0, %v6302
        %6304 = vmatprep.mubr.f32.mxu0 0.0
        %6305 = vmatmul.mubr.f32.gmra.mrb[0].mxu0 %v6220
        %v6306 = vpop.f32.mrb[0].mxu0
        %v6307 = vadd.f32 0.0, %v6306
        %v6308 = vpop.f32.mrb[0].mxu0
        %v6309 = vadd.f32 0.0, %v6308
        %6310 = vmatprep.mubr.f32.mxu0 0.0
        %6311 = vmatmul.mubr.f32.gmra.mrb[0].mxu0 %v6223
        %v6312 = vpop.f32.mrb[0].mxu0
        %v6313 = vadd.f32 0.0, %v6312
        %v6314 = vpop.f32.mrb[0].mxu0
        %v6315 = vadd.f32 0.0, %v6314
        %6316 = vmatprep.mubr.f32.mxu0 0.0
        %6317 = vmatmul.mubr.f32.gmra.mrb[0].mxu0 %v6226
        %v6318 = vpop.f32.mrb[0].mxu0
        %v6319 = vadd.f32 0.0, %v6318
        %v6320 = vpop.f32.mrb[0].mxu0
        %v6321 = vadd.f32 0.0, %v6320
        %6322 = vdwg.mxu0
        %s6323 = scalar_lea.vmem [#allocation30], 136
        %v6324 = vld [vmem:[%s6323] sm:$0xff]
        %v6325 = vld [vmem:[%s6323 + $0x8] sm:$0xff]
        %v6326 = vld [vmem:[%s6323 + $0x10] sm:$0xff]
        %v6327 = vld [vmem:[%s6323 + $0x18] sm:$0xff]
        %v6328 = vld [vmem:[%s6323 + $0x20] sm:$0xff]
        %v6329 = vld [vmem:[%s6323 + $0x28] sm:$0xff]
        %v6330 = vld [vmem:[%s6323 + $0x30] sm:$0xff]
        %v6331 = vld [vmem:[%s6323 + $0x38] sm:$0xff]
        %v6332 = vld [vmem:[%s6323 + $0x40] sm:$0xff]
        %v6333 = vld [vmem:[%s6323 + $0x48] sm:$0xff]
        %v6334 = vld [vmem:[%s6323 + $0x50] sm:$0xff]
        %v6335 = vld [vmem:[%s6323 + $0x58] sm:$0xff]
        %v6336 = vld [vmem:[%s6323 + $0x60] sm:$0xff]
        %v6337 = vld [vmem:[%s6323 + $0x68] sm:$0xff]
        %v6338 = vld [vmem:[%s6323 + $0x70] sm:$0xff]
        %v6339 = vld [vmem:[%s6323 + $0x78] sm:$0xff]
        %v6340 = vld [vmem:[%s6323 + $0x80] sm:$0xff]
        %v6342 = vsel %vm5763, %v6297, 0
        %v6345 = vsel %vm5763, %v6303, 0
        %v6348 = vsel %vm5763, %v6309, 0
        %v6351 = vsel %vm5763, %v6315, 0
        %v6354 = vsel %vm5763, %v6321, 0
        %6356 = vmatprep.subr.mxu0 0.0
        %6357 = vmatpush1.msra.mxu0 %v6324
        %6358 = vmatprep.subr.mxu0 0.0
        %6359 = vmatpush1.msra.mxu0 %v6325
        %6360 = vmatprep.subr.mxu0 0.0
        %6361 = vmatpush1.msra.mxu0 %v6326
        %6362 = vmatprep.subr.mxu0 0.0
        %6363 = vmatpush1.msra.mxu0 %v6327
        %6364 = vmatprep.subr.mxu0 0.0
        %6365 = vmatpush1.msra.mxu0 %v6328
        %6366 = vmatprep.subr.mxu0 0.0
        %6367 = vmatpush1.msra.mxu0 %v6329
        %6368 = vmatprep.subr.mxu0 0.0
        %6369 = vmatpush1.msra.mxu0 %v6330
        %6370 = vmatprep.subr.mxu0 0.0
        %6371 = vmatpush1.msra.mxu0 %v6331
        %6372 = vmatprep.subr.mxu0 0.0
        %6373 = vmatpush1.msra.mxu0 %v6332
        %6374 = vmatprep.subr.mxu0 0.0
        %6375 = vmatpush1.msra.mxu0 %v6333
        %6376 = vmatprep.subr.mxu0 0.0
        %6377 = vmatpush1.msra.mxu0 %v6334
        %6378 = vmatprep.subr.mxu0 0.0
        %6379 = vmatpush1.msra.mxu0 %v6335
        %6380 = vmatprep.subr.mxu0 0.0
        %6381 = vmatpush1.msra.mxu0 %v6336
        %6382 = vmatprep.subr.mxu0 0.0
        %6383 = vmatpush1.msra.mxu0 %v6337
        %6384 = vmatprep.subr.mxu0 0.0
        %6385 = vmatpush1.msra.mxu0 %v6338
        %6386 = vmatprep.subr.mxu0 0.0
        %6387 = vmatpush1.msra.mxu0 %v6339
        %6388 = vmatprep.subr.mxu0 0.0
        %6389 = vmatpush1.msra.mxu0 %v6340
        %6390 = vmatprep.subr.mxu0 0.0
        %6391 = vmatpush1.msra.mxu0 0.0
        %6392 = vmatprep.subr.mxu0 0.0
        %6393 = vmatpush1.msra.mxu0 0.0
        %6394 = vmatprep.subr.mxu0 0.0
        %6395 = vmatpush1.msra.mxu0 0.0
        %6396 = vmatprep.subr.mxu0 0.0
        %6397 = vmatpush1.msra.mxu0 0.0
        %6398 = vmatprep.subr.mxu0 0.0
        %6399 = vmatpush1.msra.mxu0 0.0
        %6400 = vmatprep.subr.mxu0 0.0
        %6401 = vmatpush1.msra.mxu0 0.0
        %6402 = vmatprep.subr.mxu0 0.0
        %6403 = vmatpush1.msra.mxu0 0.0
        %6404 = vmatprep.subr.mxu0 0.0
        %6405 = vmatpush1.msra.mxu0 0.0
        %6406 = vmatprep.subr.mxu0 0.0
        %6407 = vmatpush1.msra.mxu0 0.0
        %6408 = vmatprep.subr.mxu0 0.0
        %6409 = vmatpush1.msra.mxu0 0.0
        %6410 = vmatprep.subr.mxu0 0.0
        %6411 = vmatpush1.msra.mxu0 0.0
        %6412 = vmatprep.subr.mxu0 0.0
        %6413 = vmatpush1.msra.mxu0 0.0
        %6414 = vmatprep.subr.mxu0 0.0
        %6415 = vmatpush1.msra.mxu0 0.0
        %6416 = vmatprep.subr.mxu0 0.0
        %6417 = vmatpush1.msra.mxu0 0.0
        %6418 = vmatprep.subr.mxu0 0.0
        %6419 = vmatpush1.msra.mxu0 0.0
        %6420 = vmatprep.mubr.f32.mxu0 %v6342
        %6421 = vmatmul.mubr.f32.gmra.mrb[0].mxu0 %v6295
        %v6422 = vpop.f32.mrb[0].mxu0
        %v6423 = vadd.f32 0.0, %v6422
        %v6424 = vpop.f32.mrb[0].mxu0
        %6425 = vmatprep.mubr.f32.mxu0 %v6345
        %6426 = vmatmul.mubr.f32.gmra.mrb[0].mxu0 %v6301
        %v6427 = vpop.f32.mrb[0].mxu0
        %v6428 = vadd.f32 0.0, %v6427
        %v6429 = vpop.f32.mrb[0].mxu0
        %6430 = vmatprep.mubr.f32.mxu0 %v6348
        %6431 = vmatmul.mubr.f32.gmra.mrb[0].mxu0 %v6307
        %v6432 = vpop.f32.mrb[0].mxu0
        %v6433 = vadd.f32 0.0, %v6432
        %v6434 = vpop.f32.mrb[0].mxu0
        %6435 = vmatprep.mubr.f32.mxu0 %v6351
        %6436 = vmatmul.mubr.f32.gmra.mrb[0].mxu0 %v6313
        %v6437 = vpop.f32.mrb[0].mxu0
        %v6438 = vadd.f32 0.0, %v6437
        %v6439 = vpop.f32.mrb[0].mxu0
        %6440 = vmatprep.mubr.f32.mxu0 %v6354
        %6441 = vmatmul.mubr.f32.gmra.mrb[0].mxu0 %v6319
        %v6442 = vpop.f32.mrb[0].mxu0
        %v6443 = vadd.f32 0.0, %v6442
        %v6444 = vpop.f32.mrb[0].mxu0
        %6445 = vdwg.mxu0
        %v6447 = vsel %vm5763, %v6164, 0
        %v6450 = vsel %vm5763, %v6170, 0
        %v6453 = vsel %vm5763, %v6176, 0
        %v6456 = vsel %vm5763, %v6182, 0
        %v6459 = vsel %vm5763, %v6188, 0
        %6461 = vmatprep.subr.mxu0 0.0
        %6462 = vmatpush1.msra.mxu0 %v6190
        %6463 = vmatprep.subr.mxu0 0.0
        %6464 = vmatpush1.msra.mxu0 %v6191
        %6465 = vmatprep.subr.mxu0 0.0
        %6466 = vmatpush1.msra.mxu0 %v6192
        %6467 = vmatprep.subr.mxu0 0.0
        %6468 = vmatpush1.msra.mxu0 %v6193
        %6469 = vmatprep.subr.mxu0 0.0
        %6470 = vmatpush1.msra.mxu0 %v6194
        %6471 = vmatprep.subr.mxu0 0.0
        %6472 = vmatpush1.msra.mxu0 %v6195
        %6473 = vmatprep.subr.mxu0 0.0
        %6474 = vmatpush1.msra.mxu0 %v6196
        %6475 = vmatprep.subr.mxu0 0.0
        %6476 = vmatpush1.msra.mxu0 %v6197
        %6477 = vmatprep.subr.mxu0 0.0
        %6478 = vmatpush1.msra.mxu0 %v6198
        %6479 = vmatprep.subr.mxu0 0.0
        %6480 = vmatpush1.msra.mxu0 %v6199
        %6481 = vmatprep.subr.mxu0 0.0
        %6482 = vmatpush1.msra.mxu0 %v6200
        %6483 = vmatprep.subr.mxu0 0.0
        %6484 = vmatpush1.msra.mxu0 %v6201
        %6485 = vmatprep.subr.mxu0 0.0
        %6486 = vmatpush1.msra.mxu0 %v6202
        %6487 = vmatprep.subr.mxu0 0.0
        %6488 = vmatpush1.msra.mxu0 %v6203
        %6489 = vmatprep.subr.mxu0 0.0
        %6490 = vmatpush1.msra.mxu0 %v6204
        %6491 = vmatprep.subr.mxu0 0.0
        %6492 = vmatpush1.msra.mxu0 %v6205
        %6493 = vmatprep.subr.mxu0 0.0
        %6494 = vmatpush1.msra.mxu0 %v6206
        %6495 = vmatprep.subr.mxu0 0.0
        %6496 = vmatpush1.msra.mxu0 0.0
        %6497 = vmatprep.subr.mxu0 0.0
        %6498 = vmatpush1.msra.mxu0 0.0
        %6499 = vmatprep.subr.mxu0 0.0
        %6500 = vmatpush1.msra.mxu0 0.0
        %6501 = vmatprep.subr.mxu0 0.0
        %6502 = vmatpush1.msra.mxu0 0.0
        %6503 = vmatprep.subr.mxu0 0.0
        %6504 = vmatpush1.msra.mxu0 0.0
        %6505 = vmatprep.subr.mxu0 0.0
        %6506 = vmatpush1.msra.mxu0 0.0
        %6507 = vmatprep.subr.mxu0 0.0
        %6508 = vmatpush1.msra.mxu0 0.0
        %6509 = vmatprep.subr.mxu0 0.0
        %6510 = vmatpush1.msra.mxu0 0.0
        %6511 = vmatprep.subr.mxu0 0.0
        %6512 = vmatpush1.msra.mxu0 0.0
        %6513 = vmatprep.subr.mxu0 0.0
        %6514 = vmatpush1.msra.mxu0 0.0
        %6515 = vmatprep.subr.mxu0 0.0
        %6516 = vmatpush1.msra.mxu0 0.0
        %6517 = vmatprep.subr.mxu0 0.0
        %6518 = vmatpush1.msra.mxu0 0.0
        %6519 = vmatprep.subr.mxu0 0.0
        %6520 = vmatpush1.msra.mxu0 0.0
        %6521 = vmatprep.subr.mxu0 0.0
        %6522 = vmatpush1.msra.mxu0 0.0
        %6523 = vmatprep.subr.mxu0 0.0
        %6524 = vmatpush1.msra.mxu0 0.0
        %6525 = vmatprep.mubr.f32.mxu0 %v6447
        %6526 = vmatmul.mubr.f32.gmra.mrb[0].mxu0 %v6162
        %v6527 = vpop.f32.mrb[0].mxu0
        %v6528 = vadd.f32 %v6423, %v6527
        %v6529 = vpop.f32.mrb[0].mxu0
        %6530 = vmatprep.mubr.f32.mxu0 %v6450
        %6531 = vmatmul.mubr.f32.gmra.mrb[0].mxu0 %v6168
        %v6532 = vpop.f32.mrb[0].mxu0
        %v6533 = vadd.f32 %v6428, %v6532
        %v6534 = vpop.f32.mrb[0].mxu0
        %6535 = vmatprep.mubr.f32.mxu0 %v6453
        %6536 = vmatmul.mubr.f32.gmra.mrb[0].mxu0 %v6174
        %v6537 = vpop.f32.mrb[0].mxu0
        %v6538 = vadd.f32 %v6433, %v6537
        %v6539 = vpop.f32.mrb[0].mxu0
        %6540 = vmatprep.mubr.f32.mxu0 %v6456
        %6541 = vmatmul.mubr.f32.gmra.mrb[0].mxu0 %v6180
        %v6542 = vpop.f32.mrb[0].mxu0
        %v6543 = vadd.f32 %v6438, %v6542
        %v6544 = vpop.f32.mrb[0].mxu0
        %6545 = vmatprep.mubr.f32.mxu0 %v6459
        %6546 = vmatmul.mubr.f32.gmra.mrb[0].mxu0 %v6186
        %v6547 = vpop.f32.mrb[0].mxu0
        %v6548 = vadd.f32 %v6443, %v6547
        %v6549 = vpop.f32.mrb[0].mxu0
        %6550 = vdwg.mxu0
        %s6551 = scalar_lea.vmem [#allocation29], 80
        %v6552 = vld [vmem:[%s6551] sm:$0xff]
        %v6553 = vld [vmem:[%s6551 + $0x8] sm:$0xff]
        %v6554 = vld [vmem:[%s6551 + $0x10] sm:$0xff]
        %v6555 = vld [vmem:[%s6551 + $0x18] sm:$0xff]
        %v6556 = vld [vmem:[%s6551 + $0x20] sm:$0x3]
        %v6558 = vsel %vm6073, %v6552, 0
        %v6561 = vsel %vm6073, %v6553, 0
        %v6564 = vsel %vm6073, %v6554, 0
        %v6567 = vsel %vm6073, %v6555, 0
        %v6570 = vsel %vm6073, %v6556, 0
        %6572 = vmatprep.subr.mxu0 %v6042
        %6573 = vmatpush1.msra.mxu0 %v6040
        %6574 = vmatprep.subr.mxu0 %v6048
        %6575 = vmatpush1.msra.mxu0 %v6046
        %6576 = vmatprep.subr.mxu0 %v6054
        %6577 = vmatpush1.msra.mxu0 %v6052
        %6578 = vmatprep.subr.mxu0 %v6060
        %6579 = vmatpush1.msra.mxu0 %v6058
        %6580 = vmatprep.subr.mxu0 %v6093
        %6581 = vmatpush1.msra.mxu0 %v6090
        %6582 = vmatprep.subr.mxu0 0.0
        %6583 = vmatpush1.msra.mxu0 0.0
        %6584 = vmatprep.subr.mxu0 0.0
        %6585 = vmatpush1.msra.mxu0 0.0
        %6586 = vmatprep.subr.mxu0 0.0
        %6587 = vmatpush1.msra.mxu0 0.0
        %6588 = vmatprep.subr.mxu0 0.0
        %6589 = vmatpush1.msra.mxu0 0.0
        %6590 = vmatprep.subr.mxu0 0.0
        %6591 = vmatpush1.msra.mxu0 0.0
        %6592 = vmatprep.subr.mxu0 0.0
        %6593 = vmatpush1.msra.mxu0 0.0
        %6594 = vmatprep.subr.mxu0 0.0
        %6595 = vmatpush1.msra.mxu0 0.0
        %6596 = vmatprep.subr.mxu0 0.0
        %6597 = vmatpush1.msra.mxu0 0.0
        %6598 = vmatprep.subr.mxu0 0.0
        %6599 = vmatpush1.msra.mxu0 0.0
        %6600 = vmatprep.subr.mxu0 0.0
        %6601 = vmatpush1.msra.mxu0 0.0
        %6602 = vmatprep.subr.mxu0 0.0
        %6603 = vmatpush1.msra.mxu0 0.0
        %6604 = vmatprep.subr.mxu0 0.0
        %6605 = vmatpush1.msra.mxu0 0.0
        %6606 = vmatprep.subr.mxu0 0.0
        %6607 = vmatpush1.msra.mxu0 0.0
        %6608 = vmatprep.subr.mxu0 0.0
        %6609 = vmatpush1.msra.mxu0 0.0
        %6610 = vmatprep.subr.mxu0 0.0
        %6611 = vmatpush1.msra.mxu0 0.0
        %6612 = vmatprep.subr.mxu0 0.0
        %6613 = vmatpush1.msra.mxu0 0.0
        %6614 = vmatprep.subr.mxu0 0.0
        %6615 = vmatpush1.msra.mxu0 0.0
        %6616 = vmatprep.subr.mxu0 0.0
        %6617 = vmatpush1.msra.mxu0 0.0
        %6618 = vmatprep.subr.mxu0 0.0
        %6619 = vmatpush1.msra.mxu0 0.0
        %6620 = vmatprep.subr.mxu0 0.0
        %6621 = vmatpush1.msra.mxu0 0.0
        %6622 = vmatprep.subr.mxu0 0.0
        %6623 = vmatpush1.msra.mxu0 0.0
        %6624 = vmatprep.subr.mxu0 0.0
        %6625 = vmatpush1.msra.mxu0 0.0
        %6626 = vmatprep.subr.mxu0 0.0
        %6627 = vmatpush1.msra.mxu0 0.0
        %6628 = vmatprep.subr.mxu0 0.0
        %6629 = vmatpush1.msra.mxu0 0.0
        %6630 = vmatprep.subr.mxu0 0.0
        %6631 = vmatpush1.msra.mxu0 0.0
        %6632 = vmatprep.subr.mxu0 0.0
        %6633 = vmatpush1.msra.mxu0 0.0
        %6634 = vmatprep.subr.mxu0 0.0
        %6635 = vmatpush1.msra.mxu0 0.0
        %6636 = vmatprep.mubr.f32.mxu0 0.0
        %6637 = vmatmul.mubr.f32.gmra.mrb[0].mxu0 %v6558
        %v6638 = vpop.f32.mrb[0].mxu0
        %v6639 = vadd.f32 0.0, %v6638
        %v6640 = vpop.f32.mrb[0].mxu0
        %v6641 = vadd.f32 0.0, %v6640
        %6642 = vmatprep.mubr.f32.mxu0 0.0
        %6643 = vmatmul.mubr.f32.gmra.mrb[0].mxu0 %v6561
        %v6644 = vpop.f32.mrb[0].mxu0
        %v6645 = vadd.f32 0.0, %v6644
        %v6646 = vpop.f32.mrb[0].mxu0
        %v6647 = vadd.f32 0.0, %v6646
        %6648 = vmatprep.mubr.f32.mxu0 0.0
        %6649 = vmatmul.mubr.f32.gmra.mrb[0].mxu0 %v6564
        %v6650 = vpop.f32.mrb[0].mxu0
        %v6651 = vadd.f32 0.0, %v6650
        %v6652 = vpop.f32.mrb[0].mxu0
        %v6653 = vadd.f32 0.0, %v6652
        %6654 = vmatprep.mubr.f32.mxu0 0.0
        %6655 = vmatmul.mubr.f32.gmra.mrb[0].mxu0 %v6567
        %v6656 = vpop.f32.mrb[0].mxu0
        %v6657 = vadd.f32 0.0, %v6656
        %v6658 = vpop.f32.mrb[0].mxu0
        %v6659 = vadd.f32 0.0, %v6658
        %6660 = vmatprep.mubr.f32.mxu0 0.0
        %6661 = vmatmul.mubr.f32.gmra.mrb[0].mxu0 %v6570
        %v6662 = vpop.f32.mrb[0].mxu0
        %v6663 = vadd.f32 0.0, %v6662
        %v6664 = vpop.f32.mrb[0].mxu0
        %v6665 = vadd.f32 0.0, %v6664
        %6666 = vdwg.mxu0
        %s6667 = scalar_lea.vmem [#allocation30], 272
        %v6668 = vld [vmem:[%s6667] sm:$0xff]
        %v6669 = vld [vmem:[%s6667 + $0x8] sm:$0xff]
        %v6670 = vld [vmem:[%s6667 + $0x10] sm:$0xff]
        %v6671 = vld [vmem:[%s6667 + $0x18] sm:$0xff]
        %v6672 = vld [vmem:[%s6667 + $0x20] sm:$0xff]
        %v6673 = vld [vmem:[%s6667 + $0x28] sm:$0xff]
        %v6674 = vld [vmem:[%s6667 + $0x30] sm:$0xff]
        %v6675 = vld [vmem:[%s6667 + $0x38] sm:$0xff]
        %v6676 = vld [vmem:[%s6667 + $0x40] sm:$0xff]
        %v6677 = vld [vmem:[%s6667 + $0x48] sm:$0xff]
        %v6678 = vld [vmem:[%s6667 + $0x50] sm:$0xff]
        %v6679 = vld [vmem:[%s6667 + $0x58] sm:$0xff]
        %v6680 = vld [vmem:[%s6667 + $0x60] sm:$0xff]
        %v6681 = vld [vmem:[%s6667 + $0x68] sm:$0xff]
        %v6682 = vld [vmem:[%s6667 + $0x70] sm:$0xff]
        %v6683 = vld [vmem:[%s6667 + $0x78] sm:$0xff]
        %v6684 = vld [vmem:[%s6667 + $0x80] sm:$0xff]
        %v6686 = vsel %vm5763, %v6641, 0
        %v6689 = vsel %vm5763, %v6647, 0
        %v6692 = vsel %vm5763, %v6653, 0
        %v6695 = vsel %vm5763, %v6659, 0
        %v6698 = vsel %vm5763, %v6665, 0
        %6700 = vmatprep.subr.mxu0 0.0
        %6701 = vmatpush1.msra.mxu0 %v6668
        %6702 = vmatprep.subr.mxu0 0.0
        %6703 = vmatpush1.msra.mxu0 %v6669
        %6704 = vmatprep.subr.mxu0 0.0
        %6705 = vmatpush1.msra.mxu0 %v6670
        %6706 = vmatprep.subr.mxu0 0.0
        %6707 = vmatpush1.msra.mxu0 %v6671
        %6708 = vmatprep.subr.mxu0 0.0
        %6709 = vmatpush1.msra.mxu0 %v6672
        %6710 = vmatprep.subr.mxu0 0.0
        %6711 = vmatpush1.msra.mxu0 %v6673
        %6712 = vmatprep.subr.mxu0 0.0
        %6713 = vmatpush1.msra.mxu0 %v6674
        %6714 = vmatprep.subr.mxu0 0.0
        %6715 = vmatpush1.msra.mxu0 %v6675
        %6716 = vmatprep.subr.mxu0 0.0
        %6717 = vmatpush1.msra.mxu0 %v6676
        %6718 = vmatprep.subr.mxu0 0.0
        %6719 = vmatpush1.msra.mxu0 %v6677
        %6720 = vmatprep.subr.mxu0 0.0
        %6721 = vmatpush1.msra.mxu0 %v6678
        %6722 = vmatprep.subr.mxu0 0.0
        %6723 = vmatpush1.msra.mxu0 %v6679
        %6724 = vmatprep.subr.mxu0 0.0
        %6725 = vmatpush1.msra.mxu0 %v6680
        %6726 = vmatprep.subr.mxu0 0.0
        %6727 = vmatpush1.msra.mxu0 %v6681
        %6728 = vmatprep.subr.mxu0 0.0
        %6729 = vmatpush1.msra.mxu0 %v6682
        %6730 = vmatprep.subr.mxu0 0.0
        %6731 = vmatpush1.msra.mxu0 %v6683
        %6732 = vmatprep.subr.mxu0 0.0
        %6733 = vmatpush1.msra.mxu0 %v6684
        %6734 = vmatprep.subr.mxu0 0.0
        %6735 = vmatpush1.msra.mxu0 0.0
        %6736 = vmatprep.subr.mxu0 0.0
        %6737 = vmatpush1.msra.mxu0 0.0
        %6738 = vmatprep.subr.mxu0 0.0
        %6739 = vmatpush1.msra.mxu0 0.0
        %6740 = vmatprep.subr.mxu0 0.0
        %6741 = vmatpush1.msra.mxu0 0.0
        %6742 = vmatprep.subr.mxu0 0.0
        %6743 = vmatpush1.msra.mxu0 0.0
        %6744 = vmatprep.subr.mxu0 0.0
        %6745 = vmatpush1.msra.mxu0 0.0
        %6746 = vmatprep.subr.mxu0 0.0
        %6747 = vmatpush1.msra.mxu0 0.0
        %6748 = vmatprep.subr.mxu0 0.0
        %6749 = vmatpush1.msra.mxu0 0.0
        %6750 = vmatprep.subr.mxu0 0.0
        %6751 = vmatpush1.msra.mxu0 0.0
        %6752 = vmatprep.subr.mxu0 0.0
        %6753 = vmatpush1.msra.mxu0 0.0
        %6754 = vmatprep.subr.mxu0 0.0
        %6755 = vmatpush1.msra.mxu0 0.0
        %6756 = vmatprep.subr.mxu0 0.0
        %6757 = vmatpush1.msra.mxu0 0.0
        %6758 = vmatprep.subr.mxu0 0.0
        %6759 = vmatpush1.msra.mxu0 0.0
        %6760 = vmatprep.subr.mxu0 0.0
        %6761 = vmatpush1.msra.mxu0 0.0
        %6762 = vmatprep.subr.mxu0 0.0
        %6763 = vmatpush1.msra.mxu0 0.0
        %6764 = vmatprep.mubr.f32.mxu0 %v6686
        %6765 = vmatmul.mubr.f32.gmra.mrb[0].mxu0 %v6639
        %v6766 = vpop.f32.mrb[0].mxu0
        %v6767 = vadd.f32 0.0, %v6766
        %v6768 = vpop.f32.mrb[0].mxu0
        %6769 = vmatprep.mubr.f32.mxu0 %v6689
        %6770 = vmatmul.mubr.f32.gmra.mrb[0].mxu0 %v6645
        %v6771 = vpop.f32.mrb[0].mxu0
        %v6772 = vadd.f32 0.0, %v6771
        %v6773 = vpop.f32.mrb[0].mxu0
        %6774 = vmatprep.mubr.f32.mxu0 %v6692
        %6775 = vmatmul.mubr.f32.gmra.mrb[0].mxu0 %v6651
        %v6776 = vpop.f32.mrb[0].mxu0
        %v6777 = vadd.f32 0.0, %v6776
        %v6778 = vpop.f32.mrb[0].mxu0
        %6779 = vmatprep.mubr.f32.mxu0 %v6695
        %6780 = vmatmul.mubr.f32.gmra.mrb[0].mxu0 %v6657
        %v6781 = vpop.f32.mrb[0].mxu0
        %v6782 = vadd.f32 0.0, %v6781
        %v6783 = vpop.f32.mrb[0].mxu0
        %6784 = vmatprep.mubr.f32.mxu0 %v6698
        %6785 = vmatmul.mubr.f32.gmra.mrb[0].mxu0 %v6663
        %v6786 = vpop.f32.mrb[0].mxu0
        %v6787 = vadd.f32 0.0, %v6786
        %v6788 = vpop.f32.mrb[0].mxu0
        %6789 = vdwg.mxu0
        %v6790 = vadd.f32 %v6528, %v6767
        %v6791 = vadd.f32 %v6533, %v6772
        %v6792 = vadd.f32 %v6538, %v6777
        %v6793 = vadd.f32 %v6543, %v6782
        %v6794 = vadd.f32 %v6548, %v6787
        %v6795 = vld [vmem:[%s22] sm:$0x1]
        %v6797 = vlaneseq
        %v6798 = vshrl.u32 %v6797, 7
        %v6799 = vsub.s32 0, %v6798
        %v6800 = vrot.slane %v6795, %v6799
        %v6802 = vadd.f32 %v6790, %v6800
        %v6803 = vadd.f32 %v6791, %v6800
        %v6804 = vadd.f32 %v6792, %v6800
        %v6805 = vadd.f32 %v6793, %v6800
        %v6806 = vadd.f32 %v6794, %v6800
        %v6807 = vld [vmem:[%s23] sm:$0xff]
        %v6808 = vld [vmem:[%s23 + $0x8] sm:$0xff]
        %v6809 = vld [vmem:[%s23 + $0x10] sm:$0xff]
        %v6810 = vld [vmem:[%s23 + $0x18] sm:$0xff]
        %v6811 = vld [vmem:[%s23 + $0x20] sm:$0xff]
        %v6812 = vld [vmem:[%s23 + $0x28] sm:$0xff]
        %v6813 = vld [vmem:[%s23 + $0x30] sm:$0xff]
        %v6814 = vld [vmem:[%s23 + $0x38] sm:$0xff]
        %v6815 = vld [vmem:[%s23 + $0x40] sm:$0xf]
        %v6816 = vmul.f32 %v6802, %v6802
        %v6817 = vmul.f32 %v6803, %v6803
        %v6818 = vmul.f32 %v6804, %v6804
        %v6819 = vmul.f32 %v6805, %v6805
        %v6820 = vmul.f32 %v6806, %v6806
        %vm6821 = vcmask 556032
        %v6823 = vsel %vm6821, %v6816, 0
        %v6826 = vsel %vm6821, %v6817, 0
        %v6829 = vsel %vm6821, %v6818, 0
        %v6832 = vsel %vm6821, %v6819, 0
        %v6835 = vsel %vm6821, %v6820, 0
        %vm6837 = vcmask 1043456
        %v6839 = vsel %vm6837, %v6815, 0
        %6841 = vmatprep.subr.mxu0 0.0
        %6842 = vmatpush1.msra.mxu0 %v6807
        %6843 = vmatprep.subr.mxu0 0.0
        %6844 = vmatpush1.msra.mxu0 %v6808
        %6845 = vmatprep.subr.mxu0 0.0
        %6846 = vmatpush1.msra.mxu0 %v6809
        %6847 = vmatprep.subr.mxu0 0.0
        %6848 = vmatpush1.msra.mxu0 %v6810
        %6849 = vmatprep.subr.mxu0 0.0
        %6850 = vmatpush1.msra.mxu0 %v6811
        %6851 = vmatprep.subr.mxu0 0.0
        %6852 = vmatpush1.msra.mxu0 %v6812
        %6853 = vmatprep.subr.mxu0 0.0
        %6854 = vmatpush1.msra.mxu0 %v6813
        %6855 = vmatprep.subr.mxu0 0.0
        %6856 = vmatpush1.msra.mxu0 %v6814
        %6857 = vmatprep.subr.mxu0 0.0
        %6858 = vmatpush1.msra.mxu0 %v6839
        %6859 = vmatprep.subr.mxu0 0.0
        %6860 = vmatpush1.msra.mxu0 0.0
        %6861 = vmatprep.subr.mxu0 0.0
        %6862 = vmatpush1.msra.mxu0 0.0
        %6863 = vmatprep.subr.mxu0 0.0
        %6864 = vmatpush1.msra.mxu0 0.0
        %6865 = vmatprep.subr.mxu0 0.0
        %6866 = vmatpush1.msra.mxu0 0.0
        %6867 = vmatprep.subr.mxu0 0.0
        %6868 = vmatpush1.msra.mxu0 0.0
        %6869 = vmatprep.subr.mxu0 0.0
        %6870 = vmatpush1.msra.mxu0 0.0
        %6871 = vmatprep.subr.mxu0 0.0
        %6872 = vmatpush1.msra.mxu0 0.0
        %6873 = vmatprep.subr.mxu0 0.0
        %6874 = vmatpush1.msra.mxu0 0.0
        %6875 = vmatprep.subr.mxu0 0.0
        %6876 = vmatpush1.msra.mxu0 0.0
        %6877 = vmatprep.subr.mxu0 0.0
        %6878 = vmatpush1.msra.mxu0 0.0
        %6879 = vmatprep.subr.mxu0 0.0
        %6880 = vmatpush1.msra.mxu0 0.0
        %6881 = vmatprep.subr.mxu0 0.0
        %6882 = vmatpush1.msra.mxu0 0.0
        %6883 = vmatprep.subr.mxu0 0.0
        %6884 = vmatpush1.msra.mxu0 0.0
        %6885 = vmatprep.subr.mxu0 0.0
        %6886 = vmatpush1.msra.mxu0 0.0
        %6887 = vmatprep.subr.mxu0 0.0
        %6888 = vmatpush1.msra.mxu0 0.0
        %6889 = vmatprep.subr.mxu0 0.0
        %6890 = vmatpush1.msra.mxu0 0.0
        %6891 = vmatprep.subr.mxu0 0.0
        %6892 = vmatpush1.msra.mxu0 0.0
        %6893 = vmatprep.subr.mxu0 0.0
        %6894 = vmatpush1.msra.mxu0 0.0
        %6895 = vmatprep.subr.mxu0 0.0
        %6896 = vmatpush1.msra.mxu0 0.0
        %6897 = vmatprep.subr.mxu0 0.0
        %6898 = vmatpush1.msra.mxu0 0.0
        %6899 = vmatprep.subr.mxu0 0.0
        %6900 = vmatpush1.msra.mxu0 0.0
        %6901 = vmatprep.subr.mxu0 0.0
        %6902 = vmatpush1.msra.mxu0 0.0
        %6903 = vmatprep.subr.mxu0 0.0
        %6904 = vmatpush1.msra.mxu0 0.0
        %6905 = vmatprep.mubr.f32.mxu0 0.0
        %6906 = vmatmul.mubr.f32.gmra.mrb[0].mxu0 %v6823
        %v6907 = vpop.f32.mrb[0].mxu0
        %v6908 = vadd.f32 1e-08, %v6907
        %v6909 = vpop.f32.mrb[0].mxu0
        %6910 = vmatprep.mubr.f32.mxu0 0.0
        %6911 = vmatmul.mubr.f32.gmra.mrb[0].mxu0 %v6826
        %v6912 = vpop.f32.mrb[0].mxu0
        %v6913 = vadd.f32 1e-08, %v6912
        %v6914 = vpop.f32.mrb[0].mxu0
        %6915 = vmatprep.mubr.f32.mxu0 0.0
        %6916 = vmatmul.mubr.f32.gmra.mrb[0].mxu0 %v6829
        %v6917 = vpop.f32.mrb[0].mxu0
        %v6918 = vadd.f32 1e-08, %v6917
        %v6919 = vpop.f32.mrb[0].mxu0
        %6920 = vmatprep.mubr.f32.mxu0 0.0
        %6921 = vmatmul.mubr.f32.gmra.mrb[0].mxu0 %v6832
        %v6922 = vpop.f32.mrb[0].mxu0
        %v6923 = vadd.f32 1e-08, %v6922
        %v6924 = vpop.f32.mrb[0].mxu0
        %6925 = vmatprep.mubr.f32.mxu0 0.0
        %6926 = vmatmul.mubr.f32.gmra.mrb[0].mxu0 %v6835
        %v6927 = vpop.f32.mrb[0].mxu0
        %v6928 = vadd.f32 1e-08, %v6927
        %v6929 = vpop.f32.mrb[0].mxu0
        %6930 = vdwg.mxu0
        %v6931 = vrsqrt.pop %v6908
        %v6932 = vrsqrt.pop %v6913
        %v6933 = vrsqrt.pop %v6918
        %v6934 = vrsqrt.pop %v6923
        %v6935 = vrsqrt.pop %v6928
        %v6936 = vmul.f32 %v6802, %v6931
        %v6937 = vmul.f32 %v6803, %v6932
        %v6938 = vmul.f32 %v6804, %v6933
        %v6939 = vmul.f32 %v6805, %v6934
        %v6940 = vmul.f32 %v6806, %v6935
        %vm6941 = vcmp.ge.f32.partialorder %v6936, 0.0
        %vm6942 = vcmp.ge.f32.partialorder %v6937, 0.0
        %vm6943 = vcmp.ge.f32.partialorder %v6938, 0.0
        %vm6944 = vcmp.ge.f32.partialorder %v6939, 0.0
        %vm6945 = vcmp.ge.f32.partialorder %v6940, 0.0
        %v6946 = vmul.f32 %v6936, 0.2
        %v6947 = vmul.f32 %v6937, 0.2
        %v6948 = vmul.f32 %v6938, 0.2
        %v6949 = vmul.f32 %v6939, 0.2
        %v6950 = vmul.f32 %v6940, 0.2
        %v6951 = vsel %vm6941, %v6936, %v6946
        %v6952 = vsel %vm6942, %v6937, %v6947
        %v6953 = vsel %vm6943, %v6938, %v6948
        %v6954 = vsel %vm6944, %v6939, %v6949
        %v6955 = vsel %vm6945, %v6940, %v6950
        %v6956 = vld [vmem:[#allocation32] sm:$0xff]
        %v6957 = vld [vmem:[#allocation32 + $0x8] sm:$0xff]
        %v6958 = vld [vmem:[#allocation32 + $0x10] sm:$0xff]
        %v6959 = vld [vmem:[#allocation32 + $0x18] sm:$0xff]
        %v6960 = vld [vmem:[#allocation32 + $0x20] sm:$0xff]
        %v6961 = vld [vmem:[#allocation32 + $0x28] sm:$0xff]
        %v6962 = vld [vmem:[#allocation32 + $0x30] sm:$0xff]
        %v6963 = vld [vmem:[#allocation32 + $0x38] sm:$0xff]
        %v6964 = vld [vmem:[#allocation32 + $0x40] sm:$0xff]
        %v6965 = vld [vmem:[#allocation32 + $0x48] sm:$0xff]
        %v6966 = vld [vmem:[#allocation32 + $0x50] sm:$0xff]
        %v6967 = vld [vmem:[#allocation32 + $0x58] sm:$0xff]
        %v6968 = vld [vmem:[#allocation32 + $0x60] sm:$0xff]
        %v6969 = vld [vmem:[#allocation32 + $0x68] sm:$0xff]
        %v6970 = vld [vmem:[#allocation32 + $0x70] sm:$0xff]
        %v6971 = vld [vmem:[#allocation32 + $0x78] sm:$0xff]
        %v6972 = vld [vmem:[#allocation32 + $0x80] sm:$0xf]
        %v6973 = vld [vmem:[#allocation32 + $0x88] sm:$0xf]
        %v6975 = vsel %vm6821, %v6951, 0
        %v6978 = vsel %vm6821, %v6952, 0
        %v6981 = vsel %vm6821, %v6953, 0
        %v6984 = vsel %vm6821, %v6954, 0
        %v6987 = vsel %vm6821, %v6955, 0
        %v6990 = vsel %vm6837, %v6972, 0
        %v6993 = vsel %vm6837, %v6973, 0
        %6995 = vmatprep.subr.mxu0 %v6957
        %6996 = vmatpush1.msra.mxu0 %v6956
        %6997 = vmatprep.subr.mxu0 %v6959
        %6998 = vmatpush1.msra.mxu0 %v6958
        %6999 = vmatprep.subr.mxu0 %v6961
        %7000 = vmatpush1.msra.mxu0 %v6960
        %7001 = vmatprep.subr.mxu0 %v6963
        %7002 = vmatpush1.msra.mxu0 %v6962
        %7003 = vmatprep.subr.mxu0 %v6965
        %7004 = vmatpush1.msra.mxu0 %v6964
        %7005 = vmatprep.subr.mxu0 %v6967
        %7006 = vmatpush1.msra.mxu0 %v6966
        %7007 = vmatprep.subr.mxu0 %v6969
        %7008 = vmatpush1.msra.mxu0 %v6968
        %7009 = vmatprep.subr.mxu0 %v6971
        %7010 = vmatpush1.msra.mxu0 %v6970
        %7011 = vmatprep.subr.mxu0 %v6993
        %7012 = vmatpush1.msra.mxu0 %v6990
        %7013 = vmatprep.subr.mxu0 0.0
        %7014 = vmatpush1.msra.mxu0 0.0
        %7015 = vmatprep.subr.mxu0 0.0
        %7016 = vmatpush1.msra.mxu0 0.0
        %7017 = vmatprep.subr.mxu0 0.0
        %7018 = vmatpush1.msra.mxu0 0.0
        %7019 = vmatprep.subr.mxu0 0.0
        %7020 = vmatpush1.msra.mxu0 0.0
        %7021 = vmatprep.subr.mxu0 0.0
        %7022 = vmatpush1.msra.mxu0 0.0
        %7023 = vmatprep.subr.mxu0 0.0
        %7024 = vmatpush1.msra.mxu0 0.0
        %7025 = vmatprep.subr.mxu0 0.0
        %7026 = vmatpush1.msra.mxu0 0.0
        %7027 = vmatprep.subr.mxu0 0.0
        %7028 = vmatpush1.msra.mxu0 0.0
        %7029 = vmatprep.subr.mxu0 0.0
        %7030 = vmatpush1.msra.mxu0 0.0
        %7031 = vmatprep.subr.mxu0 0.0
        %7032 = vmatpush1.msra.mxu0 0.0
        %7033 = vmatprep.subr.mxu0 0.0
        %7034 = vmatpush1.msra.mxu0 0.0
        %7035 = vmatprep.subr.mxu0 0.0
        %7036 = vmatpush1.msra.mxu0 0.0
        %7037 = vmatprep.subr.mxu0 0.0
        %7038 = vmatpush1.msra.mxu0 0.0
        %7039 = vmatprep.subr.mxu0 0.0
        %7040 = vmatpush1.msra.mxu0 0.0
        %7041 = vmatprep.subr.mxu0 0.0
        %7042 = vmatpush1.msra.mxu0 0.0
        %7043 = vmatprep.subr.mxu0 0.0
        %7044 = vmatpush1.msra.mxu0 0.0
        %7045 = vmatprep.subr.mxu0 0.0
        %7046 = vmatpush1.msra.mxu0 0.0
        %7047 = vmatprep.subr.mxu0 0.0
        %7048 = vmatpush1.msra.mxu0 0.0
        %7049 = vmatprep.subr.mxu0 0.0
        %7050 = vmatpush1.msra.mxu0 0.0
        %7051 = vmatprep.subr.mxu0 0.0
        %7052 = vmatpush1.msra.mxu0 0.0
        %7053 = vmatprep.subr.mxu0 0.0
        %7054 = vmatpush1.msra.mxu0 0.0
        %7055 = vmatprep.subr.mxu0 0.0
        %7056 = vmatpush1.msra.mxu0 0.0
        %7057 = vmatprep.subr.mxu0 0.0
        %7058 = vmatpush1.msra.mxu0 0.0
        %7059 = vmatprep.mubr.f32.mxu0 0.0
        %7060 = vmatmul.mubr.f32.gmra.mrb[0].mxu0 %v6975
        %v7061 = vpop.f32.mrb[0].mxu0
        %v7062 = vadd.f32 0.0, %v7061
        %v7063 = vpop.f32.mrb[0].mxu0
        %v7064 = vadd.f32 0.0, %v7063
        %7065 = vmatprep.mubr.f32.mxu0 0.0
        %7066 = vmatmul.mubr.f32.gmra.mrb[0].mxu0 %v6978
        %v7067 = vpop.f32.mrb[0].mxu0
        %v7068 = vadd.f32 0.0, %v7067
        %v7069 = vpop.f32.mrb[0].mxu0
        %v7070 = vadd.f32 0.0, %v7069
        %7071 = vmatprep.mubr.f32.mxu0 0.0
        %7072 = vmatmul.mubr.f32.gmra.mrb[0].mxu0 %v6981
        %v7073 = vpop.f32.mrb[0].mxu0
        %v7074 = vadd.f32 0.0, %v7073
        %v7075 = vpop.f32.mrb[0].mxu0
        %v7076 = vadd.f32 0.0, %v7075
        %7077 = vmatprep.mubr.f32.mxu0 0.0
        %7078 = vmatmul.mubr.f32.gmra.mrb[0].mxu0 %v6984
        %v7079 = vpop.f32.mrb[0].mxu0
        %v7080 = vadd.f32 0.0, %v7079
        %v7081 = vpop.f32.mrb[0].mxu0
        %v7082 = vadd.f32 0.0, %v7081
        %7083 = vmatprep.mubr.f32.mxu0 0.0
        %7084 = vmatmul.mubr.f32.gmra.mrb[0].mxu0 %v6987
        %v7085 = vpop.f32.mrb[0].mxu0
        %v7086 = vadd.f32 0.0, %v7085
        %v7087 = vpop.f32.mrb[0].mxu0
        %v7088 = vadd.f32 0.0, %v7087
        %7089 = vdwg.mxu0
        %v7090 = vld [vmem:[#allocation33] sm:$0xff]
        %v7091 = vld [vmem:[#allocation33 + $0x8] sm:$0xff]
        %v7092 = vld [vmem:[#allocation33 + $0x10] sm:$0xff]
        %v7093 = vld [vmem:[#allocation33 + $0x18] sm:$0xff]
        %v7094 = vld [vmem:[#allocation33 + $0x20] sm:$0xff]
        %v7095 = vld [vmem:[#allocation33 + $0x28] sm:$0xff]
        %v7096 = vld [vmem:[#allocation33 + $0x30] sm:$0xff]
        %v7097 = vld [vmem:[#allocation33 + $0x38] sm:$0xff]
        %v7098 = vld [vmem:[#allocation33 + $0x40] sm:$0x3]
        %v7100 = vsel %vm6073, %v7090, 0
        %v7103 = vsel %vm6073, %v7091, 0
        %v7106 = vsel %vm6073, %v7092, 0
        %v7109 = vsel %vm6073, %v7093, 0
        %v7112 = vsel %vm6073, %v7094, 0
        %v7115 = vsel %vm6073, %v7095, 0
        %v7118 = vsel %vm6073, %v7096, 0
        %v7121 = vsel %vm6073, %v7097, 0
        %v7124 = vsel %vm6073, %v7098, 0
        %v7127 = vsel %vm2556, %v7086, 0
        %v7130 = vsel %vm2556, %v7088, 0
        %7132 = vmatprep.subr.mxu0 %v7064
        %7133 = vmatpush1.msra.mxu0 %v7062
        %7134 = vmatprep.subr.mxu0 %v7070
        %7135 = vmatpush1.msra.mxu0 %v7068
        %7136 = vmatprep.subr.mxu0 %v7076
        %7137 = vmatpush1.msra.mxu0 %v7074
        %7138 = vmatprep.subr.mxu0 %v7082
        %7139 = vmatpush1.msra.mxu0 %v7080
        %7140 = vmatprep.subr.mxu0 %v7130
        %7141 = vmatpush1.msra.mxu0 %v7127
        %7142 = vmatprep.subr.mxu0 0.0
        %7143 = vmatpush1.msra.mxu0 0.0
        %7144 = vmatprep.subr.mxu0 0.0
        %7145 = vmatpush1.msra.mxu0 0.0
        %7146 = vmatprep.subr.mxu0 0.0
        %7147 = vmatpush1.msra.mxu0 0.0
        %7148 = vmatprep.subr.mxu0 0.0
        %7149 = vmatpush1.msra.mxu0 0.0
        %7150 = vmatprep.subr.mxu0 0.0
        %7151 = vmatpush1.msra.mxu0 0.0
        %7152 = vmatprep.subr.mxu0 0.0
        %7153 = vmatpush1.msra.mxu0 0.0
        %7154 = vmatprep.subr.mxu0 0.0
        %7155 = vmatpush1.msra.mxu0 0.0
        %7156 = vmatprep.subr.mxu0 0.0
        %7157 = vmatpush1.msra.mxu0 0.0
        %7158 = vmatprep.subr.mxu0 0.0
        %7159 = vmatpush1.msra.mxu0 0.0
        %7160 = vmatprep.subr.mxu0 0.0
        %7161 = vmatpush1.msra.mxu0 0.0
        %7162 = vmatprep.subr.mxu0 0.0
        %7163 = vmatpush1.msra.mxu0 0.0
        %7164 = vmatprep.subr.mxu0 0.0
        %7165 = vmatpush1.msra.mxu0 0.0
        %7166 = vmatprep.subr.mxu0 0.0
        %7167 = vmatpush1.msra.mxu0 0.0
        %7168 = vmatprep.subr.mxu0 0.0
        %7169 = vmatpush1.msra.mxu0 0.0
        %7170 = vmatprep.subr.mxu0 0.0
        %7171 = vmatpush1.msra.mxu0 0.0
        %7172 = vmatprep.subr.mxu0 0.0
        %7173 = vmatpush1.msra.mxu0 0.0
        %7174 = vmatprep.subr.mxu0 0.0
        %7175 = vmatpush1.msra.mxu0 0.0
        %7176 = vmatprep.subr.mxu0 0.0
        %7177 = vmatpush1.msra.mxu0 0.0
        %7178 = vmatprep.subr.mxu0 0.0
        %7179 = vmatpush1.msra.mxu0 0.0
        %7180 = vmatprep.subr.mxu0 0.0
        %7181 = vmatpush1.msra.mxu0 0.0
        %7182 = vmatprep.subr.mxu0 0.0
        %7183 = vmatpush1.msra.mxu0 0.0
        %7184 = vmatprep.subr.mxu0 0.0
        %7185 = vmatpush1.msra.mxu0 0.0
        %7186 = vmatprep.subr.mxu0 0.0
        %7187 = vmatpush1.msra.mxu0 0.0
        %7188 = vmatprep.subr.mxu0 0.0
        %7189 = vmatpush1.msra.mxu0 0.0
        %7190 = vmatprep.subr.mxu0 0.0
        %7191 = vmatpush1.msra.mxu0 0.0
        %7192 = vmatprep.subr.mxu0 0.0
        %7193 = vmatpush1.msra.mxu0 0.0
        %7194 = vmatprep.subr.mxu0 0.0
        %7195 = vmatpush1.msra.mxu0 0.0
        %7196 = vmatprep.mubr.f32.mxu0 0.0
        %7197 = vmatmul.mubr.f32.gmra.mrb[0].mxu0 %v7100
        %v7198 = vpop.f32.mrb[0].mxu0
        %v7199 = vadd.f32 0.0, %v7198
        %v7200 = vpop.f32.mrb[0].mxu0
        %v7201 = vadd.f32 0.0, %v7200
        %7202 = vmatprep.mubr.f32.mxu0 0.0
        %7203 = vmatmul.mubr.f32.gmra.mrb[0].mxu0 %v7103
        %v7204 = vpop.f32.mrb[0].mxu0
        %v7205 = vadd.f32 0.0, %v7204
        %v7206 = vpop.f32.mrb[0].mxu0
        %v7207 = vadd.f32 0.0, %v7206
        %7208 = vmatprep.mubr.f32.mxu0 0.0
        %7209 = vmatmul.mubr.f32.gmra.mrb[0].mxu0 %v7106
        %v7210 = vpop.f32.mrb[0].mxu0
        %v7211 = vadd.f32 0.0, %v7210
        %v7212 = vpop.f32.mrb[0].mxu0
        %v7213 = vadd.f32 0.0, %v7212
        %7214 = vmatprep.mubr.f32.mxu0 0.0
        %7215 = vmatmul.mubr.f32.gmra.mrb[0].mxu0 %v7109
        %v7216 = vpop.f32.mrb[0].mxu0
        %v7217 = vadd.f32 0.0, %v7216
        %v7218 = vpop.f32.mrb[0].mxu0
        %v7219 = vadd.f32 0.0, %v7218
        %7220 = vmatprep.mubr.f32.mxu0 0.0
        %7221 = vmatmul.mubr.f32.gmra.mrb[0].mxu0 %v7112
        %v7222 = vpop.f32.mrb[0].mxu0
        %v7223 = vadd.f32 0.0, %v7222
        %v7224 = vpop.f32.mrb[0].mxu0
        %v7225 = vadd.f32 0.0, %v7224
        %7226 = vmatprep.mubr.f32.mxu0 0.0
        %7227 = vmatmul.mubr.f32.gmra.mrb[0].mxu0 %v7115
        %v7228 = vpop.f32.mrb[0].mxu0
        %v7229 = vadd.f32 0.0, %v7228
        %v7230 = vpop.f32.mrb[0].mxu0
        %v7231 = vadd.f32 0.0, %v7230
        %7232 = vmatprep.mubr.f32.mxu0 0.0
        %7233 = vmatmul.mubr.f32.gmra.mrb[0].mxu0 %v7118
        %v7234 = vpop.f32.mrb[0].mxu0
        %v7235 = vadd.f32 0.0, %v7234
        %v7236 = vpop.f32.mrb[0].mxu0
        %v7237 = vadd.f32 0.0, %v7236
        %7238 = vmatprep.mubr.f32.mxu0 0.0
        %7239 = vmatmul.mubr.f32.gmra.mrb[0].mxu0 %v7121
        %v7240 = vpop.f32.mrb[0].mxu0
        %v7241 = vadd.f32 0.0, %v7240
        %v7242 = vpop.f32.mrb[0].mxu0
        %v7243 = vadd.f32 0.0, %v7242
        %7244 = vmatprep.mubr.f32.mxu0 0.0
        %7245 = vmatmul.mubr.f32.gmra.mrb[0].mxu0 %v7124
        %v7246 = vpop.f32.mrb[0].mxu0
        %v7247 = vadd.f32 0.0, %v7246
        %v7248 = vpop.f32.mrb[0].mxu0
        %v7249 = vadd.f32 0.0, %v7248
        %7250 = vdwg.mxu0
        %v7251 = vld [vmem:[#allocation35] sm:$0xff]
        %v7252 = vld [vmem:[#allocation35 + $0x8] sm:$0xff]
        %v7253 = vld [vmem:[#allocation35 + $0x10] sm:$0xff]
        %v7254 = vld [vmem:[#allocation35 + $0x18] sm:$0xff]
        %v7255 = vld [vmem:[#allocation35 + $0x20] sm:$0xff]
        %v7256 = vld [vmem:[#allocation35 + $0x28] sm:$0xff]
        %v7257 = vld [vmem:[#allocation35 + $0x30] sm:$0xff]
        %v7258 = vld [vmem:[#allocation35 + $0x38] sm:$0xff]
        %v7259 = vld [vmem:[#allocation35 + $0x40] sm:$0xff]
        %v7260 = vld [vmem:[#allocation35 + $0x48] sm:$0xff]
        %v7261 = vld [vmem:[#allocation35 + $0x50] sm:$0xff]
        %v7262 = vld [vmem:[#allocation35 + $0x58] sm:$0xff]
        %v7263 = vld [vmem:[#allocation35 + $0x60] sm:$0xff]
        %v7264 = vld [vmem:[#allocation35 + $0x68] sm:$0xff]
        %v7265 = vld [vmem:[#allocation35 + $0x70] sm:$0xff]
        %v7266 = vld [vmem:[#allocation35 + $0x78] sm:$0xff]
        %v7267 = vld [vmem:[#allocation35 + $0x80] sm:$0xff]
        %v7268 = vld [vmem:[#allocation35 + $0x88] sm:$0xff]
        %v7269 = vld [vmem:[#allocation35 + $0x90] sm:$0xff]
        %v7270 = vld [vmem:[#allocation35 + $0x98] sm:$0xff]
        %v7271 = vld [vmem:[#allocation35 + $0xa0] sm:$0xff]
        %v7272 = vld [vmem:[#allocation35 + $0xa8] sm:$0xff]
        %v7273 = vld [vmem:[#allocation35 + $0xb0] sm:$0xff]
        %v7274 = vld [vmem:[#allocation35 + $0xb8] sm:$0xff]
        %v7275 = vld [vmem:[#allocation35 + $0xc0] sm:$0xff]
        %v7276 = vld [vmem:[#allocation35 + $0xc8] sm:$0xff]
        %v7277 = vld [vmem:[#allocation35 + $0xd0] sm:$0xff]
        %v7278 = vld [vmem:[#allocation35 + $0xd8] sm:$0xff]
        %v7279 = vld [vmem:[#allocation35 + $0xe0] sm:$0xff]
        %v7280 = vld [vmem:[#allocation35 + $0xe8] sm:$0xff]
        %v7281 = vld [vmem:[#allocation35 + $0xf0] sm:$0xff]
        %v7282 = vld [vmem:[#allocation35 + $0xf8] sm:$0xff]
        %v7283 = vld [vmem:[#allocation35 + $0x100] sm:$0xf]
        %v7284 = vld [vmem:[#allocation35 + $0x108] sm:$0xf]
        %s7285 = scalar_lea.vmem [#allocation33], 72
        %v7286 = vld [vmem:[%s7285] sm:$0xff]
        %v7287 = vld [vmem:[%s7285 + $0x8] sm:$0xff]
        %v7288 = vld [vmem:[%s7285 + $0x10] sm:$0xff]
        %v7289 = vld [vmem:[%s7285 + $0x18] sm:$0xff]
        %v7290 = vld [vmem:[%s7285 + $0x20] sm:$0xff]
        %v7291 = vld [vmem:[%s7285 + $0x28] sm:$0xff]
        %v7292 = vld [vmem:[%s7285 + $0x30] sm:$0xff]
        %v7293 = vld [vmem:[%s7285 + $0x38] sm:$0xff]
        %v7294 = vld [vmem:[%s7285 + $0x40] sm:$0x3]
        %v7296 = vsel %vm6073, %v7286, 0
        %v7299 = vsel %vm6073, %v7287, 0
        %v7302 = vsel %vm6073, %v7288, 0
        %v7305 = vsel %vm6073, %v7289, 0
        %v7308 = vsel %vm6073, %v7290, 0
        %v7311 = vsel %vm6073, %v7291, 0
        %v7314 = vsel %vm6073, %v7292, 0
        %v7317 = vsel %vm6073, %v7293, 0
        %v7320 = vsel %vm6073, %v7294, 0
        %7322 = vmatprep.subr.mxu0 %v7064
        %7323 = vmatpush1.msra.mxu0 %v7062
        %7324 = vmatprep.subr.mxu0 %v7070
        %7325 = vmatpush1.msra.mxu0 %v7068
        %7326 = vmatprep.subr.mxu0 %v7076
        %7327 = vmatpush1.msra.mxu0 %v7074
        %7328 = vmatprep.subr.mxu0 %v7082
        %7329 = vmatpush1.msra.mxu0 %v7080
        %7330 = vmatprep.subr.mxu0 %v7130
        %7331 = vmatpush1.msra.mxu0 %v7127
        %7332 = vmatprep.subr.mxu0 0.0
        %7333 = vmatpush1.msra.mxu0 0.0
        %7334 = vmatprep.subr.mxu0 0.0
        %7335 = vmatpush1.msra.mxu0 0.0
        %7336 = vmatprep.subr.mxu0 0.0
        %7337 = vmatpush1.msra.mxu0 0.0
        %7338 = vmatprep.subr.mxu0 0.0
        %7339 = vmatpush1.msra.mxu0 0.0
        %7340 = vmatprep.subr.mxu0 0.0
        %7341 = vmatpush1.msra.mxu0 0.0
        %7342 = vmatprep.subr.mxu0 0.0
        %7343 = vmatpush1.msra.mxu0 0.0
        %7344 = vmatprep.subr.mxu0 0.0
        %7345 = vmatpush1.msra.mxu0 0.0
        %7346 = vmatprep.subr.mxu0 0.0
        %7347 = vmatpush1.msra.mxu0 0.0
        %7348 = vmatprep.subr.mxu0 0.0
        %7349 = vmatpush1.msra.mxu0 0.0
        %7350 = vmatprep.subr.mxu0 0.0
        %7351 = vmatpush1.msra.mxu0 0.0
        %7352 = vmatprep.subr.mxu0 0.0
        %7353 = vmatpush1.msra.mxu0 0.0
        %7354 = vmatprep.subr.mxu0 0.0
        %7355 = vmatpush1.msra.mxu0 0.0
        %7356 = vmatprep.subr.mxu0 0.0
        %7357 = vmatpush1.msra.mxu0 0.0
        %7358 = vmatprep.subr.mxu0 0.0
        %7359 = vmatpush1.msra.mxu0 0.0
        %7360 = vmatprep.subr.mxu0 0.0
        %7361 = vmatpush1.msra.mxu0 0.0
        %7362 = vmatprep.subr.mxu0 0.0
        %7363 = vmatpush1.msra.mxu0 0.0
        %7364 = vmatprep.subr.mxu0 0.0
        %7365 = vmatpush1.msra.mxu0 0.0
        %7366 = vmatprep.subr.mxu0 0.0
        %7367 = vmatpush1.msra.mxu0 0.0
        %7368 = vmatprep.subr.mxu0 0.0
        %7369 = vmatpush1.msra.mxu0 0.0
        %7370 = vmatprep.subr.mxu0 0.0
        %7371 = vmatpush1.msra.mxu0 0.0
        %7372 = vmatprep.subr.mxu0 0.0
        %7373 = vmatpush1.msra.mxu0 0.0
        %7374 = vmatprep.subr.mxu0 0.0
        %7375 = vmatpush1.msra.mxu0 0.0
        %7376 = vmatprep.subr.mxu0 0.0
        %7377 = vmatpush1.msra.mxu0 0.0
        %7378 = vmatprep.subr.mxu0 0.0
        %7379 = vmatpush1.msra.mxu0 0.0
        %7380 = vmatprep.subr.mxu0 0.0
        %7381 = vmatpush1.msra.mxu0 0.0
        %7382 = vmatprep.subr.mxu0 0.0
        %7383 = vmatpush1.msra.mxu0 0.0
        %7384 = vmatprep.subr.mxu0 0.0
        %7385 = vmatpush1.msra.mxu0 0.0
        %7386 = vmatprep.mubr.f32.mxu0 0.0
        %7387 = vmatmul.mubr.f32.gmra.mrb[0].mxu0 %v7296
        %v7388 = vpop.f32.mrb[0].mxu0
        %v7389 = vadd.f32 0.0, %v7388
        %v7390 = vpop.f32.mrb[0].mxu0
        %v7391 = vadd.f32 0.0, %v7390
        %7392 = vmatprep.mubr.f32.mxu0 0.0
        %7393 = vmatmul.mubr.f32.gmra.mrb[0].mxu0 %v7299
        %v7394 = vpop.f32.mrb[0].mxu0
        %v7395 = vadd.f32 0.0, %v7394
        %v7396 = vpop.f32.mrb[0].mxu0
        %v7397 = vadd.f32 0.0, %v7396
        %7398 = vmatprep.mubr.f32.mxu0 0.0
        %7399 = vmatmul.mubr.f32.gmra.mrb[0].mxu0 %v7302
        %v7400 = vpop.f32.mrb[0].mxu0
        %v7401 = vadd.f32 0.0, %v7400
        %v7402 = vpop.f32.mrb[0].mxu0
        %v7403 = vadd.f32 0.0, %v7402
        %7404 = vmatprep.mubr.f32.mxu0 0.0
        %7405 = vmatmul.mubr.f32.gmra.mrb[0].mxu0 %v7305
        %v7406 = vpop.f32.mrb[0].mxu0
        %v7407 = vadd.f32 0.0, %v7406
        %v7408 = vpop.f32.mrb[0].mxu0
        %v7409 = vadd.f32 0.0, %v7408
        %7410 = vmatprep.mubr.f32.mxu0 0.0
        %7411 = vmatmul.mubr.f32.gmra.mrb[0].mxu0 %v7308
        %v7412 = vpop.f32.mrb[0].mxu0
        %v7413 = vadd.f32 0.0, %v7412
        %v7414 = vpop.f32.mrb[0].mxu0
        %v7415 = vadd.f32 0.0, %v7414
        %7416 = vmatprep.mubr.f32.mxu0 0.0
        %7417 = vmatmul.mubr.f32.gmra.mrb[0].mxu0 %v7311
        %v7418 = vpop.f32.mrb[0].mxu0
        %v7419 = vadd.f32 0.0, %v7418
        %v7420 = vpop.f32.mrb[0].mxu0
        %v7421 = vadd.f32 0.0, %v7420
        %7422 = vmatprep.mubr.f32.mxu0 0.0
        %7423 = vmatmul.mubr.f32.gmra.mrb[0].mxu0 %v7314
        %v7424 = vpop.f32.mrb[0].mxu0
        %v7425 = vadd.f32 0.0, %v7424
        %v7426 = vpop.f32.mrb[0].mxu0
        %v7427 = vadd.f32 0.0, %v7426
        %7428 = vmatprep.mubr.f32.mxu0 0.0
        %7429 = vmatmul.mubr.f32.gmra.mrb[0].mxu0 %v7317
        %v7430 = vpop.f32.mrb[0].mxu0
        %v7431 = vadd.f32 0.0, %v7430
        %v7432 = vpop.f32.mrb[0].mxu0
        %v7433 = vadd.f32 0.0, %v7432
        %7434 = vmatprep.mubr.f32.mxu0 0.0
        %7435 = vmatmul.mubr.f32.gmra.mrb[0].mxu0 %v7320
        %v7436 = vpop.f32.mrb[0].mxu0
        %v7437 = vadd.f32 0.0, %v7436
        %v7438 = vpop.f32.mrb[0].mxu0
        %v7439 = vadd.f32 0.0, %v7438
        %7440 = vdwg.mxu0
        %s7441 = scalar_lea.vmem [#allocation35], 272
        %v7442 = vld [vmem:[%s7441] sm:$0xff]
        %v7443 = vld [vmem:[%s7441 + $0x8] sm:$0xff]
        %v7444 = vld [vmem:[%s7441 + $0x10] sm:$0xff]
        %v7445 = vld [vmem:[%s7441 + $0x18] sm:$0xff]
        %v7446 = vld [vmem:[%s7441 + $0x20] sm:$0xff]
        %v7447 = vld [vmem:[%s7441 + $0x28] sm:$0xff]
        %v7448 = vld [vmem:[%s7441 + $0x30] sm:$0xff]
        %v7449 = vld [vmem:[%s7441 + $0x38] sm:$0xff]
        %v7450 = vld [vmem:[%s7441 + $0x40] sm:$0xff]
        %v7451 = vld [vmem:[%s7441 + $0x48] sm:$0xff]
        %v7452 = vld [vmem:[%s7441 + $0x50] sm:$0xff]
        %v7453 = vld [vmem:[%s7441 + $0x58] sm:$0xff]
        %v7454 = vld [vmem:[%s7441 + $0x60] sm:$0xff]
        %v7455 = vld [vmem:[%s7441 + $0x68] sm:$0xff]
        %v7456 = vld [vmem:[%s7441 + $0x70] sm:$0xff]
        %v7457 = vld [vmem:[%s7441 + $0x78] sm:$0xff]
        %v7458 = vld [vmem:[%s7441 + $0x80] sm:$0xff]
        %v7459 = vld [vmem:[%s7441 + $0x88] sm:$0xff]
        %v7460 = vld [vmem:[%s7441 + $0x90] sm:$0xff]
        %v7461 = vld [vmem:[%s7441 + $0x98] sm:$0xff]
        %v7462 = vld [vmem:[%s7441 + $0xa0] sm:$0xff]
        %v7463 = vld [vmem:[%s7441 + $0xa8] sm:$0xff]
        %v7464 = vld [vmem:[%s7441 + $0xb0] sm:$0xff]
        %v7465 = vld [vmem:[%s7441 + $0xb8] sm:$0xff]
        %v7466 = vld [vmem:[%s7441 + $0xc0] sm:$0xff]
        %v7467 = vld [vmem:[%s7441 + $0xc8] sm:$0xff]
        %v7468 = vld [vmem:[%s7441 + $0xd0] sm:$0xff]
        %v7469 = vld [vmem:[%s7441 + $0xd8] sm:$0xff]
        %v7470 = vld [vmem:[%s7441 + $0xe0] sm:$0xff]
        %v7471 = vld [vmem:[%s7441 + $0xe8] sm:$0xff]
        %v7472 = vld [vmem:[%s7441 + $0xf0] sm:$0xff]
        %v7473 = vld [vmem:[%s7441 + $0xf8] sm:$0xff]
        %v7474 = vld [vmem:[%s7441 + $0x100] sm:$0xf]
        %v7475 = vld [vmem:[%s7441 + $0x108] sm:$0xf]
        %vm7476 = vcmask 31744
        %v7478 = vsel %vm7476, %v7391, 0
        %v7481 = vsel %vm7476, %v7397, 0
        %v7484 = vsel %vm7476, %v7403, 0
        %v7487 = vsel %vm7476, %v7409, 0
        %v7490 = vsel %vm7476, %v7415, 0
        %v7493 = vsel %vm7476, %v7421, 0
        %v7496 = vsel %vm7476, %v7427, 0
        %v7499 = vsel %vm7476, %v7433, 0
        %v7502 = vsel %vm7476, %v7439, 0
        %v7505 = vsel %vm6837, %v7474, 0
        %v7508 = vsel %vm6837, %v7475, 0
        %7510 = vmatprep.subr.mxu0 %v7443
        %7511 = vmatpush1.msra.mxu0 %v7442
        %7512 = vmatprep.subr.mxu0 %v7445
        %7513 = vmatpush1.msra.mxu0 %v7444
        %7514 = vmatprep.subr.mxu0 %v7447
        %7515 = vmatpush1.msra.mxu0 %v7446
        %7516 = vmatprep.subr.mxu0 %v7449
        %7517 = vmatpush1.msra.mxu0 %v7448
        %7518 = vmatprep.subr.mxu0 %v7451
        %7519 = vmatpush1.msra.mxu0 %v7450
        %7520 = vmatprep.subr.mxu0 %v7453
        %7521 = vmatpush1.msra.mxu0 %v7452
        %7522 = vmatprep.subr.mxu0 %v7455
        %7523 = vmatpush1.msra.mxu0 %v7454
        %7524 = vmatprep.subr.mxu0 %v7457
        %7525 = vmatpush1.msra.mxu0 %v7456
        %7526 = vmatprep.subr.mxu0 %v7459
        %7527 = vmatpush1.msra.mxu0 %v7458
        %7528 = vmatprep.subr.mxu0 %v7461
        %7529 = vmatpush1.msra.mxu0 %v7460
        %7530 = vmatprep.subr.mxu0 %v7463
        %7531 = vmatpush1.msra.mxu0 %v7462
        %7532 = vmatprep.subr.mxu0 %v7465
        %7533 = vmatpush1.msra.mxu0 %v7464
        %7534 = vmatprep.subr.mxu0 %v7467
        %7535 = vmatpush1.msra.mxu0 %v7466
        %7536 = vmatprep.subr.mxu0 %v7469
        %7537 = vmatpush1.msra.mxu0 %v7468
        %7538 = vmatprep.subr.mxu0 %v7471
        %7539 = vmatpush1.msra.mxu0 %v7470
        %7540 = vmatprep.subr.mxu0 %v7473
        %7541 = vmatpush1.msra.mxu0 %v7472
        %7542 = vmatprep.subr.mxu0 %v7508
        %7543 = vmatpush1.msra.mxu0 %v7505
        %7544 = vmatprep.subr.mxu0 0.0
        %7545 = vmatpush1.msra.mxu0 0.0
        %7546 = vmatprep.subr.mxu0 0.0
        %7547 = vmatpush1.msra.mxu0 0.0
        %7548 = vmatprep.subr.mxu0 0.0
        %7549 = vmatpush1.msra.mxu0 0.0
        %7550 = vmatprep.subr.mxu0 0.0
        %7551 = vmatpush1.msra.mxu0 0.0
        %7552 = vmatprep.subr.mxu0 0.0
        %7553 = vmatpush1.msra.mxu0 0.0
        %7554 = vmatprep.subr.mxu0 0.0
        %7555 = vmatpush1.msra.mxu0 0.0
        %7556 = vmatprep.subr.mxu0 0.0
        %7557 = vmatpush1.msra.mxu0 0.0
        %7558 = vmatprep.subr.mxu0 0.0
        %7559 = vmatpush1.msra.mxu0 0.0
        %7560 = vmatprep.subr.mxu0 0.0
        %7561 = vmatpush1.msra.mxu0 0.0
        %7562 = vmatprep.subr.mxu0 0.0
        %7563 = vmatpush1.msra.mxu0 0.0
        %7564 = vmatprep.subr.mxu0 0.0
        %7565 = vmatpush1.msra.mxu0 0.0
        %7566 = vmatprep.subr.mxu0 0.0
        %7567 = vmatpush1.msra.mxu0 0.0
        %7568 = vmatprep.subr.mxu0 0.0
        %7569 = vmatpush1.msra.mxu0 0.0
        %7570 = vmatprep.subr.mxu0 0.0
        %7571 = vmatpush1.msra.mxu0 0.0
        %7572 = vmatprep.subr.mxu0 0.0
        %7573 = vmatpush1.msra.mxu0 0.0
        %7574 = vmatprep.mubr.f32.mxu0 %v7478
        %7575 = vmatmul.mubr.f32.gmra.mrb[0].mxu0 %v7389
        %v7576 = vpop.f32.mrb[0].mxu0
        %v7577 = vadd.f32 0.0, %v7576
        %v7578 = vpop.f32.mrb[0].mxu0
        %v7579 = vadd.f32 0.0, %v7578
        %7580 = vmatprep.mubr.f32.mxu0 %v7481
        %7581 = vmatmul.mubr.f32.gmra.mrb[0].mxu0 %v7395
        %v7582 = vpop.f32.mrb[0].mxu0
        %v7583 = vadd.f32 0.0, %v7582
        %v7584 = vpop.f32.mrb[0].mxu0
        %v7585 = vadd.f32 0.0, %v7584
        %7586 = vmatprep.mubr.f32.mxu0 %v7484
        %7587 = vmatmul.mubr.f32.gmra.mrb[0].mxu0 %v7401
        %v7588 = vpop.f32.mrb[0].mxu0
        %v7589 = vadd.f32 0.0, %v7588
        %v7590 = vpop.f32.mrb[0].mxu0
        %v7591 = vadd.f32 0.0, %v7590
        %7592 = vmatprep.mubr.f32.mxu0 %v7487
        %7593 = vmatmul.mubr.f32.gmra.mrb[0].mxu0 %v7407
        %v7594 = vpop.f32.mrb[0].mxu0
        %v7595 = vadd.f32 0.0, %v7594
        %v7596 = vpop.f32.mrb[0].mxu0
        %v7597 = vadd.f32 0.0, %v7596
        %7598 = vmatprep.mubr.f32.mxu0 %v7490
        %7599 = vmatmul.mubr.f32.gmra.mrb[0].mxu0 %v7413
        %v7600 = vpop.f32.mrb[0].mxu0
        %v7601 = vadd.f32 0.0, %v7600
        %v7602 = vpop.f32.mrb[0].mxu0
        %v7603 = vadd.f32 0.0, %v7602
        %7604 = vmatprep.mubr.f32.mxu0 %v7493
        %7605 = vmatmul.mubr.f32.gmra.mrb[0].mxu0 %v7419
        %v7606 = vpop.f32.mrb[0].mxu0
        %v7607 = vadd.f32 0.0, %v7606
        %v7608 = vpop.f32.mrb[0].mxu0
        %v7609 = vadd.f32 0.0, %v7608
        %7610 = vmatprep.mubr.f32.mxu0 %v7496
        %7611 = vmatmul.mubr.f32.gmra.mrb[0].mxu0 %v7425
        %v7612 = vpop.f32.mrb[0].mxu0
        %v7613 = vadd.f32 0.0, %v7612
        %v7614 = vpop.f32.mrb[0].mxu0
        %v7615 = vadd.f32 0.0, %v7614
        %7616 = vmatprep.mubr.f32.mxu0 %v7499
        %7617 = vmatmul.mubr.f32.gmra.mrb[0].mxu0 %v7431
        %v7618 = vpop.f32.mrb[0].mxu0
        %v7619 = vadd.f32 0.0, %v7618
        %v7620 = vpop.f32.mrb[0].mxu0
        %v7621 = vadd.f32 0.0, %v7620
        %7622 = vmatprep.mubr.f32.mxu0 %v7502
        %7623 = vmatmul.mubr.f32.gmra.mrb[0].mxu0 %v7437
        %v7624 = vpop.f32.mrb[0].mxu0
        %v7625 = vadd.f32 0.0, %v7624
        %v7626 = vpop.f32.mrb[0].mxu0
        %v7627 = vadd.f32 0.0, %v7626
        %7628 = vdwg.mxu0
        %v7630 = vsel %vm7476, %v7201, 0
        %v7633 = vsel %vm7476, %v7207, 0
        %v7636 = vsel %vm7476, %v7213, 0
        %v7639 = vsel %vm7476, %v7219, 0
        %v7642 = vsel %vm7476, %v7225, 0
        %v7645 = vsel %vm7476, %v7231, 0
        %v7648 = vsel %vm7476, %v7237, 0
        %v7651 = vsel %vm7476, %v7243, 0
        %v7654 = vsel %vm7476, %v7249, 0
        %v7657 = vsel %vm6837, %v7283, 0
        %v7660 = vsel %vm6837, %v7284, 0
        %7662 = vmatprep.subr.mxu0 %v7252
        %7663 = vmatpush1.msra.mxu0 %v7251
        %7664 = vmatprep.subr.mxu0 %v7254
        %7665 = vmatpush1.msra.mxu0 %v7253
        %7666 = vmatprep.subr.mxu0 %v7256
        %7667 = vmatpush1.msra.mxu0 %v7255
        %7668 = vmatprep.subr.mxu0 %v7258
        %7669 = vmatpush1.msra.mxu0 %v7257
        %7670 = vmatprep.subr.mxu0 %v7260
        %7671 = vmatpush1.msra.mxu0 %v7259
        %7672 = vmatprep.subr.mxu0 %v7262
        %7673 = vmatpush1.msra.mxu0 %v7261
        %7674 = vmatprep.subr.mxu0 %v7264
        %7675 = vmatpush1.msra.mxu0 %v7263
        %7676 = vmatprep.subr.mxu0 %v7266
        %7677 = vmatpush1.msra.mxu0 %v7265
        %7678 = vmatprep.subr.mxu0 %v7268
        %7679 = vmatpush1.msra.mxu0 %v7267
        %7680 = vmatprep.subr.mxu0 %v7270
        %7681 = vmatpush1.msra.mxu0 %v7269
        %7682 = vmatprep.subr.mxu0 %v7272
        %7683 = vmatpush1.msra.mxu0 %v7271
        %7684 = vmatprep.subr.mxu0 %v7274
        %7685 = vmatpush1.msra.mxu0 %v7273
        %7686 = vmatprep.subr.mxu0 %v7276
        %7687 = vmatpush1.msra.mxu0 %v7275
        %7688 = vmatprep.subr.mxu0 %v7278
        %7689 = vmatpush1.msra.mxu0 %v7277
        %7690 = vmatprep.subr.mxu0 %v7280
        %7691 = vmatpush1.msra.mxu0 %v7279
        %7692 = vmatprep.subr.mxu0 %v7282
        %7693 = vmatpush1.msra.mxu0 %v7281
        %7694 = vmatprep.subr.mxu0 %v7660
        %7695 = vmatpush1.msra.mxu0 %v7657
        %7696 = vmatprep.subr.mxu0 0.0
        %7697 = vmatpush1.msra.mxu0 0.0
        %7698 = vmatprep.subr.mxu0 0.0
        %7699 = vmatpush1.msra.mxu0 0.0
        %7700 = vmatprep.subr.mxu0 0.0
        %7701 = vmatpush1.msra.mxu0 0.0
        %7702 = vmatprep.subr.mxu0 0.0
        %7703 = vmatpush1.msra.mxu0 0.0
        %7704 = vmatprep.subr.mxu0 0.0
        %7705 = vmatpush1.msra.mxu0 0.0
        %7706 = vmatprep.subr.mxu0 0.0
        %7707 = vmatpush1.msra.mxu0 0.0
        %7708 = vmatprep.subr.mxu0 0.0
        %7709 = vmatpush1.msra.mxu0 0.0
        %7710 = vmatprep.subr.mxu0 0.0
        %7711 = vmatpush1.msra.mxu0 0.0
        %7712 = vmatprep.subr.mxu0 0.0
        %7713 = vmatpush1.msra.mxu0 0.0
        %7714 = vmatprep.subr.mxu0 0.0
        %7715 = vmatpush1.msra.mxu0 0.0
        %7716 = vmatprep.subr.mxu0 0.0
        %7717 = vmatpush1.msra.mxu0 0.0
        %7718 = vmatprep.subr.mxu0 0.0
        %7719 = vmatpush1.msra.mxu0 0.0
        %7720 = vmatprep.subr.mxu0 0.0
        %7721 = vmatpush1.msra.mxu0 0.0
        %7722 = vmatprep.subr.mxu0 0.0
        %7723 = vmatpush1.msra.mxu0 0.0
        %7724 = vmatprep.subr.mxu0 0.0
        %7725 = vmatpush1.msra.mxu0 0.0
        %7726 = vmatprep.mubr.f32.mxu0 %v7630
        %7727 = vmatmul.mubr.f32.gmra.mrb[0].mxu0 %v7199
        %v7728 = vpop.f32.mrb[0].mxu0
        %v7729 = vadd.f32 %v7577, %v7728
        %v7730 = vpop.f32.mrb[0].mxu0
        %v7731 = vadd.f32 %v7579, %v7730
        %7732 = vmatprep.mubr.f32.mxu0 %v7633
        %7733 = vmatmul.mubr.f32.gmra.mrb[0].mxu0 %v7205
        %v7734 = vpop.f32.mrb[0].mxu0
        %v7735 = vadd.f32 %v7583, %v7734
        %v7736 = vpop.f32.mrb[0].mxu0
        %v7737 = vadd.f32 %v7585, %v7736
        %7738 = vmatprep.mubr.f32.mxu0 %v7636
        %7739 = vmatmul.mubr.f32.gmra.mrb[0].mxu0 %v7211
        %v7740 = vpop.f32.mrb[0].mxu0
        %v7741 = vadd.f32 %v7589, %v7740
        %v7742 = vpop.f32.mrb[0].mxu0
        %v7743 = vadd.f32 %v7591, %v7742
        %7744 = vmatprep.mubr.f32.mxu0 %v7639
        %7745 = vmatmul.mubr.f32.gmra.mrb[0].mxu0 %v7217
        %v7746 = vpop.f32.mrb[0].mxu0
        %v7747 = vadd.f32 %v7595, %v7746
        %v7748 = vpop.f32.mrb[0].mxu0
        %v7749 = vadd.f32 %v7597, %v7748
        %7750 = vmatprep.mubr.f32.mxu0 %v7642
        %7751 = vmatmul.mubr.f32.gmra.mrb[0].mxu0 %v7223
        %v7752 = vpop.f32.mrb[0].mxu0
        %v7753 = vadd.f32 %v7601, %v7752
        %v7754 = vpop.f32.mrb[0].mxu0
        %v7755 = vadd.f32 %v7603, %v7754
        %7756 = vmatprep.mubr.f32.mxu0 %v7645
        %7757 = vmatmul.mubr.f32.gmra.mrb[0].mxu0 %v7229
        %v7758 = vpop.f32.mrb[0].mxu0
        %v7759 = vadd.f32 %v7607, %v7758
        %v7760 = vpop.f32.mrb[0].mxu0
        %v7761 = vadd.f32 %v7609, %v7760
        %7762 = vmatprep.mubr.f32.mxu0 %v7648
        %7763 = vmatmul.mubr.f32.gmra.mrb[0].mxu0 %v7235
        %v7764 = vpop.f32.mrb[0].mxu0
        %v7765 = vadd.f32 %v7613, %v7764
        %v7766 = vpop.f32.mrb[0].mxu0
        %v7767 = vadd.f32 %v7615, %v7766
        %7768 = vmatprep.mubr.f32.mxu0 %v7651
        %7769 = vmatmul.mubr.f32.gmra.mrb[0].mxu0 %v7241
        %v7770 = vpop.f32.mrb[0].mxu0
        %v7771 = vadd.f32 %v7619, %v7770
        %v7772 = vpop.f32.mrb[0].mxu0
        %v7773 = vadd.f32 %v7621, %v7772
        %7774 = vmatprep.mubr.f32.mxu0 %v7654
        %7775 = vmatmul.mubr.f32.gmra.mrb[0].mxu0 %v7247
        %v7776 = vpop.f32.mrb[0].mxu0
        %v7777 = vadd.f32 %v7625, %v7776
        %v7778 = vpop.f32.mrb[0].mxu0
        %v7779 = vadd.f32 %v7627, %v7778
        %7780 = vdwg.mxu0
        %s7781 = scalar_lea.vmem [#allocation33], 144
        %v7782 = vld [vmem:[%s7781] sm:$0xff]
        %v7783 = vld [vmem:[%s7781 + $0x8] sm:$0xff]
        %v7784 = vld [vmem:[%s7781 + $0x10] sm:$0xff]
        %v7785 = vld [vmem:[%s7781 + $0x18] sm:$0xff]
        %v7786 = vld [vmem:[%s7781 + $0x20] sm:$0xff]
        %v7787 = vld [vmem:[%s7781 + $0x28] sm:$0xff]
        %v7788 = vld [vmem:[%s7781 + $0x30] sm:$0xff]
        %v7789 = vld [vmem:[%s7781 + $0x38] sm:$0xff]
        %v7790 = vld [vmem:[%s7781 + $0x40] sm:$0x3]
        %v7792 = vsel %vm6073, %v7782, 0
        %v7795 = vsel %vm6073, %v7783, 0
        %v7798 = vsel %vm6073, %v7784, 0
        %v7801 = vsel %vm6073, %v7785, 0
        %v7804 = vsel %vm6073, %v7786, 0
        %v7807 = vsel %vm6073, %v7787, 0
        %v7810 = vsel %vm6073, %v7788, 0
        %v7813 = vsel %vm6073, %v7789, 0
        %v7816 = vsel %vm6073, %v7790, 0
        %7818 = vmatprep.subr.mxu0 %v7064
        %7819 = vmatpush1.msra.mxu0 %v7062
        %7820 = vmatprep.subr.mxu0 %v7070
        %7821 = vmatpush1.msra.mxu0 %v7068
        %7822 = vmatprep.subr.mxu0 %v7076
        %7823 = vmatpush1.msra.mxu0 %v7074
        %7824 = vmatprep.subr.mxu0 %v7082
        %7825 = vmatpush1.msra.mxu0 %v7080
        %7826 = vmatprep.subr.mxu0 %v7130
        %7827 = vmatpush1.msra.mxu0 %v7127
        %7828 = vmatprep.subr.mxu0 0.0
        %7829 = vmatpush1.msra.mxu0 0.0
        %7830 = vmatprep.subr.mxu0 0.0
        %7831 = vmatpush1.msra.mxu0 0.0
        %7832 = vmatprep.subr.mxu0 0.0
        %7833 = vmatpush1.msra.mxu0 0.0
        %7834 = vmatprep.subr.mxu0 0.0
        %7835 = vmatpush1.msra.mxu0 0.0
        %7836 = vmatprep.subr.mxu0 0.0
        %7837 = vmatpush1.msra.mxu0 0.0
        %7838 = vmatprep.subr.mxu0 0.0
        %7839 = vmatpush1.msra.mxu0 0.0
        %7840 = vmatprep.subr.mxu0 0.0
        %7841 = vmatpush1.msra.mxu0 0.0
        %7842 = vmatprep.subr.mxu0 0.0
        %7843 = vmatpush1.msra.mxu0 0.0
        %7844 = vmatprep.subr.mxu0 0.0
        %7845 = vmatpush1.msra.mxu0 0.0
        %7846 = vmatprep.subr.mxu0 0.0
        %7847 = vmatpush1.msra.mxu0 0.0
        %7848 = vmatprep.subr.mxu0 0.0
        %7849 = vmatpush1.msra.mxu0 0.0
        %7850 = vmatprep.subr.mxu0 0.0
        %7851 = vmatpush1.msra.mxu0 0.0
        %7852 = vmatprep.subr.mxu0 0.0
        %7853 = vmatpush1.msra.mxu0 0.0
        %7854 = vmatprep.subr.mxu0 0.0
        %7855 = vmatpush1.msra.mxu0 0.0
        %7856 = vmatprep.subr.mxu0 0.0
        %7857 = vmatpush1.msra.mxu0 0.0
        %7858 = vmatprep.subr.mxu0 0.0
        %7859 = vmatpush1.msra.mxu0 0.0
        %7860 = vmatprep.subr.mxu0 0.0
        %7861 = vmatpush1.msra.mxu0 0.0
        %7862 = vmatprep.subr.mxu0 0.0
        %7863 = vmatpush1.msra.mxu0 0.0
        %7864 = vmatprep.subr.mxu0 0.0
        %7865 = vmatpush1.msra.mxu0 0.0
        %7866 = vmatprep.subr.mxu0 0.0
        %7867 = vmatpush1.msra.mxu0 0.0
        %7868 = vmatprep.subr.mxu0 0.0
        %7869 = vmatpush1.msra.mxu0 0.0
        %7870 = vmatprep.subr.mxu0 0.0
        %7871 = vmatpush1.msra.mxu0 0.0
        %7872 = vmatprep.subr.mxu0 0.0
        %7873 = vmatpush1.msra.mxu0 0.0
        %7874 = vmatprep.subr.mxu0 0.0
        %7875 = vmatpush1.msra.mxu0 0.0
        %7876 = vmatprep.subr.mxu0 0.0
        %7877 = vmatpush1.msra.mxu0 0.0
        %7878 = vmatprep.subr.mxu0 0.0
        %7879 = vmatpush1.msra.mxu0 0.0
        %7880 = vmatprep.subr.mxu0 0.0
        %7881 = vmatpush1.msra.mxu0 0.0
        %7882 = vmatprep.mubr.f32.mxu0 0.0
        %7883 = vmatmul.mubr.f32.gmra.mrb[0].mxu0 %v7792
        %v7884 = vpop.f32.mrb[0].mxu0
        %v7885 = vadd.f32 0.0, %v7884
        %v7886 = vpop.f32.mrb[0].mxu0
        %v7887 = vadd.f32 0.0, %v7886
        %7888 = vmatprep.mubr.f32.mxu0 0.0
        %7889 = vmatmul.mubr.f32.gmra.mrb[0].mxu0 %v7795
        %v7890 = vpop.f32.mrb[0].mxu0
        %v7891 = vadd.f32 0.0, %v7890
        %v7892 = vpop.f32.mrb[0].mxu0
        %v7893 = vadd.f32 0.0, %v7892
        %7894 = vmatprep.mubr.f32.mxu0 0.0
        %7895 = vmatmul.mubr.f32.gmra.mrb[0].mxu0 %v7798
        %v7896 = vpop.f32.mrb[0].mxu0
        %v7897 = vadd.f32 0.0, %v7896
        %v7898 = vpop.f32.mrb[0].mxu0
        %v7899 = vadd.f32 0.0, %v7898
        %7900 = vmatprep.mubr.f32.mxu0 0.0
        %7901 = vmatmul.mubr.f32.gmra.mrb[0].mxu0 %v7801
        %v7902 = vpop.f32.mrb[0].mxu0
        %v7903 = vadd.f32 0.0, %v7902
        %v7904 = vpop.f32.mrb[0].mxu0
        %v7905 = vadd.f32 0.0, %v7904
        %7906 = vmatprep.mubr.f32.mxu0 0.0
        %7907 = vmatmul.mubr.f32.gmra.mrb[0].mxu0 %v7804
        %v7908 = vpop.f32.mrb[0].mxu0
        %v7909 = vadd.f32 0.0, %v7908
        %v7910 = vpop.f32.mrb[0].mxu0
        %v7911 = vadd.f32 0.0, %v7910
        %7912 = vmatprep.mubr.f32.mxu0 0.0
        %7913 = vmatmul.mubr.f32.gmra.mrb[0].mxu0 %v7807
        %v7914 = vpop.f32.mrb[0].mxu0
        %v7915 = vadd.f32 0.0, %v7914
        %v7916 = vpop.f32.mrb[0].mxu0
        %v7917 = vadd.f32 0.0, %v7916
        %7918 = vmatprep.mubr.f32.mxu0 0.0
        %7919 = vmatmul.mubr.f32.gmra.mrb[0].mxu0 %v7810
        %v7920 = vpop.f32.mrb[0].mxu0
        %v7921 = vadd.f32 0.0, %v7920
        %v7922 = vpop.f32.mrb[0].mxu0
        %v7923 = vadd.f32 0.0, %v7922
        %7924 = vmatprep.mubr.f32.mxu0 0.0
        %7925 = vmatmul.mubr.f32.gmra.mrb[0].mxu0 %v7813
        %v7926 = vpop.f32.mrb[0].mxu0
        %v7927 = vadd.f32 0.0, %v7926
        %v7928 = vpop.f32.mrb[0].mxu0
        %v7929 = vadd.f32 0.0, %v7928
        %7930 = vmatprep.mubr.f32.mxu0 0.0
        %7931 = vmatmul.mubr.f32.gmra.mrb[0].mxu0 %v7816
        %v7932 = vpop.f32.mrb[0].mxu0
        %v7933 = vadd.f32 0.0, %v7932
        %v7934 = vpop.f32.mrb[0].mxu0
        %v7935 = vadd.f32 0.0, %v7934
        %7936 = vdwg.mxu0
        %s7937 = scalar_lea.vmem [#allocation35], 544
        %v7938 = vld [vmem:[%s7937] sm:$0xff]
        %v7939 = vld [vmem:[%s7937 + $0x8] sm:$0xff]
        %v7940 = vld [vmem:[%s7937 + $0x10] sm:$0xff]
        %v7941 = vld [vmem:[%s7937 + $0x18] sm:$0xff]
        %v7942 = vld [vmem:[%s7937 + $0x20] sm:$0xff]
        %v7943 = vld [vmem:[%s7937 + $0x28] sm:$0xff]
        %v7944 = vld [vmem:[%s7937 + $0x30] sm:$0xff]
        %v7945 = vld [vmem:[%s7937 + $0x38] sm:$0xff]
        %v7946 = vld [vmem:[%s7937 + $0x40] sm:$0xff]
        %v7947 = vld [vmem:[%s7937 + $0x48] sm:$0xff]
        %v7948 = vld [vmem:[%s7937 + $0x50] sm:$0xff]
        %v7949 = vld [vmem:[%s7937 + $0x58] sm:$0xff]
        %v7950 = vld [vmem:[%s7937 + $0x60] sm:$0xff]
        %v7951 = vld [vmem:[%s7937 + $0x68] sm:$0xff]
        %v7952 = vld [vmem:[%s7937 + $0x70] sm:$0xff]
        %v7953 = vld [vmem:[%s7937 + $0x78] sm:$0xff]
        %v7954 = vld [vmem:[%s7937 + $0x80] sm:$0xff]
        %v7955 = vld [vmem:[%s7937 + $0x88] sm:$0xff]
        %v7956 = vld [vmem:[%s7937 + $0x90] sm:$0xff]
        %v7957 = vld [vmem:[%s7937 + $0x98] sm:$0xff]
        %v7958 = vld [vmem:[%s7937 + $0xa0] sm:$0xff]
        %v7959 = vld [vmem:[%s7937 + $0xa8] sm:$0xff]
        %v7960 = vld [vmem:[%s7937 + $0xb0] sm:$0xff]
        %v7961 = vld [vmem:[%s7937 + $0xb8] sm:$0xff]
        %v7962 = vld [vmem:[%s7937 + $0xc0] sm:$0xff]
        %v7963 = vld [vmem:[%s7937 + $0xc8] sm:$0xff]
        %v7964 = vld [vmem:[%s7937 + $0xd0] sm:$0xff]
        %v7965 = vld [vmem:[%s7937 + $0xd8] sm:$0xff]
        %v7966 = vld [vmem:[%s7937 + $0xe0] sm:$0xff]
        %v7967 = vld [vmem:[%s7937 + $0xe8] sm:$0xff]
        %v7968 = vld [vmem:[%s7937 + $0xf0] sm:$0xff]
        %v7969 = vld [vmem:[%s7937 + $0xf8] sm:$0xff]
        %v7970 = vld [vmem:[%s7937 + $0x100] sm:$0xf]
        %v7971 = vld [vmem:[%s7937 + $0x108] sm:$0xf]
        %v7973 = vsel %vm7476, %v7887, 0
        %v7976 = vsel %vm7476, %v7893, 0
        %v7979 = vsel %vm7476, %v7899, 0
        %v7982 = vsel %vm7476, %v7905, 0
        %v7985 = vsel %vm7476, %v7911, 0
        %v7988 = vsel %vm7476, %v7917, 0
        %v7991 = vsel %vm7476, %v7923, 0
        %v7994 = vsel %vm7476, %v7929, 0
        %v7997 = vsel %vm7476, %v7935, 0
        %v8000 = vsel %vm6837, %v7970, 0
        %v8003 = vsel %vm6837, %v7971, 0
        %8005 = vmatprep.subr.mxu0 %v7939
        %8006 = vmatpush1.msra.mxu0 %v7938
        %8007 = vmatprep.subr.mxu0 %v7941
        %8008 = vmatpush1.msra.mxu0 %v7940
        %8009 = vmatprep.subr.mxu0 %v7943
        %8010 = vmatpush1.msra.mxu0 %v7942
        %8011 = vmatprep.subr.mxu0 %v7945
        %8012 = vmatpush1.msra.mxu0 %v7944
        %8013 = vmatprep.subr.mxu0 %v7947
        %8014 = vmatpush1.msra.mxu0 %v7946
        %8015 = vmatprep.subr.mxu0 %v7949
        %8016 = vmatpush1.msra.mxu0 %v7948
        %8017 = vmatprep.subr.mxu0 %v7951
        %8018 = vmatpush1.msra.mxu0 %v7950
        %8019 = vmatprep.subr.mxu0 %v7953
        %8020 = vmatpush1.msra.mxu0 %v7952
        %8021 = vmatprep.subr.mxu0 %v7955
        %8022 = vmatpush1.msra.mxu0 %v7954
        %8023 = vmatprep.subr.mxu0 %v7957
        %8024 = vmatpush1.msra.mxu0 %v7956
        %8025 = vmatprep.subr.mxu0 %v7959
        %8026 = vmatpush1.msra.mxu0 %v7958
        %8027 = vmatprep.subr.mxu0 %v7961
        %8028 = vmatpush1.msra.mxu0 %v7960
        %8029 = vmatprep.subr.mxu0 %v7963
        %8030 = vmatpush1.msra.mxu0 %v7962
        %8031 = vmatprep.subr.mxu0 %v7965
        %8032 = vmatpush1.msra.mxu0 %v7964
        %8033 = vmatprep.subr.mxu0 %v7967
        %8034 = vmatpush1.msra.mxu0 %v7966
        %8035 = vmatprep.subr.mxu0 %v7969
        %8036 = vmatpush1.msra.mxu0 %v7968
        %8037 = vmatprep.subr.mxu0 %v8003
        %8038 = vmatpush1.msra.mxu0 %v8000
        %8039 = vmatprep.subr.mxu0 0.0
        %8040 = vmatpush1.msra.mxu0 0.0
        %8041 = vmatprep.subr.mxu0 0.0
        %8042 = vmatpush1.msra.mxu0 0.0
        %8043 = vmatprep.subr.mxu0 0.0
        %8044 = vmatpush1.msra.mxu0 0.0
        %8045 = vmatprep.subr.mxu0 0.0
        %8046 = vmatpush1.msra.mxu0 0.0
        %8047 = vmatprep.subr.mxu0 0.0
        %8048 = vmatpush1.msra.mxu0 0.0
        %8049 = vmatprep.subr.mxu0 0.0
        %8050 = vmatpush1.msra.mxu0 0.0
        %8051 = vmatprep.subr.mxu0 0.0
        %8052 = vmatpush1.msra.mxu0 0.0
        %8053 = vmatprep.subr.mxu0 0.0
        %8054 = vmatpush1.msra.mxu0 0.0
        %8055 = vmatprep.subr.mxu0 0.0
        %8056 = vmatpush1.msra.mxu0 0.0
        %8057 = vmatprep.subr.mxu0 0.0
        %8058 = vmatpush1.msra.mxu0 0.0
        %8059 = vmatprep.subr.mxu0 0.0
        %8060 = vmatpush1.msra.mxu0 0.0
        %8061 = vmatprep.subr.mxu0 0.0
        %8062 = vmatpush1.msra.mxu0 0.0
        %8063 = vmatprep.subr.mxu0 0.0
        %8064 = vmatpush1.msra.mxu0 0.0
        %8065 = vmatprep.subr.mxu0 0.0
        %8066 = vmatpush1.msra.mxu0 0.0
        %8067 = vmatprep.subr.mxu0 0.0
        %8068 = vmatpush1.msra.mxu0 0.0
        %8069 = vmatprep.mubr.f32.mxu0 %v7973
        %8070 = vmatmul.mubr.f32.gmra.mrb[0].mxu0 %v7885
        %v8071 = vpop.f32.mrb[0].mxu0
        %v8072 = vadd.f32 0.0, %v8071
        %v8073 = vpop.f32.mrb[0].mxu0
        %v8074 = vadd.f32 0.0, %v8073
        %8075 = vmatprep.mubr.f32.mxu0 %v7976
        %8076 = vmatmul.mubr.f32.gmra.mrb[0].mxu0 %v7891
        %v8077 = vpop.f32.mrb[0].mxu0
        %v8078 = vadd.f32 0.0, %v8077
        %v8079 = vpop.f32.mrb[0].mxu0
        %v8080 = vadd.f32 0.0, %v8079
        %8081 = vmatprep.mubr.f32.mxu0 %v7979
        %8082 = vmatmul.mubr.f32.gmra.mrb[0].mxu0 %v7897
        %v8083 = vpop.f32.mrb[0].mxu0
        %v8084 = vadd.f32 0.0, %v8083
        %v8085 = vpop.f32.mrb[0].mxu0
        %v8086 = vadd.f32 0.0, %v8085
        %8087 = vmatprep.mubr.f32.mxu0 %v7982
        %8088 = vmatmul.mubr.f32.gmra.mrb[0].mxu0 %v7903
        %v8089 = vpop.f32.mrb[0].mxu0
        %v8090 = vadd.f32 0.0, %v8089
        %v8091 = vpop.f32.mrb[0].mxu0
        %v8092 = vadd.f32 0.0, %v8091
        %8093 = vmatprep.mubr.f32.mxu0 %v7985
        %8094 = vmatmul.mubr.f32.gmra.mrb[0].mxu0 %v7909
        %v8095 = vpop.f32.mrb[0].mxu0
        %v8096 = vadd.f32 0.0, %v8095
        %v8097 = vpop.f32.mrb[0].mxu0
        %v8098 = vadd.f32 0.0, %v8097
        %8099 = vmatprep.mubr.f32.mxu0 %v7988
        %8100 = vmatmul.mubr.f32.gmra.mrb[0].mxu0 %v7915
        %v8101 = vpop.f32.mrb[0].mxu0
        %v8102 = vadd.f32 0.0, %v8101
        %v8103 = vpop.f32.mrb[0].mxu0
        %v8104 = vadd.f32 0.0, %v8103
        %8105 = vmatprep.mubr.f32.mxu0 %v7991
        %8106 = vmatmul.mubr.f32.gmra.mrb[0].mxu0 %v7921
        %v8107 = vpop.f32.mrb[0].mxu0
        %v8108 = vadd.f32 0.0, %v8107
        %v8109 = vpop.f32.mrb[0].mxu0
        %v8110 = vadd.f32 0.0, %v8109
        %8111 = vmatprep.mubr.f32.mxu0 %v7994
        %8112 = vmatmul.mubr.f32.gmra.mrb[0].mxu0 %v7927
        %v8113 = vpop.f32.mrb[0].mxu0
        %v8114 = vadd.f32 0.0, %v8113
        %v8115 = vpop.f32.mrb[0].mxu0
        %v8116 = vadd.f32 0.0, %v8115
        %8117 = vmatprep.mubr.f32.mxu0 %v7997
        %8118 = vmatmul.mubr.f32.gmra.mrb[0].mxu0 %v7933
        %v8119 = vpop.f32.mrb[0].mxu0
        %v8120 = vadd.f32 0.0, %v8119
        %v8121 = vpop.f32.mrb[0].mxu0
        %v8122 = vadd.f32 0.0, %v8121
        %8123 = vdwg.mxu0
        %v8124 = vadd.f32 %v7729, %v8072
        %v8125 = vadd.f32 %v7731, %v8074
        %v8126 = vadd.f32 %v7735, %v8078
        %v8127 = vadd.f32 %v7737, %v8080
        %v8128 = vadd.f32 %v7741, %v8084
        %v8129 = vadd.f32 %v7743, %v8086
        %v8130 = vadd.f32 %v7747, %v8090
        %v8131 = vadd.f32 %v7749, %v8092
        %v8132 = vadd.f32 %v7753, %v8096
        %v8133 = vadd.f32 %v7755, %v8098
        %v8134 = vadd.f32 %v7759, %v8102
        %v8135 = vadd.f32 %v7761, %v8104
        %v8136 = vadd.f32 %v7765, %v8108
        %v8137 = vadd.f32 %v7767, %v8110
        %v8138 = vadd.f32 %v7771, %v8114
        %v8139 = vadd.f32 %v7773, %v8116
        %v8140 = vadd.f32 %v7777, %v8120
        %v8141 = vadd.f32 %v7779, %v8122
        %v8142 = vld [vmem:[%s27] sm:$0x3]
        %v8144 = vlaneseq
        %v8145 = vshrl.u32 %v8144, 7
        %v8146 = vsub.s32 0, %v8145
        %v8147 = vrot.slane %v8142, %v8146
        %v8148 = vlaneseq
        %v8149 = vshrl.u32 %v8148, 7
        %v8150 = vsub.s32 1, %v8149
        %v8151 = vrot.slane %v8142, %v8150
        %v8154 = vadd.f32 %v8124, %v8147
        %v8155 = vadd.f32 %v8125, %v8151
        %v8156 = vadd.f32 %v8126, %v8147
        %v8157 = vadd.f32 %v8127, %v8151
        %v8158 = vadd.f32 %v8128, %v8147
        %v8159 = vadd.f32 %v8129, %v8151
        %v8160 = vadd.f32 %v8130, %v8147
        %v8161 = vadd.f32 %v8131, %v8151
        %v8162 = vadd.f32 %v8132, %v8147
        %v8163 = vadd.f32 %v8133, %v8151
        %v8164 = vadd.f32 %v8134, %v8147
        %v8165 = vadd.f32 %v8135, %v8151
        %v8166 = vadd.f32 %v8136, %v8147
        %v8167 = vadd.f32 %v8137, %v8151
        %v8168 = vadd.f32 %v8138, %v8147
        %v8169 = vadd.f32 %v8139, %v8151
        %v8170 = vadd.f32 %v8140, %v8147
        %v8171 = vadd.f32 %v8141, %v8151
        %v8172 = vmax.f32 %v8154, -1.0
        %v8173 = vmax.f32 %v8155, -1.0
        %v8174 = vmax.f32 %v8156, -1.0
        %v8175 = vmax.f32 %v8157, -1.0
        %v8176 = vmax.f32 %v8158, -1.0
        %v8177 = vmax.f32 %v8159, -1.0
        %v8178 = vmax.f32 %v8160, -1.0
        %v8179 = vmax.f32 %v8161, -1.0
        %v8180 = vmax.f32 %v8162, -1.0
        %v8181 = vmax.f32 %v8163, -1.0
        %v8182 = vmax.f32 %v8164, -1.0
        %v8183 = vmax.f32 %v8165, -1.0
        %v8184 = vmax.f32 %v8166, -1.0
        %v8185 = vmax.f32 %v8167, -1.0
        %v8186 = vmax.f32 %v8168, -1.0
        %v8187 = vmax.f32 %v8169, -1.0
        %v8188 = vmax.f32 %v8170, -1.0
        %v8189 = vmax.f32 %v8171, -1.0
        %v8190 = vmin.f32 %v8172, 1.0
        %v8191 = vmin.f32 %v8173, 1.0
        %v8192 = vmin.f32 %v8174, 1.0
        %v8193 = vmin.f32 %v8175, 1.0
        %v8194 = vmin.f32 %v8176, 1.0
        %v8195 = vmin.f32 %v8177, 1.0
        %v8196 = vmin.f32 %v8178, 1.0
        %v8197 = vmin.f32 %v8179, 1.0
        %v8198 = vmin.f32 %v8180, 1.0
        %v8199 = vmin.f32 %v8181, 1.0
        %v8200 = vmin.f32 %v8182, 1.0
        %v8201 = vmin.f32 %v8183, 1.0
        %v8202 = vmin.f32 %v8184, 1.0
        %v8203 = vmin.f32 %v8185, 1.0
        %v8204 = vmin.f32 %v8186, 1.0
        %v8205 = vmin.f32 %v8187, 1.0
        %v8206 = vmin.f32 %v8188, 1.0
        %v8207 = vmin.f32 %v8189, 1.0
        %8208 = vst [vmem:[%s1106] sm:$0xff] %v8190
        %vm8209 = vcmask 572416
        %8210 = vst.msk [vmem:[%s1106 + $0x8] sm:$0xff] %vm8209, %v8191
        %8211 = vst [vmem:[%s1106 + $0x10] sm:$0xff] %v8192
        %8212 = vst.msk [vmem:[%s1106 + $0x18] sm:$0xff] %vm8209, %v8193
        %8213 = vst [vmem:[%s1106 + $0x20] sm:$0xff] %v8194
        %8214 = vst.msk [vmem:[%s1106 + $0x28] sm:$0xff] %vm8209, %v8195
        %8215 = vst [vmem:[%s1106 + $0x30] sm:$0xff] %v8196
        %8216 = vst.msk [vmem:[%s1106 + $0x38] sm:$0xff] %vm8209, %v8197
        %8217 = vst [vmem:[%s1106 + $0x40] sm:$0xff] %v8198
        %8218 = vst.msk [vmem:[%s1106 + $0x48] sm:$0xff] %vm8209, %v8199
        %8219 = vst [vmem:[%s1106 + $0x50] sm:$0xff] %v8200
        %8220 = vst.msk [vmem:[%s1106 + $0x58] sm:$0xff] %vm8209, %v8201
        %8221 = vst [vmem:[%s1106 + $0x60] sm:$0xff] %v8202
        %8222 = vst.msk [vmem:[%s1106 + $0x68] sm:$0xff] %vm8209, %v8203
        %8223 = vst [vmem:[%s1106 + $0x70] sm:$0xff] %v8204
        %8224 = vst.msk [vmem:[%s1106 + $0x78] sm:$0xff] %vm8209, %v8205
        %8225 = vst [vmem:[%s1106 + $0x80] sm:$0x3] %v8206
        %vm8226 = vcmask 566272
        %8227 = vst.msk [vmem:[%s1106 + $0x88] sm:$0x3] %vm8226, %v8207
        %p8228 = scmp.lt.s32.totalorder %s54, 1
        %s8229 = scalar_select %p8228, %s54, 1
        %s8230 = smul.addr %s8229, 18
        %s8231 = smul.addr %s8230, 8
        %s8232 = scalar_lea.vmem %s28, %s8231
        // Predicated region
        $region213: #{generate.1} parent=127 // pred_check
          %p8233 = pneg %p639
        $region214: #{generate.1} parent=127 // pred_check_branch
          %8235 = sbr.rel (%p8233) target = $region216
        $region215: #{generate.1} parent=127 // pred_region
          _
        $region216: #{generate.1} parent=127 // pred_fallthru
          _
      $region128: #{generate.1} parent=5 // pred_fallthru
        _
      %p8236 = scmp.le.s32.totalorder 2, %s49
      // Predicated region
      $region217: #{generate.1} parent=5 // pred_check
        %p8237 = pneg %p8236
      $region218: #{generate.1} parent=5 // pred_check_branch
        %8239 = sbr.rel (%p8237) target = $region220
      $region219: #{generate.1} parent=5 // pred_region
        %s8240 = ssub.s32 %s49, 2
        // Predicated region
        $region221: #{generate.1} parent=219 // pred_check
          %p8241 = pneg %p645
        $region222: #{generate.1} parent=219 // pred_check_branch
          %8243 = sbr.rel (%p8241) target = $region224
        $region223: #{generate.1} parent=219 // pred_region
          %p8244 = scmp.lt.s32.totalorder %s55, 1
          %s8245 = scalar_select %p8244, %s55, 1
          %s8246 = smul.addr %s8245, 18
          %s8247 = smul.addr %s8246, 8
          %s8248 = scalar_lea.vmem %s28, %s8247
        $region224: #{generate.1} parent=219 // pred_fallthru
          _
      $region220: #{generate.1} parent=5 // pred_fallthru
        _
    $region6: #{generate.1} parent=1 // loop_footer
      %s53 = sadd.s32 1, %s49
    $region7: #{generate.1} parent=1 // loop_footer_branch
      %48 = sbr.rel target = $region3
    $region8: #{generate.1} parent=1 // loop_exit
      _
    %8249 = vsyncpa [#allocation5], 1
    %s8250 = scalar_lea.sflag [#allocation5], 1
    %8251 = vsyncpa %s8250, 1
    %8252 = vsyncpa [#allocation7], 1
    %8253 = vsyncpa [#allocation10], 1
    %8254 = vsyncpa [#allocation13], 1
    %8255 = vsyncpa [#allocation16], 1
    %8256 = vsyncpa [#allocation19], 1
    %8257 = vsyncpa [#allocation22], 1
    %8258 = vsyncpa [#allocation25], 1
    %8259 = vsyncpa [#allocation28], 1
    %8260 = vsyncpa [#allocation31], 1
    %8261 = vsyncpa [#allocation34], 1

</llo_original>
